<compile_context>
chip_gen: v6e
topology: v6e:2x2x1
jax: 0.10.0
libtpu: 0.0.40
codegen_flags: <defaults>
</compile_context>

<pallas_src>
from functools import partial

import jax
import jax.numpy as jnp
from jax.experimental import pallas as pl
from jax.experimental.pallas import tpu as pltpu

_BN_EPS = 1e-5
_VMEM_BUDGET = 8 * 1024 * 1024  # bytes for the double-buffered streaming operands


# ----------------------------------------------------------------------------
# Fused GEMM + bias + (ReLU) Pallas kernel, shared by every dense stage.
# ----------------------------------------------------------------------------
def _gemm_bias_act_kernel(a_ref, b_ref, bias_ref, o_ref, *, relu):
    y = jnp.dot(a_ref[...], b_ref[...], preferred_element_type=jnp.float32)
    y = y + bias_ref[...]          # (1, N) or (C, 1) -> broadcasts
    if relu:
        y = jnp.maximum(y, 0.0)
    o_ref[...] = y


def _round_up(x, m):
    return ((x + m - 1) // m) * m


def _pad_contract(a, a_axis, b, b_axis, mult=8):
    """Zero-pad the shared contracting dim of a/b to a multiple of `mult`."""
    k = a.shape[a_axis]
    kp = _round_up(k, mult)
    if kp != k:
        pa = [(0, 0)] * a.ndim
        pa[a_axis] = (0, kp - k)
        pb = [(0, 0)] * b.ndim
        pb[b_axis] = (0, kp - k)
        a = jnp.pad(a, pa)
        b = jnp.pad(b, pb)
    return a, b


def _pick_rows_block(m, k, n):
    """Row-block (multiple of 8) so double-buffered x+out (lane-padded) fit."""
    per_row = 2 * (_round_up(k, 128) + _round_up(n, 128)) * 4
    rows = max(8, (_VMEM_BUDGET // per_row) // 8 * 8)
    return m if rows >= m else int(rows)


def _pick_cols_block(m, c, k):
    """Col-block (multiple of 128) so double-buffered x+out (sublane-padded) fit."""
    per_col = 2 * (_round_up(k, 8) + _round_up(c, 8)) * 4
    cols = max(128, (_VMEM_BUDGET // per_col) // 128 * 128)
    return m if cols >= m else int(cols)


def _gemm_rows(x, w, bias_row, *, relu):
    """out[M, N] = act(x[M, K] @ w[K, N] + bias[1, N]); tiles M if needed."""
    m, _ = x.shape
    _, n = w.shape
    x, w = _pad_contract(x, 1, w, 0)
    k = x.shape[1]

    blk = _pick_rows_block(m, k, n)
    grid_m = pl.cdiv(m, blk)
    mp = grid_m * blk
    if mp != m:
        x = jnp.pad(x, ((0, mp - m), (0, 0)))

    out = pl.pallas_call(
        partial(_gemm_bias_act_kernel, relu=relu),
        out_shape=jax.ShapeDtypeStruct((mp, n), jnp.float32),
        grid=(grid_m,),
        in_specs=[
            pl.BlockSpec((blk, k), lambda i: (i, 0)),
            pl.BlockSpec((k, n), lambda i: (0, 0)),
            pl.BlockSpec((1, n), lambda i: (0, 0)),
        ],
        out_specs=pl.BlockSpec((blk, n), lambda i: (i, 0)),
        compiler_params=pltpu.CompilerParams(dimension_semantics=("parallel",)),
    )(x, w, bias_row)
    return out[:m] if mp != m else out


def _gemm_cols(a, x, bias_col, *, relu):
    """out[C, M] = act(a[C, K] @ x[K, M] + bias[C, 1]); tiles M (lanes) if needed."""
    c, _ = a.shape
    _, m = x.shape
    a, x = _pad_contract(a, 1, x, 0)
    k = a.shape[1]

    blk = _pick_cols_block(m, c, k)
    grid_m = pl.cdiv(m, blk)
    mp = grid_m * blk
    if mp != m:
        x = jnp.pad(x, ((0, 0), (0, mp - m)))

    out = pl.pallas_call(
        partial(_gemm_bias_act_kernel, relu=relu),
        out_shape=jax.ShapeDtypeStruct((c, mp), jnp.float32),
        grid=(grid_m,),
        in_specs=[
            pl.BlockSpec((c, k), lambda i: (0, 0)),
            pl.BlockSpec((k, blk), lambda i: (0, i)),
            pl.BlockSpec((c, 1), lambda i: (0, 0)),
        ],
        out_specs=pl.BlockSpec((c, blk), lambda i: (0, i)),
        compiler_params=pltpu.CompilerParams(dimension_semantics=("parallel",)),
    )(a, x, bias_col)
    return out[:, :m] if mp != m else out


# ----------------------------------------------------------------------------
# JEPA forward (wrapper: layout plumbing only, all GEMMs in Pallas).
# ----------------------------------------------------------------------------
def _im2col_t(x, kh, kw, stride, pad):
    """x: (N, C, H, W) -> patches (C*kh*kw, N*OH*OW).

    Row index ordering: (c, i, j) — matches torch weight.reshape(C_out, -1).
    Column index ordering: (n, oh, ow).
    """
    n, c, h, w = x.shape
    oh = (h + 2 * pad - kh) // stride + 1
    ow = (w + 2 * pad - kw) // stride + 1
    xp = jnp.pad(x, ((0, 0), (0, 0), (pad, pad), (pad, pad)))
    cols = []
    for i in range(kh):
        for j in range(kw):
            cols.append(
                xp[:, :,
                   i:i + stride * (oh - 1) + 1:stride,
                   j:j + stride * (ow - 1) + 1:stride])
    pat = jnp.stack(cols, axis=2)            # (N, C, kh*kw, OH, OW)
    pat = pat.transpose(1, 2, 0, 3, 4)       # (C, kh*kw, N, OH, OW)
    return pat.reshape(c * kh * kw, n * oh * ow), oh, ow


def _conv_bn_relu(x_nchw, w, b, gamma, beta, mean, var, *, stride, pad):
    """Conv2d + BatchNorm2d(eval) + ReLU as a lane-dense Pallas GEMM."""
    c_out, c_in, kh, kw = w.shape
    patches, oh, ow = _im2col_t(x_nchw, kh, kw, stride, pad)      # (K, M)
    scale = gamma / jnp.sqrt(var + _BN_EPS)
    shift = beta + (b - mean) * scale
    wt = w.reshape(c_out, c_in * kh * kw) * scale[:, None]        # fold BN scale
    out = _gemm_cols(wt, patches, shift[:, None], relu=True)      # (C_out, M)
    n = x_nchw.shape[0]
    return out.reshape(c_out, n, oh, ow).transpose(1, 0, 2, 3)    # back to NCHW


def _encoder(params, states):
    b, t = states.shape[:2]
    x = states.reshape((b * t,) + states.shape[2:]).astype(jnp.float32)
    h = _conv_bn_relu(x, params["conv1_w"], params["conv1_b"],
                      params["bn1_g"], params["bn1_b"], params["bn1_m"],
                      params["bn1_v"], stride=2, pad=1)
    h = _conv_bn_relu(h, params["conv2_w"], params["conv2_b"],
                      params["bn2_g"], params["bn2_b"], params["bn2_m"],
                      params["bn2_v"], stride=2, pad=2)
    h = h.reshape(b * t, -1)                                      # torch Flatten (C,H,W order)
    z = _gemm_rows(h, params["fc_w"], params["fc_b"][None, :], relu=False)
    return z.reshape(b, t, -1)


def _predictor(params, state_2d, action_2d):
    """Linear(s_dim+2 -> s_dim) + BatchNorm1d(eval) + ReLU on (rows, features)."""
    scale = params["pbn_g"] / jnp.sqrt(params["pbn_v"] + _BN_EPS)
    shift = params["pbn_b"] + (params["pred_b"] - params["pbn_m"]) * scale
    w = params["pred_w"] * scale[None, :]
    x = jnp.concatenate([state_2d, action_2d.astype(jnp.float32)], axis=1)
    return _gemm_rows(x, w, shift[None, :], relu=True)


def jepa_forward(params, states, actions):
    """states: (B, T, 2, 65, 65); actions: (B, T-1, 2) -> (B, T, s_dim)."""
    s = _encoder(params, states)                       # (B, T, s_dim)
    b, t, s_dim = s.shape
    if t == 1:
        # Autoregressive rollout branch of JEPA.forward.
        preds = [s]
        cur = s[:, 0]
        for step in range(actions.shape[1]):
            cur = _predictor(params, cur, actions[:, step])
            preds.append(cur[:, None, :])
        return jnp.concatenate(preds, axis=1)
    st = s[:, :-1].reshape(b * (t - 1), s_dim)
    ac = actions.reshape(b * (t - 1), -1)
    pred = _predictor(params, st, ac).reshape(b, t - 1, s_dim)
    return jnp.concatenate([s[:, :1], pred], axis=1)


# ----------------------------------------------------------------------------
# Parameters (torch-like init; weights stored as (in, out) for x @ W).
# ----------------------------------------------------------------------------
def init_jepa_params(key, s_dim, cnn_dim):
    c, h, w = 2, 65, 65                       # hardcoded in the torch Encoder
    h1 = (h - 1) // 2 + 1
    h2 = (h1 - 1) // 2 + 1
    fc_in = h2 * h2 * cnn_dim * 2
    del w
    k = jax.random.split(key, 8)

    def uni(kk, shape, fan_in):
        bound = 1.0 / float(fan_in) ** 0.5
        return jax.random.uniform(kk, shape, jnp.float32, -bound, bound)

    ones = lambda n: jnp.ones((n,), jnp.float32)
    zeros = lambda n: jnp.zeros((n,), jnp.float32)
    return dict(
        conv1_w=uni(k[0], (cnn_dim, c, 3, 3), c * 9),
        conv1_b=uni(k[1], (cnn_dim,), c * 9),
        bn1_g=ones(cnn_dim), bn1_b=zeros(cnn_dim),
        bn1_m=zeros(cnn_dim), bn1_v=ones(cnn_dim),
        conv2_w=uni(k[2], (cnn_dim * 2, cnn_dim, 5, 5), cnn_dim * 25),
        conv2_b=uni(k[3], (cnn_dim * 2,), cnn_dim * 25),
        bn2_g=ones(cnn_dim * 2), bn2_b=zeros(cnn_dim * 2),
        bn2_m=zeros(cnn_dim * 2), bn2_v=ones(cnn_dim * 2),
        fc_w=uni(k[4], (fc_in, s_dim), fc_in),
        fc_b=uni(k[5], (s_dim,), fc_in),
        pred_w=uni(k[6], (s_dim + 2, s_dim), s_dim + 2),
        pred_b=uni(k[7], (s_dim,), s_dim + 2),
        pbn_g=ones(s_dim), pbn_b=zeros(s_dim),
        pbn_m=zeros(s_dim), pbn_v=ones(s_dim),
    )


# ----------------------------------------------------------------------------
# Pure-JAX reference (lax.conv, HIGHEST precision) for a correctness check.
# ----------------------------------------------------------------------------
def _reference_forward(params, states, actions):
    hi = jax.lax.Precision.HIGHEST
    b, t = states.shape[:2]
    x = states.reshape((b * t,) + states.shape[2:]).astype(jnp.float32)

    def conv_bn_relu(xx, w, bb, g, be, m, v, stride, pad):
        y = jax.lax.conv_general_dilated(
            xx, w, (stride, stride), ((pad, pad), (pad, pad)),
            dimension_numbers=("NCHW", "OIHW", "NCHW"), precision=hi)
        y = y + bb[None, :, None, None]
        sc = g / jnp.sqrt(v + _BN_EPS)
        y = (y - m[None, :, None, None]) * sc[None, :, None, None] + be[None, :, None, None]
        return jnp.maximum(y, 0.0)

    h = conv_bn_relu(x, params["conv1_w"], params["conv1_b"], params["bn1_g"],
                     params["bn1_b"], params["bn1_m"], params["bn1_v"], 2, 1)
    h = conv_bn_relu(h, params["conv2_w"], params["conv2_b"], params["bn2_g"],
                     params["bn2_b"], params["bn2_m"], params["bn2_v"], 2, 2)
    h = h.reshape(b * t, -1)
    s = (jnp.dot(h, params["fc_w"], precision=hi) + params["fc_b"]).reshape(b, t, -1)

    st = s[:, :-1].reshape(b * (t - 1), -1)
    ac = actions.reshape(b * (t - 1), -1).astype(jnp.float32)
    y = jnp.dot(jnp.concatenate([st, ac], axis=1), params["pred_w"], precision=hi)
    y = y + params["pred_b"]
    sc = params["pbn_g"] / jnp.sqrt(params["pbn_v"] + _BN_EPS)
    y = (y - params["pbn_m"]) * sc + params["pbn_b"]
    y = jnp.maximum(y, 0.0).reshape(b, t - 1, -1)
    return jnp.concatenate([s[:, :1], y], axis=1)


if __name__ == "__main__":
    S_DIM, CNN_DIM = 128, 8
    B, T, C, H, W = 2, 8, 2, 65, 65           # C/H/W fixed by the Encoder spec (2, 65, 65)

    key = jax.random.PRNGKey(0)
    kp, ks, ka = jax.random.split(key, 3)
    params = init_jepa_params(kp, S_DIM, CNN_DIM)
    states = jax.random.normal(ks, (B, T, C, H, W), dtype=jnp.float32)
    actions = jax.random.normal(ka, (B, T - 1, 2), dtype=jnp.float32)

    fwd = jax.jit(jepa_forward)
    out = jax.block_until_ready(fwd(params, states, actions))
    assert out.shape == (B, T, S_DIM), out.shape
    assert out.dtype == jnp.float32
    assert bool(jnp.all(jnp.isfinite(out)))

    ref = _reference_forward(params, states, actions)
    max_err = float(jnp.max(jnp.abs(out - ref)))
    assert max_err < 2e-2, f"mismatch vs reference: {max_err}"

    # Exercise the T == 1 autoregressive rollout branch as well.
    out1 = jax.block_until_ready(fwd(params, states[:, :1], actions[:, :3]))
    assert out1.shape == (B, 4, S_DIM), out1.shape
    assert bool(jnp.all(jnp.isfinite(out1)))

    print("KERNEL_OK")
</pallas_src>

<mosaic_0001>
module attributes {stable_mosaic.version = 11 : i64} {
  func.func @_gemm_bias_act_kernel(%arg0: i32, %arg1: memref<8x24xf32, #tpu.memory_space<vmem>>, %arg2: memref<24x17424xf32, #tpu.memory_space<vmem>>, %arg3: memref<8x1xf32, #tpu.memory_space<vmem>>, %arg4: memref<8x17424xf32, #tpu.memory_space<vmem>>) attributes {dimension_semantics = [#tpu.dimension_semantics<parallel>], iteration_bounds = array<i64: 1>, scalar_prefetch = 0 : i64, scratch_operands = 0 : i64, tpu.core_type = #tpu.core_type<tc>, window_params = [{pipeline_mode = #tpu.pipeline_mode<synchronous>, transform_indices = @transform_0, window_bounds = array<i64: 8, 24>}, {transform_indices = @transform_1, window_bounds = array<i64: 24, 17424>}, {pipeline_mode = #tpu.pipeline_mode<synchronous>, transform_indices = @transform_2, window_bounds = array<i64: 8, 1>}, {transform_indices = @transform_3, window_bounds = array<i64: 8, 17424>}]} {
    %c0 = arith.constant 0 : index
    %c0_0 = arith.constant 0 : index
    %0 = vector.load %arg1[%c0, %c0_0] : memref<8x24xf32, #tpu.memory_space<vmem>>, vector<8x24xf32>
    %c0_1 = arith.constant 0 : index
    %c0_2 = arith.constant 0 : index
    %1 = vector.load %arg2[%c0_1, %c0_2] : memref<24x17424xf32, #tpu.memory_space<vmem>>, vector<24x17424xf32>
    %cst = arith.constant dense<0.000000e+00> : vector<8x17424xf32>
    %2 = tpu.matmul %0, %1, %cst {dimension_numbers = #tpu.dot_dimension_numbers<[1], [0], [0], [1], [0, 0, 1, 1], [], []>} : vector<8x24xf32>, vector<24x17424xf32>, vector<8x17424xf32> -> vector<8x17424xf32>
    %c0_3 = arith.constant 0 : index
    %c0_4 = arith.constant 0 : index
    %3 = vector.load %arg3[%c0_3, %c0_4] : memref<8x1xf32, #tpu.memory_space<vmem>>, vector<8x1xf32>
    %4 = vector.broadcast %3 : vector<8x1xf32> to vector<8x17424xf32>
    %5 = arith.addf %2, %4 : vector<8x17424xf32>
    %cst_5 = arith.constant 0.000000e+00 : f32
    %6 = vector.broadcast %cst_5 : f32 to vector<8x17424xf32>
    %7 = arith.maximumf %5, %6 : vector<8x17424xf32>
    %c0_6 = arith.constant 0 : index
    %c0_7 = arith.constant 0 : index
    %8 = vector.load %arg4[%c0_6, %c0_7] : memref<8x17424xf32, #tpu.memory_space<vmem>>, vector<8x17424xf32>
    tpu.vector_store %arg4[%c0_6, %c0_7], %7 {strides = array<i32>} : memref<8x17424xf32, #tpu.memory_space<vmem>>, vector<8x17424xf32>,
    return
  }
  func.func @transform_0(%arg0: i32) -> (i32, i32) {
    %c0_i32 = arith.constant 0 : i32
    %c0_i32_0 = arith.constant 0 : i32
    %c0_i32_1 = arith.constant 0 : i32
    return %c0_i32, %c0_i32_0 : i32, i32
  }
  func.func @transform_1(%arg0: i32) -> (i32, i32) {
    %c0_i32 = arith.constant 0 : i32
    %c0_i32_0 = arith.constant 0 : i32
    return %c0_i32, %arg0 : i32, i32
  }
  func.func @transform_2(%arg0: i32) -> (i32, i32) {
    %c0_i32 = arith.constant 0 : i32
    %c0_i32_0 = arith.constant 0 : i32
    %c0_i32_1 = arith.constant 0 : i32
    return %c0_i32, %c0_i32_0 : i32, i32
  }
  func.func @transform_3(%arg0: i32) -> (i32, i32) {
    %c0_i32 = arith.constant 0 : i32
    %c0_i32_0 = arith.constant 0 : i32
    return %c0_i32, %arg0 : i32, i32
  }
}

module attributes {stable_mosaic.version = 11 : i64} {
  func.func @_gemm_bias_act_kernel(%arg0: i32, %arg1: memref<16x200xf32, #tpu.memory_space<vmem>>, %arg2: memref<200x4624xf32, #tpu.memory_space<vmem>>, %arg3: memref<16x1xf32, #tpu.memory_space<vmem>>, %arg4: memref<16x4624xf32, #tpu.memory_space<vmem>>) attributes {dimension_semantics = [#tpu.dimension_semantics<parallel>], iteration_bounds = array<i64: 1>, scalar_prefetch = 0 : i64, scratch_operands = 0 : i64, tpu.core_type = #tpu.core_type<tc>, window_params = [{pipeline_mode = #tpu.pipeline_mode<synchronous>, transform_indices = @transform_0, window_bounds = array<i64: 16, 200>}, {transform_indices = @transform_1, window_bounds = array<i64: 200, 4624>}, {pipeline_mode = #tpu.pipeline_mode<synchronous>, transform_indices = @transform_2, window_bounds = array<i64: 16, 1>}, {transform_indices = @transform_3, window_bounds = array<i64: 16, 4624>}]} {
    %c0 = arith.constant 0 : index
    %c0_0 = arith.constant 0 : index
    %0 = vector.load %arg1[%c0, %c0_0] : memref<16x200xf32, #tpu.memory_space<vmem>>, vector<16x200xf32>
    %c0_1 = arith.constant 0 : index
    %c0_2 = arith.constant 0 : index
    %1 = vector.load %arg2[%c0_1, %c0_2] : memref<200x4624xf32, #tpu.memory_space<vmem>>, vector<200x4624xf32>
    %cst = arith.constant dense<0.000000e+00> : vector<16x4624xf32>
    %2 = tpu.matmul %0, %1, %cst {dimension_numbers = #tpu.dot_dimension_numbers<[1], [0], [0], [1], [0, 0, 1, 1], [], []>} : vector<16x200xf32>, vector<200x4624xf32>, vector<16x4624xf32> -> vector<16x4624xf32>
    %c0_3 = arith.constant 0 : index
    %c0_4 = arith.constant 0 : index
    %3 = vector.load %arg3[%c0_3, %c0_4] : memref<16x1xf32, #tpu.memory_space<vmem>>, vector<16x1xf32>
    %4 = vector.broadcast %3 : vector<16x1xf32> to vector<16x4624xf32>
    %5 = arith.addf %2, %4 : vector<16x4624xf32>
    %cst_5 = arith.constant 0.000000e+00 : f32
    %6 = vector.broadcast %cst_5 : f32 to vector<16x4624xf32>
    %7 = arith.maximumf %5, %6 : vector<16x4624xf32>
    %c0_6 = arith.constant 0 : index
    %c0_7 = arith.constant 0 : index
    %8 = vector.load %arg4[%c0_6, %c0_7] : memref<16x4624xf32, #tpu.memory_space<vmem>>, vector<16x4624xf32>
    tpu.vector_store %arg4[%c0_6, %c0_7], %7 {strides = array<i32>} : memref<16x4624xf32, #tpu.memory_space<vmem>>, vector<16x4624xf32>,
    return
  }
  func.func @transform_0(%arg0: i32) -> (i32, i32) {
    %c0_i32 = arith.constant 0 : i32
    %c0_i32_0 = arith.constant 0 : i32
    %c0_i32_1 = arith.constant 0 : i32
    return %c0_i32, %c0_i32_0 : i32, i32
  }
  func.func @transform_1(%arg0: i32) -> (i32, i32) {
    %c0_i32 = arith.constant 0 : i32
    %c0_i32_0 = arith.constant 0 : i32
    return %c0_i32, %arg0 : i32, i32
  }
  func.func @transform_2(%arg0: i32) -> (i32, i32) {
    %c0_i32 = arith.constant 0 : i32
    %c0_i32_0 = arith.constant 0 : i32
    %c0_i32_1 = arith.constant 0 : i32
    return %c0_i32, %c0_i32_0 : i32, i32
  }
  func.func @transform_3(%arg0: i32) -> (i32, i32) {
    %c0_i32 = arith.constant 0 : i32
    %c0_i32_0 = arith.constant 0 : i32
    return %c0_i32, %arg0 : i32, i32
  }
}

module attributes {stable_mosaic.version = 11 : i64} {
  func.func @_gemm_bias_act_kernel(%arg0: i32, %arg1: memref<16x4624xf32, #tpu.memory_space<vmem>>, %arg2: memref<4624x128xf32, #tpu.memory_space<vmem>>, %arg3: memref<1x128xf32, #tpu.memory_space<vmem>>, %arg4: memref<16x128xf32, #tpu.memory_space<vmem>>) attributes {dimension_semantics = [#tpu.dimension_semantics<parallel>], iteration_bounds = array<i64: 1>, scalar_prefetch = 0 : i64, scratch_operands = 0 : i64, tpu.core_type = #tpu.core_type<tc>, window_params = [{transform_indices = @transform_0, window_bounds = array<i64: 16, 4624>}, {pipeline_mode = #tpu.pipeline_mode<synchronous>, transform_indices = @transform_1, window_bounds = array<i64: 4624, 128>}, {pipeline_mode = #tpu.pipeline_mode<synchronous>, transform_indices = @transform_2, window_bounds = array<i64: 1, 128>}, {transform_indices = @transform_3, window_bounds = array<i64: 16, 128>}]} {
    %c0 = arith.constant 0 : index
    %c0_0 = arith.constant 0 : index
    %0 = vector.load %arg1[%c0, %c0_0] : memref<16x4624xf32, #tpu.memory_space<vmem>>, vector<16x4624xf32>
    %c0_1 = arith.constant 0 : index
    %c0_2 = arith.constant 0 : index
    %1 = vector.load %arg2[%c0_1, %c0_2] : memref<4624x128xf32, #tpu.memory_space<vmem>>, vector<4624x128xf32>
    %cst = arith.constant dense<0.000000e+00> : vector<16x128xf32>
    %2 = tpu.matmul %0, %1, %cst {dimension_numbers = #tpu.dot_dimension_numbers<[1], [0], [0], [1], [0, 0, 1, 1], [], []>} : vector<16x4624xf32>, vector<4624x128xf32>, vector<16x128xf32> -> vector<16x128xf32>
    %c0_3 = arith.constant 0 : index
    %c0_4 = arith.constant 0 : index
    %3 = vector.load %arg3[%c0_3, %c0_4] : memref<1x128xf32, #tpu.memory_space<vmem>>, vector<1x128xf32>
    %4 = vector.broadcast %3 : vector<1x128xf32> to vector<16x128xf32>
    %5 = arith.addf %2, %4 : vector<16x128xf32>
    %c0_5 = arith.constant 0 : index
    %c0_6 = arith.constant 0 : index
    %6 = vector.load %arg4[%c0_5, %c0_6] : memref<16x128xf32, #tpu.memory_space<vmem>>, vector<16x128xf32>
    tpu.vector_store %arg4[%c0_5, %c0_6], %5 {strides = array<i32>} : memref<16x128xf32, #tpu.memory_space<vmem>>, vector<16x128xf32>,
    return
  }
  func.func @transform_0(%arg0: i32) -> (i32, i32) {
    %c0_i32 = arith.constant 0 : i32
    %c0_i32_0 = arith.constant 0 : i32
    return %arg0, %c0_i32 : i32, i32
  }
  func.func @transform_1(%arg0: i32) -> (i32, i32) {
    %c0_i32 = arith.constant 0 : i32
    %c0_i32_0 = arith.constant 0 : i32
    %c0_i32_1 = arith.constant 0 : i32
    return %c0_i32, %c0_i32_0 : i32, i32
  }
  func.func @transform_2(%arg0: i32) -> (i32, i32) {
    %c0_i32 = arith.constant 0 : i32
    %c0_i32_0 = arith.constant 0 : i32
    %c0_i32_1 = arith.constant 0 : i32
    return %c0_i32, %c0_i32_0 : i32, i32
  }
  func.func @transform_3(%arg0: i32) -> (i32, i32) {
    %c0_i32 = arith.constant 0 : i32
    %c0_i32_0 = arith.constant 0 : i32
    return %arg0, %c0_i32 : i32, i32
  }
}

module attributes {stable_mosaic.version = 11 : i64} {
  func.func @_gemm_bias_act_kernel(%arg0: i32, %arg1: memref<14x136xf32, #tpu.memory_space<vmem>>, %arg2: memref<136x128xf32, #tpu.memory_space<vmem>>, %arg3: memref<1x128xf32, #tpu.memory_space<vmem>>, %arg4: memref<14x128xf32, #tpu.memory_space<vmem>>) attributes {dimension_semantics = [#tpu.dimension_semantics<parallel>], iteration_bounds = array<i64: 1>, scalar_prefetch = 0 : i64, scratch_operands = 0 : i64, tpu.core_type = #tpu.core_type<tc>, window_params = [{transform_indices = @transform_0, window_bounds = array<i64: 14, 136>}, {pipeline_mode = #tpu.pipeline_mode<synchronous>, transform_indices = @transform_1, window_bounds = array<i64: 136, 128>}, {pipeline_mode = #tpu.pipeline_mode<synchronous>, transform_indices = @transform_2, window_bounds = array<i64: 1, 128>}, {transform_indices = @transform_3, window_bounds = array<i64: 14, 128>}]} {
    %c0 = arith.constant 0 : index
    %c0_0 = arith.constant 0 : index
    %0 = vector.load %arg1[%c0, %c0_0] : memref<14x136xf32, #tpu.memory_space<vmem>>, vector<14x136xf32>
    %c0_1 = arith.constant 0 : index
    %c0_2 = arith.constant 0 : index
    %1 = vector.load %arg2[%c0_1, %c0_2] : memref<136x128xf32, #tpu.memory_space<vmem>>, vector<136x128xf32>
    %cst = arith.constant dense<0.000000e+00> : vector<14x128xf32>
    %2 = tpu.matmul %0, %1, %cst {dimension_numbers = #tpu.dot_dimension_numbers<[1], [0], [0], [1], [0, 0, 1, 1], [], []>} : vector<14x136xf32>, vector<136x128xf32>, vector<14x128xf32> -> vector<14x128xf32>
    %c0_3 = arith.constant 0 : index
    %c0_4 = arith.constant 0 : index
    %3 = vector.load %arg3[%c0_3, %c0_4] : memref<1x128xf32, #tpu.memory_space<vmem>>, vector<1x128xf32>
    %4 = vector.broadcast %3 : vector<1x128xf32> to vector<14x128xf32>
    %5 = arith.addf %2, %4 : vector<14x128xf32>
    %cst_5 = arith.constant 0.000000e+00 : f32
    %6 = vector.broadcast %cst_5 : f32 to vector<14x128xf32>
    %7 = arith.maximumf %5, %6 : vector<14x128xf32>
    %c0_6 = arith.constant 0 : index
    %c0_7 = arith.constant 0 : index
    %8 = vector.load %arg4[%c0_6, %c0_7] : memref<14x128xf32, #tpu.memory_space<vmem>>, vector<14x128xf32>
    tpu.vector_store %arg4[%c0_6, %c0_7], %7 {strides = array<i32>} : memref<14x128xf32, #tpu.memory_space<vmem>>, vector<14x128xf32>,
    return
  }
  func.func @transform_0(%arg0: i32) -> (i32, i32) {
    %c0_i32 = arith.constant 0 : i32
    %c0_i32_0 = arith.constant 0 : i32
    return %arg0, %c0_i32 : i32, i32
  }
  func.func @transform_1(%arg0: i32) -> (i32, i32) {
    %c0_i32 = arith.constant 0 : i32
    %c0_i32_0 = arith.constant 0 : i32
    %c0_i32_1 = arith.constant 0 : i32
    return %c0_i32, %c0_i32_0 : i32, i32
  }
  func.func @transform_2(%arg0: i32) -> (i32, i32) {
    %c0_i32 = arith.constant 0 : i32
    %c0_i32_0 = arith.constant 0 : i32
    %c0_i32_1 = arith.constant 0 : i32
    return %c0_i32, %c0_i32_0 : i32, i32
  }
  func.func @transform_3(%arg0: i32) -> (i32, i32) {
    %c0_i32 = arith.constant 0 : i32
    %c0_i32_0 = arith.constant 0 : i32
    return %arg0, %c0_i32 : i32, i32
  }
}

</mosaic_0001>

<llo_original>
// kernel: jepa_forward.4
$region0: #{jepa_forward.4}
  #allocation0 [shape = 'u32[]', space=smem, size = 0x4, offset = 0x4, fixed_abs, tag = 'smem constant byte address 0x4 - core index']
  #allocation1 [shape = 'u32[144,128]{1,0:T(1,128)}', space=vmem, size = 0x12000, scoped, tag = 'internal scratch']
  %s0 = inlined_call_operand.vmem [shape: f32[8,24], index: 0, kind: input, shape index: {}]
  %s1 = inlined_call_operand.vmem [shape: f32[24,17424], index: 1, kind: input, shape index: {}]
  %s2 = inlined_call_operand.vmem [shape: f32[8,1], index: 2, kind: input, shape index: {}]
  %s3 = inlined_call_operand.vmem [shape: f32[8,17424], index: 3, kind: output, shape index: {}]
  %s4 = sld [smem:[#allocation0]]
  $region22: #{jepa_forward.4} parent=0
    _
  %s6 = ssub.s32 1, %s4
  %s7 = scalar_select 0, %s6, %s4
  // Predicated region
  $region2: #{jepa_forward.4} parent=0 // pred_check
    _
  $region3: #{jepa_forward.4} parent=0 // pred_check_branch
    %9 = sbr.rel (0) target = $region5
  $region4: #{jepa_forward.4} parent=0 // pred_region
    _
  $region5: #{jepa_forward.4} parent=0 // pred_fallthru
    _
  // Predicated region
  $region6: #{jepa_forward.4} parent=0 // pred_check
    _
  $region7: #{jepa_forward.4} parent=0 // pred_check_branch
    %11 = sbr.rel (0) target = $region9
  $region8: #{jepa_forward.4} parent=0 // pred_region
    _
  $region9: #{jepa_forward.4} parent=0 // pred_fallthru
    _
  // Predicated region
  $region10: #{jepa_forward.4} parent=0 // pred_check
    _
  $region11: #{jepa_forward.4} parent=0 // pred_check_branch
    %13 = sbr.rel (0) target = $region13
  $region12: #{jepa_forward.4} parent=0 // pred_region
    _
  $region13: #{jepa_forward.4} parent=0 // pred_fallthru
    _
  %v14 = vld [vmem:[%s0] sm:$0xff]
  %v15 = vld [vmem:[%s1] sm:$0xff]
  %v16 = vld [vmem:[%s1 + $0x8] sm:$0xff]
  %v17 = vld [vmem:[%s1 + $0x10] sm:$0xff]
  %v18 = vld [vmem:[%s1 + $0x18] sm:$0xff]
  %v19 = vld [vmem:[%s1 + $0x20] sm:$0xff]
  %v20 = vld [vmem:[%s1 + $0x28] sm:$0xff]
  %v21 = vld [vmem:[%s1 + $0x30] sm:$0xff]
  %v22 = vld [vmem:[%s1 + $0x38] sm:$0xff]
  %v23 = vld [vmem:[%s1 + $0x40] sm:$0xff]
  %v24 = vld [vmem:[%s1 + $0x48] sm:$0xff]
  %v25 = vld [vmem:[%s1 + $0x50] sm:$0xff]
  %v26 = vld [vmem:[%s1 + $0x58] sm:$0xff]
  %v27 = vld [vmem:[%s1 + $0x60] sm:$0xff]
  %v28 = vld [vmem:[%s1 + $0x68] sm:$0xff]
  %v29 = vld [vmem:[%s1 + $0x70] sm:$0xff]
  %v30 = vld [vmem:[%s1 + $0x78] sm:$0xff]
  %v31 = vld [vmem:[%s1 + $0x80] sm:$0xff]
  %v32 = vld [vmem:[%s1 + $0x88] sm:$0xff]
  %v33 = vld [vmem:[%s1 + $0x90] sm:$0xff]
  %v34 = vld [vmem:[%s1 + $0x98] sm:$0xff]
  %v35 = vld [vmem:[%s1 + $0xa0] sm:$0xff]
  %v36 = vld [vmem:[%s1 + $0xa8] sm:$0xff]
  %v37 = vld [vmem:[%s1 + $0xb0] sm:$0xff]
  %v38 = vld [vmem:[%s1 + $0xb8] sm:$0xff]
  %v39 = vld [vmem:[%s1 + $0xc0] sm:$0xff]
  %v40 = vld [vmem:[%s1 + $0xc8] sm:$0xff]
  %v41 = vld [vmem:[%s1 + $0xd0] sm:$0xff]
  %v42 = vld [vmem:[%s1 + $0xd8] sm:$0xff]
  %v43 = vld [vmem:[%s1 + $0xe0] sm:$0xff]
  %v44 = vld [vmem:[%s1 + $0xe8] sm:$0xff]
  %v45 = vld [vmem:[%s1 + $0xf0] sm:$0xff]
  %v46 = vld [vmem:[%s1 + $0xf8] sm:$0xff]
  %v47 = vld [vmem:[%s1 + $0x100] sm:$0xff]
  %v48 = vld [vmem:[%s1 + $0x108] sm:$0xff]
  %v49 = vld [vmem:[%s1 + $0x110] sm:$0xff]
  %v50 = vld [vmem:[%s1 + $0x118] sm:$0xff]
  %v51 = vld [vmem:[%s1 + $0x120] sm:$0xff]
  %v52 = vld [vmem:[%s1 + $0x128] sm:$0xff]
  %v53 = vld [vmem:[%s1 + $0x130] sm:$0xff]
  %v54 = vld [vmem:[%s1 + $0x138] sm:$0xff]
  %v55 = vld [vmem:[%s1 + $0x140] sm:$0xff]
  %v56 = vld [vmem:[%s1 + $0x148] sm:$0xff]
  %v57 = vld [vmem:[%s1 + $0x150] sm:$0xff]
  %v58 = vld [vmem:[%s1 + $0x158] sm:$0xff]
  %v59 = vld [vmem:[%s1 + $0x160] sm:$0xff]
  %v60 = vld [vmem:[%s1 + $0x168] sm:$0xff]
  %v61 = vld [vmem:[%s1 + $0x170] sm:$0xff]
  %v62 = vld [vmem:[%s1 + $0x178] sm:$0xff]
  %v63 = vld [vmem:[%s1 + $0x180] sm:$0xff]
  %v64 = vld [vmem:[%s1 + $0x188] sm:$0xff]
  %v65 = vld [vmem:[%s1 + $0x190] sm:$0xff]
  %v66 = vld [vmem:[%s1 + $0x198] sm:$0xff]
  %v67 = vld [vmem:[%s1 + $0x1a0] sm:$0xff]
  %v68 = vld [vmem:[%s1 + $0x1a8] sm:$0xff]
  %v69 = vld [vmem:[%s1 + $0x1b0] sm:$0xff]
  %v70 = vld [vmem:[%s1 + $0x1b8] sm:$0xff]
  %v71 = vld [vmem:[%s1 + $0x1c0] sm:$0xff]
  %v72 = vld [vmem:[%s1 + $0x1c8] sm:$0xff]
  %v73 = vld [vmem:[%s1 + $0x1d0] sm:$0xff]
  %v74 = vld [vmem:[%s1 + $0x1d8] sm:$0xff]
  %v75 = vld [vmem:[%s1 + $0x1e0] sm:$0xff]
  %v76 = vld [vmem:[%s1 + $0x1e8] sm:$0xff]
  %v77 = vld [vmem:[%s1 + $0x1f0] sm:$0xff]
  %v78 = vld [vmem:[%s1 + $0x1f8] sm:$0xff]
  %v79 = vld [vmem:[%s1 + $0x200] sm:$0xff]
  %v80 = vld [vmem:[%s1 + $0x208] sm:$0xff]
  %v81 = vld [vmem:[%s1 + $0x210] sm:$0xff]
  %v82 = vld [vmem:[%s1 + $0x218] sm:$0xff]
  %v83 = vld [vmem:[%s1 + $0x220] sm:$0xff]
  %v84 = vld [vmem:[%s1 + $0x228] sm:$0xff]
  %v85 = vld [vmem:[%s1 + $0x230] sm:$0xff]
  %v86 = vld [vmem:[%s1 + $0x238] sm:$0xff]
  %v87 = vld [vmem:[%s1 + $0x240] sm:$0xff]
  %v88 = vld [vmem:[%s1 + $0x248] sm:$0xff]
  %v89 = vld [vmem:[%s1 + $0x250] sm:$0xff]
  %v90 = vld [vmem:[%s1 + $0x258] sm:$0xff]
  %v91 = vld [vmem:[%s1 + $0x260] sm:$0xff]
  %v92 = vld [vmem:[%s1 + $0x268] sm:$0xff]
  %v93 = vld [vmem:[%s1 + $0x270] sm:$0xff]
  %v94 = vld [vmem:[%s1 + $0x278] sm:$0xff]
  %v95 = vld [vmem:[%s1 + $0x280] sm:$0xff]
  %v96 = vld [vmem:[%s1 + $0x288] sm:$0xff]
  %v97 = vld [vmem:[%s1 + $0x290] sm:$0xff]
  %v98 = vld [vmem:[%s1 + $0x298] sm:$0xff]
  %v99 = vld [vmem:[%s1 + $0x2a0] sm:$0xff]
  %v100 = vld [vmem:[%s1 + $0x2a8] sm:$0xff]
  %v101 = vld [vmem:[%s1 + $0x2b0] sm:$0xff]
  %v102 = vld [vmem:[%s1 + $0x2b8] sm:$0xff]
  %v103 = vld [vmem:[%s1 + $0x2c0] sm:$0xff]
  %v104 = vld [vmem:[%s1 + $0x2c8] sm:$0xff]
  %v105 = vld [vmem:[%s1 + $0x2d0] sm:$0xff]
  %v106 = vld [vmem:[%s1 + $0x2d8] sm:$0xff]
  %v107 = vld [vmem:[%s1 + $0x2e0] sm:$0xff]
  %v108 = vld [vmem:[%s1 + $0x2e8] sm:$0xff]
  %v109 = vld [vmem:[%s1 + $0x2f0] sm:$0xff]
  %v110 = vld [vmem:[%s1 + $0x2f8] sm:$0xff]
  %v111 = vld [vmem:[%s1 + $0x300] sm:$0xff]
  %v112 = vld [vmem:[%s1 + $0x308] sm:$0xff]
  %v113 = vld [vmem:[%s1 + $0x310] sm:$0xff]
  %v114 = vld [vmem:[%s1 + $0x318] sm:$0xff]
  %v115 = vld [vmem:[%s1 + $0x320] sm:$0xff]
  %v116 = vld [vmem:[%s1 + $0x328] sm:$0xff]
  %v117 = vld [vmem:[%s1 + $0x330] sm:$0xff]
  %v118 = vld [vmem:[%s1 + $0x338] sm:$0xff]
  %v119 = vld [vmem:[%s1 + $0x340] sm:$0xff]
  %v120 = vld [vmem:[%s1 + $0x348] sm:$0xff]
  %v121 = vld [vmem:[%s1 + $0x350] sm:$0xff]
  %v122 = vld [vmem:[%s1 + $0x358] sm:$0xff]
  %v123 = vld [vmem:[%s1 + $0x360] sm:$0xff]
  %v124 = vld [vmem:[%s1 + $0x368] sm:$0xff]
  %v125 = vld [vmem:[%s1 + $0x370] sm:$0xff]
  %v126 = vld [vmem:[%s1 + $0x378] sm:$0xff]
  %v127 = vld [vmem:[%s1 + $0x380] sm:$0xff]
  %v128 = vld [vmem:[%s1 + $0x388] sm:$0xff]
  %v129 = vld [vmem:[%s1 + $0x390] sm:$0xff]
  %v130 = vld [vmem:[%s1 + $0x398] sm:$0xff]
  %v131 = vld [vmem:[%s1 + $0x3a0] sm:$0xff]
  %v132 = vld [vmem:[%s1 + $0x3a8] sm:$0xff]
  %v133 = vld [vmem:[%s1 + $0x3b0] sm:$0xff]
  %v134 = vld [vmem:[%s1 + $0x3b8] sm:$0xff]
  %v135 = vld [vmem:[%s1 + $0x3c0] sm:$0xff]
  %v136 = vld [vmem:[%s1 + $0x3c8] sm:$0xff]
  %v137 = vld [vmem:[%s1 + $0x3d0] sm:$0xff]
  %v138 = vld [vmem:[%s1 + $0x3d8] sm:$0xff]
  %v139 = vld [vmem:[%s1 + $0x3e0] sm:$0xff]
  %v140 = vld [vmem:[%s1 + $0x3e8] sm:$0xff]
  %v141 = vld [vmem:[%s1 + $0x3f0] sm:$0xff]
  %v142 = vld [vmem:[%s1 + $0x3f8] sm:$0xff]
  %v143 = vld [vmem:[%s1 + $0x400] sm:$0xff]
  %v144 = vld [vmem:[%s1 + $0x408] sm:$0xff]
  %v145 = vld [vmem:[%s1 + $0x410] sm:$0xff]
  %v146 = vld [vmem:[%s1 + $0x418] sm:$0xff]
  %v147 = vld [vmem:[%s1 + $0x420] sm:$0xff]
  %v148 = vld [vmem:[%s1 + $0x428] sm:$0xff]
  %v149 = vld [vmem:[%s1 + $0x430] sm:$0xff]
  %v150 = vld [vmem:[%s1 + $0x438] sm:$0xff]
  %v151 = vld [vmem:[%s1 + $0x440] sm:$0xff]
  %v152 = vld [vmem:[%s1 + $0x448] sm:$0xff]
  %v153 = vld [vmem:[%s1 + $0x450] sm:$0xff]
  %v154 = vld [vmem:[%s1 + $0x458] sm:$0xff]
  %v155 = vld [vmem:[%s1 + $0x460] sm:$0xff]
  %v156 = vld [vmem:[%s1 + $0x468] sm:$0xff]
  %v157 = vld [vmem:[%s1 + $0x470] sm:$0xff]
  %v158 = vld [vmem:[%s1 + $0x478] sm:$0xff]
  %v159 = vld [vmem:[%s1 + $0x480] sm:$0xff]
  %v160 = vld [vmem:[%s1 + $0x488] sm:$0xff]
  %v161 = vld [vmem:[%s1 + $0x490] sm:$0xff]
  %v162 = vld [vmem:[%s1 + $0x498] sm:$0xff]
  %v163 = vld [vmem:[%s1 + $0x4a0] sm:$0xff]
  %v164 = vld [vmem:[%s1 + $0x4a8] sm:$0xff]
  %v165 = vld [vmem:[%s1 + $0x4b0] sm:$0xff]
  %v166 = vld [vmem:[%s1 + $0x4b8] sm:$0xff]
  %v167 = vld [vmem:[%s1 + $0x4c0] sm:$0xff]
  %v168 = vld [vmem:[%s1 + $0x4c8] sm:$0xff]
  %v169 = vld [vmem:[%s1 + $0x4d0] sm:$0xff]
  %v170 = vld [vmem:[%s1 + $0x4d8] sm:$0xff]
  %v171 = vld [vmem:[%s1 + $0x4e0] sm:$0xff]
  %v172 = vld [vmem:[%s1 + $0x4e8] sm:$0xff]
  %v173 = vld [vmem:[%s1 + $0x4f0] sm:$0xff]
  %v174 = vld [vmem:[%s1 + $0x4f8] sm:$0xff]
  %v175 = vld [vmem:[%s1 + $0x500] sm:$0xff]
  %v176 = vld [vmem:[%s1 + $0x508] sm:$0xff]
  %v177 = vld [vmem:[%s1 + $0x510] sm:$0xff]
  %v178 = vld [vmem:[%s1 + $0x518] sm:$0xff]
  %v179 = vld [vmem:[%s1 + $0x520] sm:$0xff]
  %v180 = vld [vmem:[%s1 + $0x528] sm:$0xff]
  %v181 = vld [vmem:[%s1 + $0x530] sm:$0xff]
  %v182 = vld [vmem:[%s1 + $0x538] sm:$0xff]
  %v183 = vld [vmem:[%s1 + $0x540] sm:$0xff]
  %v184 = vld [vmem:[%s1 + $0x548] sm:$0xff]
  %v185 = vld [vmem:[%s1 + $0x550] sm:$0xff]
  %v186 = vld [vmem:[%s1 + $0x558] sm:$0xff]
  %v187 = vld [vmem:[%s1 + $0x560] sm:$0xff]
  %v188 = vld [vmem:[%s1 + $0x568] sm:$0xff]
  %v189 = vld [vmem:[%s1 + $0x570] sm:$0xff]
  %v190 = vld [vmem:[%s1 + $0x578] sm:$0xff]
  %v191 = vld [vmem:[%s1 + $0x580] sm:$0xff]
  %v192 = vld [vmem:[%s1 + $0x588] sm:$0xff]
  %v193 = vld [vmem:[%s1 + $0x590] sm:$0xff]
  %v194 = vld [vmem:[%s1 + $0x598] sm:$0xff]
  %v195 = vld [vmem:[%s1 + $0x5a0] sm:$0xff]
  %v196 = vld [vmem:[%s1 + $0x5a8] sm:$0xff]
  %v197 = vld [vmem:[%s1 + $0x5b0] sm:$0xff]
  %v198 = vld [vmem:[%s1 + $0x5b8] sm:$0xff]
  %v199 = vld [vmem:[%s1 + $0x5c0] sm:$0xff]
  %v200 = vld [vmem:[%s1 + $0x5c8] sm:$0xff]
  %v201 = vld [vmem:[%s1 + $0x5d0] sm:$0xff]
  %v202 = vld [vmem:[%s1 + $0x5d8] sm:$0xff]
  %v203 = vld [vmem:[%s1 + $0x5e0] sm:$0xff]
  %v204 = vld [vmem:[%s1 + $0x5e8] sm:$0xff]
  %v205 = vld [vmem:[%s1 + $0x5f0] sm:$0xff]
  %v206 = vld [vmem:[%s1 + $0x5f8] sm:$0xff]
  %v207 = vld [vmem:[%s1 + $0x600] sm:$0xff]
  %v208 = vld [vmem:[%s1 + $0x608] sm:$0xff]
  %v209 = vld [vmem:[%s1 + $0x610] sm:$0xff]
  %v210 = vld [vmem:[%s1 + $0x618] sm:$0xff]
  %v211 = vld [vmem:[%s1 + $0x620] sm:$0xff]
  %v212 = vld [vmem:[%s1 + $0x628] sm:$0xff]
  %v213 = vld [vmem:[%s1 + $0x630] sm:$0xff]
  %v214 = vld [vmem:[%s1 + $0x638] sm:$0xff]
  %v215 = vld [vmem:[%s1 + $0x640] sm:$0xff]
  %v216 = vld [vmem:[%s1 + $0x648] sm:$0xff]
  %v217 = vld [vmem:[%s1 + $0x650] sm:$0xff]
  %v218 = vld [vmem:[%s1 + $0x658] sm:$0xff]
  %v219 = vld [vmem:[%s1 + $0x660] sm:$0xff]
  %v220 = vld [vmem:[%s1 + $0x668] sm:$0xff]
  %v221 = vld [vmem:[%s1 + $0x670] sm:$0xff]
  %v222 = vld [vmem:[%s1 + $0x678] sm:$0xff]
  %v223 = vld [vmem:[%s1 + $0x680] sm:$0xff]
  %v224 = vld [vmem:[%s1 + $0x688] sm:$0xff]
  %v225 = vld [vmem:[%s1 + $0x690] sm:$0xff]
  %v226 = vld [vmem:[%s1 + $0x698] sm:$0xff]
  %v227 = vld [vmem:[%s1 + $0x6a0] sm:$0xff]
  %v228 = vld [vmem:[%s1 + $0x6a8] sm:$0xff]
  %v229 = vld [vmem:[%s1 + $0x6b0] sm:$0xff]
  %v230 = vld [vmem:[%s1 + $0x6b8] sm:$0xff]
  %v231 = vld [vmem:[%s1 + $0x6c0] sm:$0xff]
  %v232 = vld [vmem:[%s1 + $0x6c8] sm:$0xff]
  %v233 = vld [vmem:[%s1 + $0x6d0] sm:$0xff]
  %v234 = vld [vmem:[%s1 + $0x6d8] sm:$0xff]
  %v235 = vld [vmem:[%s1 + $0x6e0] sm:$0xff]
  %v236 = vld [vmem:[%s1 + $0x6e8] sm:$0xff]
  %v237 = vld [vmem:[%s1 + $0x6f0] sm:$0xff]
  %v238 = vld [vmem:[%s1 + $0x6f8] sm:$0xff]
  %v239 = vld [vmem:[%s1 + $0x700] sm:$0xff]
  %v240 = vld [vmem:[%s1 + $0x708] sm:$0xff]
  %v241 = vld [vmem:[%s1 + $0x710] sm:$0xff]
  %v242 = vld [vmem:[%s1 + $0x718] sm:$0xff]
  %v243 = vld [vmem:[%s1 + $0x720] sm:$0xff]
  %v244 = vld [vmem:[%s1 + $0x728] sm:$0xff]
  %v245 = vld [vmem:[%s1 + $0x730] sm:$0xff]
  %v246 = vld [vmem:[%s1 + $0x738] sm:$0xff]
  %v247 = vld [vmem:[%s1 + $0x740] sm:$0xff]
  %v248 = vld [vmem:[%s1 + $0x748] sm:$0xff]
  %v249 = vld [vmem:[%s1 + $0x750] sm:$0xff]
  %v250 = vld [vmem:[%s1 + $0x758] sm:$0xff]
  %v251 = vld [vmem:[%s1 + $0x760] sm:$0xff]
  %v252 = vld [vmem:[%s1 + $0x768] sm:$0xff]
  %v253 = vld [vmem:[%s1 + $0x770] sm:$0xff]
  %v254 = vld [vmem:[%s1 + $0x778] sm:$0xff]
  %v255 = vld [vmem:[%s1 + $0x780] sm:$0xff]
  %v256 = vld [vmem:[%s1 + $0x788] sm:$0xff]
  %v257 = vld [vmem:[%s1 + $0x790] sm:$0xff]
  %v258 = vld [vmem:[%s1 + $0x798] sm:$0xff]
  %v259 = vld [vmem:[%s1 + $0x7a0] sm:$0xff]
  %v260 = vld [vmem:[%s1 + $0x7a8] sm:$0xff]
  %v261 = vld [vmem:[%s1 + $0x7b0] sm:$0xff]
  %v262 = vld [vmem:[%s1 + $0x7b8] sm:$0xff]
  %v263 = vld [vmem:[%s1 + $0x7c0] sm:$0xff]
  %v264 = vld [vmem:[%s1 + $0x7c8] sm:$0xff]
  %v265 = vld [vmem:[%s1 + $0x7d0] sm:$0xff]
  %v266 = vld [vmem:[%s1 + $0x7d8] sm:$0xff]
  %v267 = vld [vmem:[%s1 + $0x7e0] sm:$0xff]
  %v268 = vld [vmem:[%s1 + $0x7e8] sm:$0xff]
  %v269 = vld [vmem:[%s1 + $0x7f0] sm:$0xff]
  %v270 = vld [vmem:[%s1 + $0x7f8] sm:$0xff]
  %v271 = vld [vmem:[%s1 + $0x800] sm:$0xff]
  %v272 = vld [vmem:[%s1 + $0x808] sm:$0xff]
  %v273 = vld [vmem:[%s1 + $0x810] sm:$0xff]
  %v274 = vld [vmem:[%s1 + $0x818] sm:$0xff]
  %v275 = vld [vmem:[%s1 + $0x820] sm:$0xff]
  %v276 = vld [vmem:[%s1 + $0x828] sm:$0xff]
  %v277 = vld [vmem:[%s1 + $0x830] sm:$0xff]
  %v278 = vld [vmem:[%s1 + $0x838] sm:$0xff]
  %v279 = vld [vmem:[%s1 + $0x840] sm:$0xff]
  %v280 = vld [vmem:[%s1 + $0x848] sm:$0xff]
  %v281 = vld [vmem:[%s1 + $0x850] sm:$0xff]
  %v282 = vld [vmem:[%s1 + $0x858] sm:$0xff]
  %v283 = vld [vmem:[%s1 + $0x860] sm:$0xff]
  %v284 = vld [vmem:[%s1 + $0x868] sm:$0xff]
  %v285 = vld [vmem:[%s1 + $0x870] sm:$0xff]
  %v286 = vld [vmem:[%s1 + $0x878] sm:$0xff]
  %v287 = vld [vmem:[%s1 + $0x880] sm:$0xff]
  %v288 = vld [vmem:[%s1 + $0x888] sm:$0xff]
  %v289 = vld [vmem:[%s1 + $0x890] sm:$0xff]
  %v290 = vld [vmem:[%s1 + $0x898] sm:$0xff]
  %v291 = vld [vmem:[%s1 + $0x8a0] sm:$0xff]
  %v292 = vld [vmem:[%s1 + $0x8a8] sm:$0xff]
  %v293 = vld [vmem:[%s1 + $0x8b0] sm:$0xff]
  %v294 = vld [vmem:[%s1 + $0x8b8] sm:$0xff]
  %v295 = vld [vmem:[%s1 + $0x8c0] sm:$0xff]
  %v296 = vld [vmem:[%s1 + $0x8c8] sm:$0xff]
  %v297 = vld [vmem:[%s1 + $0x8d0] sm:$0xff]
  %v298 = vld [vmem:[%s1 + $0x8d8] sm:$0xff]
  %v299 = vld [vmem:[%s1 + $0x8e0] sm:$0xff]
  %v300 = vld [vmem:[%s1 + $0x8e8] sm:$0xff]
  %v301 = vld [vmem:[%s1 + $0x8f0] sm:$0xff]
  %v302 = vld [vmem:[%s1 + $0x8f8] sm:$0xff]
  %v303 = vld [vmem:[%s1 + $0x900] sm:$0xff]
  %v304 = vld [vmem:[%s1 + $0x908] sm:$0xff]
  %v305 = vld [vmem:[%s1 + $0x910] sm:$0xff]
  %v306 = vld [vmem:[%s1 + $0x918] sm:$0xff]
  %v307 = vld [vmem:[%s1 + $0x920] sm:$0xff]
  %v308 = vld [vmem:[%s1 + $0x928] sm:$0xff]
  %v309 = vld [vmem:[%s1 + $0x930] sm:$0xff]
  %v310 = vld [vmem:[%s1 + $0x938] sm:$0xff]
  %v311 = vld [vmem:[%s1 + $0x940] sm:$0xff]
  %v312 = vld [vmem:[%s1 + $0x948] sm:$0xff]
  %v313 = vld [vmem:[%s1 + $0x950] sm:$0xff]
  %v314 = vld [vmem:[%s1 + $0x958] sm:$0xff]
  %v315 = vld [vmem:[%s1 + $0x960] sm:$0xff]
  %v316 = vld [vmem:[%s1 + $0x968] sm:$0xff]
  %v317 = vld [vmem:[%s1 + $0x970] sm:$0xff]
  %v318 = vld [vmem:[%s1 + $0x978] sm:$0xff]
  %v319 = vld [vmem:[%s1 + $0x980] sm:$0xff]
  %v320 = vld [vmem:[%s1 + $0x988] sm:$0xff]
  %v321 = vld [vmem:[%s1 + $0x990] sm:$0xff]
  %v322 = vld [vmem:[%s1 + $0x998] sm:$0xff]
  %v323 = vld [vmem:[%s1 + $0x9a0] sm:$0xff]
  %v324 = vld [vmem:[%s1 + $0x9a8] sm:$0xff]
  %v325 = vld [vmem:[%s1 + $0x9b0] sm:$0xff]
  %v326 = vld [vmem:[%s1 + $0x9b8] sm:$0xff]
  %v327 = vld [vmem:[%s1 + $0x9c0] sm:$0xff]
  %v328 = vld [vmem:[%s1 + $0x9c8] sm:$0xff]
  %v329 = vld [vmem:[%s1 + $0x9d0] sm:$0xff]
  %v330 = vld [vmem:[%s1 + $0x9d8] sm:$0xff]
  %v331 = vld [vmem:[%s1 + $0x9e0] sm:$0xff]
  %v332 = vld [vmem:[%s1 + $0x9e8] sm:$0xff]
  %v333 = vld [vmem:[%s1 + $0x9f0] sm:$0xff]
  %v334 = vld [vmem:[%s1 + $0x9f8] sm:$0xff]
  %v335 = vld [vmem:[%s1 + $0xa00] sm:$0xff]
  %v336 = vld [vmem:[%s1 + $0xa08] sm:$0xff]
  %v337 = vld [vmem:[%s1 + $0xa10] sm:$0xff]
  %v338 = vld [vmem:[%s1 + $0xa18] sm:$0xff]
  %v339 = vld [vmem:[%s1 + $0xa20] sm:$0xff]
  %v340 = vld [vmem:[%s1 + $0xa28] sm:$0xff]
  %v341 = vld [vmem:[%s1 + $0xa30] sm:$0xff]
  %v342 = vld [vmem:[%s1 + $0xa38] sm:$0xff]
  %v343 = vld [vmem:[%s1 + $0xa40] sm:$0xff]
  %v344 = vld [vmem:[%s1 + $0xa48] sm:$0xff]
  %v345 = vld [vmem:[%s1 + $0xa50] sm:$0xff]
  %v346 = vld [vmem:[%s1 + $0xa58] sm:$0xff]
  %v347 = vld [vmem:[%s1 + $0xa60] sm:$0xff]
  %v348 = vld [vmem:[%s1 + $0xa68] sm:$0xff]
  %v349 = vld [vmem:[%s1 + $0xa70] sm:$0xff]
  %v350 = vld [vmem:[%s1 + $0xa78] sm:$0xff]
  %v351 = vld [vmem:[%s1 + $0xa80] sm:$0xff]
  %v352 = vld [vmem:[%s1 + $0xa88] sm:$0xff]
  %v353 = vld [vmem:[%s1 + $0xa90] sm:$0xff]
  %v354 = vld [vmem:[%s1 + $0xa98] sm:$0xff]
  %v355 = vld [vmem:[%s1 + $0xaa0] sm:$0xff]
  %v356 = vld [vmem:[%s1 + $0xaa8] sm:$0xff]
  %v357 = vld [vmem:[%s1 + $0xab0] sm:$0xff]
  %v358 = vld [vmem:[%s1 + $0xab8] sm:$0xff]
  %v359 = vld [vmem:[%s1 + $0xac0] sm:$0xff]
  %v360 = vld [vmem:[%s1 + $0xac8] sm:$0xff]
  %v361 = vld [vmem:[%s1 + $0xad0] sm:$0xff]
  %v362 = vld [vmem:[%s1 + $0xad8] sm:$0xff]
  %v363 = vld [vmem:[%s1 + $0xae0] sm:$0xff]
  %v364 = vld [vmem:[%s1 + $0xae8] sm:$0xff]
  %v365 = vld [vmem:[%s1 + $0xaf0] sm:$0xff]
  %v366 = vld [vmem:[%s1 + $0xaf8] sm:$0xff]
  %v367 = vld [vmem:[%s1 + $0xb00] sm:$0xff]
  %v368 = vld [vmem:[%s1 + $0xb08] sm:$0xff]
  %v369 = vld [vmem:[%s1 + $0xb10] sm:$0xff]
  %v370 = vld [vmem:[%s1 + $0xb18] sm:$0xff]
  %v371 = vld [vmem:[%s1 + $0xb20] sm:$0xff]
  %v372 = vld [vmem:[%s1 + $0xb28] sm:$0xff]
  %v373 = vld [vmem:[%s1 + $0xb30] sm:$0xff]
  %v374 = vld [vmem:[%s1 + $0xb38] sm:$0xff]
  %v375 = vld [vmem:[%s1 + $0xb40] sm:$0xff]
  %v376 = vld [vmem:[%s1 + $0xb48] sm:$0xff]
  %v377 = vld [vmem:[%s1 + $0xb50] sm:$0xff]
  %v378 = vld [vmem:[%s1 + $0xb58] sm:$0xff]
  %v379 = vld [vmem:[%s1 + $0xb60] sm:$0xff]
  %v380 = vld [vmem:[%s1 + $0xb68] sm:$0xff]
  %v381 = vld [vmem:[%s1 + $0xb70] sm:$0xff]
  %v382 = vld [vmem:[%s1 + $0xb78] sm:$0xff]
  %v383 = vld [vmem:[%s1 + $0xb80] sm:$0xff]
  %v384 = vld [vmem:[%s1 + $0xb88] sm:$0xff]
  %v385 = vld [vmem:[%s1 + $0xb90] sm:$0xff]
  %v386 = vld [vmem:[%s1 + $0xb98] sm:$0xff]
  %v387 = vld [vmem:[%s1 + $0xba0] sm:$0xff]
  %v388 = vld [vmem:[%s1 + $0xba8] sm:$0xff]
  %v389 = vld [vmem:[%s1 + $0xbb0] sm:$0xff]
  %v390 = vld [vmem:[%s1 + $0xbb8] sm:$0xff]
  %v391 = vld [vmem:[%s1 + $0xbc0] sm:$0xff]
  %v392 = vld [vmem:[%s1 + $0xbc8] sm:$0xff]
  %v393 = vld [vmem:[%s1 + $0xbd0] sm:$0xff]
  %v394 = vld [vmem:[%s1 + $0xbd8] sm:$0xff]
  %v395 = vld [vmem:[%s1 + $0xbe0] sm:$0xff]
  %v396 = vld [vmem:[%s1 + $0xbe8] sm:$0xff]
  %v397 = vld [vmem:[%s1 + $0xbf0] sm:$0xff]
  %v398 = vld [vmem:[%s1 + $0xbf8] sm:$0xff]
  %v399 = vld [vmem:[%s1 + $0xc00] sm:$0xff]
  %v400 = vld [vmem:[%s1 + $0xc08] sm:$0xff]
  %v401 = vld [vmem:[%s1 + $0xc10] sm:$0xff]
  %v402 = vld [vmem:[%s1 + $0xc18] sm:$0xff]
  %v403 = vld [vmem:[%s1 + $0xc20] sm:$0xff]
  %v404 = vld [vmem:[%s1 + $0xc28] sm:$0xff]
  %v405 = vld [vmem:[%s1 + $0xc30] sm:$0xff]
  %v406 = vld [vmem:[%s1 + $0xc38] sm:$0xff]
  %v407 = vld [vmem:[%s1 + $0xc40] sm:$0xff]
  %v408 = vld [vmem:[%s1 + $0xc48] sm:$0xff]
  %v409 = vld [vmem:[%s1 + $0xc50] sm:$0xff]
  %v410 = vld [vmem:[%s1 + $0xc58] sm:$0xff]
  %v411 = vld [vmem:[%s1 + $0xc60] sm:$0xff]
  %v412 = vld [vmem:[%s1 + $0xc68] sm:$0xff]
  %v413 = vld [vmem:[%s1 + $0xc70] sm:$0xff]
  %v414 = vld [vmem:[%s1 + $0xc78] sm:$0xff]
  %v415 = vld [vmem:[%s1 + $0xc80] sm:$0xff]
  %v416 = vld [vmem:[%s1 + $0xc88] sm:$0xff]
  %v417 = vld [vmem:[%s1 + $0xc90] sm:$0xff]
  %v418 = vld [vmem:[%s1 + $0xc98] sm:$0xff]
  %v419 = vld [vmem:[%s1 + $0xca0] sm:$0xff]
  %v420 = vld [vmem:[%s1 + $0xca8] sm:$0xff]
  %v421 = vld [vmem:[%s1 + $0xcb0] sm:$0xff]
  %v422 = vld [vmem:[%s1 + $0xcb8] sm:$0xff]
  %v423 = vld [vmem:[%s1 + $0xcc0] sm:$0xff]
  %v424 = vld [vmem:[%s1 + $0xcc8] sm:$0xff]
  %v425 = vld [vmem:[%s1 + $0xcd0] sm:$0xff]
  %v426 = vld [vmem:[%s2] sm:$0xff]
  %428 = vset.pattern.permute.xlu0 0
  %429 = vperm.xlu0 %428, %v426
  %v430 = vpop.permute.xlu0 %429
  %vm432 = vcmask 195584
  %v434 = vsel %vm432, %v14, 0
  %436 = vmatprep.subr.mxu0 0.0
  %437 = vmatpush1.msra.mxu0 0.0
  %438 = vmatprep.subr.mxu0 0.0
  %439 = vmatpush1.msra.mxu0 0.0
  %440 = vmatprep.subr.mxu0 0.0
  %441 = vmatpush1.msra.mxu0 0.0
  %442 = vmatprep.subr.mxu0 0.0
  %443 = vmatpush1.msra.mxu0 0.0
  %444 = vmatprep.subr.mxu0 0.0
  %445 = vmatpush1.msra.mxu0 0.0
  %446 = vmatprep.subr.mxu0 0.0
  %447 = vmatpush1.msra.mxu0 0.0
  %448 = vmatprep.subr.mxu0 0.0
  %449 = vmatpush1.msra.mxu0 0.0
  %450 = vmatprep.subr.mxu0 0.0
  %451 = vmatpush1.msra.mxu0 0.0
  %452 = vmatprep.subr.mxu0 0.0
  %453 = vmatpush1.msra.mxu0 0.0
  %454 = vmatprep.subr.mxu0 0.0
  %455 = vmatpush1.msra.mxu0 0.0
  %456 = vmatprep.subr.mxu0 0.0
  %457 = vmatpush1.msra.mxu0 0.0
  %458 = vmatprep.subr.mxu0 0.0
  %459 = vmatpush1.msra.mxu0 0.0
  %460 = vmatprep.subr.mxu0 0.0
  %461 = vmatpush1.msra.mxu0 0.0
  %462 = vmatprep.subr.mxu0 %v290
  %463 = vmatpush1.msra.mxu0 %v289
  %464 = vmatprep.subr.mxu0 %v153
  %465 = vmatpush1.msra.mxu0 %v152
  %466 = vmatprep.subr.mxu0 %v16
  %467 = vmatpush1.msra.mxu0 %v15
  %468 = vmatprep.subr.mxu0 0.0
  %469 = vmatpush2.msra.mxu0 0.0
  %470 = vmatprep.subr.mxu0 0.0
  %471 = vmatpush2.msra.mxu0 0.0
  %472 = vmatprep.subr.mxu0 0.0
  %473 = vmatpush2.msra.mxu0 0.0
  %474 = vmatprep.subr.mxu0 0.0
  %475 = vmatpush2.msra.mxu0 0.0
  %476 = vmatprep.subr.mxu0 0.0
  %477 = vmatpush2.msra.mxu0 0.0
  %478 = vmatprep.subr.mxu0 0.0
  %479 = vmatpush2.msra.mxu0 0.0
  %480 = vmatprep.subr.mxu0 0.0
  %481 = vmatpush2.msra.mxu0 0.0
  %482 = vmatprep.subr.mxu0 0.0
  %483 = vmatpush2.msra.mxu0 0.0
  %484 = vmatprep.subr.mxu0 0.0
  %485 = vmatpush2.msra.mxu0 0.0
  %486 = vmatprep.subr.mxu0 0.0
  %487 = vmatpush2.msra.mxu0 0.0
  %488 = vmatprep.subr.mxu0 0.0
  %489 = vmatpush2.msra.mxu0 0.0
  %490 = vmatprep.subr.mxu0 0.0
  %491 = vmatpush2.msra.mxu0 0.0
  %492 = vmatprep.subr.mxu0 0.0
  %493 = vmatpush2.msra.mxu0 0.0
  %494 = vmatprep.subr.mxu0 0.0
  %495 = vmatpush2.msra.mxu0 0.0
  %496 = vmatprep.subr.mxu0 0.0
  %497 = vmatpush2.msra.mxu0 0.0
  %498 = vmatprep.subr.mxu0 0.0
  %499 = vmatpush2.msra.mxu0 0.0
  %500 = vmatprep.mubr.f32.mxu0 0.0
  %501 = vmatmul.mubr.f32.gmra.mxu0 %v434
  %v502 = vpop.f32.mrf.mxu0
  %v503 = vadd.f32 %v430, %v502
  %v504 = vpop.f32.mrf.mxu0
  %v505 = vadd.f32 %v430, %v504
  %506 = vdwg.mxu0
  %507 = vmatprep.subr.mxu0 0.0
  %508 = vmatpush1.msra.mxu0 0.0
  %509 = vmatprep.subr.mxu0 0.0
  %510 = vmatpush1.msra.mxu0 0.0
  %511 = vmatprep.subr.mxu0 0.0
  %512 = vmatpush1.msra.mxu0 0.0
  %513 = vmatprep.subr.mxu0 0.0
  %514 = vmatpush1.msra.mxu0 0.0
  %515 = vmatprep.subr.mxu0 0.0
  %516 = vmatpush1.msra.mxu0 0.0
  %517 = vmatprep.subr.mxu0 0.0
  %518 = vmatpush1.msra.mxu0 0.0
  %519 = vmatprep.subr.mxu0 0.0
  %520 = vmatpush1.msra.mxu0 0.0
  %521 = vmatprep.subr.mxu0 0.0
  %522 = vmatpush1.msra.mxu0 0.0
  %523 = vmatprep.subr.mxu0 0.0
  %524 = vmatpush1.msra.mxu0 0.0
  %525 = vmatprep.subr.mxu0 0.0
  %526 = vmatpush1.msra.mxu0 0.0
  %527 = vmatprep.subr.mxu0 0.0
  %528 = vmatpush1.msra.mxu0 0.0
  %529 = vmatprep.subr.mxu0 0.0
  %530 = vmatpush1.msra.mxu0 0.0
  %531 = vmatprep.subr.mxu0 0.0
  %532 = vmatpush1.msra.mxu0 0.0
  %533 = vmatprep.subr.mxu0 %v292
  %534 = vmatpush1.msra.mxu0 %v291
  %535 = vmatprep.subr.mxu0 %v155
  %536 = vmatpush1.msra.mxu0 %v154
  %537 = vmatprep.subr.mxu0 %v18
  %538 = vmatpush1.msra.mxu0 %v17
  %539 = vmatprep.subr.mxu0 0.0
  %540 = vmatpush2.msra.mxu0 0.0
  %541 = vmatprep.subr.mxu0 0.0
  %542 = vmatpush2.msra.mxu0 0.0
  %543 = vmatprep.subr.mxu0 0.0
  %544 = vmatpush2.msra.mxu0 0.0
  %545 = vmatprep.subr.mxu0 0.0
  %546 = vmatpush2.msra.mxu0 0.0
  %547 = vmatprep.subr.mxu0 0.0
  %548 = vmatpush2.msra.mxu0 0.0
  %549 = vmatprep.subr.mxu0 0.0
  %550 = vmatpush2.msra.mxu0 0.0
  %551 = vmatprep.subr.mxu0 0.0
  %552 = vmatpush2.msra.mxu0 0.0
  %553 = vmatprep.subr.mxu0 0.0
  %554 = vmatpush2.msra.mxu0 0.0
  %555 = vmatprep.subr.mxu0 0.0
  %556 = vmatpush2.msra.mxu0 0.0
  %557 = vmatprep.subr.mxu0 0.0
  %558 = vmatpush2.msra.mxu0 0.0
  %559 = vmatprep.subr.mxu0 0.0
  %560 = vmatpush2.msra.mxu0 0.0
  %561 = vmatprep.subr.mxu0 0.0
  %562 = vmatpush2.msra.mxu0 0.0
  %563 = vmatprep.subr.mxu0 0.0
  %564 = vmatpush2.msra.mxu0 0.0
  %565 = vmatprep.subr.mxu0 0.0
  %566 = vmatpush2.msra.mxu0 0.0
  %567 = vmatprep.subr.mxu0 0.0
  %568 = vmatpush2.msra.mxu0 0.0
  %569 = vmatprep.subr.mxu0 0.0
  %570 = vmatpush2.msra.mxu0 0.0
  %571 = vmatprep.mubr.f32.mxu0 0.0
  %572 = vmatmul.mubr.f32.gmra.mxu0 %v434
  %v573 = vpop.f32.mrf.mxu0
  %v574 = vadd.f32 %v430, %v573
  %v575 = vpop.f32.mrf.mxu0
  %v576 = vadd.f32 %v430, %v575
  %577 = vdwg.mxu0
  %578 = vmatprep.subr.mxu0 0.0
  %579 = vmatpush1.msra.mxu0 0.0
  %580 = vmatprep.subr.mxu0 0.0
  %581 = vmatpush1.msra.mxu0 0.0
  %582 = vmatprep.subr.mxu0 0.0
  %583 = vmatpush1.msra.mxu0 0.0
  %584 = vmatprep.subr.mxu0 0.0
  %585 = vmatpush1.msra.mxu0 0.0
  %586 = vmatprep.subr.mxu0 0.0
  %587 = vmatpush1.msra.mxu0 0.0
  %588 = vmatprep.subr.mxu0 0.0
  %589 = vmatpush1.msra.mxu0 0.0
  %590 = vmatprep.subr.mxu0 0.0
  %591 = vmatpush1.msra.mxu0 0.0
  %592 = vmatprep.subr.mxu0 0.0
  %593 = vmatpush1.msra.mxu0 0.0
  %594 = vmatprep.subr.mxu0 0.0
  %595 = vmatpush1.msra.mxu0 0.0
  %596 = vmatprep.subr.mxu0 0.0
  %597 = vmatpush1.msra.mxu0 0.0
  %598 = vmatprep.subr.mxu0 0.0
  %599 = vmatpush1.msra.mxu0 0.0
  %600 = vmatprep.subr.mxu0 0.0
  %601 = vmatpush1.msra.mxu0 0.0
  %602 = vmatprep.subr.mxu0 0.0
  %603 = vmatpush1.msra.mxu0 0.0
  %604 = vmatprep.subr.mxu0 %v294
  %605 = vmatpush1.msra.mxu0 %v293
  %606 = vmatprep.subr.mxu0 %v157
  %607 = vmatpush1.msra.mxu0 %v156
  %608 = vmatprep.subr.mxu0 %v20
  %609 = vmatpush1.msra.mxu0 %v19
  %610 = vmatprep.subr.mxu0 0.0
  %611 = vmatpush2.msra.mxu0 0.0
  %612 = vmatprep.subr.mxu0 0.0
  %613 = vmatpush2.msra.mxu0 0.0
  %614 = vmatprep.subr.mxu0 0.0
  %615 = vmatpush2.msra.mxu0 0.0
  %616 = vmatprep.subr.mxu0 0.0
  %617 = vmatpush2.msra.mxu0 0.0
  %618 = vmatprep.subr.mxu0 0.0
  %619 = vmatpush2.msra.mxu0 0.0
  %620 = vmatprep.subr.mxu0 0.0
  %621 = vmatpush2.msra.mxu0 0.0
  %622 = vmatprep.subr.mxu0 0.0
  %623 = vmatpush2.msra.mxu0 0.0
  %624 = vmatprep.subr.mxu0 0.0
  %625 = vmatpush2.msra.mxu0 0.0
  %626 = vmatprep.subr.mxu0 0.0
  %627 = vmatpush2.msra.mxu0 0.0
  %628 = vmatprep.subr.mxu0 0.0
  %629 = vmatpush2.msra.mxu0 0.0
  %630 = vmatprep.subr.mxu0 0.0
  %631 = vmatpush2.msra.mxu0 0.0
  %632 = vmatprep.subr.mxu0 0.0
  %633 = vmatpush2.msra.mxu0 0.0
  %634 = vmatprep.subr.mxu0 0.0
  %635 = vmatpush2.msra.mxu0 0.0
  %636 = vmatprep.subr.mxu0 0.0
  %637 = vmatpush2.msra.mxu0 0.0
  %638 = vmatprep.subr.mxu0 0.0
  %639 = vmatpush2.msra.mxu0 0.0
  %640 = vmatprep.subr.mxu0 0.0
  %641 = vmatpush2.msra.mxu0 0.0
  %642 = vmatprep.mubr.f32.mxu0 0.0
  %643 = vmatmul.mubr.f32.gmra.mxu0 %v434
  %v644 = vpop.f32.mrf.mxu0
  %v645 = vadd.f32 %v430, %v644
  %v646 = vpop.f32.mrf.mxu0
  %v647 = vadd.f32 %v430, %v646
  %648 = vdwg.mxu0
  %649 = vmatprep.subr.mxu0 0.0
  %650 = vmatpush1.msra.mxu0 0.0
  %651 = vmatprep.subr.mxu0 0.0
  %652 = vmatpush1.msra.mxu0 0.0
  %653 = vmatprep.subr.mxu0 0.0
  %654 = vmatpush1.msra.mxu0 0.0
  %655 = vmatprep.subr.mxu0 0.0
  %656 = vmatpush1.msra.mxu0 0.0
  %657 = vmatprep.subr.mxu0 0.0
  %658 = vmatpush1.msra.mxu0 0.0
  %659 = vmatprep.subr.mxu0 0.0
  %660 = vmatpush1.msra.mxu0 0.0
  %661 = vmatprep.subr.mxu0 0.0
  %662 = vmatpush1.msra.mxu0 0.0
  %663 = vmatprep.subr.mxu0 0.0
  %664 = vmatpush1.msra.mxu0 0.0
  %665 = vmatprep.subr.mxu0 0.0
  %666 = vmatpush1.msra.mxu0 0.0
  %667 = vmatprep.subr.mxu0 0.0
  %668 = vmatpush1.msra.mxu0 0.0
  %669 = vmatprep.subr.mxu0 0.0
  %670 = vmatpush1.msra.mxu0 0.0
  %671 = vmatprep.subr.mxu0 0.0
  %672 = vmatpush1.msra.mxu0 0.0
  %673 = vmatprep.subr.mxu0 0.0
  %674 = vmatpush1.msra.mxu0 0.0
  %675 = vmatprep.subr.mxu0 %v296
  %676 = vmatpush1.msra.mxu0 %v295
  %677 = vmatprep.subr.mxu0 %v159
  %678 = vmatpush1.msra.mxu0 %v158
  %679 = vmatprep.subr.mxu0 %v22
  %680 = vmatpush1.msra.mxu0 %v21
  %681 = vmatprep.subr.mxu0 0.0
  %682 = vmatpush2.msra.mxu0 0.0
  %683 = vmatprep.subr.mxu0 0.0
  %684 = vmatpush2.msra.mxu0 0.0
  %685 = vmatprep.subr.mxu0 0.0
  %686 = vmatpush2.msra.mxu0 0.0
  %687 = vmatprep.subr.mxu0 0.0
  %688 = vmatpush2.msra.mxu0 0.0
  %689 = vmatprep.subr.mxu0 0.0
  %690 = vmatpush2.msra.mxu0 0.0
  %691 = vmatprep.subr.mxu0 0.0
  %692 = vmatpush2.msra.mxu0 0.0
  %693 = vmatprep.subr.mxu0 0.0
  %694 = vmatpush2.msra.mxu0 0.0
  %695 = vmatprep.subr.mxu0 0.0
  %696 = vmatpush2.msra.mxu0 0.0
  %697 = vmatprep.subr.mxu0 0.0
  %698 = vmatpush2.msra.mxu0 0.0
  %699 = vmatprep.subr.mxu0 0.0
  %700 = vmatpush2.msra.mxu0 0.0
  %701 = vmatprep.subr.mxu0 0.0
  %702 = vmatpush2.msra.mxu0 0.0
  %703 = vmatprep.subr.mxu0 0.0
  %704 = vmatpush2.msra.mxu0 0.0
  %705 = vmatprep.subr.mxu0 0.0
  %706 = vmatpush2.msra.mxu0 0.0
  %707 = vmatprep.subr.mxu0 0.0
  %708 = vmatpush2.msra.mxu0 0.0
  %709 = vmatprep.subr.mxu0 0.0
  %710 = vmatpush2.msra.mxu0 0.0
  %711 = vmatprep.subr.mxu0 0.0
  %712 = vmatpush2.msra.mxu0 0.0
  %713 = vmatprep.mubr.f32.mxu0 0.0
  %714 = vmatmul.mubr.f32.gmra.mxu0 %v434
  %v715 = vpop.f32.mrf.mxu0
  %v716 = vadd.f32 %v430, %v715
  %v717 = vpop.f32.mrf.mxu0
  %v718 = vadd.f32 %v430, %v717
  %719 = vdwg.mxu0
  %720 = vmatprep.subr.mxu0 0.0
  %721 = vmatpush1.msra.mxu0 0.0
  %722 = vmatprep.subr.mxu0 0.0
  %723 = vmatpush1.msra.mxu0 0.0
  %724 = vmatprep.subr.mxu0 0.0
  %725 = vmatpush1.msra.mxu0 0.0
  %726 = vmatprep.subr.mxu0 0.0
  %727 = vmatpush1.msra.mxu0 0.0
  %728 = vmatprep.subr.mxu0 0.0
  %729 = vmatpush1.msra.mxu0 0.0
  %730 = vmatprep.subr.mxu0 0.0
  %731 = vmatpush1.msra.mxu0 0.0
  %732 = vmatprep.subr.mxu0 0.0
  %733 = vmatpush1.msra.mxu0 0.0
  %734 = vmatprep.subr.mxu0 0.0
  %735 = vmatpush1.msra.mxu0 0.0
  %736 = vmatprep.subr.mxu0 0.0
  %737 = vmatpush1.msra.mxu0 0.0
  %738 = vmatprep.subr.mxu0 0.0
  %739 = vmatpush1.msra.mxu0 0.0
  %740 = vmatprep.subr.mxu0 0.0
  %741 = vmatpush1.msra.mxu0 0.0
  %742 = vmatprep.subr.mxu0 0.0
  %743 = vmatpush1.msra.mxu0 0.0
  %744 = vmatprep.subr.mxu0 0.0
  %745 = vmatpush1.msra.mxu0 0.0
  %746 = vmatprep.subr.mxu0 %v298
  %747 = vmatpush1.msra.mxu0 %v297
  %748 = vmatprep.subr.mxu0 %v161
  %749 = vmatpush1.msra.mxu0 %v160
  %750 = vmatprep.subr.mxu0 %v24
  %751 = vmatpush1.msra.mxu0 %v23
  %752 = vmatprep.subr.mxu0 0.0
  %753 = vmatpush2.msra.mxu0 0.0
  %754 = vmatprep.subr.mxu0 0.0
  %755 = vmatpush2.msra.mxu0 0.0
  %756 = vmatprep.subr.mxu0 0.0
  %757 = vmatpush2.msra.mxu0 0.0
  %758 = vmatprep.subr.mxu0 0.0
  %759 = vmatpush2.msra.mxu0 0.0
  %760 = vmatprep.subr.mxu0 0.0
  %761 = vmatpush2.msra.mxu0 0.0
  %762 = vmatprep.subr.mxu0 0.0
  %763 = vmatpush2.msra.mxu0 0.0
  %764 = vmatprep.subr.mxu0 0.0
  %765 = vmatpush2.msra.mxu0 0.0
  %766 = vmatprep.subr.mxu0 0.0
  %767 = vmatpush2.msra.mxu0 0.0
  %768 = vmatprep.subr.mxu0 0.0
  %769 = vmatpush2.msra.mxu0 0.0
  %770 = vmatprep.subr.mxu0 0.0
  %771 = vmatpush2.msra.mxu0 0.0
  %772 = vmatprep.subr.mxu0 0.0
  %773 = vmatpush2.msra.mxu0 0.0
  %774 = vmatprep.subr.mxu0 0.0
  %775 = vmatpush2.msra.mxu0 0.0
  %776 = vmatprep.subr.mxu0 0.0
  %777 = vmatpush2.msra.mxu0 0.0
  %778 = vmatprep.subr.mxu0 0.0
  %779 = vmatpush2.msra.mxu0 0.0
  %780 = vmatprep.subr.mxu0 0.0
  %781 = vmatpush2.msra.mxu0 0.0
  %782 = vmatprep.subr.mxu0 0.0
  %783 = vmatpush2.msra.mxu0 0.0
  %784 = vmatprep.mubr.f32.mxu0 0.0
  %785 = vmatmul.mubr.f32.gmra.mxu0 %v434
  %v786 = vpop.f32.mrf.mxu0
  %v787 = vadd.f32 %v430, %v786
  %v788 = vpop.f32.mrf.mxu0
  %v789 = vadd.f32 %v430, %v788
  %790 = vdwg.mxu0
  %791 = vmatprep.subr.mxu0 0.0
  %792 = vmatpush1.msra.mxu0 0.0
  %793 = vmatprep.subr.mxu0 0.0
  %794 = vmatpush1.msra.mxu0 0.0
  %795 = vmatprep.subr.mxu0 0.0
  %796 = vmatpush1.msra.mxu0 0.0
  %797 = vmatprep.subr.mxu0 0.0
  %798 = vmatpush1.msra.mxu0 0.0
  %799 = vmatprep.subr.mxu0 0.0
  %800 = vmatpush1.msra.mxu0 0.0
  %801 = vmatprep.subr.mxu0 0.0
  %802 = vmatpush1.msra.mxu0 0.0
  %803 = vmatprep.subr.mxu0 0.0
  %804 = vmatpush1.msra.mxu0 0.0
  %805 = vmatprep.subr.mxu0 0.0
  %806 = vmatpush1.msra.mxu0 0.0
  %807 = vmatprep.subr.mxu0 0.0
  %808 = vmatpush1.msra.mxu0 0.0
  %809 = vmatprep.subr.mxu0 0.0
  %810 = vmatpush1.msra.mxu0 0.0
  %811 = vmatprep.subr.mxu0 0.0
  %812 = vmatpush1.msra.mxu0 0.0
  %813 = vmatprep.subr.mxu0 0.0
  %814 = vmatpush1.msra.mxu0 0.0
  %815 = vmatprep.subr.mxu0 0.0
  %816 = vmatpush1.msra.mxu0 0.0
  %817 = vmatprep.subr.mxu0 %v300
  %818 = vmatpush1.msra.mxu0 %v299
  %819 = vmatprep.subr.mxu0 %v163
  %820 = vmatpush1.msra.mxu0 %v162
  %821 = vmatprep.subr.mxu0 %v26
  %822 = vmatpush1.msra.mxu0 %v25
  %823 = vmatprep.subr.mxu0 0.0
  %824 = vmatpush2.msra.mxu0 0.0
  %825 = vmatprep.subr.mxu0 0.0
  %826 = vmatpush2.msra.mxu0 0.0
  %827 = vmatprep.subr.mxu0 0.0
  %828 = vmatpush2.msra.mxu0 0.0
  %829 = vmatprep.subr.mxu0 0.0
  %830 = vmatpush2.msra.mxu0 0.0
  %831 = vmatprep.subr.mxu0 0.0
  %832 = vmatpush2.msra.mxu0 0.0
  %833 = vmatprep.subr.mxu0 0.0
  %834 = vmatpush2.msra.mxu0 0.0
  %835 = vmatprep.subr.mxu0 0.0
  %836 = vmatpush2.msra.mxu0 0.0
  %837 = vmatprep.subr.mxu0 0.0
  %838 = vmatpush2.msra.mxu0 0.0
  %839 = vmatprep.subr.mxu0 0.0
  %840 = vmatpush2.msra.mxu0 0.0
  %841 = vmatprep.subr.mxu0 0.0
  %842 = vmatpush2.msra.mxu0 0.0
  %843 = vmatprep.subr.mxu0 0.0
  %844 = vmatpush2.msra.mxu0 0.0
  %845 = vmatprep.subr.mxu0 0.0
  %846 = vmatpush2.msra.mxu0 0.0
  %847 = vmatprep.subr.mxu0 0.0
  %848 = vmatpush2.msra.mxu0 0.0
  %849 = vmatprep.subr.mxu0 0.0
  %850 = vmatpush2.msra.mxu0 0.0
  %851 = vmatprep.subr.mxu0 0.0
  %852 = vmatpush2.msra.mxu0 0.0
  %853 = vmatprep.subr.mxu0 0.0
  %854 = vmatpush2.msra.mxu0 0.0
  %855 = vmatprep.mubr.f32.mxu0 0.0
  %856 = vmatmul.mubr.f32.gmra.mxu0 %v434
  %v857 = vpop.f32.mrf.mxu0
  %v858 = vadd.f32 %v430, %v857
  %v859 = vpop.f32.mrf.mxu0
  %v860 = vadd.f32 %v430, %v859
  %861 = vdwg.mxu0
  %862 = vmatprep.subr.mxu0 0.0
  %863 = vmatpush1.msra.mxu0 0.0
  %864 = vmatprep.subr.mxu0 0.0
  %865 = vmatpush1.msra.mxu0 0.0
  %866 = vmatprep.subr.mxu0 0.0
  %867 = vmatpush1.msra.mxu0 0.0
  %868 = vmatprep.subr.mxu0 0.0
  %869 = vmatpush1.msra.mxu0 0.0
  %870 = vmatprep.subr.mxu0 0.0
  %871 = vmatpush1.msra.mxu0 0.0
  %872 = vmatprep.subr.mxu0 0.0
  %873 = vmatpush1.msra.mxu0 0.0
  %874 = vmatprep.subr.mxu0 0.0
  %875 = vmatpush1.msra.mxu0 0.0
  %876 = vmatprep.subr.mxu0 0.0
  %877 = vmatpush1.msra.mxu0 0.0
  %878 = vmatprep.subr.mxu0 0.0
  %879 = vmatpush1.msra.mxu0 0.0
  %880 = vmatprep.subr.mxu0 0.0
  %881 = vmatpush1.msra.mxu0 0.0
  %882 = vmatprep.subr.mxu0 0.0
  %883 = vmatpush1.msra.mxu0 0.0
  %884 = vmatprep.subr.mxu0 0.0
  %885 = vmatpush1.msra.mxu0 0.0
  %886 = vmatprep.subr.mxu0 0.0
  %887 = vmatpush1.msra.mxu0 0.0
  %888 = vmatprep.subr.mxu0 %v302
  %889 = vmatpush1.msra.mxu0 %v301
  %890 = vmatprep.subr.mxu0 %v165
  %891 = vmatpush1.msra.mxu0 %v164
  %892 = vmatprep.subr.mxu0 %v28
  %893 = vmatpush1.msra.mxu0 %v27
  %894 = vmatprep.subr.mxu0 0.0
  %895 = vmatpush2.msra.mxu0 0.0
  %896 = vmatprep.subr.mxu0 0.0
  %897 = vmatpush2.msra.mxu0 0.0
  %898 = vmatprep.subr.mxu0 0.0
  %899 = vmatpush2.msra.mxu0 0.0
  %900 = vmatprep.subr.mxu0 0.0
  %901 = vmatpush2.msra.mxu0 0.0
  %902 = vmatprep.subr.mxu0 0.0
  %903 = vmatpush2.msra.mxu0 0.0
  %904 = vmatprep.subr.mxu0 0.0
  %905 = vmatpush2.msra.mxu0 0.0
  %906 = vmatprep.subr.mxu0 0.0
  %907 = vmatpush2.msra.mxu0 0.0
  %908 = vmatprep.subr.mxu0 0.0
  %909 = vmatpush2.msra.mxu0 0.0
  %910 = vmatprep.subr.mxu0 0.0
  %911 = vmatpush2.msra.mxu0 0.0
  %912 = vmatprep.subr.mxu0 0.0
  %913 = vmatpush2.msra.mxu0 0.0
  %914 = vmatprep.subr.mxu0 0.0
  %915 = vmatpush2.msra.mxu0 0.0
  %916 = vmatprep.subr.mxu0 0.0
  %917 = vmatpush2.msra.mxu0 0.0
  %918 = vmatprep.subr.mxu0 0.0
  %919 = vmatpush2.msra.mxu0 0.0
  %920 = vmatprep.subr.mxu0 0.0
  %921 = vmatpush2.msra.mxu0 0.0
  %922 = vmatprep.subr.mxu0 0.0
  %923 = vmatpush2.msra.mxu0 0.0
  %924 = vmatprep.subr.mxu0 0.0
  %925 = vmatpush2.msra.mxu0 0.0
  %926 = vmatprep.mubr.f32.mxu0 0.0
  %927 = vmatmul.mubr.f32.gmra.mxu0 %v434
  %v928 = vpop.f32.mrf.mxu0
  %v929 = vadd.f32 %v430, %v928
  %v930 = vpop.f32.mrf.mxu0
  %v931 = vadd.f32 %v430, %v930
  %932 = vdwg.mxu0
  %933 = vmatprep.subr.mxu0 0.0
  %934 = vmatpush1.msra.mxu0 0.0
  %935 = vmatprep.subr.mxu0 0.0
  %936 = vmatpush1.msra.mxu0 0.0
  %937 = vmatprep.subr.mxu0 0.0
  %938 = vmatpush1.msra.mxu0 0.0
  %939 = vmatprep.subr.mxu0 0.0
  %940 = vmatpush1.msra.mxu0 0.0
  %941 = vmatprep.subr.mxu0 0.0
  %942 = vmatpush1.msra.mxu0 0.0
  %943 = vmatprep.subr.mxu0 0.0
  %944 = vmatpush1.msra.mxu0 0.0
  %945 = vmatprep.subr.mxu0 0.0
  %946 = vmatpush1.msra.mxu0 0.0
  %947 = vmatprep.subr.mxu0 0.0
  %948 = vmatpush1.msra.mxu0 0.0
  %949 = vmatprep.subr.mxu0 0.0
  %950 = vmatpush1.msra.mxu0 0.0
  %951 = vmatprep.subr.mxu0 0.0
  %952 = vmatpush1.msra.mxu0 0.0
  %953 = vmatprep.subr.mxu0 0.0
  %954 = vmatpush1.msra.mxu0 0.0
  %955 = vmatprep.subr.mxu0 0.0
  %956 = vmatpush1.msra.mxu0 0.0
  %957 = vmatprep.subr.mxu0 0.0
  %958 = vmatpush1.msra.mxu0 0.0
  %959 = vmatprep.subr.mxu0 %v304
  %960 = vmatpush1.msra.mxu0 %v303
  %961 = vmatprep.subr.mxu0 %v167
  %962 = vmatpush1.msra.mxu0 %v166
  %963 = vmatprep.subr.mxu0 %v30
  %964 = vmatpush1.msra.mxu0 %v29
  %965 = vmatprep.subr.mxu0 0.0
  %966 = vmatpush2.msra.mxu0 0.0
  %967 = vmatprep.subr.mxu0 0.0
  %968 = vmatpush2.msra.mxu0 0.0
  %969 = vmatprep.subr.mxu0 0.0
  %970 = vmatpush2.msra.mxu0 0.0
  %971 = vmatprep.subr.mxu0 0.0
  %972 = vmatpush2.msra.mxu0 0.0
  %973 = vmatprep.subr.mxu0 0.0
  %974 = vmatpush2.msra.mxu0 0.0
  %975 = vmatprep.subr.mxu0 0.0
  %976 = vmatpush2.msra.mxu0 0.0
  %977 = vmatprep.subr.mxu0 0.0
  %978 = vmatpush2.msra.mxu0 0.0
  %979 = vmatprep.subr.mxu0 0.0
  %980 = vmatpush2.msra.mxu0 0.0
  %981 = vmatprep.subr.mxu0 0.0
  %982 = vmatpush2.msra.mxu0 0.0
  %983 = vmatprep.subr.mxu0 0.0
  %984 = vmatpush2.msra.mxu0 0.0
  %985 = vmatprep.subr.mxu0 0.0
  %986 = vmatpush2.msra.mxu0 0.0
  %987 = vmatprep.subr.mxu0 0.0
  %988 = vmatpush2.msra.mxu0 0.0
  %989 = vmatprep.subr.mxu0 0.0
  %990 = vmatpush2.msra.mxu0 0.0
  %991 = vmatprep.subr.mxu0 0.0
  %992 = vmatpush2.msra.mxu0 0.0
  %993 = vmatprep.subr.mxu0 0.0
  %994 = vmatpush2.msra.mxu0 0.0
  %995 = vmatprep.subr.mxu0 0.0
  %996 = vmatpush2.msra.mxu0 0.0
  %997 = vmatprep.mubr.f32.mxu0 0.0
  %998 = vmatmul.mubr.f32.gmra.mxu0 %v434
  %v999 = vpop.f32.mrf.mxu0
  %v1000 = vadd.f32 %v430, %v999
  %v1001 = vpop.f32.mrf.mxu0
  %v1002 = vadd.f32 %v430, %v1001
  %1003 = vdwg.mxu0
  %1004 = vmatprep.subr.mxu0 0.0
  %1005 = vmatpush1.msra.mxu0 0.0
  %1006 = vmatprep.subr.mxu0 0.0
  %1007 = vmatpush1.msra.mxu0 0.0
  %1008 = vmatprep.subr.mxu0 0.0
  %1009 = vmatpush1.msra.mxu0 0.0
  %1010 = vmatprep.subr.mxu0 0.0
  %1011 = vmatpush1.msra.mxu0 0.0
  %1012 = vmatprep.subr.mxu0 0.0
  %1013 = vmatpush1.msra.mxu0 0.0
  %1014 = vmatprep.subr.mxu0 0.0
  %1015 = vmatpush1.msra.mxu0 0.0
  %1016 = vmatprep.subr.mxu0 0.0
  %1017 = vmatpush1.msra.mxu0 0.0
  %1018 = vmatprep.subr.mxu0 0.0
  %1019 = vmatpush1.msra.mxu0 0.0
  %1020 = vmatprep.subr.mxu0 0.0
  %1021 = vmatpush1.msra.mxu0 0.0
  %1022 = vmatprep.subr.mxu0 0.0
  %1023 = vmatpush1.msra.mxu0 0.0
  %1024 = vmatprep.subr.mxu0 0.0
  %1025 = vmatpush1.msra.mxu0 0.0
  %1026 = vmatprep.subr.mxu0 0.0
  %1027 = vmatpush1.msra.mxu0 0.0
  %1028 = vmatprep.subr.mxu0 0.0
  %1029 = vmatpush1.msra.mxu0 0.0
  %1030 = vmatprep.subr.mxu0 %v306
  %1031 = vmatpush1.msra.mxu0 %v305
  %1032 = vmatprep.subr.mxu0 %v169
  %1033 = vmatpush1.msra.mxu0 %v168
  %1034 = vmatprep.subr.mxu0 %v32
  %1035 = vmatpush1.msra.mxu0 %v31
  %1036 = vmatprep.subr.mxu0 0.0
  %1037 = vmatpush2.msra.mxu0 0.0
  %1038 = vmatprep.subr.mxu0 0.0
  %1039 = vmatpush2.msra.mxu0 0.0
  %1040 = vmatprep.subr.mxu0 0.0
  %1041 = vmatpush2.msra.mxu0 0.0
  %1042 = vmatprep.subr.mxu0 0.0
  %1043 = vmatpush2.msra.mxu0 0.0
  %1044 = vmatprep.subr.mxu0 0.0
  %1045 = vmatpush2.msra.mxu0 0.0
  %1046 = vmatprep.subr.mxu0 0.0
  %1047 = vmatpush2.msra.mxu0 0.0
  %1048 = vmatprep.subr.mxu0 0.0
  %1049 = vmatpush2.msra.mxu0 0.0
  %1050 = vmatprep.subr.mxu0 0.0
  %1051 = vmatpush2.msra.mxu0 0.0
  %1052 = vmatprep.subr.mxu0 0.0
  %1053 = vmatpush2.msra.mxu0 0.0
  %1054 = vmatprep.subr.mxu0 0.0
  %1055 = vmatpush2.msra.mxu0 0.0
  %1056 = vmatprep.subr.mxu0 0.0
  %1057 = vmatpush2.msra.mxu0 0.0
  %1058 = vmatprep.subr.mxu0 0.0
  %1059 = vmatpush2.msra.mxu0 0.0
  %1060 = vmatprep.subr.mxu0 0.0
  %1061 = vmatpush2.msra.mxu0 0.0
  %1062 = vmatprep.subr.mxu0 0.0
  %1063 = vmatpush2.msra.mxu0 0.0
  %1064 = vmatprep.subr.mxu0 0.0
  %1065 = vmatpush2.msra.mxu0 0.0
  %1066 = vmatprep.subr.mxu0 0.0
  %1067 = vmatpush2.msra.mxu0 0.0
  %1068 = vmatprep.mubr.f32.mxu0 0.0
  %1069 = vmatmul.mubr.f32.gmra.mxu0 %v434
  %v1070 = vpop.f32.mrf.mxu0
  %v1071 = vadd.f32 %v430, %v1070
  %v1072 = vpop.f32.mrf.mxu0
  %v1073 = vadd.f32 %v430, %v1072
  %1074 = vdwg.mxu0
  %1075 = vmatprep.subr.mxu0 0.0
  %1076 = vmatpush1.msra.mxu0 0.0
  %1077 = vmatprep.subr.mxu0 0.0
  %1078 = vmatpush1.msra.mxu0 0.0
  %1079 = vmatprep.subr.mxu0 0.0
  %1080 = vmatpush1.msra.mxu0 0.0
  %1081 = vmatprep.subr.mxu0 0.0
  %1082 = vmatpush1.msra.mxu0 0.0
  %1083 = vmatprep.subr.mxu0 0.0
  %1084 = vmatpush1.msra.mxu0 0.0
  %1085 = vmatprep.subr.mxu0 0.0
  %1086 = vmatpush1.msra.mxu0 0.0
  %1087 = vmatprep.subr.mxu0 0.0
  %1088 = vmatpush1.msra.mxu0 0.0
  %1089 = vmatprep.subr.mxu0 0.0
  %1090 = vmatpush1.msra.mxu0 0.0
  %1091 = vmatprep.subr.mxu0 0.0
  %1092 = vmatpush1.msra.mxu0 0.0
  %1093 = vmatprep.subr.mxu0 0.0
  %1094 = vmatpush1.msra.mxu0 0.0
  %1095 = vmatprep.subr.mxu0 0.0
  %1096 = vmatpush1.msra.mxu0 0.0
  %1097 = vmatprep.subr.mxu0 0.0
  %1098 = vmatpush1.msra.mxu0 0.0
  %1099 = vmatprep.subr.mxu0 0.0
  %1100 = vmatpush1.msra.mxu0 0.0
  %1101 = vmatprep.subr.mxu0 %v308
  %1102 = vmatpush1.msra.mxu0 %v307
  %1103 = vmatprep.subr.mxu0 %v171
  %1104 = vmatpush1.msra.mxu0 %v170
  %1105 = vmatprep.subr.mxu0 %v34
  %1106 = vmatpush1.msra.mxu0 %v33
  %1107 = vmatprep.subr.mxu0 0.0
  %1108 = vmatpush2.msra.mxu0 0.0
  %1109 = vmatprep.subr.mxu0 0.0
  %1110 = vmatpush2.msra.mxu0 0.0
  %1111 = vmatprep.subr.mxu0 0.0
  %1112 = vmatpush2.msra.mxu0 0.0
  %1113 = vmatprep.subr.mxu0 0.0
  %1114 = vmatpush2.msra.mxu0 0.0
  %1115 = vmatprep.subr.mxu0 0.0
  %1116 = vmatpush2.msra.mxu0 0.0
  %1117 = vmatprep.subr.mxu0 0.0
  %1118 = vmatpush2.msra.mxu0 0.0
  %1119 = vmatprep.subr.mxu0 0.0
  %1120 = vmatpush2.msra.mxu0 0.0
  %1121 = vmatprep.subr.mxu0 0.0
  %1122 = vmatpush2.msra.mxu0 0.0
  %1123 = vmatprep.subr.mxu0 0.0
  %1124 = vmatpush2.msra.mxu0 0.0
  %1125 = vmatprep.subr.mxu0 0.0
  %1126 = vmatpush2.msra.mxu0 0.0
  %1127 = vmatprep.subr.mxu0 0.0
  %1128 = vmatpush2.msra.mxu0 0.0
  %1129 = vmatprep.subr.mxu0 0.0
  %1130 = vmatpush2.msra.mxu0 0.0
  %1131 = vmatprep.subr.mxu0 0.0
  %1132 = vmatpush2.msra.mxu0 0.0
  %1133 = vmatprep.subr.mxu0 0.0
  %1134 = vmatpush2.msra.mxu0 0.0
  %1135 = vmatprep.subr.mxu0 0.0
  %1136 = vmatpush2.msra.mxu0 0.0
  %1137 = vmatprep.subr.mxu0 0.0
  %1138 = vmatpush2.msra.mxu0 0.0
  %1139 = vmatprep.mubr.f32.mxu0 0.0
  %1140 = vmatmul.mubr.f32.gmra.mxu0 %v434
  %v1141 = vpop.f32.mrf.mxu0
  %v1142 = vadd.f32 %v430, %v1141
  %v1143 = vpop.f32.mrf.mxu0
  %v1144 = vadd.f32 %v430, %v1143
  %1145 = vdwg.mxu0
  %1146 = vmatprep.subr.mxu0 0.0
  %1147 = vmatpush1.msra.mxu0 0.0
  %1148 = vmatprep.subr.mxu0 0.0
  %1149 = vmatpush1.msra.mxu0 0.0
  %1150 = vmatprep.subr.mxu0 0.0
  %1151 = vmatpush1.msra.mxu0 0.0
  %1152 = vmatprep.subr.mxu0 0.0
  %1153 = vmatpush1.msra.mxu0 0.0
  %1154 = vmatprep.subr.mxu0 0.0
  %1155 = vmatpush1.msra.mxu0 0.0
  %1156 = vmatprep.subr.mxu0 0.0
  %1157 = vmatpush1.msra.mxu0 0.0
  %1158 = vmatprep.subr.mxu0 0.0
  %1159 = vmatpush1.msra.mxu0 0.0
  %1160 = vmatprep.subr.mxu0 0.0
  %1161 = vmatpush1.msra.mxu0 0.0
  %1162 = vmatprep.subr.mxu0 0.0
  %1163 = vmatpush1.msra.mxu0 0.0
  %1164 = vmatprep.subr.mxu0 0.0
  %1165 = vmatpush1.msra.mxu0 0.0
  %1166 = vmatprep.subr.mxu0 0.0
  %1167 = vmatpush1.msra.mxu0 0.0
  %1168 = vmatprep.subr.mxu0 0.0
  %1169 = vmatpush1.msra.mxu0 0.0
  %1170 = vmatprep.subr.mxu0 0.0
  %1171 = vmatpush1.msra.mxu0 0.0
  %1172 = vmatprep.subr.mxu0 %v310
  %1173 = vmatpush1.msra.mxu0 %v309
  %1174 = vmatprep.subr.mxu0 %v173
  %1175 = vmatpush1.msra.mxu0 %v172
  %1176 = vmatprep.subr.mxu0 %v36
  %1177 = vmatpush1.msra.mxu0 %v35
  %1178 = vmatprep.subr.mxu0 0.0
  %1179 = vmatpush2.msra.mxu0 0.0
  %1180 = vmatprep.subr.mxu0 0.0
  %1181 = vmatpush2.msra.mxu0 0.0
  %1182 = vmatprep.subr.mxu0 0.0
  %1183 = vmatpush2.msra.mxu0 0.0
  %1184 = vmatprep.subr.mxu0 0.0
  %1185 = vmatpush2.msra.mxu0 0.0
  %1186 = vmatprep.subr.mxu0 0.0
  %1187 = vmatpush2.msra.mxu0 0.0
  %1188 = vmatprep.subr.mxu0 0.0
  %1189 = vmatpush2.msra.mxu0 0.0
  %1190 = vmatprep.subr.mxu0 0.0
  %1191 = vmatpush2.msra.mxu0 0.0
  %1192 = vmatprep.subr.mxu0 0.0
  %1193 = vmatpush2.msra.mxu0 0.0
  %1194 = vmatprep.subr.mxu0 0.0
  %1195 = vmatpush2.msra.mxu0 0.0
  %1196 = vmatprep.subr.mxu0 0.0
  %1197 = vmatpush2.msra.mxu0 0.0
  %1198 = vmatprep.subr.mxu0 0.0
  %1199 = vmatpush2.msra.mxu0 0.0
  %1200 = vmatprep.subr.mxu0 0.0
  %1201 = vmatpush2.msra.mxu0 0.0
  %1202 = vmatprep.subr.mxu0 0.0
  %1203 = vmatpush2.msra.mxu0 0.0
  %1204 = vmatprep.subr.mxu0 0.0
  %1205 = vmatpush2.msra.mxu0 0.0
  %1206 = vmatprep.subr.mxu0 0.0
  %1207 = vmatpush2.msra.mxu0 0.0
  %1208 = vmatprep.subr.mxu0 0.0
  %1209 = vmatpush2.msra.mxu0 0.0
  %1210 = vmatprep.mubr.f32.mxu0 0.0
  %1211 = vmatmul.mubr.f32.gmra.mxu0 %v434
  %v1212 = vpop.f32.mrf.mxu0
  %v1213 = vadd.f32 %v430, %v1212
  %v1214 = vpop.f32.mrf.mxu0
  %v1215 = vadd.f32 %v430, %v1214
  %1216 = vdwg.mxu0
  %1217 = vmatprep.subr.mxu0 0.0
  %1218 = vmatpush1.msra.mxu0 0.0
  %1219 = vmatprep.subr.mxu0 0.0
  %1220 = vmatpush1.msra.mxu0 0.0
  %1221 = vmatprep.subr.mxu0 0.0
  %1222 = vmatpush1.msra.mxu0 0.0
  %1223 = vmatprep.subr.mxu0 0.0
  %1224 = vmatpush1.msra.mxu0 0.0
  %1225 = vmatprep.subr.mxu0 0.0
  %1226 = vmatpush1.msra.mxu0 0.0
  %1227 = vmatprep.subr.mxu0 0.0
  %1228 = vmatpush1.msra.mxu0 0.0
  %1229 = vmatprep.subr.mxu0 0.0
  %1230 = vmatpush1.msra.mxu0 0.0
  %1231 = vmatprep.subr.mxu0 0.0
  %1232 = vmatpush1.msra.mxu0 0.0
  %1233 = vmatprep.subr.mxu0 0.0
  %1234 = vmatpush1.msra.mxu0 0.0
  %1235 = vmatprep.subr.mxu0 0.0
  %1236 = vmatpush1.msra.mxu0 0.0
  %1237 = vmatprep.subr.mxu0 0.0
  %1238 = vmatpush1.msra.mxu0 0.0
  %1239 = vmatprep.subr.mxu0 0.0
  %1240 = vmatpush1.msra.mxu0 0.0
  %1241 = vmatprep.subr.mxu0 0.0
  %1242 = vmatpush1.msra.mxu0 0.0
  %1243 = vmatprep.subr.mxu0 %v312
  %1244 = vmatpush1.msra.mxu0 %v311
  %1245 = vmatprep.subr.mxu0 %v175
  %1246 = vmatpush1.msra.mxu0 %v174
  %1247 = vmatprep.subr.mxu0 %v38
  %1248 = vmatpush1.msra.mxu0 %v37
  %1249 = vmatprep.subr.mxu0 0.0
  %1250 = vmatpush2.msra.mxu0 0.0
  %1251 = vmatprep.subr.mxu0 0.0
  %1252 = vmatpush2.msra.mxu0 0.0
  %1253 = vmatprep.subr.mxu0 0.0
  %1254 = vmatpush2.msra.mxu0 0.0
  %1255 = vmatprep.subr.mxu0 0.0
  %1256 = vmatpush2.msra.mxu0 0.0
  %1257 = vmatprep.subr.mxu0 0.0
  %1258 = vmatpush2.msra.mxu0 0.0
  %1259 = vmatprep.subr.mxu0 0.0
  %1260 = vmatpush2.msra.mxu0 0.0
  %1261 = vmatprep.subr.mxu0 0.0
  %1262 = vmatpush2.msra.mxu0 0.0
  %1263 = vmatprep.subr.mxu0 0.0
  %1264 = vmatpush2.msra.mxu0 0.0
  %1265 = vmatprep.subr.mxu0 0.0
  %1266 = vmatpush2.msra.mxu0 0.0
  %1267 = vmatprep.subr.mxu0 0.0
  %1268 = vmatpush2.msra.mxu0 0.0
  %1269 = vmatprep.subr.mxu0 0.0
  %1270 = vmatpush2.msra.mxu0 0.0
  %1271 = vmatprep.subr.mxu0 0.0
  %1272 = vmatpush2.msra.mxu0 0.0
  %1273 = vmatprep.subr.mxu0 0.0
  %1274 = vmatpush2.msra.mxu0 0.0
  %1275 = vmatprep.subr.mxu0 0.0
  %1276 = vmatpush2.msra.mxu0 0.0
  %1277 = vmatprep.subr.mxu0 0.0
  %1278 = vmatpush2.msra.mxu0 0.0
  %1279 = vmatprep.subr.mxu0 0.0
  %1280 = vmatpush2.msra.mxu0 0.0
  %1281 = vmatprep.mubr.f32.mxu0 0.0
  %1282 = vmatmul.mubr.f32.gmra.mxu0 %v434
  %v1283 = vpop.f32.mrf.mxu0
  %v1284 = vadd.f32 %v430, %v1283
  %v1285 = vpop.f32.mrf.mxu0
  %v1286 = vadd.f32 %v430, %v1285
  %1287 = vdwg.mxu0
  %1288 = vmatprep.subr.mxu0 0.0
  %1289 = vmatpush1.msra.mxu0 0.0
  %1290 = vmatprep.subr.mxu0 0.0
  %1291 = vmatpush1.msra.mxu0 0.0
  %1292 = vmatprep.subr.mxu0 0.0
  %1293 = vmatpush1.msra.mxu0 0.0
  %1294 = vmatprep.subr.mxu0 0.0
  %1295 = vmatpush1.msra.mxu0 0.0
  %1296 = vmatprep.subr.mxu0 0.0
  %1297 = vmatpush1.msra.mxu0 0.0
  %1298 = vmatprep.subr.mxu0 0.0
  %1299 = vmatpush1.msra.mxu0 0.0
  %1300 = vmatprep.subr.mxu0 0.0
  %1301 = vmatpush1.msra.mxu0 0.0
  %1302 = vmatprep.subr.mxu0 0.0
  %1303 = vmatpush1.msra.mxu0 0.0
  %1304 = vmatprep.subr.mxu0 0.0
  %1305 = vmatpush1.msra.mxu0 0.0
  %1306 = vmatprep.subr.mxu0 0.0
  %1307 = vmatpush1.msra.mxu0 0.0
  %1308 = vmatprep.subr.mxu0 0.0
  %1309 = vmatpush1.msra.mxu0 0.0
  %1310 = vmatprep.subr.mxu0 0.0
  %1311 = vmatpush1.msra.mxu0 0.0
  %1312 = vmatprep.subr.mxu0 0.0
  %1313 = vmatpush1.msra.mxu0 0.0
  %1314 = vmatprep.subr.mxu0 %v314
  %1315 = vmatpush1.msra.mxu0 %v313
  %1316 = vmatprep.subr.mxu0 %v177
  %1317 = vmatpush1.msra.mxu0 %v176
  %1318 = vmatprep.subr.mxu0 %v40
  %1319 = vmatpush1.msra.mxu0 %v39
  %1320 = vmatprep.subr.mxu0 0.0
  %1321 = vmatpush2.msra.mxu0 0.0
  %1322 = vmatprep.subr.mxu0 0.0
  %1323 = vmatpush2.msra.mxu0 0.0
  %1324 = vmatprep.subr.mxu0 0.0
  %1325 = vmatpush2.msra.mxu0 0.0
  %1326 = vmatprep.subr.mxu0 0.0
  %1327 = vmatpush2.msra.mxu0 0.0
  %1328 = vmatprep.subr.mxu0 0.0
  %1329 = vmatpush2.msra.mxu0 0.0
  %1330 = vmatprep.subr.mxu0 0.0
  %1331 = vmatpush2.msra.mxu0 0.0
  %1332 = vmatprep.subr.mxu0 0.0
  %1333 = vmatpush2.msra.mxu0 0.0
  %1334 = vmatprep.subr.mxu0 0.0
  %1335 = vmatpush2.msra.mxu0 0.0
  %1336 = vmatprep.subr.mxu0 0.0
  %1337 = vmatpush2.msra.mxu0 0.0
  %1338 = vmatprep.subr.mxu0 0.0
  %1339 = vmatpush2.msra.mxu0 0.0
  %1340 = vmatprep.subr.mxu0 0.0
  %1341 = vmatpush2.msra.mxu0 0.0
  %1342 = vmatprep.subr.mxu0 0.0
  %1343 = vmatpush2.msra.mxu0 0.0
  %1344 = vmatprep.subr.mxu0 0.0
  %1345 = vmatpush2.msra.mxu0 0.0
  %1346 = vmatprep.subr.mxu0 0.0
  %1347 = vmatpush2.msra.mxu0 0.0
  %1348 = vmatprep.subr.mxu0 0.0
  %1349 = vmatpush2.msra.mxu0 0.0
  %1350 = vmatprep.subr.mxu0 0.0
  %1351 = vmatpush2.msra.mxu0 0.0
  %1352 = vmatprep.mubr.f32.mxu0 0.0
  %1353 = vmatmul.mubr.f32.gmra.mxu0 %v434
  %v1354 = vpop.f32.mrf.mxu0
  %v1355 = vadd.f32 %v430, %v1354
  %v1356 = vpop.f32.mrf.mxu0
  %v1357 = vadd.f32 %v430, %v1356
  %1358 = vdwg.mxu0
  %1359 = vmatprep.subr.mxu0 0.0
  %1360 = vmatpush1.msra.mxu0 0.0
  %1361 = vmatprep.subr.mxu0 0.0
  %1362 = vmatpush1.msra.mxu0 0.0
  %1363 = vmatprep.subr.mxu0 0.0
  %1364 = vmatpush1.msra.mxu0 0.0
  %1365 = vmatprep.subr.mxu0 0.0
  %1366 = vmatpush1.msra.mxu0 0.0
  %1367 = vmatprep.subr.mxu0 0.0
  %1368 = vmatpush1.msra.mxu0 0.0
  %1369 = vmatprep.subr.mxu0 0.0
  %1370 = vmatpush1.msra.mxu0 0.0
  %1371 = vmatprep.subr.mxu0 0.0
  %1372 = vmatpush1.msra.mxu0 0.0
  %1373 = vmatprep.subr.mxu0 0.0
  %1374 = vmatpush1.msra.mxu0 0.0
  %1375 = vmatprep.subr.mxu0 0.0
  %1376 = vmatpush1.msra.mxu0 0.0
  %1377 = vmatprep.subr.mxu0 0.0
  %1378 = vmatpush1.msra.mxu0 0.0
  %1379 = vmatprep.subr.mxu0 0.0
  %1380 = vmatpush1.msra.mxu0 0.0
  %1381 = vmatprep.subr.mxu0 0.0
  %1382 = vmatpush1.msra.mxu0 0.0
  %1383 = vmatprep.subr.mxu0 0.0
  %1384 = vmatpush1.msra.mxu0 0.0
  %1385 = vmatprep.subr.mxu0 %v316
  %1386 = vmatpush1.msra.mxu0 %v315
  %1387 = vmatprep.subr.mxu0 %v179
  %1388 = vmatpush1.msra.mxu0 %v178
  %1389 = vmatprep.subr.mxu0 %v42
  %1390 = vmatpush1.msra.mxu0 %v41
  %1391 = vmatprep.subr.mxu0 0.0
  %1392 = vmatpush2.msra.mxu0 0.0
  %1393 = vmatprep.subr.mxu0 0.0
  %1394 = vmatpush2.msra.mxu0 0.0
  %1395 = vmatprep.subr.mxu0 0.0
  %1396 = vmatpush2.msra.mxu0 0.0
  %1397 = vmatprep.subr.mxu0 0.0
  %1398 = vmatpush2.msra.mxu0 0.0
  %1399 = vmatprep.subr.mxu0 0.0
  %1400 = vmatpush2.msra.mxu0 0.0
  %1401 = vmatprep.subr.mxu0 0.0
  %1402 = vmatpush2.msra.mxu0 0.0
  %1403 = vmatprep.subr.mxu0 0.0
  %1404 = vmatpush2.msra.mxu0 0.0
  %1405 = vmatprep.subr.mxu0 0.0
  %1406 = vmatpush2.msra.mxu0 0.0
  %1407 = vmatprep.subr.mxu0 0.0
  %1408 = vmatpush2.msra.mxu0 0.0
  %1409 = vmatprep.subr.mxu0 0.0
  %1410 = vmatpush2.msra.mxu0 0.0
  %1411 = vmatprep.subr.mxu0 0.0
  %1412 = vmatpush2.msra.mxu0 0.0
  %1413 = vmatprep.subr.mxu0 0.0
  %1414 = vmatpush2.msra.mxu0 0.0
  %1415 = vmatprep.subr.mxu0 0.0
  %1416 = vmatpush2.msra.mxu0 0.0
  %1417 = vmatprep.subr.mxu0 0.0
  %1418 = vmatpush2.msra.mxu0 0.0
  %1419 = vmatprep.subr.mxu0 0.0
  %1420 = vmatpush2.msra.mxu0 0.0
  %1421 = vmatprep.subr.mxu0 0.0
  %1422 = vmatpush2.msra.mxu0 0.0
  %1423 = vmatprep.mubr.f32.mxu0 0.0
  %1424 = vmatmul.mubr.f32.gmra.mxu0 %v434
  %v1425 = vpop.f32.mrf.mxu0
  %v1426 = vadd.f32 %v430, %v1425
  %v1427 = vpop.f32.mrf.mxu0
  %v1428 = vadd.f32 %v430, %v1427
  %1429 = vdwg.mxu0
  %1430 = vmatprep.subr.mxu0 0.0
  %1431 = vmatpush1.msra.mxu0 0.0
  %1432 = vmatprep.subr.mxu0 0.0
  %1433 = vmatpush1.msra.mxu0 0.0
  %1434 = vmatprep.subr.mxu0 0.0
  %1435 = vmatpush1.msra.mxu0 0.0
  %1436 = vmatprep.subr.mxu0 0.0
  %1437 = vmatpush1.msra.mxu0 0.0
  %1438 = vmatprep.subr.mxu0 0.0
  %1439 = vmatpush1.msra.mxu0 0.0
  %1440 = vmatprep.subr.mxu0 0.0
  %1441 = vmatpush1.msra.mxu0 0.0
  %1442 = vmatprep.subr.mxu0 0.0
  %1443 = vmatpush1.msra.mxu0 0.0
  %1444 = vmatprep.subr.mxu0 0.0
  %1445 = vmatpush1.msra.mxu0 0.0
  %1446 = vmatprep.subr.mxu0 0.0
  %1447 = vmatpush1.msra.mxu0 0.0
  %1448 = vmatprep.subr.mxu0 0.0
  %1449 = vmatpush1.msra.mxu0 0.0
  %1450 = vmatprep.subr.mxu0 0.0
  %1451 = vmatpush1.msra.mxu0 0.0
  %1452 = vmatprep.subr.mxu0 0.0
  %1453 = vmatpush1.msra.mxu0 0.0
  %1454 = vmatprep.subr.mxu0 0.0
  %1455 = vmatpush1.msra.mxu0 0.0
  %1456 = vmatprep.subr.mxu0 %v318
  %1457 = vmatpush1.msra.mxu0 %v317
  %1458 = vmatprep.subr.mxu0 %v181
  %1459 = vmatpush1.msra.mxu0 %v180
  %1460 = vmatprep.subr.mxu0 %v44
  %1461 = vmatpush1.msra.mxu0 %v43
  %1462 = vmatprep.subr.mxu0 0.0
  %1463 = vmatpush2.msra.mxu0 0.0
  %1464 = vmatprep.subr.mxu0 0.0
  %1465 = vmatpush2.msra.mxu0 0.0
  %1466 = vmatprep.subr.mxu0 0.0
  %1467 = vmatpush2.msra.mxu0 0.0
  %1468 = vmatprep.subr.mxu0 0.0
  %1469 = vmatpush2.msra.mxu0 0.0
  %1470 = vmatprep.subr.mxu0 0.0
  %1471 = vmatpush2.msra.mxu0 0.0
  %1472 = vmatprep.subr.mxu0 0.0
  %1473 = vmatpush2.msra.mxu0 0.0
  %1474 = vmatprep.subr.mxu0 0.0
  %1475 = vmatpush2.msra.mxu0 0.0
  %1476 = vmatprep.subr.mxu0 0.0
  %1477 = vmatpush2.msra.mxu0 0.0
  %1478 = vmatprep.subr.mxu0 0.0
  %1479 = vmatpush2.msra.mxu0 0.0
  %1480 = vmatprep.subr.mxu0 0.0
  %1481 = vmatpush2.msra.mxu0 0.0
  %1482 = vmatprep.subr.mxu0 0.0
  %1483 = vmatpush2.msra.mxu0 0.0
  %1484 = vmatprep.subr.mxu0 0.0
  %1485 = vmatpush2.msra.mxu0 0.0
  %1486 = vmatprep.subr.mxu0 0.0
  %1487 = vmatpush2.msra.mxu0 0.0
  %1488 = vmatprep.subr.mxu0 0.0
  %1489 = vmatpush2.msra.mxu0 0.0
  %1490 = vmatprep.subr.mxu0 0.0
  %1491 = vmatpush2.msra.mxu0 0.0
  %1492 = vmatprep.subr.mxu0 0.0
  %1493 = vmatpush2.msra.mxu0 0.0
  %1494 = vmatprep.mubr.f32.mxu0 0.0
  %1495 = vmatmul.mubr.f32.gmra.mxu0 %v434
  %v1496 = vpop.f32.mrf.mxu0
  %v1497 = vadd.f32 %v430, %v1496
  %v1498 = vpop.f32.mrf.mxu0
  %v1499 = vadd.f32 %v430, %v1498
  %1500 = vdwg.mxu0
  %1501 = vmatprep.subr.mxu0 0.0
  %1502 = vmatpush1.msra.mxu0 0.0
  %1503 = vmatprep.subr.mxu0 0.0
  %1504 = vmatpush1.msra.mxu0 0.0
  %1505 = vmatprep.subr.mxu0 0.0
  %1506 = vmatpush1.msra.mxu0 0.0
  %1507 = vmatprep.subr.mxu0 0.0
  %1508 = vmatpush1.msra.mxu0 0.0
  %1509 = vmatprep.subr.mxu0 0.0
  %1510 = vmatpush1.msra.mxu0 0.0
  %1511 = vmatprep.subr.mxu0 0.0
  %1512 = vmatpush1.msra.mxu0 0.0
  %1513 = vmatprep.subr.mxu0 0.0
  %1514 = vmatpush1.msra.mxu0 0.0
  %1515 = vmatprep.subr.mxu0 0.0
  %1516 = vmatpush1.msra.mxu0 0.0
  %1517 = vmatprep.subr.mxu0 0.0
  %1518 = vmatpush1.msra.mxu0 0.0
  %1519 = vmatprep.subr.mxu0 0.0
  %1520 = vmatpush1.msra.mxu0 0.0
  %1521 = vmatprep.subr.mxu0 0.0
  %1522 = vmatpush1.msra.mxu0 0.0
  %1523 = vmatprep.subr.mxu0 0.0
  %1524 = vmatpush1.msra.mxu0 0.0
  %1525 = vmatprep.subr.mxu0 0.0
  %1526 = vmatpush1.msra.mxu0 0.0
  %1527 = vmatprep.subr.mxu0 %v320
  %1528 = vmatpush1.msra.mxu0 %v319
  %1529 = vmatprep.subr.mxu0 %v183
  %1530 = vmatpush1.msra.mxu0 %v182
  %1531 = vmatprep.subr.mxu0 %v46
  %1532 = vmatpush1.msra.mxu0 %v45
  %1533 = vmatprep.subr.mxu0 0.0
  %1534 = vmatpush2.msra.mxu0 0.0
  %1535 = vmatprep.subr.mxu0 0.0
  %1536 = vmatpush2.msra.mxu0 0.0
  %1537 = vmatprep.subr.mxu0 0.0
  %1538 = vmatpush2.msra.mxu0 0.0
  %1539 = vmatprep.subr.mxu0 0.0
  %1540 = vmatpush2.msra.mxu0 0.0
  %1541 = vmatprep.subr.mxu0 0.0
  %1542 = vmatpush2.msra.mxu0 0.0
  %1543 = vmatprep.subr.mxu0 0.0
  %1544 = vmatpush2.msra.mxu0 0.0
  %1545 = vmatprep.subr.mxu0 0.0
  %1546 = vmatpush2.msra.mxu0 0.0
  %1547 = vmatprep.subr.mxu0 0.0
  %1548 = vmatpush2.msra.mxu0 0.0
  %1549 = vmatprep.subr.mxu0 0.0
  %1550 = vmatpush2.msra.mxu0 0.0
  %1551 = vmatprep.subr.mxu0 0.0
  %1552 = vmatpush2.msra.mxu0 0.0
  %1553 = vmatprep.subr.mxu0 0.0
  %1554 = vmatpush2.msra.mxu0 0.0
  %1555 = vmatprep.subr.mxu0 0.0
  %1556 = vmatpush2.msra.mxu0 0.0
  %1557 = vmatprep.subr.mxu0 0.0
  %1558 = vmatpush2.msra.mxu0 0.0
  %1559 = vmatprep.subr.mxu0 0.0
  %1560 = vmatpush2.msra.mxu0 0.0
  %1561 = vmatprep.subr.mxu0 0.0
  %1562 = vmatpush2.msra.mxu0 0.0
  %1563 = vmatprep.subr.mxu0 0.0
  %1564 = vmatpush2.msra.mxu0 0.0
  %1565 = vmatprep.mubr.f32.mxu0 0.0
  %1566 = vmatmul.mubr.f32.gmra.mxu0 %v434
  %v1567 = vpop.f32.mrf.mxu0
  %v1568 = vadd.f32 %v430, %v1567
  %v1569 = vpop.f32.mrf.mxu0
  %v1570 = vadd.f32 %v430, %v1569
  %1571 = vdwg.mxu0
  %1572 = vmatprep.subr.mxu0 0.0
  %1573 = vmatpush1.msra.mxu0 0.0
  %1574 = vmatprep.subr.mxu0 0.0
  %1575 = vmatpush1.msra.mxu0 0.0
  %1576 = vmatprep.subr.mxu0 0.0
  %1577 = vmatpush1.msra.mxu0 0.0
  %1578 = vmatprep.subr.mxu0 0.0
  %1579 = vmatpush1.msra.mxu0 0.0
  %1580 = vmatprep.subr.mxu0 0.0
  %1581 = vmatpush1.msra.mxu0 0.0
  %1582 = vmatprep.subr.mxu0 0.0
  %1583 = vmatpush1.msra.mxu0 0.0
  %1584 = vmatprep.subr.mxu0 0.0
  %1585 = vmatpush1.msra.mxu0 0.0
  %1586 = vmatprep.subr.mxu0 0.0
  %1587 = vmatpush1.msra.mxu0 0.0
  %1588 = vmatprep.subr.mxu0 0.0
  %1589 = vmatpush1.msra.mxu0 0.0
  %1590 = vmatprep.subr.mxu0 0.0
  %1591 = vmatpush1.msra.mxu0 0.0
  %1592 = vmatprep.subr.mxu0 0.0
  %1593 = vmatpush1.msra.mxu0 0.0
  %1594 = vmatprep.subr.mxu0 0.0
  %1595 = vmatpush1.msra.mxu0 0.0
  %1596 = vmatprep.subr.mxu0 0.0
  %1597 = vmatpush1.msra.mxu0 0.0
  %1598 = vmatprep.subr.mxu0 %v322
  %1599 = vmatpush1.msra.mxu0 %v321
  %1600 = vmatprep.subr.mxu0 %v185
  %1601 = vmatpush1.msra.mxu0 %v184
  %1602 = vmatprep.subr.mxu0 %v48
  %1603 = vmatpush1.msra.mxu0 %v47
  %1604 = vmatprep.subr.mxu0 0.0
  %1605 = vmatpush2.msra.mxu0 0.0
  %1606 = vmatprep.subr.mxu0 0.0
  %1607 = vmatpush2.msra.mxu0 0.0
  %1608 = vmatprep.subr.mxu0 0.0
  %1609 = vmatpush2.msra.mxu0 0.0
  %1610 = vmatprep.subr.mxu0 0.0
  %1611 = vmatpush2.msra.mxu0 0.0
  %1612 = vmatprep.subr.mxu0 0.0
  %1613 = vmatpush2.msra.mxu0 0.0
  %1614 = vmatprep.subr.mxu0 0.0
  %1615 = vmatpush2.msra.mxu0 0.0
  %1616 = vmatprep.subr.mxu0 0.0
  %1617 = vmatpush2.msra.mxu0 0.0
  %1618 = vmatprep.subr.mxu0 0.0
  %1619 = vmatpush2.msra.mxu0 0.0
  %1620 = vmatprep.subr.mxu0 0.0
  %1621 = vmatpush2.msra.mxu0 0.0
  %1622 = vmatprep.subr.mxu0 0.0
  %1623 = vmatpush2.msra.mxu0 0.0
  %1624 = vmatprep.subr.mxu0 0.0
  %1625 = vmatpush2.msra.mxu0 0.0
  %1626 = vmatprep.subr.mxu0 0.0
  %1627 = vmatpush2.msra.mxu0 0.0
  %1628 = vmatprep.subr.mxu0 0.0
  %1629 = vmatpush2.msra.mxu0 0.0
  %1630 = vmatprep.subr.mxu0 0.0
  %1631 = vmatpush2.msra.mxu0 0.0
  %1632 = vmatprep.subr.mxu0 0.0
  %1633 = vmatpush2.msra.mxu0 0.0
  %1634 = vmatprep.subr.mxu0 0.0
  %1635 = vmatpush2.msra.mxu0 0.0
  %1636 = vmatprep.mubr.f32.mxu0 0.0
  %1637 = vmatmul.mubr.f32.gmra.mxu0 %v434
  %v1638 = vpop.f32.mrf.mxu0
  %v1639 = vadd.f32 %v430, %v1638
  %v1640 = vpop.f32.mrf.mxu0
  %v1641 = vadd.f32 %v430, %v1640
  %1642 = vdwg.mxu0
  %1643 = vmatprep.subr.mxu0 0.0
  %1644 = vmatpush1.msra.mxu0 0.0
  %1645 = vmatprep.subr.mxu0 0.0
  %1646 = vmatpush1.msra.mxu0 0.0
  %1647 = vmatprep.subr.mxu0 0.0
  %1648 = vmatpush1.msra.mxu0 0.0
  %1649 = vmatprep.subr.mxu0 0.0
  %1650 = vmatpush1.msra.mxu0 0.0
  %1651 = vmatprep.subr.mxu0 0.0
  %1652 = vmatpush1.msra.mxu0 0.0
  %1653 = vmatprep.subr.mxu0 0.0
  %1654 = vmatpush1.msra.mxu0 0.0
  %1655 = vmatprep.subr.mxu0 0.0
  %1656 = vmatpush1.msra.mxu0 0.0
  %1657 = vmatprep.subr.mxu0 0.0
  %1658 = vmatpush1.msra.mxu0 0.0
  %1659 = vmatprep.subr.mxu0 0.0
  %1660 = vmatpush1.msra.mxu0 0.0
  %1661 = vmatprep.subr.mxu0 0.0
  %1662 = vmatpush1.msra.mxu0 0.0
  %1663 = vmatprep.subr.mxu0 0.0
  %1664 = vmatpush1.msra.mxu0 0.0
  %1665 = vmatprep.subr.mxu0 0.0
  %1666 = vmatpush1.msra.mxu0 0.0
  %1667 = vmatprep.subr.mxu0 0.0
  %1668 = vmatpush1.msra.mxu0 0.0
  %1669 = vmatprep.subr.mxu0 %v324
  %1670 = vmatpush1.msra.mxu0 %v323
  %1671 = vmatprep.subr.mxu0 %v187
  %1672 = vmatpush1.msra.mxu0 %v186
  %1673 = vmatprep.subr.mxu0 %v50
  %1674 = vmatpush1.msra.mxu0 %v49
  %1675 = vmatprep.subr.mxu0 0.0
  %1676 = vmatpush2.msra.mxu0 0.0
  %1677 = vmatprep.subr.mxu0 0.0
  %1678 = vmatpush2.msra.mxu0 0.0
  %1679 = vmatprep.subr.mxu0 0.0
  %1680 = vmatpush2.msra.mxu0 0.0
  %1681 = vmatprep.subr.mxu0 0.0
  %1682 = vmatpush2.msra.mxu0 0.0
  %1683 = vmatprep.subr.mxu0 0.0
  %1684 = vmatpush2.msra.mxu0 0.0
  %1685 = vmatprep.subr.mxu0 0.0
  %1686 = vmatpush2.msra.mxu0 0.0
  %1687 = vmatprep.subr.mxu0 0.0
  %1688 = vmatpush2.msra.mxu0 0.0
  %1689 = vmatprep.subr.mxu0 0.0
  %1690 = vmatpush2.msra.mxu0 0.0
  %1691 = vmatprep.subr.mxu0 0.0
  %1692 = vmatpush2.msra.mxu0 0.0
  %1693 = vmatprep.subr.mxu0 0.0
  %1694 = vmatpush2.msra.mxu0 0.0
  %1695 = vmatprep.subr.mxu0 0.0
  %1696 = vmatpush2.msra.mxu0 0.0
  %1697 = vmatprep.subr.mxu0 0.0
  %1698 = vmatpush2.msra.mxu0 0.0
  %1699 = vmatprep.subr.mxu0 0.0
  %1700 = vmatpush2.msra.mxu0 0.0
  %1701 = vmatprep.subr.mxu0 0.0
  %1702 = vmatpush2.msra.mxu0 0.0
  %1703 = vmatprep.subr.mxu0 0.0
  %1704 = vmatpush2.msra.mxu0 0.0
  %1705 = vmatprep.subr.mxu0 0.0
  %1706 = vmatpush2.msra.mxu0 0.0
  %1707 = vmatprep.mubr.f32.mxu0 0.0
  %1708 = vmatmul.mubr.f32.gmra.mxu0 %v434
  %v1709 = vpop.f32.mrf.mxu0
  %v1710 = vadd.f32 %v430, %v1709
  %v1711 = vpop.f32.mrf.mxu0
  %v1712 = vadd.f32 %v430, %v1711
  %1713 = vdwg.mxu0
  %1714 = vmatprep.subr.mxu0 0.0
  %1715 = vmatpush1.msra.mxu0 0.0
  %1716 = vmatprep.subr.mxu0 0.0
  %1717 = vmatpush1.msra.mxu0 0.0
  %1718 = vmatprep.subr.mxu0 0.0
  %1719 = vmatpush1.msra.mxu0 0.0
  %1720 = vmatprep.subr.mxu0 0.0
  %1721 = vmatpush1.msra.mxu0 0.0
  %1722 = vmatprep.subr.mxu0 0.0
  %1723 = vmatpush1.msra.mxu0 0.0
  %1724 = vmatprep.subr.mxu0 0.0
  %1725 = vmatpush1.msra.mxu0 0.0
  %1726 = vmatprep.subr.mxu0 0.0
  %1727 = vmatpush1.msra.mxu0 0.0
  %1728 = vmatprep.subr.mxu0 0.0
  %1729 = vmatpush1.msra.mxu0 0.0
  %1730 = vmatprep.subr.mxu0 0.0
  %1731 = vmatpush1.msra.mxu0 0.0
  %1732 = vmatprep.subr.mxu0 0.0
  %1733 = vmatpush1.msra.mxu0 0.0
  %1734 = vmatprep.subr.mxu0 0.0
  %1735 = vmatpush1.msra.mxu0 0.0
  %1736 = vmatprep.subr.mxu0 0.0
  %1737 = vmatpush1.msra.mxu0 0.0
  %1738 = vmatprep.subr.mxu0 0.0
  %1739 = vmatpush1.msra.mxu0 0.0
  %1740 = vmatprep.subr.mxu0 %v326
  %1741 = vmatpush1.msra.mxu0 %v325
  %1742 = vmatprep.subr.mxu0 %v189
  %1743 = vmatpush1.msra.mxu0 %v188
  %1744 = vmatprep.subr.mxu0 %v52
  %1745 = vmatpush1.msra.mxu0 %v51
  %1746 = vmatprep.subr.mxu0 0.0
  %1747 = vmatpush2.msra.mxu0 0.0
  %1748 = vmatprep.subr.mxu0 0.0
  %1749 = vmatpush2.msra.mxu0 0.0
  %1750 = vmatprep.subr.mxu0 0.0
  %1751 = vmatpush2.msra.mxu0 0.0
  %1752 = vmatprep.subr.mxu0 0.0
  %1753 = vmatpush2.msra.mxu0 0.0
  %1754 = vmatprep.subr.mxu0 0.0
  %1755 = vmatpush2.msra.mxu0 0.0
  %1756 = vmatprep.subr.mxu0 0.0
  %1757 = vmatpush2.msra.mxu0 0.0
  %1758 = vmatprep.subr.mxu0 0.0
  %1759 = vmatpush2.msra.mxu0 0.0
  %1760 = vmatprep.subr.mxu0 0.0
  %1761 = vmatpush2.msra.mxu0 0.0
  %1762 = vmatprep.subr.mxu0 0.0
  %1763 = vmatpush2.msra.mxu0 0.0
  %1764 = vmatprep.subr.mxu0 0.0
  %1765 = vmatpush2.msra.mxu0 0.0
  %1766 = vmatprep.subr.mxu0 0.0
  %1767 = vmatpush2.msra.mxu0 0.0
  %1768 = vmatprep.subr.mxu0 0.0
  %1769 = vmatpush2.msra.mxu0 0.0
  %1770 = vmatprep.subr.mxu0 0.0
  %1771 = vmatpush2.msra.mxu0 0.0
  %1772 = vmatprep.subr.mxu0 0.0
  %1773 = vmatpush2.msra.mxu0 0.0
  %1774 = vmatprep.subr.mxu0 0.0
  %1775 = vmatpush2.msra.mxu0 0.0
  %1776 = vmatprep.subr.mxu0 0.0
  %1777 = vmatpush2.msra.mxu0 0.0
  %1778 = vmatprep.mubr.f32.mxu0 0.0
  %1779 = vmatmul.mubr.f32.gmra.mxu0 %v434
  %v1780 = vpop.f32.mrf.mxu0
  %v1781 = vadd.f32 %v430, %v1780
  %v1782 = vpop.f32.mrf.mxu0
  %v1783 = vadd.f32 %v430, %v1782
  %1784 = vdwg.mxu0
  %1785 = vmatprep.subr.mxu0 0.0
  %1786 = vmatpush1.msra.mxu0 0.0
  %1787 = vmatprep.subr.mxu0 0.0
  %1788 = vmatpush1.msra.mxu0 0.0
  %1789 = vmatprep.subr.mxu0 0.0
  %1790 = vmatpush1.msra.mxu0 0.0
  %1791 = vmatprep.subr.mxu0 0.0
  %1792 = vmatpush1.msra.mxu0 0.0
  %1793 = vmatprep.subr.mxu0 0.0
  %1794 = vmatpush1.msra.mxu0 0.0
  %1795 = vmatprep.subr.mxu0 0.0
  %1796 = vmatpush1.msra.mxu0 0.0
  %1797 = vmatprep.subr.mxu0 0.0
  %1798 = vmatpush1.msra.mxu0 0.0
  %1799 = vmatprep.subr.mxu0 0.0
  %1800 = vmatpush1.msra.mxu0 0.0
  %1801 = vmatprep.subr.mxu0 0.0
  %1802 = vmatpush1.msra.mxu0 0.0
  %1803 = vmatprep.subr.mxu0 0.0
  %1804 = vmatpush1.msra.mxu0 0.0
  %1805 = vmatprep.subr.mxu0 0.0
  %1806 = vmatpush1.msra.mxu0 0.0
  %1807 = vmatprep.subr.mxu0 0.0
  %1808 = vmatpush1.msra.mxu0 0.0
  %1809 = vmatprep.subr.mxu0 0.0
  %1810 = vmatpush1.msra.mxu0 0.0
  %1811 = vmatprep.subr.mxu0 %v328
  %1812 = vmatpush1.msra.mxu0 %v327
  %1813 = vmatprep.subr.mxu0 %v191
  %1814 = vmatpush1.msra.mxu0 %v190
  %1815 = vmatprep.subr.mxu0 %v54
  %1816 = vmatpush1.msra.mxu0 %v53
  %1817 = vmatprep.subr.mxu0 0.0
  %1818 = vmatpush2.msra.mxu0 0.0
  %1819 = vmatprep.subr.mxu0 0.0
  %1820 = vmatpush2.msra.mxu0 0.0
  %1821 = vmatprep.subr.mxu0 0.0
  %1822 = vmatpush2.msra.mxu0 0.0
  %1823 = vmatprep.subr.mxu0 0.0
  %1824 = vmatpush2.msra.mxu0 0.0
  %1825 = vmatprep.subr.mxu0 0.0
  %1826 = vmatpush2.msra.mxu0 0.0
  %1827 = vmatprep.subr.mxu0 0.0
  %1828 = vmatpush2.msra.mxu0 0.0
  %1829 = vmatprep.subr.mxu0 0.0
  %1830 = vmatpush2.msra.mxu0 0.0
  %1831 = vmatprep.subr.mxu0 0.0
  %1832 = vmatpush2.msra.mxu0 0.0
  %1833 = vmatprep.subr.mxu0 0.0
  %1834 = vmatpush2.msra.mxu0 0.0
  %1835 = vmatprep.subr.mxu0 0.0
  %1836 = vmatpush2.msra.mxu0 0.0
  %1837 = vmatprep.subr.mxu0 0.0
  %1838 = vmatpush2.msra.mxu0 0.0
  %1839 = vmatprep.subr.mxu0 0.0
  %1840 = vmatpush2.msra.mxu0 0.0
  %1841 = vmatprep.subr.mxu0 0.0
  %1842 = vmatpush2.msra.mxu0 0.0
  %1843 = vmatprep.subr.mxu0 0.0
  %1844 = vmatpush2.msra.mxu0 0.0
  %1845 = vmatprep.subr.mxu0 0.0
  %1846 = vmatpush2.msra.mxu0 0.0
  %1847 = vmatprep.subr.mxu0 0.0
  %1848 = vmatpush2.msra.mxu0 0.0
  %1849 = vmatprep.mubr.f32.mxu0 0.0
  %1850 = vmatmul.mubr.f32.gmra.mxu0 %v434
  %v1851 = vpop.f32.mrf.mxu0
  %v1852 = vadd.f32 %v430, %v1851
  %v1853 = vpop.f32.mrf.mxu0
  %v1854 = vadd.f32 %v430, %v1853
  %1855 = vdwg.mxu0
  %1856 = vmatprep.subr.mxu0 0.0
  %1857 = vmatpush1.msra.mxu0 0.0
  %1858 = vmatprep.subr.mxu0 0.0
  %1859 = vmatpush1.msra.mxu0 0.0
  %1860 = vmatprep.subr.mxu0 0.0
  %1861 = vmatpush1.msra.mxu0 0.0
  %1862 = vmatprep.subr.mxu0 0.0
  %1863 = vmatpush1.msra.mxu0 0.0
  %1864 = vmatprep.subr.mxu0 0.0
  %1865 = vmatpush1.msra.mxu0 0.0
  %1866 = vmatprep.subr.mxu0 0.0
  %1867 = vmatpush1.msra.mxu0 0.0
  %1868 = vmatprep.subr.mxu0 0.0
  %1869 = vmatpush1.msra.mxu0 0.0
  %1870 = vmatprep.subr.mxu0 0.0
  %1871 = vmatpush1.msra.mxu0 0.0
  %1872 = vmatprep.subr.mxu0 0.0
  %1873 = vmatpush1.msra.mxu0 0.0
  %1874 = vmatprep.subr.mxu0 0.0
  %1875 = vmatpush1.msra.mxu0 0.0
  %1876 = vmatprep.subr.mxu0 0.0
  %1877 = vmatpush1.msra.mxu0 0.0
  %1878 = vmatprep.subr.mxu0 0.0
  %1879 = vmatpush1.msra.mxu0 0.0
  %1880 = vmatprep.subr.mxu0 0.0
  %1881 = vmatpush1.msra.mxu0 0.0
  %1882 = vmatprep.subr.mxu0 %v330
  %1883 = vmatpush1.msra.mxu0 %v329
  %1884 = vmatprep.subr.mxu0 %v193
  %1885 = vmatpush1.msra.mxu0 %v192
  %1886 = vmatprep.subr.mxu0 %v56
  %1887 = vmatpush1.msra.mxu0 %v55
  %1888 = vmatprep.subr.mxu0 0.0
  %1889 = vmatpush2.msra.mxu0 0.0
  %1890 = vmatprep.subr.mxu0 0.0
  %1891 = vmatpush2.msra.mxu0 0.0
  %1892 = vmatprep.subr.mxu0 0.0
  %1893 = vmatpush2.msra.mxu0 0.0
  %1894 = vmatprep.subr.mxu0 0.0
  %1895 = vmatpush2.msra.mxu0 0.0
  %1896 = vmatprep.subr.mxu0 0.0
  %1897 = vmatpush2.msra.mxu0 0.0
  %1898 = vmatprep.subr.mxu0 0.0
  %1899 = vmatpush2.msra.mxu0 0.0
  %1900 = vmatprep.subr.mxu0 0.0
  %1901 = vmatpush2.msra.mxu0 0.0
  %1902 = vmatprep.subr.mxu0 0.0
  %1903 = vmatpush2.msra.mxu0 0.0
  %1904 = vmatprep.subr.mxu0 0.0
  %1905 = vmatpush2.msra.mxu0 0.0
  %1906 = vmatprep.subr.mxu0 0.0
  %1907 = vmatpush2.msra.mxu0 0.0
  %1908 = vmatprep.subr.mxu0 0.0
  %1909 = vmatpush2.msra.mxu0 0.0
  %1910 = vmatprep.subr.mxu0 0.0
  %1911 = vmatpush2.msra.mxu0 0.0
  %1912 = vmatprep.subr.mxu0 0.0
  %1913 = vmatpush2.msra.mxu0 0.0
  %1914 = vmatprep.subr.mxu0 0.0
  %1915 = vmatpush2.msra.mxu0 0.0
  %1916 = vmatprep.subr.mxu0 0.0
  %1917 = vmatpush2.msra.mxu0 0.0
  %1918 = vmatprep.subr.mxu0 0.0
  %1919 = vmatpush2.msra.mxu0 0.0
  %1920 = vmatprep.mubr.f32.mxu0 0.0
  %1921 = vmatmul.mubr.f32.gmra.mxu0 %v434
  %v1922 = vpop.f32.mrf.mxu0
  %v1923 = vadd.f32 %v430, %v1922
  %v1924 = vpop.f32.mrf.mxu0
  %v1925 = vadd.f32 %v430, %v1924
  %1926 = vdwg.mxu0
  %1927 = vmatprep.subr.mxu0 0.0
  %1928 = vmatpush1.msra.mxu0 0.0
  %1929 = vmatprep.subr.mxu0 0.0
  %1930 = vmatpush1.msra.mxu0 0.0
  %1931 = vmatprep.subr.mxu0 0.0
  %1932 = vmatpush1.msra.mxu0 0.0
  %1933 = vmatprep.subr.mxu0 0.0
  %1934 = vmatpush1.msra.mxu0 0.0
  %1935 = vmatprep.subr.mxu0 0.0
  %1936 = vmatpush1.msra.mxu0 0.0
  %1937 = vmatprep.subr.mxu0 0.0
  %1938 = vmatpush1.msra.mxu0 0.0
  %1939 = vmatprep.subr.mxu0 0.0
  %1940 = vmatpush1.msra.mxu0 0.0
  %1941 = vmatprep.subr.mxu0 0.0
  %1942 = vmatpush1.msra.mxu0 0.0
  %1943 = vmatprep.subr.mxu0 0.0
  %1944 = vmatpush1.msra.mxu0 0.0
  %1945 = vmatprep.subr.mxu0 0.0
  %1946 = vmatpush1.msra.mxu0 0.0
  %1947 = vmatprep.subr.mxu0 0.0
  %1948 = vmatpush1.msra.mxu0 0.0
  %1949 = vmatprep.subr.mxu0 0.0
  %1950 = vmatpush1.msra.mxu0 0.0
  %1951 = vmatprep.subr.mxu0 0.0
  %1952 = vmatpush1.msra.mxu0 0.0
  %1953 = vmatprep.subr.mxu0 %v332
  %1954 = vmatpush1.msra.mxu0 %v331
  %1955 = vmatprep.subr.mxu0 %v195
  %1956 = vmatpush1.msra.mxu0 %v194
  %1957 = vmatprep.subr.mxu0 %v58
  %1958 = vmatpush1.msra.mxu0 %v57
  %1959 = vmatprep.subr.mxu0 0.0
  %1960 = vmatpush2.msra.mxu0 0.0
  %1961 = vmatprep.subr.mxu0 0.0
  %1962 = vmatpush2.msra.mxu0 0.0
  %1963 = vmatprep.subr.mxu0 0.0
  %1964 = vmatpush2.msra.mxu0 0.0
  %1965 = vmatprep.subr.mxu0 0.0
  %1966 = vmatpush2.msra.mxu0 0.0
  %1967 = vmatprep.subr.mxu0 0.0
  %1968 = vmatpush2.msra.mxu0 0.0
  %1969 = vmatprep.subr.mxu0 0.0
  %1970 = vmatpush2.msra.mxu0 0.0
  %1971 = vmatprep.subr.mxu0 0.0
  %1972 = vmatpush2.msra.mxu0 0.0
  %1973 = vmatprep.subr.mxu0 0.0
  %1974 = vmatpush2.msra.mxu0 0.0
  %1975 = vmatprep.subr.mxu0 0.0
  %1976 = vmatpush2.msra.mxu0 0.0
  %1977 = vmatprep.subr.mxu0 0.0
  %1978 = vmatpush2.msra.mxu0 0.0
  %1979 = vmatprep.subr.mxu0 0.0
  %1980 = vmatpush2.msra.mxu0 0.0
  %1981 = vmatprep.subr.mxu0 0.0
  %1982 = vmatpush2.msra.mxu0 0.0
  %1983 = vmatprep.subr.mxu0 0.0
  %1984 = vmatpush2.msra.mxu0 0.0
  %1985 = vmatprep.subr.mxu0 0.0
  %1986 = vmatpush2.msra.mxu0 0.0
  %1987 = vmatprep.subr.mxu0 0.0
  %1988 = vmatpush2.msra.mxu0 0.0
  %1989 = vmatprep.subr.mxu0 0.0
  %1990 = vmatpush2.msra.mxu0 0.0
  %1991 = vmatprep.mubr.f32.mxu0 0.0
  %1992 = vmatmul.mubr.f32.gmra.mxu0 %v434
  %v1993 = vpop.f32.mrf.mxu0
  %v1994 = vadd.f32 %v430, %v1993
  %v1995 = vpop.f32.mrf.mxu0
  %v1996 = vadd.f32 %v430, %v1995
  %1997 = vdwg.mxu0
  %1998 = vmatprep.subr.mxu0 0.0
  %1999 = vmatpush1.msra.mxu0 0.0
  %2000 = vmatprep.subr.mxu0 0.0
  %2001 = vmatpush1.msra.mxu0 0.0
  %2002 = vmatprep.subr.mxu0 0.0
  %2003 = vmatpush1.msra.mxu0 0.0
  %2004 = vmatprep.subr.mxu0 0.0
  %2005 = vmatpush1.msra.mxu0 0.0
  %2006 = vmatprep.subr.mxu0 0.0
  %2007 = vmatpush1.msra.mxu0 0.0
  %2008 = vmatprep.subr.mxu0 0.0
  %2009 = vmatpush1.msra.mxu0 0.0
  %2010 = vmatprep.subr.mxu0 0.0
  %2011 = vmatpush1.msra.mxu0 0.0
  %2012 = vmatprep.subr.mxu0 0.0
  %2013 = vmatpush1.msra.mxu0 0.0
  %2014 = vmatprep.subr.mxu0 0.0
  %2015 = vmatpush1.msra.mxu0 0.0
  %2016 = vmatprep.subr.mxu0 0.0
  %2017 = vmatpush1.msra.mxu0 0.0
  %2018 = vmatprep.subr.mxu0 0.0
  %2019 = vmatpush1.msra.mxu0 0.0
  %2020 = vmatprep.subr.mxu0 0.0
  %2021 = vmatpush1.msra.mxu0 0.0
  %2022 = vmatprep.subr.mxu0 0.0
  %2023 = vmatpush1.msra.mxu0 0.0
  %2024 = vmatprep.subr.mxu0 %v334
  %2025 = vmatpush1.msra.mxu0 %v333
  %2026 = vmatprep.subr.mxu0 %v197
  %2027 = vmatpush1.msra.mxu0 %v196
  %2028 = vmatprep.subr.mxu0 %v60
  %2029 = vmatpush1.msra.mxu0 %v59
  %2030 = vmatprep.subr.mxu0 0.0
  %2031 = vmatpush2.msra.mxu0 0.0
  %2032 = vmatprep.subr.mxu0 0.0
  %2033 = vmatpush2.msra.mxu0 0.0
  %2034 = vmatprep.subr.mxu0 0.0
  %2035 = vmatpush2.msra.mxu0 0.0
  %2036 = vmatprep.subr.mxu0 0.0
  %2037 = vmatpush2.msra.mxu0 0.0
  %2038 = vmatprep.subr.mxu0 0.0
  %2039 = vmatpush2.msra.mxu0 0.0
  %2040 = vmatprep.subr.mxu0 0.0
  %2041 = vmatpush2.msra.mxu0 0.0
  %2042 = vmatprep.subr.mxu0 0.0
  %2043 = vmatpush2.msra.mxu0 0.0
  %2044 = vmatprep.subr.mxu0 0.0
  %2045 = vmatpush2.msra.mxu0 0.0
  %2046 = vmatprep.subr.mxu0 0.0
  %2047 = vmatpush2.msra.mxu0 0.0
  %2048 = vmatprep.subr.mxu0 0.0
  %2049 = vmatpush2.msra.mxu0 0.0
  %2050 = vmatprep.subr.mxu0 0.0
  %2051 = vmatpush2.msra.mxu0 0.0
  %2052 = vmatprep.subr.mxu0 0.0
  %2053 = vmatpush2.msra.mxu0 0.0
  %2054 = vmatprep.subr.mxu0 0.0
  %2055 = vmatpush2.msra.mxu0 0.0
  %2056 = vmatprep.subr.mxu0 0.0
  %2057 = vmatpush2.msra.mxu0 0.0
  %2058 = vmatprep.subr.mxu0 0.0
  %2059 = vmatpush2.msra.mxu0 0.0
  %2060 = vmatprep.subr.mxu0 0.0
  %2061 = vmatpush2.msra.mxu0 0.0
  %2062 = vmatprep.mubr.f32.mxu0 0.0
  %2063 = vmatmul.mubr.f32.gmra.mxu0 %v434
  %v2064 = vpop.f32.mrf.mxu0
  %v2065 = vadd.f32 %v430, %v2064
  %v2066 = vpop.f32.mrf.mxu0
  %v2067 = vadd.f32 %v430, %v2066
  %2068 = vdwg.mxu0
  %2069 = vmatprep.subr.mxu0 0.0
  %2070 = vmatpush1.msra.mxu0 0.0
  %2071 = vmatprep.subr.mxu0 0.0
  %2072 = vmatpush1.msra.mxu0 0.0
  %2073 = vmatprep.subr.mxu0 0.0
  %2074 = vmatpush1.msra.mxu0 0.0
  %2075 = vmatprep.subr.mxu0 0.0
  %2076 = vmatpush1.msra.mxu0 0.0
  %2077 = vmatprep.subr.mxu0 0.0
  %2078 = vmatpush1.msra.mxu0 0.0
  %2079 = vmatprep.subr.mxu0 0.0
  %2080 = vmatpush1.msra.mxu0 0.0
  %2081 = vmatprep.subr.mxu0 0.0
  %2082 = vmatpush1.msra.mxu0 0.0
  %2083 = vmatprep.subr.mxu0 0.0
  %2084 = vmatpush1.msra.mxu0 0.0
  %2085 = vmatprep.subr.mxu0 0.0
  %2086 = vmatpush1.msra.mxu0 0.0
  %2087 = vmatprep.subr.mxu0 0.0
  %2088 = vmatpush1.msra.mxu0 0.0
  %2089 = vmatprep.subr.mxu0 0.0
  %2090 = vmatpush1.msra.mxu0 0.0
  %2091 = vmatprep.subr.mxu0 0.0
  %2092 = vmatpush1.msra.mxu0 0.0
  %2093 = vmatprep.subr.mxu0 0.0
  %2094 = vmatpush1.msra.mxu0 0.0
  %2095 = vmatprep.subr.mxu0 %v336
  %2096 = vmatpush1.msra.mxu0 %v335
  %2097 = vmatprep.subr.mxu0 %v199
  %2098 = vmatpush1.msra.mxu0 %v198
  %2099 = vmatprep.subr.mxu0 %v62
  %2100 = vmatpush1.msra.mxu0 %v61
  %2101 = vmatprep.subr.mxu0 0.0
  %2102 = vmatpush2.msra.mxu0 0.0
  %2103 = vmatprep.subr.mxu0 0.0
  %2104 = vmatpush2.msra.mxu0 0.0
  %2105 = vmatprep.subr.mxu0 0.0
  %2106 = vmatpush2.msra.mxu0 0.0
  %2107 = vmatprep.subr.mxu0 0.0
  %2108 = vmatpush2.msra.mxu0 0.0
  %2109 = vmatprep.subr.mxu0 0.0
  %2110 = vmatpush2.msra.mxu0 0.0
  %2111 = vmatprep.subr.mxu0 0.0
  %2112 = vmatpush2.msra.mxu0 0.0
  %2113 = vmatprep.subr.mxu0 0.0
  %2114 = vmatpush2.msra.mxu0 0.0
  %2115 = vmatprep.subr.mxu0 0.0
  %2116 = vmatpush2.msra.mxu0 0.0
  %2117 = vmatprep.subr.mxu0 0.0
  %2118 = vmatpush2.msra.mxu0 0.0
  %2119 = vmatprep.subr.mxu0 0.0
  %2120 = vmatpush2.msra.mxu0 0.0
  %2121 = vmatprep.subr.mxu0 0.0
  %2122 = vmatpush2.msra.mxu0 0.0
  %2123 = vmatprep.subr.mxu0 0.0
  %2124 = vmatpush2.msra.mxu0 0.0
  %2125 = vmatprep.subr.mxu0 0.0
  %2126 = vmatpush2.msra.mxu0 0.0
  %2127 = vmatprep.subr.mxu0 0.0
  %2128 = vmatpush2.msra.mxu0 0.0
  %2129 = vmatprep.subr.mxu0 0.0
  %2130 = vmatpush2.msra.mxu0 0.0
  %2131 = vmatprep.subr.mxu0 0.0
  %2132 = vmatpush2.msra.mxu0 0.0
  %2133 = vmatprep.mubr.f32.mxu0 0.0
  %2134 = vmatmul.mubr.f32.gmra.mxu0 %v434
  %v2135 = vpop.f32.mrf.mxu0
  %v2136 = vadd.f32 %v430, %v2135
  %v2137 = vpop.f32.mrf.mxu0
  %v2138 = vadd.f32 %v430, %v2137
  %2139 = vdwg.mxu0
  %2140 = vmatprep.subr.mxu0 0.0
  %2141 = vmatpush1.msra.mxu0 0.0
  %2142 = vmatprep.subr.mxu0 0.0
  %2143 = vmatpush1.msra.mxu0 0.0
  %2144 = vmatprep.subr.mxu0 0.0
  %2145 = vmatpush1.msra.mxu0 0.0
  %2146 = vmatprep.subr.mxu0 0.0
  %2147 = vmatpush1.msra.mxu0 0.0
  %2148 = vmatprep.subr.mxu0 0.0
  %2149 = vmatpush1.msra.mxu0 0.0
  %2150 = vmatprep.subr.mxu0 0.0
  %2151 = vmatpush1.msra.mxu0 0.0
  %2152 = vmatprep.subr.mxu0 0.0
  %2153 = vmatpush1.msra.mxu0 0.0
  %2154 = vmatprep.subr.mxu0 0.0
  %2155 = vmatpush1.msra.mxu0 0.0
  %2156 = vmatprep.subr.mxu0 0.0
  %2157 = vmatpush1.msra.mxu0 0.0
  %2158 = vmatprep.subr.mxu0 0.0
  %2159 = vmatpush1.msra.mxu0 0.0
  %2160 = vmatprep.subr.mxu0 0.0
  %2161 = vmatpush1.msra.mxu0 0.0
  %2162 = vmatprep.subr.mxu0 0.0
  %2163 = vmatpush1.msra.mxu0 0.0
  %2164 = vmatprep.subr.mxu0 0.0
  %2165 = vmatpush1.msra.mxu0 0.0
  %2166 = vmatprep.subr.mxu0 %v338
  %2167 = vmatpush1.msra.mxu0 %v337
  %2168 = vmatprep.subr.mxu0 %v201
  %2169 = vmatpush1.msra.mxu0 %v200
  %2170 = vmatprep.subr.mxu0 %v64
  %2171 = vmatpush1.msra.mxu0 %v63
  %2172 = vmatprep.subr.mxu0 0.0
  %2173 = vmatpush2.msra.mxu0 0.0
  %2174 = vmatprep.subr.mxu0 0.0
  %2175 = vmatpush2.msra.mxu0 0.0
  %2176 = vmatprep.subr.mxu0 0.0
  %2177 = vmatpush2.msra.mxu0 0.0
  %2178 = vmatprep.subr.mxu0 0.0
  %2179 = vmatpush2.msra.mxu0 0.0
  %2180 = vmatprep.subr.mxu0 0.0
  %2181 = vmatpush2.msra.mxu0 0.0
  %2182 = vmatprep.subr.mxu0 0.0
  %2183 = vmatpush2.msra.mxu0 0.0
  %2184 = vmatprep.subr.mxu0 0.0
  %2185 = vmatpush2.msra.mxu0 0.0
  %2186 = vmatprep.subr.mxu0 0.0
  %2187 = vmatpush2.msra.mxu0 0.0
  %2188 = vmatprep.subr.mxu0 0.0
  %2189 = vmatpush2.msra.mxu0 0.0
  %2190 = vmatprep.subr.mxu0 0.0
  %2191 = vmatpush2.msra.mxu0 0.0
  %2192 = vmatprep.subr.mxu0 0.0
  %2193 = vmatpush2.msra.mxu0 0.0
  %2194 = vmatprep.subr.mxu0 0.0
  %2195 = vmatpush2.msra.mxu0 0.0
  %2196 = vmatprep.subr.mxu0 0.0
  %2197 = vmatpush2.msra.mxu0 0.0
  %2198 = vmatprep.subr.mxu0 0.0
  %2199 = vmatpush2.msra.mxu0 0.0
  %2200 = vmatprep.subr.mxu0 0.0
  %2201 = vmatpush2.msra.mxu0 0.0
  %2202 = vmatprep.subr.mxu0 0.0
  %2203 = vmatpush2.msra.mxu0 0.0
  %2204 = vmatprep.mubr.f32.mxu0 0.0
  %2205 = vmatmul.mubr.f32.gmra.mxu0 %v434
  %v2206 = vpop.f32.mrf.mxu0
  %v2207 = vadd.f32 %v430, %v2206
  %v2208 = vpop.f32.mrf.mxu0
  %v2209 = vadd.f32 %v430, %v2208
  %2210 = vdwg.mxu0
  %2211 = vmatprep.subr.mxu0 0.0
  %2212 = vmatpush1.msra.mxu0 0.0
  %2213 = vmatprep.subr.mxu0 0.0
  %2214 = vmatpush1.msra.mxu0 0.0
  %2215 = vmatprep.subr.mxu0 0.0
  %2216 = vmatpush1.msra.mxu0 0.0
  %2217 = vmatprep.subr.mxu0 0.0
  %2218 = vmatpush1.msra.mxu0 0.0
  %2219 = vmatprep.subr.mxu0 0.0
  %2220 = vmatpush1.msra.mxu0 0.0
  %2221 = vmatprep.subr.mxu0 0.0
  %2222 = vmatpush1.msra.mxu0 0.0
  %2223 = vmatprep.subr.mxu0 0.0
  %2224 = vmatpush1.msra.mxu0 0.0
  %2225 = vmatprep.subr.mxu0 0.0
  %2226 = vmatpush1.msra.mxu0 0.0
  %2227 = vmatprep.subr.mxu0 0.0
  %2228 = vmatpush1.msra.mxu0 0.0
  %2229 = vmatprep.subr.mxu0 0.0
  %2230 = vmatpush1.msra.mxu0 0.0
  %2231 = vmatprep.subr.mxu0 0.0
  %2232 = vmatpush1.msra.mxu0 0.0
  %2233 = vmatprep.subr.mxu0 0.0
  %2234 = vmatpush1.msra.mxu0 0.0
  %2235 = vmatprep.subr.mxu0 0.0
  %2236 = vmatpush1.msra.mxu0 0.0
  %2237 = vmatprep.subr.mxu0 %v340
  %2238 = vmatpush1.msra.mxu0 %v339
  %2239 = vmatprep.subr.mxu0 %v203
  %2240 = vmatpush1.msra.mxu0 %v202
  %2241 = vmatprep.subr.mxu0 %v66
  %2242 = vmatpush1.msra.mxu0 %v65
  %2243 = vmatprep.subr.mxu0 0.0
  %2244 = vmatpush2.msra.mxu0 0.0
  %2245 = vmatprep.subr.mxu0 0.0
  %2246 = vmatpush2.msra.mxu0 0.0
  %2247 = vmatprep.subr.mxu0 0.0
  %2248 = vmatpush2.msra.mxu0 0.0
  %2249 = vmatprep.subr.mxu0 0.0
  %2250 = vmatpush2.msra.mxu0 0.0
  %2251 = vmatprep.subr.mxu0 0.0
  %2252 = vmatpush2.msra.mxu0 0.0
  %2253 = vmatprep.subr.mxu0 0.0
  %2254 = vmatpush2.msra.mxu0 0.0
  %2255 = vmatprep.subr.mxu0 0.0
  %2256 = vmatpush2.msra.mxu0 0.0
  %2257 = vmatprep.subr.mxu0 0.0
  %2258 = vmatpush2.msra.mxu0 0.0
  %2259 = vmatprep.subr.mxu0 0.0
  %2260 = vmatpush2.msra.mxu0 0.0
  %2261 = vmatprep.subr.mxu0 0.0
  %2262 = vmatpush2.msra.mxu0 0.0
  %2263 = vmatprep.subr.mxu0 0.0
  %2264 = vmatpush2.msra.mxu0 0.0
  %2265 = vmatprep.subr.mxu0 0.0
  %2266 = vmatpush2.msra.mxu0 0.0
  %2267 = vmatprep.subr.mxu0 0.0
  %2268 = vmatpush2.msra.mxu0 0.0
  %2269 = vmatprep.subr.mxu0 0.0
  %2270 = vmatpush2.msra.mxu0 0.0
  %2271 = vmatprep.subr.mxu0 0.0
  %2272 = vmatpush2.msra.mxu0 0.0
  %2273 = vmatprep.subr.mxu0 0.0
  %2274 = vmatpush2.msra.mxu0 0.0
  %2275 = vmatprep.mubr.f32.mxu0 0.0
  %2276 = vmatmul.mubr.f32.gmra.mxu0 %v434
  %v2277 = vpop.f32.mrf.mxu0
  %v2278 = vadd.f32 %v430, %v2277
  %v2279 = vpop.f32.mrf.mxu0
  %v2280 = vadd.f32 %v430, %v2279
  %2281 = vdwg.mxu0
  %2282 = vmatprep.subr.mxu0 0.0
  %2283 = vmatpush1.msra.mxu0 0.0
  %2284 = vmatprep.subr.mxu0 0.0
  %2285 = vmatpush1.msra.mxu0 0.0
  %2286 = vmatprep.subr.mxu0 0.0
  %2287 = vmatpush1.msra.mxu0 0.0
  %2288 = vmatprep.subr.mxu0 0.0
  %2289 = vmatpush1.msra.mxu0 0.0
  %2290 = vmatprep.subr.mxu0 0.0
  %2291 = vmatpush1.msra.mxu0 0.0
  %2292 = vmatprep.subr.mxu0 0.0
  %2293 = vmatpush1.msra.mxu0 0.0
  %2294 = vmatprep.subr.mxu0 0.0
  %2295 = vmatpush1.msra.mxu0 0.0
  %2296 = vmatprep.subr.mxu0 0.0
  %2297 = vmatpush1.msra.mxu0 0.0
  %2298 = vmatprep.subr.mxu0 0.0
  %2299 = vmatpush1.msra.mxu0 0.0
  %2300 = vmatprep.subr.mxu0 0.0
  %2301 = vmatpush1.msra.mxu0 0.0
  %2302 = vmatprep.subr.mxu0 0.0
  %2303 = vmatpush1.msra.mxu0 0.0
  %2304 = vmatprep.subr.mxu0 0.0
  %2305 = vmatpush1.msra.mxu0 0.0
  %2306 = vmatprep.subr.mxu0 0.0
  %2307 = vmatpush1.msra.mxu0 0.0
  %2308 = vmatprep.subr.mxu0 %v342
  %2309 = vmatpush1.msra.mxu0 %v341
  %2310 = vmatprep.subr.mxu0 %v205
  %2311 = vmatpush1.msra.mxu0 %v204
  %2312 = vmatprep.subr.mxu0 %v68
  %2313 = vmatpush1.msra.mxu0 %v67
  %2314 = vmatprep.subr.mxu0 0.0
  %2315 = vmatpush2.msra.mxu0 0.0
  %2316 = vmatprep.subr.mxu0 0.0
  %2317 = vmatpush2.msra.mxu0 0.0
  %2318 = vmatprep.subr.mxu0 0.0
  %2319 = vmatpush2.msra.mxu0 0.0
  %2320 = vmatprep.subr.mxu0 0.0
  %2321 = vmatpush2.msra.mxu0 0.0
  %2322 = vmatprep.subr.mxu0 0.0
  %2323 = vmatpush2.msra.mxu0 0.0
  %2324 = vmatprep.subr.mxu0 0.0
  %2325 = vmatpush2.msra.mxu0 0.0
  %2326 = vmatprep.subr.mxu0 0.0
  %2327 = vmatpush2.msra.mxu0 0.0
  %2328 = vmatprep.subr.mxu0 0.0
  %2329 = vmatpush2.msra.mxu0 0.0
  %2330 = vmatprep.subr.mxu0 0.0
  %2331 = vmatpush2.msra.mxu0 0.0
  %2332 = vmatprep.subr.mxu0 0.0
  %2333 = vmatpush2.msra.mxu0 0.0
  %2334 = vmatprep.subr.mxu0 0.0
  %2335 = vmatpush2.msra.mxu0 0.0
  %2336 = vmatprep.subr.mxu0 0.0
  %2337 = vmatpush2.msra.mxu0 0.0
  %2338 = vmatprep.subr.mxu0 0.0
  %2339 = vmatpush2.msra.mxu0 0.0
  %2340 = vmatprep.subr.mxu0 0.0
  %2341 = vmatpush2.msra.mxu0 0.0
  %2342 = vmatprep.subr.mxu0 0.0
  %2343 = vmatpush2.msra.mxu0 0.0
  %2344 = vmatprep.subr.mxu0 0.0
  %2345 = vmatpush2.msra.mxu0 0.0
  %2346 = vmatprep.mubr.f32.mxu0 0.0
  %2347 = vmatmul.mubr.f32.gmra.mxu0 %v434
  %v2348 = vpop.f32.mrf.mxu0
  %v2349 = vadd.f32 %v430, %v2348
  %v2350 = vpop.f32.mrf.mxu0
  %v2351 = vadd.f32 %v430, %v2350
  %2352 = vdwg.mxu0
  %2353 = vmatprep.subr.mxu0 0.0
  %2354 = vmatpush1.msra.mxu0 0.0
  %2355 = vmatprep.subr.mxu0 0.0
  %2356 = vmatpush1.msra.mxu0 0.0
  %2357 = vmatprep.subr.mxu0 0.0
  %2358 = vmatpush1.msra.mxu0 0.0
  %2359 = vmatprep.subr.mxu0 0.0
  %2360 = vmatpush1.msra.mxu0 0.0
  %2361 = vmatprep.subr.mxu0 0.0
  %2362 = vmatpush1.msra.mxu0 0.0
  %2363 = vmatprep.subr.mxu0 0.0
  %2364 = vmatpush1.msra.mxu0 0.0
  %2365 = vmatprep.subr.mxu0 0.0
  %2366 = vmatpush1.msra.mxu0 0.0
  %2367 = vmatprep.subr.mxu0 0.0
  %2368 = vmatpush1.msra.mxu0 0.0
  %2369 = vmatprep.subr.mxu0 0.0
  %2370 = vmatpush1.msra.mxu0 0.0
  %2371 = vmatprep.subr.mxu0 0.0
  %2372 = vmatpush1.msra.mxu0 0.0
  %2373 = vmatprep.subr.mxu0 0.0
  %2374 = vmatpush1.msra.mxu0 0.0
  %2375 = vmatprep.subr.mxu0 0.0
  %2376 = vmatpush1.msra.mxu0 0.0
  %2377 = vmatprep.subr.mxu0 0.0
  %2378 = vmatpush1.msra.mxu0 0.0
  %2379 = vmatprep.subr.mxu0 %v344
  %2380 = vmatpush1.msra.mxu0 %v343
  %2381 = vmatprep.subr.mxu0 %v207
  %2382 = vmatpush1.msra.mxu0 %v206
  %2383 = vmatprep.subr.mxu0 %v70
  %2384 = vmatpush1.msra.mxu0 %v69
  %2385 = vmatprep.subr.mxu0 0.0
  %2386 = vmatpush2.msra.mxu0 0.0
  %2387 = vmatprep.subr.mxu0 0.0
  %2388 = vmatpush2.msra.mxu0 0.0
  %2389 = vmatprep.subr.mxu0 0.0
  %2390 = vmatpush2.msra.mxu0 0.0
  %2391 = vmatprep.subr.mxu0 0.0
  %2392 = vmatpush2.msra.mxu0 0.0
  %2393 = vmatprep.subr.mxu0 0.0
  %2394 = vmatpush2.msra.mxu0 0.0
  %2395 = vmatprep.subr.mxu0 0.0
  %2396 = vmatpush2.msra.mxu0 0.0
  %2397 = vmatprep.subr.mxu0 0.0
  %2398 = vmatpush2.msra.mxu0 0.0
  %2399 = vmatprep.subr.mxu0 0.0
  %2400 = vmatpush2.msra.mxu0 0.0
  %2401 = vmatprep.subr.mxu0 0.0
  %2402 = vmatpush2.msra.mxu0 0.0
  %2403 = vmatprep.subr.mxu0 0.0
  %2404 = vmatpush2.msra.mxu0 0.0
  %2405 = vmatprep.subr.mxu0 0.0
  %2406 = vmatpush2.msra.mxu0 0.0
  %2407 = vmatprep.subr.mxu0 0.0
  %2408 = vmatpush2.msra.mxu0 0.0
  %2409 = vmatprep.subr.mxu0 0.0
  %2410 = vmatpush2.msra.mxu0 0.0
  %2411 = vmatprep.subr.mxu0 0.0
  %2412 = vmatpush2.msra.mxu0 0.0
  %2413 = vmatprep.subr.mxu0 0.0
  %2414 = vmatpush2.msra.mxu0 0.0
  %2415 = vmatprep.subr.mxu0 0.0
  %2416 = vmatpush2.msra.mxu0 0.0
  %2417 = vmatprep.mubr.f32.mxu0 0.0
  %2418 = vmatmul.mubr.f32.gmra.mxu0 %v434
  %v2419 = vpop.f32.mrf.mxu0
  %v2420 = vadd.f32 %v430, %v2419
  %v2421 = vpop.f32.mrf.mxu0
  %v2422 = vadd.f32 %v430, %v2421
  %2423 = vdwg.mxu0
  %2424 = vmatprep.subr.mxu0 0.0
  %2425 = vmatpush1.msra.mxu0 0.0
  %2426 = vmatprep.subr.mxu0 0.0
  %2427 = vmatpush1.msra.mxu0 0.0
  %2428 = vmatprep.subr.mxu0 0.0
  %2429 = vmatpush1.msra.mxu0 0.0
  %2430 = vmatprep.subr.mxu0 0.0
  %2431 = vmatpush1.msra.mxu0 0.0
  %2432 = vmatprep.subr.mxu0 0.0
  %2433 = vmatpush1.msra.mxu0 0.0
  %2434 = vmatprep.subr.mxu0 0.0
  %2435 = vmatpush1.msra.mxu0 0.0
  %2436 = vmatprep.subr.mxu0 0.0
  %2437 = vmatpush1.msra.mxu0 0.0
  %2438 = vmatprep.subr.mxu0 0.0
  %2439 = vmatpush1.msra.mxu0 0.0
  %2440 = vmatprep.subr.mxu0 0.0
  %2441 = vmatpush1.msra.mxu0 0.0
  %2442 = vmatprep.subr.mxu0 0.0
  %2443 = vmatpush1.msra.mxu0 0.0
  %2444 = vmatprep.subr.mxu0 0.0
  %2445 = vmatpush1.msra.mxu0 0.0
  %2446 = vmatprep.subr.mxu0 0.0
  %2447 = vmatpush1.msra.mxu0 0.0
  %2448 = vmatprep.subr.mxu0 0.0
  %2449 = vmatpush1.msra.mxu0 0.0
  %2450 = vmatprep.subr.mxu0 %v346
  %2451 = vmatpush1.msra.mxu0 %v345
  %2452 = vmatprep.subr.mxu0 %v209
  %2453 = vmatpush1.msra.mxu0 %v208
  %2454 = vmatprep.subr.mxu0 %v72
  %2455 = vmatpush1.msra.mxu0 %v71
  %2456 = vmatprep.subr.mxu0 0.0
  %2457 = vmatpush2.msra.mxu0 0.0
  %2458 = vmatprep.subr.mxu0 0.0
  %2459 = vmatpush2.msra.mxu0 0.0
  %2460 = vmatprep.subr.mxu0 0.0
  %2461 = vmatpush2.msra.mxu0 0.0
  %2462 = vmatprep.subr.mxu0 0.0
  %2463 = vmatpush2.msra.mxu0 0.0
  %2464 = vmatprep.subr.mxu0 0.0
  %2465 = vmatpush2.msra.mxu0 0.0
  %2466 = vmatprep.subr.mxu0 0.0
  %2467 = vmatpush2.msra.mxu0 0.0
  %2468 = vmatprep.subr.mxu0 0.0
  %2469 = vmatpush2.msra.mxu0 0.0
  %2470 = vmatprep.subr.mxu0 0.0
  %2471 = vmatpush2.msra.mxu0 0.0
  %2472 = vmatprep.subr.mxu0 0.0
  %2473 = vmatpush2.msra.mxu0 0.0
  %2474 = vmatprep.subr.mxu0 0.0
  %2475 = vmatpush2.msra.mxu0 0.0
  %2476 = vmatprep.subr.mxu0 0.0
  %2477 = vmatpush2.msra.mxu0 0.0
  %2478 = vmatprep.subr.mxu0 0.0
  %2479 = vmatpush2.msra.mxu0 0.0
  %2480 = vmatprep.subr.mxu0 0.0
  %2481 = vmatpush2.msra.mxu0 0.0
  %2482 = vmatprep.subr.mxu0 0.0
  %2483 = vmatpush2.msra.mxu0 0.0
  %2484 = vmatprep.subr.mxu0 0.0
  %2485 = vmatpush2.msra.mxu0 0.0
  %2486 = vmatprep.subr.mxu0 0.0
  %2487 = vmatpush2.msra.mxu0 0.0
  %2488 = vmatprep.mubr.f32.mxu0 0.0
  %2489 = vmatmul.mubr.f32.gmra.mxu0 %v434
  %v2490 = vpop.f32.mrf.mxu0
  %v2491 = vadd.f32 %v430, %v2490
  %v2492 = vpop.f32.mrf.mxu0
  %v2493 = vadd.f32 %v430, %v2492
  %2494 = vdwg.mxu0
  %2495 = vmatprep.subr.mxu0 0.0
  %2496 = vmatpush1.msra.mxu0 0.0
  %2497 = vmatprep.subr.mxu0 0.0
  %2498 = vmatpush1.msra.mxu0 0.0
  %2499 = vmatprep.subr.mxu0 0.0
  %2500 = vmatpush1.msra.mxu0 0.0
  %2501 = vmatprep.subr.mxu0 0.0
  %2502 = vmatpush1.msra.mxu0 0.0
  %2503 = vmatprep.subr.mxu0 0.0
  %2504 = vmatpush1.msra.mxu0 0.0
  %2505 = vmatprep.subr.mxu0 0.0
  %2506 = vmatpush1.msra.mxu0 0.0
  %2507 = vmatprep.subr.mxu0 0.0
  %2508 = vmatpush1.msra.mxu0 0.0
  %2509 = vmatprep.subr.mxu0 0.0
  %2510 = vmatpush1.msra.mxu0 0.0
  %2511 = vmatprep.subr.mxu0 0.0
  %2512 = vmatpush1.msra.mxu0 0.0
  %2513 = vmatprep.subr.mxu0 0.0
  %2514 = vmatpush1.msra.mxu0 0.0
  %2515 = vmatprep.subr.mxu0 0.0
  %2516 = vmatpush1.msra.mxu0 0.0
  %2517 = vmatprep.subr.mxu0 0.0
  %2518 = vmatpush1.msra.mxu0 0.0
  %2519 = vmatprep.subr.mxu0 0.0
  %2520 = vmatpush1.msra.mxu0 0.0
  %2521 = vmatprep.subr.mxu0 %v348
  %2522 = vmatpush1.msra.mxu0 %v347
  %2523 = vmatprep.subr.mxu0 %v211
  %2524 = vmatpush1.msra.mxu0 %v210
  %2525 = vmatprep.subr.mxu0 %v74
  %2526 = vmatpush1.msra.mxu0 %v73
  %2527 = vmatprep.subr.mxu0 0.0
  %2528 = vmatpush2.msra.mxu0 0.0
  %2529 = vmatprep.subr.mxu0 0.0
  %2530 = vmatpush2.msra.mxu0 0.0
  %2531 = vmatprep.subr.mxu0 0.0
  %2532 = vmatpush2.msra.mxu0 0.0
  %2533 = vmatprep.subr.mxu0 0.0
  %2534 = vmatpush2.msra.mxu0 0.0
  %2535 = vmatprep.subr.mxu0 0.0
  %2536 = vmatpush2.msra.mxu0 0.0
  %2537 = vmatprep.subr.mxu0 0.0
  %2538 = vmatpush2.msra.mxu0 0.0
  %2539 = vmatprep.subr.mxu0 0.0
  %2540 = vmatpush2.msra.mxu0 0.0
  %2541 = vmatprep.subr.mxu0 0.0
  %2542 = vmatpush2.msra.mxu0 0.0
  %2543 = vmatprep.subr.mxu0 0.0
  %2544 = vmatpush2.msra.mxu0 0.0
  %2545 = vmatprep.subr.mxu0 0.0
  %2546 = vmatpush2.msra.mxu0 0.0
  %2547 = vmatprep.subr.mxu0 0.0
  %2548 = vmatpush2.msra.mxu0 0.0
  %2549 = vmatprep.subr.mxu0 0.0
  %2550 = vmatpush2.msra.mxu0 0.0
  %2551 = vmatprep.subr.mxu0 0.0
  %2552 = vmatpush2.msra.mxu0 0.0
  %2553 = vmatprep.subr.mxu0 0.0
  %2554 = vmatpush2.msra.mxu0 0.0
  %2555 = vmatprep.subr.mxu0 0.0
  %2556 = vmatpush2.msra.mxu0 0.0
  %2557 = vmatprep.subr.mxu0 0.0
  %2558 = vmatpush2.msra.mxu0 0.0
  %2559 = vmatprep.mubr.f32.mxu0 0.0
  %2560 = vmatmul.mubr.f32.gmra.mxu0 %v434
  %v2561 = vpop.f32.mrf.mxu0
  %v2562 = vadd.f32 %v430, %v2561
  %v2563 = vpop.f32.mrf.mxu0
  %v2564 = vadd.f32 %v430, %v2563
  %2565 = vdwg.mxu0
  %2566 = vmatprep.subr.mxu0 0.0
  %2567 = vmatpush1.msra.mxu0 0.0
  %2568 = vmatprep.subr.mxu0 0.0
  %2569 = vmatpush1.msra.mxu0 0.0
  %2570 = vmatprep.subr.mxu0 0.0
  %2571 = vmatpush1.msra.mxu0 0.0
  %2572 = vmatprep.subr.mxu0 0.0
  %2573 = vmatpush1.msra.mxu0 0.0
  %2574 = vmatprep.subr.mxu0 0.0
  %2575 = vmatpush1.msra.mxu0 0.0
  %2576 = vmatprep.subr.mxu0 0.0
  %2577 = vmatpush1.msra.mxu0 0.0
  %2578 = vmatprep.subr.mxu0 0.0
  %2579 = vmatpush1.msra.mxu0 0.0
  %2580 = vmatprep.subr.mxu0 0.0
  %2581 = vmatpush1.msra.mxu0 0.0
  %2582 = vmatprep.subr.mxu0 0.0
  %2583 = vmatpush1.msra.mxu0 0.0
  %2584 = vmatprep.subr.mxu0 0.0
  %2585 = vmatpush1.msra.mxu0 0.0
  %2586 = vmatprep.subr.mxu0 0.0
  %2587 = vmatpush1.msra.mxu0 0.0
  %2588 = vmatprep.subr.mxu0 0.0
  %2589 = vmatpush1.msra.mxu0 0.0
  %2590 = vmatprep.subr.mxu0 0.0
  %2591 = vmatpush1.msra.mxu0 0.0
  %2592 = vmatprep.subr.mxu0 %v350
  %2593 = vmatpush1.msra.mxu0 %v349
  %2594 = vmatprep.subr.mxu0 %v213
  %2595 = vmatpush1.msra.mxu0 %v212
  %2596 = vmatprep.subr.mxu0 %v76
  %2597 = vmatpush1.msra.mxu0 %v75
  %2598 = vmatprep.subr.mxu0 0.0
  %2599 = vmatpush2.msra.mxu0 0.0
  %2600 = vmatprep.subr.mxu0 0.0
  %2601 = vmatpush2.msra.mxu0 0.0
  %2602 = vmatprep.subr.mxu0 0.0
  %2603 = vmatpush2.msra.mxu0 0.0
  %2604 = vmatprep.subr.mxu0 0.0
  %2605 = vmatpush2.msra.mxu0 0.0
  %2606 = vmatprep.subr.mxu0 0.0
  %2607 = vmatpush2.msra.mxu0 0.0
  %2608 = vmatprep.subr.mxu0 0.0
  %2609 = vmatpush2.msra.mxu0 0.0
  %2610 = vmatprep.subr.mxu0 0.0
  %2611 = vmatpush2.msra.mxu0 0.0
  %2612 = vmatprep.subr.mxu0 0.0
  %2613 = vmatpush2.msra.mxu0 0.0
  %2614 = vmatprep.subr.mxu0 0.0
  %2615 = vmatpush2.msra.mxu0 0.0
  %2616 = vmatprep.subr.mxu0 0.0
  %2617 = vmatpush2.msra.mxu0 0.0
  %2618 = vmatprep.subr.mxu0 0.0
  %2619 = vmatpush2.msra.mxu0 0.0
  %2620 = vmatprep.subr.mxu0 0.0
  %2621 = vmatpush2.msra.mxu0 0.0
  %2622 = vmatprep.subr.mxu0 0.0
  %2623 = vmatpush2.msra.mxu0 0.0
  %2624 = vmatprep.subr.mxu0 0.0
  %2625 = vmatpush2.msra.mxu0 0.0
  %2626 = vmatprep.subr.mxu0 0.0
  %2627 = vmatpush2.msra.mxu0 0.0
  %2628 = vmatprep.subr.mxu0 0.0
  %2629 = vmatpush2.msra.mxu0 0.0
  %2630 = vmatprep.mubr.f32.mxu0 0.0
  %2631 = vmatmul.mubr.f32.gmra.mxu0 %v434
  %v2632 = vpop.f32.mrf.mxu0
  %v2633 = vadd.f32 %v430, %v2632
  %v2634 = vpop.f32.mrf.mxu0
  %v2635 = vadd.f32 %v430, %v2634
  %2636 = vdwg.mxu0
  %2637 = vmatprep.subr.mxu0 0.0
  %2638 = vmatpush1.msra.mxu0 0.0
  %2639 = vmatprep.subr.mxu0 0.0
  %2640 = vmatpush1.msra.mxu0 0.0
  %2641 = vmatprep.subr.mxu0 0.0
  %2642 = vmatpush1.msra.mxu0 0.0
  %2643 = vmatprep.subr.mxu0 0.0
  %2644 = vmatpush1.msra.mxu0 0.0
  %2645 = vmatprep.subr.mxu0 0.0
  %2646 = vmatpush1.msra.mxu0 0.0
  %2647 = vmatprep.subr.mxu0 0.0
  %2648 = vmatpush1.msra.mxu0 0.0
  %2649 = vmatprep.subr.mxu0 0.0
  %2650 = vmatpush1.msra.mxu0 0.0
  %2651 = vmatprep.subr.mxu0 0.0
  %2652 = vmatpush1.msra.mxu0 0.0
  %2653 = vmatprep.subr.mxu0 0.0
  %2654 = vmatpush1.msra.mxu0 0.0
  %2655 = vmatprep.subr.mxu0 0.0
  %2656 = vmatpush1.msra.mxu0 0.0
  %2657 = vmatprep.subr.mxu0 0.0
  %2658 = vmatpush1.msra.mxu0 0.0
  %2659 = vmatprep.subr.mxu0 0.0
  %2660 = vmatpush1.msra.mxu0 0.0
  %2661 = vmatprep.subr.mxu0 0.0
  %2662 = vmatpush1.msra.mxu0 0.0
  %2663 = vmatprep.subr.mxu0 %v352
  %2664 = vmatpush1.msra.mxu0 %v351
  %2665 = vmatprep.subr.mxu0 %v215
  %2666 = vmatpush1.msra.mxu0 %v214
  %2667 = vmatprep.subr.mxu0 %v78
  %2668 = vmatpush1.msra.mxu0 %v77
  %2669 = vmatprep.subr.mxu0 0.0
  %2670 = vmatpush2.msra.mxu0 0.0
  %2671 = vmatprep.subr.mxu0 0.0
  %2672 = vmatpush2.msra.mxu0 0.0
  %2673 = vmatprep.subr.mxu0 0.0
  %2674 = vmatpush2.msra.mxu0 0.0
  %2675 = vmatprep.subr.mxu0 0.0
  %2676 = vmatpush2.msra.mxu0 0.0
  %2677 = vmatprep.subr.mxu0 0.0
  %2678 = vmatpush2.msra.mxu0 0.0
  %2679 = vmatprep.subr.mxu0 0.0
  %2680 = vmatpush2.msra.mxu0 0.0
  %2681 = vmatprep.subr.mxu0 0.0
  %2682 = vmatpush2.msra.mxu0 0.0
  %2683 = vmatprep.subr.mxu0 0.0
  %2684 = vmatpush2.msra.mxu0 0.0
  %2685 = vmatprep.subr.mxu0 0.0
  %2686 = vmatpush2.msra.mxu0 0.0
  %2687 = vmatprep.subr.mxu0 0.0
  %2688 = vmatpush2.msra.mxu0 0.0
  %2689 = vmatprep.subr.mxu0 0.0
  %2690 = vmatpush2.msra.mxu0 0.0
  %2691 = vmatprep.subr.mxu0 0.0
  %2692 = vmatpush2.msra.mxu0 0.0
  %2693 = vmatprep.subr.mxu0 0.0
  %2694 = vmatpush2.msra.mxu0 0.0
  %2695 = vmatprep.subr.mxu0 0.0
  %2696 = vmatpush2.msra.mxu0 0.0
  %2697 = vmatprep.subr.mxu0 0.0
  %2698 = vmatpush2.msra.mxu0 0.0
  %2699 = vmatprep.subr.mxu0 0.0
  %2700 = vmatpush2.msra.mxu0 0.0
  %2701 = vmatprep.mubr.f32.mxu0 0.0
  %2702 = vmatmul.mubr.f32.gmra.mxu0 %v434
  %v2703 = vpop.f32.mrf.mxu0
  %v2704 = vadd.f32 %v430, %v2703
  %v2705 = vpop.f32.mrf.mxu0
  %v2706 = vadd.f32 %v430, %v2705
  %2707 = vdwg.mxu0
  %2708 = vmatprep.subr.mxu0 0.0
  %2709 = vmatpush1.msra.mxu0 0.0
  %2710 = vmatprep.subr.mxu0 0.0
  %2711 = vmatpush1.msra.mxu0 0.0
  %2712 = vmatprep.subr.mxu0 0.0
  %2713 = vmatpush1.msra.mxu0 0.0
  %2714 = vmatprep.subr.mxu0 0.0
  %2715 = vmatpush1.msra.mxu0 0.0
  %2716 = vmatprep.subr.mxu0 0.0
  %2717 = vmatpush1.msra.mxu0 0.0
  %2718 = vmatprep.subr.mxu0 0.0
  %2719 = vmatpush1.msra.mxu0 0.0
  %2720 = vmatprep.subr.mxu0 0.0
  %2721 = vmatpush1.msra.mxu0 0.0
  %2722 = vmatprep.subr.mxu0 0.0
  %2723 = vmatpush1.msra.mxu0 0.0
  %2724 = vmatprep.subr.mxu0 0.0
  %2725 = vmatpush1.msra.mxu0 0.0
  %2726 = vmatprep.subr.mxu0 0.0
  %2727 = vmatpush1.msra.mxu0 0.0
  %2728 = vmatprep.subr.mxu0 0.0
  %2729 = vmatpush1.msra.mxu0 0.0
  %2730 = vmatprep.subr.mxu0 0.0
  %2731 = vmatpush1.msra.mxu0 0.0
  %2732 = vmatprep.subr.mxu0 0.0
  %2733 = vmatpush1.msra.mxu0 0.0
  %2734 = vmatprep.subr.mxu0 %v354
  %2735 = vmatpush1.msra.mxu0 %v353
  %2736 = vmatprep.subr.mxu0 %v217
  %2737 = vmatpush1.msra.mxu0 %v216
  %2738 = vmatprep.subr.mxu0 %v80
  %2739 = vmatpush1.msra.mxu0 %v79
  %2740 = vmatprep.subr.mxu0 0.0
  %2741 = vmatpush2.msra.mxu0 0.0
  %2742 = vmatprep.subr.mxu0 0.0
  %2743 = vmatpush2.msra.mxu0 0.0
  %2744 = vmatprep.subr.mxu0 0.0
  %2745 = vmatpush2.msra.mxu0 0.0
  %2746 = vmatprep.subr.mxu0 0.0
  %2747 = vmatpush2.msra.mxu0 0.0
  %2748 = vmatprep.subr.mxu0 0.0
  %2749 = vmatpush2.msra.mxu0 0.0
  %2750 = vmatprep.subr.mxu0 0.0
  %2751 = vmatpush2.msra.mxu0 0.0
  %2752 = vmatprep.subr.mxu0 0.0
  %2753 = vmatpush2.msra.mxu0 0.0
  %2754 = vmatprep.subr.mxu0 0.0
  %2755 = vmatpush2.msra.mxu0 0.0
  %2756 = vmatprep.subr.mxu0 0.0
  %2757 = vmatpush2.msra.mxu0 0.0
  %2758 = vmatprep.subr.mxu0 0.0
  %2759 = vmatpush2.msra.mxu0 0.0
  %2760 = vmatprep.subr.mxu0 0.0
  %2761 = vmatpush2.msra.mxu0 0.0
  %2762 = vmatprep.subr.mxu0 0.0
  %2763 = vmatpush2.msra.mxu0 0.0
  %2764 = vmatprep.subr.mxu0 0.0
  %2765 = vmatpush2.msra.mxu0 0.0
  %2766 = vmatprep.subr.mxu0 0.0
  %2767 = vmatpush2.msra.mxu0 0.0
  %2768 = vmatprep.subr.mxu0 0.0
  %2769 = vmatpush2.msra.mxu0 0.0
  %2770 = vmatprep.subr.mxu0 0.0
  %2771 = vmatpush2.msra.mxu0 0.0
  %2772 = vmatprep.mubr.f32.mxu0 0.0
  %2773 = vmatmul.mubr.f32.gmra.mxu0 %v434
  %v2774 = vpop.f32.mrf.mxu0
  %v2775 = vadd.f32 %v430, %v2774
  %v2776 = vpop.f32.mrf.mxu0
  %v2777 = vadd.f32 %v430, %v2776
  %2778 = vdwg.mxu0
  %2779 = vmatprep.subr.mxu0 0.0
  %2780 = vmatpush1.msra.mxu0 0.0
  %2781 = vmatprep.subr.mxu0 0.0
  %2782 = vmatpush1.msra.mxu0 0.0
  %2783 = vmatprep.subr.mxu0 0.0
  %2784 = vmatpush1.msra.mxu0 0.0
  %2785 = vmatprep.subr.mxu0 0.0
  %2786 = vmatpush1.msra.mxu0 0.0
  %2787 = vmatprep.subr.mxu0 0.0
  %2788 = vmatpush1.msra.mxu0 0.0
  %2789 = vmatprep.subr.mxu0 0.0
  %2790 = vmatpush1.msra.mxu0 0.0
  %2791 = vmatprep.subr.mxu0 0.0
  %2792 = vmatpush1.msra.mxu0 0.0
  %2793 = vmatprep.subr.mxu0 0.0
  %2794 = vmatpush1.msra.mxu0 0.0
  %2795 = vmatprep.subr.mxu0 0.0
  %2796 = vmatpush1.msra.mxu0 0.0
  %2797 = vmatprep.subr.mxu0 0.0
  %2798 = vmatpush1.msra.mxu0 0.0
  %2799 = vmatprep.subr.mxu0 0.0
  %2800 = vmatpush1.msra.mxu0 0.0
  %2801 = vmatprep.subr.mxu0 0.0
  %2802 = vmatpush1.msra.mxu0 0.0
  %2803 = vmatprep.subr.mxu0 0.0
  %2804 = vmatpush1.msra.mxu0 0.0
  %2805 = vmatprep.subr.mxu0 %v356
  %2806 = vmatpush1.msra.mxu0 %v355
  %2807 = vmatprep.subr.mxu0 %v219
  %2808 = vmatpush1.msra.mxu0 %v218
  %2809 = vmatprep.subr.mxu0 %v82
  %2810 = vmatpush1.msra.mxu0 %v81
  %2811 = vmatprep.subr.mxu0 0.0
  %2812 = vmatpush2.msra.mxu0 0.0
  %2813 = vmatprep.subr.mxu0 0.0
  %2814 = vmatpush2.msra.mxu0 0.0
  %2815 = vmatprep.subr.mxu0 0.0
  %2816 = vmatpush2.msra.mxu0 0.0
  %2817 = vmatprep.subr.mxu0 0.0
  %2818 = vmatpush2.msra.mxu0 0.0
  %2819 = vmatprep.subr.mxu0 0.0
  %2820 = vmatpush2.msra.mxu0 0.0
  %2821 = vmatprep.subr.mxu0 0.0
  %2822 = vmatpush2.msra.mxu0 0.0
  %2823 = vmatprep.subr.mxu0 0.0
  %2824 = vmatpush2.msra.mxu0 0.0
  %2825 = vmatprep.subr.mxu0 0.0
  %2826 = vmatpush2.msra.mxu0 0.0
  %2827 = vmatprep.subr.mxu0 0.0
  %2828 = vmatpush2.msra.mxu0 0.0
  %2829 = vmatprep.subr.mxu0 0.0
  %2830 = vmatpush2.msra.mxu0 0.0
  %2831 = vmatprep.subr.mxu0 0.0
  %2832 = vmatpush2.msra.mxu0 0.0
  %2833 = vmatprep.subr.mxu0 0.0
  %2834 = vmatpush2.msra.mxu0 0.0
  %2835 = vmatprep.subr.mxu0 0.0
  %2836 = vmatpush2.msra.mxu0 0.0
  %2837 = vmatprep.subr.mxu0 0.0
  %2838 = vmatpush2.msra.mxu0 0.0
  %2839 = vmatprep.subr.mxu0 0.0
  %2840 = vmatpush2.msra.mxu0 0.0
  %2841 = vmatprep.subr.mxu0 0.0
  %2842 = vmatpush2.msra.mxu0 0.0
  %2843 = vmatprep.mubr.f32.mxu0 0.0
  %2844 = vmatmul.mubr.f32.gmra.mxu0 %v434
  %v2845 = vpop.f32.mrf.mxu0
  %v2846 = vadd.f32 %v430, %v2845
  %v2847 = vpop.f32.mrf.mxu0
  %v2848 = vadd.f32 %v430, %v2847
  %2849 = vdwg.mxu0
  %2850 = vmatprep.subr.mxu0 0.0
  %2851 = vmatpush1.msra.mxu0 0.0
  %2852 = vmatprep.subr.mxu0 0.0
  %2853 = vmatpush1.msra.mxu0 0.0
  %2854 = vmatprep.subr.mxu0 0.0
  %2855 = vmatpush1.msra.mxu0 0.0
  %2856 = vmatprep.subr.mxu0 0.0
  %2857 = vmatpush1.msra.mxu0 0.0
  %2858 = vmatprep.subr.mxu0 0.0
  %2859 = vmatpush1.msra.mxu0 0.0
  %2860 = vmatprep.subr.mxu0 0.0
  %2861 = vmatpush1.msra.mxu0 0.0
  %2862 = vmatprep.subr.mxu0 0.0
  %2863 = vmatpush1.msra.mxu0 0.0
  %2864 = vmatprep.subr.mxu0 0.0
  %2865 = vmatpush1.msra.mxu0 0.0
  %2866 = vmatprep.subr.mxu0 0.0
  %2867 = vmatpush1.msra.mxu0 0.0
  %2868 = vmatprep.subr.mxu0 0.0
  %2869 = vmatpush1.msra.mxu0 0.0
  %2870 = vmatprep.subr.mxu0 0.0
  %2871 = vmatpush1.msra.mxu0 0.0
  %2872 = vmatprep.subr.mxu0 0.0
  %2873 = vmatpush1.msra.mxu0 0.0
  %2874 = vmatprep.subr.mxu0 0.0
  %2875 = vmatpush1.msra.mxu0 0.0
  %2876 = vmatprep.subr.mxu0 %v358
  %2877 = vmatpush1.msra.mxu0 %v357
  %2878 = vmatprep.subr.mxu0 %v221
  %2879 = vmatpush1.msra.mxu0 %v220
  %2880 = vmatprep.subr.mxu0 %v84
  %2881 = vmatpush1.msra.mxu0 %v83
  %2882 = vmatprep.subr.mxu0 0.0
  %2883 = vmatpush2.msra.mxu0 0.0
  %2884 = vmatprep.subr.mxu0 0.0
  %2885 = vmatpush2.msra.mxu0 0.0
  %2886 = vmatprep.subr.mxu0 0.0
  %2887 = vmatpush2.msra.mxu0 0.0
  %2888 = vmatprep.subr.mxu0 0.0
  %2889 = vmatpush2.msra.mxu0 0.0
  %2890 = vmatprep.subr.mxu0 0.0
  %2891 = vmatpush2.msra.mxu0 0.0
  %2892 = vmatprep.subr.mxu0 0.0
  %2893 = vmatpush2.msra.mxu0 0.0
  %2894 = vmatprep.subr.mxu0 0.0
  %2895 = vmatpush2.msra.mxu0 0.0
  %2896 = vmatprep.subr.mxu0 0.0
  %2897 = vmatpush2.msra.mxu0 0.0
  %2898 = vmatprep.subr.mxu0 0.0
  %2899 = vmatpush2.msra.mxu0 0.0
  %2900 = vmatprep.subr.mxu0 0.0
  %2901 = vmatpush2.msra.mxu0 0.0
  %2902 = vmatprep.subr.mxu0 0.0
  %2903 = vmatpush2.msra.mxu0 0.0
  %2904 = vmatprep.subr.mxu0 0.0
  %2905 = vmatpush2.msra.mxu0 0.0
  %2906 = vmatprep.subr.mxu0 0.0
  %2907 = vmatpush2.msra.mxu0 0.0
  %2908 = vmatprep.subr.mxu0 0.0
  %2909 = vmatpush2.msra.mxu0 0.0
  %2910 = vmatprep.subr.mxu0 0.0
  %2911 = vmatpush2.msra.mxu0 0.0
  %2912 = vmatprep.subr.mxu0 0.0
  %2913 = vmatpush2.msra.mxu0 0.0
  %2914 = vmatprep.mubr.f32.mxu0 0.0
  %2915 = vmatmul.mubr.f32.gmra.mxu0 %v434
  %v2916 = vpop.f32.mrf.mxu0
  %v2917 = vadd.f32 %v430, %v2916
  %v2918 = vpop.f32.mrf.mxu0
  %v2919 = vadd.f32 %v430, %v2918
  %2920 = vdwg.mxu0
  %2921 = vmatprep.subr.mxu0 0.0
  %2922 = vmatpush1.msra.mxu0 0.0
  %2923 = vmatprep.subr.mxu0 0.0
  %2924 = vmatpush1.msra.mxu0 0.0
  %2925 = vmatprep.subr.mxu0 0.0
  %2926 = vmatpush1.msra.mxu0 0.0
  %2927 = vmatprep.subr.mxu0 0.0
  %2928 = vmatpush1.msra.mxu0 0.0
  %2929 = vmatprep.subr.mxu0 0.0
  %2930 = vmatpush1.msra.mxu0 0.0
  %2931 = vmatprep.subr.mxu0 0.0
  %2932 = vmatpush1.msra.mxu0 0.0
  %2933 = vmatprep.subr.mxu0 0.0
  %2934 = vmatpush1.msra.mxu0 0.0
  %2935 = vmatprep.subr.mxu0 0.0
  %2936 = vmatpush1.msra.mxu0 0.0
  %2937 = vmatprep.subr.mxu0 0.0
  %2938 = vmatpush1.msra.mxu0 0.0
  %2939 = vmatprep.subr.mxu0 0.0
  %2940 = vmatpush1.msra.mxu0 0.0
  %2941 = vmatprep.subr.mxu0 0.0
  %2942 = vmatpush1.msra.mxu0 0.0
  %2943 = vmatprep.subr.mxu0 0.0
  %2944 = vmatpush1.msra.mxu0 0.0
  %2945 = vmatprep.subr.mxu0 0.0
  %2946 = vmatpush1.msra.mxu0 0.0
  %2947 = vmatprep.subr.mxu0 %v360
  %2948 = vmatpush1.msra.mxu0 %v359
  %2949 = vmatprep.subr.mxu0 %v223
  %2950 = vmatpush1.msra.mxu0 %v222
  %2951 = vmatprep.subr.mxu0 %v86
  %2952 = vmatpush1.msra.mxu0 %v85
  %2953 = vmatprep.subr.mxu0 0.0
  %2954 = vmatpush2.msra.mxu0 0.0
  %2955 = vmatprep.subr.mxu0 0.0
  %2956 = vmatpush2.msra.mxu0 0.0
  %2957 = vmatprep.subr.mxu0 0.0
  %2958 = vmatpush2.msra.mxu0 0.0
  %2959 = vmatprep.subr.mxu0 0.0
  %2960 = vmatpush2.msra.mxu0 0.0
  %2961 = vmatprep.subr.mxu0 0.0
  %2962 = vmatpush2.msra.mxu0 0.0
  %2963 = vmatprep.subr.mxu0 0.0
  %2964 = vmatpush2.msra.mxu0 0.0
  %2965 = vmatprep.subr.mxu0 0.0
  %2966 = vmatpush2.msra.mxu0 0.0
  %2967 = vmatprep.subr.mxu0 0.0
  %2968 = vmatpush2.msra.mxu0 0.0
  %2969 = vmatprep.subr.mxu0 0.0
  %2970 = vmatpush2.msra.mxu0 0.0
  %2971 = vmatprep.subr.mxu0 0.0
  %2972 = vmatpush2.msra.mxu0 0.0
  %2973 = vmatprep.subr.mxu0 0.0
  %2974 = vmatpush2.msra.mxu0 0.0
  %2975 = vmatprep.subr.mxu0 0.0
  %2976 = vmatpush2.msra.mxu0 0.0
  %2977 = vmatprep.subr.mxu0 0.0
  %2978 = vmatpush2.msra.mxu0 0.0
  %2979 = vmatprep.subr.mxu0 0.0
  %2980 = vmatpush2.msra.mxu0 0.0
  %2981 = vmatprep.subr.mxu0 0.0
  %2982 = vmatpush2.msra.mxu0 0.0
  %2983 = vmatprep.subr.mxu0 0.0
  %2984 = vmatpush2.msra.mxu0 0.0
  %2985 = vmatprep.mubr.f32.mxu0 0.0
  %2986 = vmatmul.mubr.f32.gmra.mxu0 %v434
  %v2987 = vpop.f32.mrf.mxu0
  %v2988 = vadd.f32 %v430, %v2987
  %v2989 = vpop.f32.mrf.mxu0
  %v2990 = vadd.f32 %v430, %v2989
  %2991 = vdwg.mxu0
  %2992 = vmatprep.subr.mxu0 0.0
  %2993 = vmatpush1.msra.mxu0 0.0
  %2994 = vmatprep.subr.mxu0 0.0
  %2995 = vmatpush1.msra.mxu0 0.0
  %2996 = vmatprep.subr.mxu0 0.0
  %2997 = vmatpush1.msra.mxu0 0.0
  %2998 = vmatprep.subr.mxu0 0.0
  %2999 = vmatpush1.msra.mxu0 0.0
  %3000 = vmatprep.subr.mxu0 0.0
  %3001 = vmatpush1.msra.mxu0 0.0
  %3002 = vmatprep.subr.mxu0 0.0
  %3003 = vmatpush1.msra.mxu0 0.0
  %3004 = vmatprep.subr.mxu0 0.0
  %3005 = vmatpush1.msra.mxu0 0.0
  %3006 = vmatprep.subr.mxu0 0.0
  %3007 = vmatpush1.msra.mxu0 0.0
  %3008 = vmatprep.subr.mxu0 0.0
  %3009 = vmatpush1.msra.mxu0 0.0
  %3010 = vmatprep.subr.mxu0 0.0
  %3011 = vmatpush1.msra.mxu0 0.0
  %3012 = vmatprep.subr.mxu0 0.0
  %3013 = vmatpush1.msra.mxu0 0.0
  %3014 = vmatprep.subr.mxu0 0.0
  %3015 = vmatpush1.msra.mxu0 0.0
  %3016 = vmatprep.subr.mxu0 0.0
  %3017 = vmatpush1.msra.mxu0 0.0
  %3018 = vmatprep.subr.mxu0 %v362
  %3019 = vmatpush1.msra.mxu0 %v361
  %3020 = vmatprep.subr.mxu0 %v225
  %3021 = vmatpush1.msra.mxu0 %v224
  %3022 = vmatprep.subr.mxu0 %v88
  %3023 = vmatpush1.msra.mxu0 %v87
  %3024 = vmatprep.subr.mxu0 0.0
  %3025 = vmatpush2.msra.mxu0 0.0
  %3026 = vmatprep.subr.mxu0 0.0
  %3027 = vmatpush2.msra.mxu0 0.0
  %3028 = vmatprep.subr.mxu0 0.0
  %3029 = vmatpush2.msra.mxu0 0.0
  %3030 = vmatprep.subr.mxu0 0.0
  %3031 = vmatpush2.msra.mxu0 0.0
  %3032 = vmatprep.subr.mxu0 0.0
  %3033 = vmatpush2.msra.mxu0 0.0
  %3034 = vmatprep.subr.mxu0 0.0
  %3035 = vmatpush2.msra.mxu0 0.0
  %3036 = vmatprep.subr.mxu0 0.0
  %3037 = vmatpush2.msra.mxu0 0.0
  %3038 = vmatprep.subr.mxu0 0.0
  %3039 = vmatpush2.msra.mxu0 0.0
  %3040 = vmatprep.subr.mxu0 0.0
  %3041 = vmatpush2.msra.mxu0 0.0
  %3042 = vmatprep.subr.mxu0 0.0
  %3043 = vmatpush2.msra.mxu0 0.0
  %3044 = vmatprep.subr.mxu0 0.0
  %3045 = vmatpush2.msra.mxu0 0.0
  %3046 = vmatprep.subr.mxu0 0.0
  %3047 = vmatpush2.msra.mxu0 0.0
  %3048 = vmatprep.subr.mxu0 0.0
  %3049 = vmatpush2.msra.mxu0 0.0
  %3050 = vmatprep.subr.mxu0 0.0
  %3051 = vmatpush2.msra.mxu0 0.0
  %3052 = vmatprep.subr.mxu0 0.0
  %3053 = vmatpush2.msra.mxu0 0.0
  %3054 = vmatprep.subr.mxu0 0.0
  %3055 = vmatpush2.msra.mxu0 0.0
  %3056 = vmatprep.mubr.f32.mxu0 0.0
  %3057 = vmatmul.mubr.f32.gmra.mxu0 %v434
  %v3058 = vpop.f32.mrf.mxu0
  %v3059 = vadd.f32 %v430, %v3058
  %v3060 = vpop.f32.mrf.mxu0
  %v3061 = vadd.f32 %v430, %v3060
  %3062 = vdwg.mxu0
  %3063 = vmatprep.subr.mxu0 0.0
  %3064 = vmatpush1.msra.mxu0 0.0
  %3065 = vmatprep.subr.mxu0 0.0
  %3066 = vmatpush1.msra.mxu0 0.0
  %3067 = vmatprep.subr.mxu0 0.0
  %3068 = vmatpush1.msra.mxu0 0.0
  %3069 = vmatprep.subr.mxu0 0.0
  %3070 = vmatpush1.msra.mxu0 0.0
  %3071 = vmatprep.subr.mxu0 0.0
  %3072 = vmatpush1.msra.mxu0 0.0
  %3073 = vmatprep.subr.mxu0 0.0
  %3074 = vmatpush1.msra.mxu0 0.0
  %3075 = vmatprep.subr.mxu0 0.0
  %3076 = vmatpush1.msra.mxu0 0.0
  %3077 = vmatprep.subr.mxu0 0.0
  %3078 = vmatpush1.msra.mxu0 0.0
  %3079 = vmatprep.subr.mxu0 0.0
  %3080 = vmatpush1.msra.mxu0 0.0
  %3081 = vmatprep.subr.mxu0 0.0
  %3082 = vmatpush1.msra.mxu0 0.0
  %3083 = vmatprep.subr.mxu0 0.0
  %3084 = vmatpush1.msra.mxu0 0.0
  %3085 = vmatprep.subr.mxu0 0.0
  %3086 = vmatpush1.msra.mxu0 0.0
  %3087 = vmatprep.subr.mxu0 0.0
  %3088 = vmatpush1.msra.mxu0 0.0
  %3089 = vmatprep.subr.mxu0 %v364
  %3090 = vmatpush1.msra.mxu0 %v363
  %3091 = vmatprep.subr.mxu0 %v227
  %3092 = vmatpush1.msra.mxu0 %v226
  %3093 = vmatprep.subr.mxu0 %v90
  %3094 = vmatpush1.msra.mxu0 %v89
  %3095 = vmatprep.subr.mxu0 0.0
  %3096 = vmatpush2.msra.mxu0 0.0
  %3097 = vmatprep.subr.mxu0 0.0
  %3098 = vmatpush2.msra.mxu0 0.0
  %3099 = vmatprep.subr.mxu0 0.0
  %3100 = vmatpush2.msra.mxu0 0.0
  %3101 = vmatprep.subr.mxu0 0.0
  %3102 = vmatpush2.msra.mxu0 0.0
  %3103 = vmatprep.subr.mxu0 0.0
  %3104 = vmatpush2.msra.mxu0 0.0
  %3105 = vmatprep.subr.mxu0 0.0
  %3106 = vmatpush2.msra.mxu0 0.0
  %3107 = vmatprep.subr.mxu0 0.0
  %3108 = vmatpush2.msra.mxu0 0.0
  %3109 = vmatprep.subr.mxu0 0.0
  %3110 = vmatpush2.msra.mxu0 0.0
  %3111 = vmatprep.subr.mxu0 0.0
  %3112 = vmatpush2.msra.mxu0 0.0
  %3113 = vmatprep.subr.mxu0 0.0
  %3114 = vmatpush2.msra.mxu0 0.0
  %3115 = vmatprep.subr.mxu0 0.0
  %3116 = vmatpush2.msra.mxu0 0.0
  %3117 = vmatprep.subr.mxu0 0.0
  %3118 = vmatpush2.msra.mxu0 0.0
  %3119 = vmatprep.subr.mxu0 0.0
  %3120 = vmatpush2.msra.mxu0 0.0
  %3121 = vmatprep.subr.mxu0 0.0
  %3122 = vmatpush2.msra.mxu0 0.0
  %3123 = vmatprep.subr.mxu0 0.0
  %3124 = vmatpush2.msra.mxu0 0.0
  %3125 = vmatprep.subr.mxu0 0.0
  %3126 = vmatpush2.msra.mxu0 0.0
  %3127 = vmatprep.mubr.f32.mxu0 0.0
  %3128 = vmatmul.mubr.f32.gmra.mxu0 %v434
  %v3129 = vpop.f32.mrf.mxu0
  %v3130 = vadd.f32 %v430, %v3129
  %v3131 = vpop.f32.mrf.mxu0
  %v3132 = vadd.f32 %v430, %v3131
  %3133 = vdwg.mxu0
  %3134 = vmatprep.subr.mxu0 0.0
  %3135 = vmatpush1.msra.mxu0 0.0
  %3136 = vmatprep.subr.mxu0 0.0
  %3137 = vmatpush1.msra.mxu0 0.0
  %3138 = vmatprep.subr.mxu0 0.0
  %3139 = vmatpush1.msra.mxu0 0.0
  %3140 = vmatprep.subr.mxu0 0.0
  %3141 = vmatpush1.msra.mxu0 0.0
  %3142 = vmatprep.subr.mxu0 0.0
  %3143 = vmatpush1.msra.mxu0 0.0
  %3144 = vmatprep.subr.mxu0 0.0
  %3145 = vmatpush1.msra.mxu0 0.0
  %3146 = vmatprep.subr.mxu0 0.0
  %3147 = vmatpush1.msra.mxu0 0.0
  %3148 = vmatprep.subr.mxu0 0.0
  %3149 = vmatpush1.msra.mxu0 0.0
  %3150 = vmatprep.subr.mxu0 0.0
  %3151 = vmatpush1.msra.mxu0 0.0
  %3152 = vmatprep.subr.mxu0 0.0
  %3153 = vmatpush1.msra.mxu0 0.0
  %3154 = vmatprep.subr.mxu0 0.0
  %3155 = vmatpush1.msra.mxu0 0.0
  %3156 = vmatprep.subr.mxu0 0.0
  %3157 = vmatpush1.msra.mxu0 0.0
  %3158 = vmatprep.subr.mxu0 0.0
  %3159 = vmatpush1.msra.mxu0 0.0
  %3160 = vmatprep.subr.mxu0 %v366
  %3161 = vmatpush1.msra.mxu0 %v365
  %3162 = vmatprep.subr.mxu0 %v229
  %3163 = vmatpush1.msra.mxu0 %v228
  %3164 = vmatprep.subr.mxu0 %v92
  %3165 = vmatpush1.msra.mxu0 %v91
  %3166 = vmatprep.subr.mxu0 0.0
  %3167 = vmatpush2.msra.mxu0 0.0
  %3168 = vmatprep.subr.mxu0 0.0
  %3169 = vmatpush2.msra.mxu0 0.0
  %3170 = vmatprep.subr.mxu0 0.0
  %3171 = vmatpush2.msra.mxu0 0.0
  %3172 = vmatprep.subr.mxu0 0.0
  %3173 = vmatpush2.msra.mxu0 0.0
  %3174 = vmatprep.subr.mxu0 0.0
  %3175 = vmatpush2.msra.mxu0 0.0
  %3176 = vmatprep.subr.mxu0 0.0
  %3177 = vmatpush2.msra.mxu0 0.0
  %3178 = vmatprep.subr.mxu0 0.0
  %3179 = vmatpush2.msra.mxu0 0.0
  %3180 = vmatprep.subr.mxu0 0.0
  %3181 = vmatpush2.msra.mxu0 0.0
  %3182 = vmatprep.subr.mxu0 0.0
  %3183 = vmatpush2.msra.mxu0 0.0
  %3184 = vmatprep.subr.mxu0 0.0
  %3185 = vmatpush2.msra.mxu0 0.0
  %3186 = vmatprep.subr.mxu0 0.0
  %3187 = vmatpush2.msra.mxu0 0.0
  %3188 = vmatprep.subr.mxu0 0.0
  %3189 = vmatpush2.msra.mxu0 0.0
  %3190 = vmatprep.subr.mxu0 0.0
  %3191 = vmatpush2.msra.mxu0 0.0
  %3192 = vmatprep.subr.mxu0 0.0
  %3193 = vmatpush2.msra.mxu0 0.0
  %3194 = vmatprep.subr.mxu0 0.0
  %3195 = vmatpush2.msra.mxu0 0.0
  %3196 = vmatprep.subr.mxu0 0.0
  %3197 = vmatpush2.msra.mxu0 0.0
  %3198 = vmatprep.mubr.f32.mxu0 0.0
  %3199 = vmatmul.mubr.f32.gmra.mxu0 %v434
  %v3200 = vpop.f32.mrf.mxu0
  %v3201 = vadd.f32 %v430, %v3200
  %v3202 = vpop.f32.mrf.mxu0
  %v3203 = vadd.f32 %v430, %v3202
  %3204 = vdwg.mxu0
  %3205 = vmatprep.subr.mxu0 0.0
  %3206 = vmatpush1.msra.mxu0 0.0
  %3207 = vmatprep.subr.mxu0 0.0
  %3208 = vmatpush1.msra.mxu0 0.0
  %3209 = vmatprep.subr.mxu0 0.0
  %3210 = vmatpush1.msra.mxu0 0.0
  %3211 = vmatprep.subr.mxu0 0.0
  %3212 = vmatpush1.msra.mxu0 0.0
  %3213 = vmatprep.subr.mxu0 0.0
  %3214 = vmatpush1.msra.mxu0 0.0
  %3215 = vmatprep.subr.mxu0 0.0
  %3216 = vmatpush1.msra.mxu0 0.0
  %3217 = vmatprep.subr.mxu0 0.0
  %3218 = vmatpush1.msra.mxu0 0.0
  %3219 = vmatprep.subr.mxu0 0.0
  %3220 = vmatpush1.msra.mxu0 0.0
  %3221 = vmatprep.subr.mxu0 0.0
  %3222 = vmatpush1.msra.mxu0 0.0
  %3223 = vmatprep.subr.mxu0 0.0
  %3224 = vmatpush1.msra.mxu0 0.0
  %3225 = vmatprep.subr.mxu0 0.0
  %3226 = vmatpush1.msra.mxu0 0.0
  %3227 = vmatprep.subr.mxu0 0.0
  %3228 = vmatpush1.msra.mxu0 0.0
  %3229 = vmatprep.subr.mxu0 0.0
  %3230 = vmatpush1.msra.mxu0 0.0
  %3231 = vmatprep.subr.mxu0 %v368
  %3232 = vmatpush1.msra.mxu0 %v367
  %3233 = vmatprep.subr.mxu0 %v231
  %3234 = vmatpush1.msra.mxu0 %v230
  %3235 = vmatprep.subr.mxu0 %v94
  %3236 = vmatpush1.msra.mxu0 %v93
  %3237 = vmatprep.subr.mxu0 0.0
  %3238 = vmatpush2.msra.mxu0 0.0
  %3239 = vmatprep.subr.mxu0 0.0
  %3240 = vmatpush2.msra.mxu0 0.0
  %3241 = vmatprep.subr.mxu0 0.0
  %3242 = vmatpush2.msra.mxu0 0.0
  %3243 = vmatprep.subr.mxu0 0.0
  %3244 = vmatpush2.msra.mxu0 0.0
  %3245 = vmatprep.subr.mxu0 0.0
  %3246 = vmatpush2.msra.mxu0 0.0
  %3247 = vmatprep.subr.mxu0 0.0
  %3248 = vmatpush2.msra.mxu0 0.0
  %3249 = vmatprep.subr.mxu0 0.0
  %3250 = vmatpush2.msra.mxu0 0.0
  %3251 = vmatprep.subr.mxu0 0.0
  %3252 = vmatpush2.msra.mxu0 0.0
  %3253 = vmatprep.subr.mxu0 0.0
  %3254 = vmatpush2.msra.mxu0 0.0
  %3255 = vmatprep.subr.mxu0 0.0
  %3256 = vmatpush2.msra.mxu0 0.0
  %3257 = vmatprep.subr.mxu0 0.0
  %3258 = vmatpush2.msra.mxu0 0.0
  %3259 = vmatprep.subr.mxu0 0.0
  %3260 = vmatpush2.msra.mxu0 0.0
  %3261 = vmatprep.subr.mxu0 0.0
  %3262 = vmatpush2.msra.mxu0 0.0
  %3263 = vmatprep.subr.mxu0 0.0
  %3264 = vmatpush2.msra.mxu0 0.0
  %3265 = vmatprep.subr.mxu0 0.0
  %3266 = vmatpush2.msra.mxu0 0.0
  %3267 = vmatprep.subr.mxu0 0.0
  %3268 = vmatpush2.msra.mxu0 0.0
  %3269 = vmatprep.mubr.f32.mxu0 0.0
  %3270 = vmatmul.mubr.f32.gmra.mxu0 %v434
  %v3271 = vpop.f32.mrf.mxu0
  %v3272 = vadd.f32 %v430, %v3271
  %v3273 = vpop.f32.mrf.mxu0
  %v3274 = vadd.f32 %v430, %v3273
  %3275 = vdwg.mxu0
  %3276 = vmatprep.subr.mxu0 0.0
  %3277 = vmatpush1.msra.mxu0 0.0
  %3278 = vmatprep.subr.mxu0 0.0
  %3279 = vmatpush1.msra.mxu0 0.0
  %3280 = vmatprep.subr.mxu0 0.0
  %3281 = vmatpush1.msra.mxu0 0.0
  %3282 = vmatprep.subr.mxu0 0.0
  %3283 = vmatpush1.msra.mxu0 0.0
  %3284 = vmatprep.subr.mxu0 0.0
  %3285 = vmatpush1.msra.mxu0 0.0
  %3286 = vmatprep.subr.mxu0 0.0
  %3287 = vmatpush1.msra.mxu0 0.0
  %3288 = vmatprep.subr.mxu0 0.0
  %3289 = vmatpush1.msra.mxu0 0.0
  %3290 = vmatprep.subr.mxu0 0.0
  %3291 = vmatpush1.msra.mxu0 0.0
  %3292 = vmatprep.subr.mxu0 0.0
  %3293 = vmatpush1.msra.mxu0 0.0
  %3294 = vmatprep.subr.mxu0 0.0
  %3295 = vmatpush1.msra.mxu0 0.0
  %3296 = vmatprep.subr.mxu0 0.0
  %3297 = vmatpush1.msra.mxu0 0.0
  %3298 = vmatprep.subr.mxu0 0.0
  %3299 = vmatpush1.msra.mxu0 0.0
  %3300 = vmatprep.subr.mxu0 0.0
  %3301 = vmatpush1.msra.mxu0 0.0
  %3302 = vmatprep.subr.mxu0 %v370
  %3303 = vmatpush1.msra.mxu0 %v369
  %3304 = vmatprep.subr.mxu0 %v233
  %3305 = vmatpush1.msra.mxu0 %v232
  %3306 = vmatprep.subr.mxu0 %v96
  %3307 = vmatpush1.msra.mxu0 %v95
  %3308 = vmatprep.subr.mxu0 0.0
  %3309 = vmatpush2.msra.mxu0 0.0
  %3310 = vmatprep.subr.mxu0 0.0
  %3311 = vmatpush2.msra.mxu0 0.0
  %3312 = vmatprep.subr.mxu0 0.0
  %3313 = vmatpush2.msra.mxu0 0.0
  %3314 = vmatprep.subr.mxu0 0.0
  %3315 = vmatpush2.msra.mxu0 0.0
  %3316 = vmatprep.subr.mxu0 0.0
  %3317 = vmatpush2.msra.mxu0 0.0
  %3318 = vmatprep.subr.mxu0 0.0
  %3319 = vmatpush2.msra.mxu0 0.0
  %3320 = vmatprep.subr.mxu0 0.0
  %3321 = vmatpush2.msra.mxu0 0.0
  %3322 = vmatprep.subr.mxu0 0.0
  %3323 = vmatpush2.msra.mxu0 0.0
  %3324 = vmatprep.subr.mxu0 0.0
  %3325 = vmatpush2.msra.mxu0 0.0
  %3326 = vmatprep.subr.mxu0 0.0
  %3327 = vmatpush2.msra.mxu0 0.0
  %3328 = vmatprep.subr.mxu0 0.0
  %3329 = vmatpush2.msra.mxu0 0.0
  %3330 = vmatprep.subr.mxu0 0.0
  %3331 = vmatpush2.msra.mxu0 0.0
  %3332 = vmatprep.subr.mxu0 0.0
  %3333 = vmatpush2.msra.mxu0 0.0
  %3334 = vmatprep.subr.mxu0 0.0
  %3335 = vmatpush2.msra.mxu0 0.0
  %3336 = vmatprep.subr.mxu0 0.0
  %3337 = vmatpush2.msra.mxu0 0.0
  %3338 = vmatprep.subr.mxu0 0.0
  %3339 = vmatpush2.msra.mxu0 0.0
  %3340 = vmatprep.mubr.f32.mxu0 0.0
  %3341 = vmatmul.mubr.f32.gmra.mxu0 %v434
  %v3342 = vpop.f32.mrf.mxu0
  %v3343 = vadd.f32 %v430, %v3342
  %v3344 = vpop.f32.mrf.mxu0
  %v3345 = vadd.f32 %v430, %v3344
  %3346 = vdwg.mxu0
  %3347 = vmatprep.subr.mxu0 0.0
  %3348 = vmatpush1.msra.mxu0 0.0
  %3349 = vmatprep.subr.mxu0 0.0
  %3350 = vmatpush1.msra.mxu0 0.0
  %3351 = vmatprep.subr.mxu0 0.0
  %3352 = vmatpush1.msra.mxu0 0.0
  %3353 = vmatprep.subr.mxu0 0.0
  %3354 = vmatpush1.msra.mxu0 0.0
  %3355 = vmatprep.subr.mxu0 0.0
  %3356 = vmatpush1.msra.mxu0 0.0
  %3357 = vmatprep.subr.mxu0 0.0
  %3358 = vmatpush1.msra.mxu0 0.0
  %3359 = vmatprep.subr.mxu0 0.0
  %3360 = vmatpush1.msra.mxu0 0.0
  %3361 = vmatprep.subr.mxu0 0.0
  %3362 = vmatpush1.msra.mxu0 0.0
  %3363 = vmatprep.subr.mxu0 0.0
  %3364 = vmatpush1.msra.mxu0 0.0
  %3365 = vmatprep.subr.mxu0 0.0
  %3366 = vmatpush1.msra.mxu0 0.0
  %3367 = vmatprep.subr.mxu0 0.0
  %3368 = vmatpush1.msra.mxu0 0.0
  %3369 = vmatprep.subr.mxu0 0.0
  %3370 = vmatpush1.msra.mxu0 0.0
  %3371 = vmatprep.subr.mxu0 0.0
  %3372 = vmatpush1.msra.mxu0 0.0
  %3373 = vmatprep.subr.mxu0 %v372
  %3374 = vmatpush1.msra.mxu0 %v371
  %3375 = vmatprep.subr.mxu0 %v235
  %3376 = vmatpush1.msra.mxu0 %v234
  %3377 = vmatprep.subr.mxu0 %v98
  %3378 = vmatpush1.msra.mxu0 %v97
  %3379 = vmatprep.subr.mxu0 0.0
  %3380 = vmatpush2.msra.mxu0 0.0
  %3381 = vmatprep.subr.mxu0 0.0
  %3382 = vmatpush2.msra.mxu0 0.0
  %3383 = vmatprep.subr.mxu0 0.0
  %3384 = vmatpush2.msra.mxu0 0.0
  %3385 = vmatprep.subr.mxu0 0.0
  %3386 = vmatpush2.msra.mxu0 0.0
  %3387 = vmatprep.subr.mxu0 0.0
  %3388 = vmatpush2.msra.mxu0 0.0
  %3389 = vmatprep.subr.mxu0 0.0
  %3390 = vmatpush2.msra.mxu0 0.0
  %3391 = vmatprep.subr.mxu0 0.0
  %3392 = vmatpush2.msra.mxu0 0.0
  %3393 = vmatprep.subr.mxu0 0.0
  %3394 = vmatpush2.msra.mxu0 0.0
  %3395 = vmatprep.subr.mxu0 0.0
  %3396 = vmatpush2.msra.mxu0 0.0
  %3397 = vmatprep.subr.mxu0 0.0
  %3398 = vmatpush2.msra.mxu0 0.0
  %3399 = vmatprep.subr.mxu0 0.0
  %3400 = vmatpush2.msra.mxu0 0.0
  %3401 = vmatprep.subr.mxu0 0.0
  %3402 = vmatpush2.msra.mxu0 0.0
  %3403 = vmatprep.subr.mxu0 0.0
  %3404 = vmatpush2.msra.mxu0 0.0
  %3405 = vmatprep.subr.mxu0 0.0
  %3406 = vmatpush2.msra.mxu0 0.0
  %3407 = vmatprep.subr.mxu0 0.0
  %3408 = vmatpush2.msra.mxu0 0.0
  %3409 = vmatprep.subr.mxu0 0.0
  %3410 = vmatpush2.msra.mxu0 0.0
  %3411 = vmatprep.mubr.f32.mxu0 0.0
  %3412 = vmatmul.mubr.f32.gmra.mxu0 %v434
  %v3413 = vpop.f32.mrf.mxu0
  %v3414 = vadd.f32 %v430, %v3413
  %v3415 = vpop.f32.mrf.mxu0
  %v3416 = vadd.f32 %v430, %v3415
  %3417 = vdwg.mxu0
  %3418 = vmatprep.subr.mxu0 0.0
  %3419 = vmatpush1.msra.mxu0 0.0
  %3420 = vmatprep.subr.mxu0 0.0
  %3421 = vmatpush1.msra.mxu0 0.0
  %3422 = vmatprep.subr.mxu0 0.0
  %3423 = vmatpush1.msra.mxu0 0.0
  %3424 = vmatprep.subr.mxu0 0.0
  %3425 = vmatpush1.msra.mxu0 0.0
  %3426 = vmatprep.subr.mxu0 0.0
  %3427 = vmatpush1.msra.mxu0 0.0
  %3428 = vmatprep.subr.mxu0 0.0
  %3429 = vmatpush1.msra.mxu0 0.0
  %3430 = vmatprep.subr.mxu0 0.0
  %3431 = vmatpush1.msra.mxu0 0.0
  %3432 = vmatprep.subr.mxu0 0.0
  %3433 = vmatpush1.msra.mxu0 0.0
  %3434 = vmatprep.subr.mxu0 0.0
  %3435 = vmatpush1.msra.mxu0 0.0
  %3436 = vmatprep.subr.mxu0 0.0
  %3437 = vmatpush1.msra.mxu0 0.0
  %3438 = vmatprep.subr.mxu0 0.0
  %3439 = vmatpush1.msra.mxu0 0.0
  %3440 = vmatprep.subr.mxu0 0.0
  %3441 = vmatpush1.msra.mxu0 0.0
  %3442 = vmatprep.subr.mxu0 0.0
  %3443 = vmatpush1.msra.mxu0 0.0
  %3444 = vmatprep.subr.mxu0 %v374
  %3445 = vmatpush1.msra.mxu0 %v373
  %3446 = vmatprep.subr.mxu0 %v237
  %3447 = vmatpush1.msra.mxu0 %v236
  %3448 = vmatprep.subr.mxu0 %v100
  %3449 = vmatpush1.msra.mxu0 %v99
  %3450 = vmatprep.subr.mxu0 0.0
  %3451 = vmatpush2.msra.mxu0 0.0
  %3452 = vmatprep.subr.mxu0 0.0
  %3453 = vmatpush2.msra.mxu0 0.0
  %3454 = vmatprep.subr.mxu0 0.0
  %3455 = vmatpush2.msra.mxu0 0.0
  %3456 = vmatprep.subr.mxu0 0.0
  %3457 = vmatpush2.msra.mxu0 0.0
  %3458 = vmatprep.subr.mxu0 0.0
  %3459 = vmatpush2.msra.mxu0 0.0
  %3460 = vmatprep.subr.mxu0 0.0
  %3461 = vmatpush2.msra.mxu0 0.0
  %3462 = vmatprep.subr.mxu0 0.0
  %3463 = vmatpush2.msra.mxu0 0.0
  %3464 = vmatprep.subr.mxu0 0.0
  %3465 = vmatpush2.msra.mxu0 0.0
  %3466 = vmatprep.subr.mxu0 0.0
  %3467 = vmatpush2.msra.mxu0 0.0
  %3468 = vmatprep.subr.mxu0 0.0
  %3469 = vmatpush2.msra.mxu0 0.0
  %3470 = vmatprep.subr.mxu0 0.0
  %3471 = vmatpush2.msra.mxu0 0.0
  %3472 = vmatprep.subr.mxu0 0.0
  %3473 = vmatpush2.msra.mxu0 0.0
  %3474 = vmatprep.subr.mxu0 0.0
  %3475 = vmatpush2.msra.mxu0 0.0
  %3476 = vmatprep.subr.mxu0 0.0
  %3477 = vmatpush2.msra.mxu0 0.0
  %3478 = vmatprep.subr.mxu0 0.0
  %3479 = vmatpush2.msra.mxu0 0.0
  %3480 = vmatprep.subr.mxu0 0.0
  %3481 = vmatpush2.msra.mxu0 0.0
  %3482 = vmatprep.mubr.f32.mxu0 0.0
  %3483 = vmatmul.mubr.f32.gmra.mxu0 %v434
  %v3484 = vpop.f32.mrf.mxu0
  %v3485 = vadd.f32 %v430, %v3484
  %v3486 = vpop.f32.mrf.mxu0
  %v3487 = vadd.f32 %v430, %v3486
  %3488 = vdwg.mxu0
  %3489 = vmatprep.subr.mxu0 0.0
  %3490 = vmatpush1.msra.mxu0 0.0
  %3491 = vmatprep.subr.mxu0 0.0
  %3492 = vmatpush1.msra.mxu0 0.0
  %3493 = vmatprep.subr.mxu0 0.0
  %3494 = vmatpush1.msra.mxu0 0.0
  %3495 = vmatprep.subr.mxu0 0.0
  %3496 = vmatpush1.msra.mxu0 0.0
  %3497 = vmatprep.subr.mxu0 0.0
  %3498 = vmatpush1.msra.mxu0 0.0
  %3499 = vmatprep.subr.mxu0 0.0
  %3500 = vmatpush1.msra.mxu0 0.0
  %3501 = vmatprep.subr.mxu0 0.0
  %3502 = vmatpush1.msra.mxu0 0.0
  %3503 = vmatprep.subr.mxu0 0.0
  %3504 = vmatpush1.msra.mxu0 0.0
  %3505 = vmatprep.subr.mxu0 0.0
  %3506 = vmatpush1.msra.mxu0 0.0
  %3507 = vmatprep.subr.mxu0 0.0
  %3508 = vmatpush1.msra.mxu0 0.0
  %3509 = vmatprep.subr.mxu0 0.0
  %3510 = vmatpush1.msra.mxu0 0.0
  %3511 = vmatprep.subr.mxu0 0.0
  %3512 = vmatpush1.msra.mxu0 0.0
  %3513 = vmatprep.subr.mxu0 0.0
  %3514 = vmatpush1.msra.mxu0 0.0
  %3515 = vmatprep.subr.mxu0 %v376
  %3516 = vmatpush1.msra.mxu0 %v375
  %3517 = vmatprep.subr.mxu0 %v239
  %3518 = vmatpush1.msra.mxu0 %v238
  %3519 = vmatprep.subr.mxu0 %v102
  %3520 = vmatpush1.msra.mxu0 %v101
  %3521 = vmatprep.subr.mxu0 0.0
  %3522 = vmatpush2.msra.mxu0 0.0
  %3523 = vmatprep.subr.mxu0 0.0
  %3524 = vmatpush2.msra.mxu0 0.0
  %3525 = vmatprep.subr.mxu0 0.0
  %3526 = vmatpush2.msra.mxu0 0.0
  %3527 = vmatprep.subr.mxu0 0.0
  %3528 = vmatpush2.msra.mxu0 0.0
  %3529 = vmatprep.subr.mxu0 0.0
  %3530 = vmatpush2.msra.mxu0 0.0
  %3531 = vmatprep.subr.mxu0 0.0
  %3532 = vmatpush2.msra.mxu0 0.0
  %3533 = vmatprep.subr.mxu0 0.0
  %3534 = vmatpush2.msra.mxu0 0.0
  %3535 = vmatprep.subr.mxu0 0.0
  %3536 = vmatpush2.msra.mxu0 0.0
  %3537 = vmatprep.subr.mxu0 0.0
  %3538 = vmatpush2.msra.mxu0 0.0
  %3539 = vmatprep.subr.mxu0 0.0
  %3540 = vmatpush2.msra.mxu0 0.0
  %3541 = vmatprep.subr.mxu0 0.0
  %3542 = vmatpush2.msra.mxu0 0.0
  %3543 = vmatprep.subr.mxu0 0.0
  %3544 = vmatpush2.msra.mxu0 0.0
  %3545 = vmatprep.subr.mxu0 0.0
  %3546 = vmatpush2.msra.mxu0 0.0
  %3547 = vmatprep.subr.mxu0 0.0
  %3548 = vmatpush2.msra.mxu0 0.0
  %3549 = vmatprep.subr.mxu0 0.0
  %3550 = vmatpush2.msra.mxu0 0.0
  %3551 = vmatprep.subr.mxu0 0.0
  %3552 = vmatpush2.msra.mxu0 0.0
  %3553 = vmatprep.mubr.f32.mxu0 0.0
  %3554 = vmatmul.mubr.f32.gmra.mxu0 %v434
  %v3555 = vpop.f32.mrf.mxu0
  %v3556 = vadd.f32 %v430, %v3555
  %v3557 = vpop.f32.mrf.mxu0
  %v3558 = vadd.f32 %v430, %v3557
  %3559 = vdwg.mxu0
  %3560 = vmatprep.subr.mxu0 0.0
  %3561 = vmatpush1.msra.mxu0 0.0
  %3562 = vmatprep.subr.mxu0 0.0
  %3563 = vmatpush1.msra.mxu0 0.0
  %3564 = vmatprep.subr.mxu0 0.0
  %3565 = vmatpush1.msra.mxu0 0.0
  %3566 = vmatprep.subr.mxu0 0.0
  %3567 = vmatpush1.msra.mxu0 0.0
  %3568 = vmatprep.subr.mxu0 0.0
  %3569 = vmatpush1.msra.mxu0 0.0
  %3570 = vmatprep.subr.mxu0 0.0
  %3571 = vmatpush1.msra.mxu0 0.0
  %3572 = vmatprep.subr.mxu0 0.0
  %3573 = vmatpush1.msra.mxu0 0.0
  %3574 = vmatprep.subr.mxu0 0.0
  %3575 = vmatpush1.msra.mxu0 0.0
  %3576 = vmatprep.subr.mxu0 0.0
  %3577 = vmatpush1.msra.mxu0 0.0
  %3578 = vmatprep.subr.mxu0 0.0
  %3579 = vmatpush1.msra.mxu0 0.0
  %3580 = vmatprep.subr.mxu0 0.0
  %3581 = vmatpush1.msra.mxu0 0.0
  %3582 = vmatprep.subr.mxu0 0.0
  %3583 = vmatpush1.msra.mxu0 0.0
  %3584 = vmatprep.subr.mxu0 0.0
  %3585 = vmatpush1.msra.mxu0 0.0
  %3586 = vmatprep.subr.mxu0 %v378
  %3587 = vmatpush1.msra.mxu0 %v377
  %3588 = vmatprep.subr.mxu0 %v241
  %3589 = vmatpush1.msra.mxu0 %v240
  %3590 = vmatprep.subr.mxu0 %v104
  %3591 = vmatpush1.msra.mxu0 %v103
  %3592 = vmatprep.subr.mxu0 0.0
  %3593 = vmatpush2.msra.mxu0 0.0
  %3594 = vmatprep.subr.mxu0 0.0
  %3595 = vmatpush2.msra.mxu0 0.0
  %3596 = vmatprep.subr.mxu0 0.0
  %3597 = vmatpush2.msra.mxu0 0.0
  %3598 = vmatprep.subr.mxu0 0.0
  %3599 = vmatpush2.msra.mxu0 0.0
  %3600 = vmatprep.subr.mxu0 0.0
  %3601 = vmatpush2.msra.mxu0 0.0
  %3602 = vmatprep.subr.mxu0 0.0
  %3603 = vmatpush2.msra.mxu0 0.0
  %3604 = vmatprep.subr.mxu0 0.0
  %3605 = vmatpush2.msra.mxu0 0.0
  %3606 = vmatprep.subr.mxu0 0.0
  %3607 = vmatpush2.msra.mxu0 0.0
  %3608 = vmatprep.subr.mxu0 0.0
  %3609 = vmatpush2.msra.mxu0 0.0
  %3610 = vmatprep.subr.mxu0 0.0
  %3611 = vmatpush2.msra.mxu0 0.0
  %3612 = vmatprep.subr.mxu0 0.0
  %3613 = vmatpush2.msra.mxu0 0.0
  %3614 = vmatprep.subr.mxu0 0.0
  %3615 = vmatpush2.msra.mxu0 0.0
  %3616 = vmatprep.subr.mxu0 0.0
  %3617 = vmatpush2.msra.mxu0 0.0
  %3618 = vmatprep.subr.mxu0 0.0
  %3619 = vmatpush2.msra.mxu0 0.0
  %3620 = vmatprep.subr.mxu0 0.0
  %3621 = vmatpush2.msra.mxu0 0.0
  %3622 = vmatprep.subr.mxu0 0.0
  %3623 = vmatpush2.msra.mxu0 0.0
  %3624 = vmatprep.mubr.f32.mxu0 0.0
  %3625 = vmatmul.mubr.f32.gmra.mxu0 %v434
  %v3626 = vpop.f32.mrf.mxu0
  %v3627 = vadd.f32 %v430, %v3626
  %v3628 = vpop.f32.mrf.mxu0
  %v3629 = vadd.f32 %v430, %v3628
  %3630 = vdwg.mxu0
  %3631 = vmatprep.subr.mxu0 0.0
  %3632 = vmatpush1.msra.mxu0 0.0
  %3633 = vmatprep.subr.mxu0 0.0
  %3634 = vmatpush1.msra.mxu0 0.0
  %3635 = vmatprep.subr.mxu0 0.0
  %3636 = vmatpush1.msra.mxu0 0.0
  %3637 = vmatprep.subr.mxu0 0.0
  %3638 = vmatpush1.msra.mxu0 0.0
  %3639 = vmatprep.subr.mxu0 0.0
  %3640 = vmatpush1.msra.mxu0 0.0
  %3641 = vmatprep.subr.mxu0 0.0
  %3642 = vmatpush1.msra.mxu0 0.0
  %3643 = vmatprep.subr.mxu0 0.0
  %3644 = vmatpush1.msra.mxu0 0.0
  %3645 = vmatprep.subr.mxu0 0.0
  %3646 = vmatpush1.msra.mxu0 0.0
  %3647 = vmatprep.subr.mxu0 0.0
  %3648 = vmatpush1.msra.mxu0 0.0
  %3649 = vmatprep.subr.mxu0 0.0
  %3650 = vmatpush1.msra.mxu0 0.0
  %3651 = vmatprep.subr.mxu0 0.0
  %3652 = vmatpush1.msra.mxu0 0.0
  %3653 = vmatprep.subr.mxu0 0.0
  %3654 = vmatpush1.msra.mxu0 0.0
  %3655 = vmatprep.subr.mxu0 0.0
  %3656 = vmatpush1.msra.mxu0 0.0
  %3657 = vmatprep.subr.mxu0 %v380
  %3658 = vmatpush1.msra.mxu0 %v379
  %3659 = vmatprep.subr.mxu0 %v243
  %3660 = vmatpush1.msra.mxu0 %v242
  %3661 = vmatprep.subr.mxu0 %v106
  %3662 = vmatpush1.msra.mxu0 %v105
  %3663 = vmatprep.subr.mxu0 0.0
  %3664 = vmatpush2.msra.mxu0 0.0
  %3665 = vmatprep.subr.mxu0 0.0
  %3666 = vmatpush2.msra.mxu0 0.0
  %3667 = vmatprep.subr.mxu0 0.0
  %3668 = vmatpush2.msra.mxu0 0.0
  %3669 = vmatprep.subr.mxu0 0.0
  %3670 = vmatpush2.msra.mxu0 0.0
  %3671 = vmatprep.subr.mxu0 0.0
  %3672 = vmatpush2.msra.mxu0 0.0
  %3673 = vmatprep.subr.mxu0 0.0
  %3674 = vmatpush2.msra.mxu0 0.0
  %3675 = vmatprep.subr.mxu0 0.0
  %3676 = vmatpush2.msra.mxu0 0.0
  %3677 = vmatprep.subr.mxu0 0.0
  %3678 = vmatpush2.msra.mxu0 0.0
  %3679 = vmatprep.subr.mxu0 0.0
  %3680 = vmatpush2.msra.mxu0 0.0
  %3681 = vmatprep.subr.mxu0 0.0
  %3682 = vmatpush2.msra.mxu0 0.0
  %3683 = vmatprep.subr.mxu0 0.0
  %3684 = vmatpush2.msra.mxu0 0.0
  %3685 = vmatprep.subr.mxu0 0.0
  %3686 = vmatpush2.msra.mxu0 0.0
  %3687 = vmatprep.subr.mxu0 0.0
  %3688 = vmatpush2.msra.mxu0 0.0
  %3689 = vmatprep.subr.mxu0 0.0
  %3690 = vmatpush2.msra.mxu0 0.0
  %3691 = vmatprep.subr.mxu0 0.0
  %3692 = vmatpush2.msra.mxu0 0.0
  %3693 = vmatprep.subr.mxu0 0.0
  %3694 = vmatpush2.msra.mxu0 0.0
  %3695 = vmatprep.mubr.f32.mxu0 0.0
  %3696 = vmatmul.mubr.f32.gmra.mxu0 %v434
  %v3697 = vpop.f32.mrf.mxu0
  %v3698 = vadd.f32 %v430, %v3697
  %v3699 = vpop.f32.mrf.mxu0
  %v3700 = vadd.f32 %v430, %v3699
  %3701 = vdwg.mxu0
  %3702 = vmatprep.subr.mxu0 0.0
  %3703 = vmatpush1.msra.mxu0 0.0
  %3704 = vmatprep.subr.mxu0 0.0
  %3705 = vmatpush1.msra.mxu0 0.0
  %3706 = vmatprep.subr.mxu0 0.0
  %3707 = vmatpush1.msra.mxu0 0.0
  %3708 = vmatprep.subr.mxu0 0.0
  %3709 = vmatpush1.msra.mxu0 0.0
  %3710 = vmatprep.subr.mxu0 0.0
  %3711 = vmatpush1.msra.mxu0 0.0
  %3712 = vmatprep.subr.mxu0 0.0
  %3713 = vmatpush1.msra.mxu0 0.0
  %3714 = vmatprep.subr.mxu0 0.0
  %3715 = vmatpush1.msra.mxu0 0.0
  %3716 = vmatprep.subr.mxu0 0.0
  %3717 = vmatpush1.msra.mxu0 0.0
  %3718 = vmatprep.subr.mxu0 0.0
  %3719 = vmatpush1.msra.mxu0 0.0
  %3720 = vmatprep.subr.mxu0 0.0
  %3721 = vmatpush1.msra.mxu0 0.0
  %3722 = vmatprep.subr.mxu0 0.0
  %3723 = vmatpush1.msra.mxu0 0.0
  %3724 = vmatprep.subr.mxu0 0.0
  %3725 = vmatpush1.msra.mxu0 0.0
  %3726 = vmatprep.subr.mxu0 0.0
  %3727 = vmatpush1.msra.mxu0 0.0
  %3728 = vmatprep.subr.mxu0 %v382
  %3729 = vmatpush1.msra.mxu0 %v381
  %3730 = vmatprep.subr.mxu0 %v245
  %3731 = vmatpush1.msra.mxu0 %v244
  %3732 = vmatprep.subr.mxu0 %v108
  %3733 = vmatpush1.msra.mxu0 %v107
  %3734 = vmatprep.subr.mxu0 0.0
  %3735 = vmatpush2.msra.mxu0 0.0
  %3736 = vmatprep.subr.mxu0 0.0
  %3737 = vmatpush2.msra.mxu0 0.0
  %3738 = vmatprep.subr.mxu0 0.0
  %3739 = vmatpush2.msra.mxu0 0.0
  %3740 = vmatprep.subr.mxu0 0.0
  %3741 = vmatpush2.msra.mxu0 0.0
  %3742 = vmatprep.subr.mxu0 0.0
  %3743 = vmatpush2.msra.mxu0 0.0
  %3744 = vmatprep.subr.mxu0 0.0
  %3745 = vmatpush2.msra.mxu0 0.0
  %3746 = vmatprep.subr.mxu0 0.0
  %3747 = vmatpush2.msra.mxu0 0.0
  %3748 = vmatprep.subr.mxu0 0.0
  %3749 = vmatpush2.msra.mxu0 0.0
  %3750 = vmatprep.subr.mxu0 0.0
  %3751 = vmatpush2.msra.mxu0 0.0
  %3752 = vmatprep.subr.mxu0 0.0
  %3753 = vmatpush2.msra.mxu0 0.0
  %3754 = vmatprep.subr.mxu0 0.0
  %3755 = vmatpush2.msra.mxu0 0.0
  %3756 = vmatprep.subr.mxu0 0.0
  %3757 = vmatpush2.msra.mxu0 0.0
  %3758 = vmatprep.subr.mxu0 0.0
  %3759 = vmatpush2.msra.mxu0 0.0
  %3760 = vmatprep.subr.mxu0 0.0
  %3761 = vmatpush2.msra.mxu0 0.0
  %3762 = vmatprep.subr.mxu0 0.0
  %3763 = vmatpush2.msra.mxu0 0.0
  %3764 = vmatprep.subr.mxu0 0.0
  %3765 = vmatpush2.msra.mxu0 0.0
  %3766 = vmatprep.mubr.f32.mxu0 0.0
  %3767 = vmatmul.mubr.f32.gmra.mxu0 %v434
  %v3768 = vpop.f32.mrf.mxu0
  %v3769 = vadd.f32 %v430, %v3768
  %v3770 = vpop.f32.mrf.mxu0
  %v3771 = vadd.f32 %v430, %v3770
  %3772 = vdwg.mxu0
  %3773 = vmatprep.subr.mxu0 0.0
  %3774 = vmatpush1.msra.mxu0 0.0
  %3775 = vmatprep.subr.mxu0 0.0
  %3776 = vmatpush1.msra.mxu0 0.0
  %3777 = vmatprep.subr.mxu0 0.0
  %3778 = vmatpush1.msra.mxu0 0.0
  %3779 = vmatprep.subr.mxu0 0.0
  %3780 = vmatpush1.msra.mxu0 0.0
  %3781 = vmatprep.subr.mxu0 0.0
  %3782 = vmatpush1.msra.mxu0 0.0
  %3783 = vmatprep.subr.mxu0 0.0
  %3784 = vmatpush1.msra.mxu0 0.0
  %3785 = vmatprep.subr.mxu0 0.0
  %3786 = vmatpush1.msra.mxu0 0.0
  %3787 = vmatprep.subr.mxu0 0.0
  %3788 = vmatpush1.msra.mxu0 0.0
  %3789 = vmatprep.subr.mxu0 0.0
  %3790 = vmatpush1.msra.mxu0 0.0
  %3791 = vmatprep.subr.mxu0 0.0
  %3792 = vmatpush1.msra.mxu0 0.0
  %3793 = vmatprep.subr.mxu0 0.0
  %3794 = vmatpush1.msra.mxu0 0.0
  %3795 = vmatprep.subr.mxu0 0.0
  %3796 = vmatpush1.msra.mxu0 0.0
  %3797 = vmatprep.subr.mxu0 0.0
  %3798 = vmatpush1.msra.mxu0 0.0
  %3799 = vmatprep.subr.mxu0 %v384
  %3800 = vmatpush1.msra.mxu0 %v383
  %3801 = vmatprep.subr.mxu0 %v247
  %3802 = vmatpush1.msra.mxu0 %v246
  %3803 = vmatprep.subr.mxu0 %v110
  %3804 = vmatpush1.msra.mxu0 %v109
  %3805 = vmatprep.subr.mxu0 0.0
  %3806 = vmatpush2.msra.mxu0 0.0
  %3807 = vmatprep.subr.mxu0 0.0
  %3808 = vmatpush2.msra.mxu0 0.0
  %3809 = vmatprep.subr.mxu0 0.0
  %3810 = vmatpush2.msra.mxu0 0.0
  %3811 = vmatprep.subr.mxu0 0.0
  %3812 = vmatpush2.msra.mxu0 0.0
  %3813 = vmatprep.subr.mxu0 0.0
  %3814 = vmatpush2.msra.mxu0 0.0
  %3815 = vmatprep.subr.mxu0 0.0
  %3816 = vmatpush2.msra.mxu0 0.0
  %3817 = vmatprep.subr.mxu0 0.0
  %3818 = vmatpush2.msra.mxu0 0.0
  %3819 = vmatprep.subr.mxu0 0.0
  %3820 = vmatpush2.msra.mxu0 0.0
  %3821 = vmatprep.subr.mxu0 0.0
  %3822 = vmatpush2.msra.mxu0 0.0
  %3823 = vmatprep.subr.mxu0 0.0
  %3824 = vmatpush2.msra.mxu0 0.0
  %3825 = vmatprep.subr.mxu0 0.0
  %3826 = vmatpush2.msra.mxu0 0.0
  %3827 = vmatprep.subr.mxu0 0.0
  %3828 = vmatpush2.msra.mxu0 0.0
  %3829 = vmatprep.subr.mxu0 0.0
  %3830 = vmatpush2.msra.mxu0 0.0
  %3831 = vmatprep.subr.mxu0 0.0
  %3832 = vmatpush2.msra.mxu0 0.0
  %3833 = vmatprep.subr.mxu0 0.0
  %3834 = vmatpush2.msra.mxu0 0.0
  %3835 = vmatprep.subr.mxu0 0.0
  %3836 = vmatpush2.msra.mxu0 0.0
  %3837 = vmatprep.mubr.f32.mxu0 0.0
  %3838 = vmatmul.mubr.f32.gmra.mxu0 %v434
  %v3839 = vpop.f32.mrf.mxu0
  %v3840 = vadd.f32 %v430, %v3839
  %v3841 = vpop.f32.mrf.mxu0
  %v3842 = vadd.f32 %v430, %v3841
  %3843 = vdwg.mxu0
  %3844 = vmatprep.subr.mxu0 0.0
  %3845 = vmatpush1.msra.mxu0 0.0
  %3846 = vmatprep.subr.mxu0 0.0
  %3847 = vmatpush1.msra.mxu0 0.0
  %3848 = vmatprep.subr.mxu0 0.0
  %3849 = vmatpush1.msra.mxu0 0.0
  %3850 = vmatprep.subr.mxu0 0.0
  %3851 = vmatpush1.msra.mxu0 0.0
  %3852 = vmatprep.subr.mxu0 0.0
  %3853 = vmatpush1.msra.mxu0 0.0
  %3854 = vmatprep.subr.mxu0 0.0
  %3855 = vmatpush1.msra.mxu0 0.0
  %3856 = vmatprep.subr.mxu0 0.0
  %3857 = vmatpush1.msra.mxu0 0.0
  %3858 = vmatprep.subr.mxu0 0.0
  %3859 = vmatpush1.msra.mxu0 0.0
  %3860 = vmatprep.subr.mxu0 0.0
  %3861 = vmatpush1.msra.mxu0 0.0
  %3862 = vmatprep.subr.mxu0 0.0
  %3863 = vmatpush1.msra.mxu0 0.0
  %3864 = vmatprep.subr.mxu0 0.0
  %3865 = vmatpush1.msra.mxu0 0.0
  %3866 = vmatprep.subr.mxu0 0.0
  %3867 = vmatpush1.msra.mxu0 0.0
  %3868 = vmatprep.subr.mxu0 0.0
  %3869 = vmatpush1.msra.mxu0 0.0
  %3870 = vmatprep.subr.mxu0 %v386
  %3871 = vmatpush1.msra.mxu0 %v385
  %3872 = vmatprep.subr.mxu0 %v249
  %3873 = vmatpush1.msra.mxu0 %v248
  %3874 = vmatprep.subr.mxu0 %v112
  %3875 = vmatpush1.msra.mxu0 %v111
  %3876 = vmatprep.subr.mxu0 0.0
  %3877 = vmatpush2.msra.mxu0 0.0
  %3878 = vmatprep.subr.mxu0 0.0
  %3879 = vmatpush2.msra.mxu0 0.0
  %3880 = vmatprep.subr.mxu0 0.0
  %3881 = vmatpush2.msra.mxu0 0.0
  %3882 = vmatprep.subr.mxu0 0.0
  %3883 = vmatpush2.msra.mxu0 0.0
  %3884 = vmatprep.subr.mxu0 0.0
  %3885 = vmatpush2.msra.mxu0 0.0
  %3886 = vmatprep.subr.mxu0 0.0
  %3887 = vmatpush2.msra.mxu0 0.0
  %3888 = vmatprep.subr.mxu0 0.0
  %3889 = vmatpush2.msra.mxu0 0.0
  %3890 = vmatprep.subr.mxu0 0.0
  %3891 = vmatpush2.msra.mxu0 0.0
  %3892 = vmatprep.subr.mxu0 0.0
  %3893 = vmatpush2.msra.mxu0 0.0
  %3894 = vmatprep.subr.mxu0 0.0
  %3895 = vmatpush2.msra.mxu0 0.0
  %3896 = vmatprep.subr.mxu0 0.0
  %3897 = vmatpush2.msra.mxu0 0.0
  %3898 = vmatprep.subr.mxu0 0.0
  %3899 = vmatpush2.msra.mxu0 0.0
  %3900 = vmatprep.subr.mxu0 0.0
  %3901 = vmatpush2.msra.mxu0 0.0
  %3902 = vmatprep.subr.mxu0 0.0
  %3903 = vmatpush2.msra.mxu0 0.0
  %3904 = vmatprep.subr.mxu0 0.0
  %3905 = vmatpush2.msra.mxu0 0.0
  %3906 = vmatprep.subr.mxu0 0.0
  %3907 = vmatpush2.msra.mxu0 0.0
  %3908 = vmatprep.mubr.f32.mxu0 0.0
  %3909 = vmatmul.mubr.f32.gmra.mxu0 %v434
  %v3910 = vpop.f32.mrf.mxu0
  %v3911 = vadd.f32 %v430, %v3910
  %v3912 = vpop.f32.mrf.mxu0
  %v3913 = vadd.f32 %v430, %v3912
  %3914 = vdwg.mxu0
  %3915 = vmatprep.subr.mxu0 0.0
  %3916 = vmatpush1.msra.mxu0 0.0
  %3917 = vmatprep.subr.mxu0 0.0
  %3918 = vmatpush1.msra.mxu0 0.0
  %3919 = vmatprep.subr.mxu0 0.0
  %3920 = vmatpush1.msra.mxu0 0.0
  %3921 = vmatprep.subr.mxu0 0.0
  %3922 = vmatpush1.msra.mxu0 0.0
  %3923 = vmatprep.subr.mxu0 0.0
  %3924 = vmatpush1.msra.mxu0 0.0
  %3925 = vmatprep.subr.mxu0 0.0
  %3926 = vmatpush1.msra.mxu0 0.0
  %3927 = vmatprep.subr.mxu0 0.0
  %3928 = vmatpush1.msra.mxu0 0.0
  %3929 = vmatprep.subr.mxu0 0.0
  %3930 = vmatpush1.msra.mxu0 0.0
  %3931 = vmatprep.subr.mxu0 0.0
  %3932 = vmatpush1.msra.mxu0 0.0
  %3933 = vmatprep.subr.mxu0 0.0
  %3934 = vmatpush1.msra.mxu0 0.0
  %3935 = vmatprep.subr.mxu0 0.0
  %3936 = vmatpush1.msra.mxu0 0.0
  %3937 = vmatprep.subr.mxu0 0.0
  %3938 = vmatpush1.msra.mxu0 0.0
  %3939 = vmatprep.subr.mxu0 0.0
  %3940 = vmatpush1.msra.mxu0 0.0
  %3941 = vmatprep.subr.mxu0 %v388
  %3942 = vmatpush1.msra.mxu0 %v387
  %3943 = vmatprep.subr.mxu0 %v251
  %3944 = vmatpush1.msra.mxu0 %v250
  %3945 = vmatprep.subr.mxu0 %v114
  %3946 = vmatpush1.msra.mxu0 %v113
  %3947 = vmatprep.subr.mxu0 0.0
  %3948 = vmatpush2.msra.mxu0 0.0
  %3949 = vmatprep.subr.mxu0 0.0
  %3950 = vmatpush2.msra.mxu0 0.0
  %3951 = vmatprep.subr.mxu0 0.0
  %3952 = vmatpush2.msra.mxu0 0.0
  %3953 = vmatprep.subr.mxu0 0.0
  %3954 = vmatpush2.msra.mxu0 0.0
  %3955 = vmatprep.subr.mxu0 0.0
  %3956 = vmatpush2.msra.mxu0 0.0
  %3957 = vmatprep.subr.mxu0 0.0
  %3958 = vmatpush2.msra.mxu0 0.0
  %3959 = vmatprep.subr.mxu0 0.0
  %3960 = vmatpush2.msra.mxu0 0.0
  %3961 = vmatprep.subr.mxu0 0.0
  %3962 = vmatpush2.msra.mxu0 0.0
  %3963 = vmatprep.subr.mxu0 0.0
  %3964 = vmatpush2.msra.mxu0 0.0
  %3965 = vmatprep.subr.mxu0 0.0
  %3966 = vmatpush2.msra.mxu0 0.0
  %3967 = vmatprep.subr.mxu0 0.0
  %3968 = vmatpush2.msra.mxu0 0.0
  %3969 = vmatprep.subr.mxu0 0.0
  %3970 = vmatpush2.msra.mxu0 0.0
  %3971 = vmatprep.subr.mxu0 0.0
  %3972 = vmatpush2.msra.mxu0 0.0
  %3973 = vmatprep.subr.mxu0 0.0
  %3974 = vmatpush2.msra.mxu0 0.0
  %3975 = vmatprep.subr.mxu0 0.0
  %3976 = vmatpush2.msra.mxu0 0.0
  %3977 = vmatprep.subr.mxu0 0.0
  %3978 = vmatpush2.msra.mxu0 0.0
  %3979 = vmatprep.mubr.f32.mxu0 0.0
  %3980 = vmatmul.mubr.f32.gmra.mxu0 %v434
  %v3981 = vpop.f32.mrf.mxu0
  %v3982 = vadd.f32 %v430, %v3981
  %v3983 = vpop.f32.mrf.mxu0
  %v3984 = vadd.f32 %v430, %v3983
  %3985 = vdwg.mxu0
  %3986 = vmatprep.subr.mxu0 0.0
  %3987 = vmatpush1.msra.mxu0 0.0
  %3988 = vmatprep.subr.mxu0 0.0
  %3989 = vmatpush1.msra.mxu0 0.0
  %3990 = vmatprep.subr.mxu0 0.0
  %3991 = vmatpush1.msra.mxu0 0.0
  %3992 = vmatprep.subr.mxu0 0.0
  %3993 = vmatpush1.msra.mxu0 0.0
  %3994 = vmatprep.subr.mxu0 0.0
  %3995 = vmatpush1.msra.mxu0 0.0
  %3996 = vmatprep.subr.mxu0 0.0
  %3997 = vmatpush1.msra.mxu0 0.0
  %3998 = vmatprep.subr.mxu0 0.0
  %3999 = vmatpush1.msra.mxu0 0.0
  %4000 = vmatprep.subr.mxu0 0.0
  %4001 = vmatpush1.msra.mxu0 0.0
  %4002 = vmatprep.subr.mxu0 0.0
  %4003 = vmatpush1.msra.mxu0 0.0
  %4004 = vmatprep.subr.mxu0 0.0
  %4005 = vmatpush1.msra.mxu0 0.0
  %4006 = vmatprep.subr.mxu0 0.0
  %4007 = vmatpush1.msra.mxu0 0.0
  %4008 = vmatprep.subr.mxu0 0.0
  %4009 = vmatpush1.msra.mxu0 0.0
  %4010 = vmatprep.subr.mxu0 0.0
  %4011 = vmatpush1.msra.mxu0 0.0
  %4012 = vmatprep.subr.mxu0 %v390
  %4013 = vmatpush1.msra.mxu0 %v389
  %4014 = vmatprep.subr.mxu0 %v253
  %4015 = vmatpush1.msra.mxu0 %v252
  %4016 = vmatprep.subr.mxu0 %v116
  %4017 = vmatpush1.msra.mxu0 %v115
  %4018 = vmatprep.subr.mxu0 0.0
  %4019 = vmatpush2.msra.mxu0 0.0
  %4020 = vmatprep.subr.mxu0 0.0
  %4021 = vmatpush2.msra.mxu0 0.0
  %4022 = vmatprep.subr.mxu0 0.0
  %4023 = vmatpush2.msra.mxu0 0.0
  %4024 = vmatprep.subr.mxu0 0.0
  %4025 = vmatpush2.msra.mxu0 0.0
  %4026 = vmatprep.subr.mxu0 0.0
  %4027 = vmatpush2.msra.mxu0 0.0
  %4028 = vmatprep.subr.mxu0 0.0
  %4029 = vmatpush2.msra.mxu0 0.0
  %4030 = vmatprep.subr.mxu0 0.0
  %4031 = vmatpush2.msra.mxu0 0.0
  %4032 = vmatprep.subr.mxu0 0.0
  %4033 = vmatpush2.msra.mxu0 0.0
  %4034 = vmatprep.subr.mxu0 0.0
  %4035 = vmatpush2.msra.mxu0 0.0
  %4036 = vmatprep.subr.mxu0 0.0
  %4037 = vmatpush2.msra.mxu0 0.0
  %4038 = vmatprep.subr.mxu0 0.0
  %4039 = vmatpush2.msra.mxu0 0.0
  %4040 = vmatprep.subr.mxu0 0.0
  %4041 = vmatpush2.msra.mxu0 0.0
  %4042 = vmatprep.subr.mxu0 0.0
  %4043 = vmatpush2.msra.mxu0 0.0
  %4044 = vmatprep.subr.mxu0 0.0
  %4045 = vmatpush2.msra.mxu0 0.0
  %4046 = vmatprep.subr.mxu0 0.0
  %4047 = vmatpush2.msra.mxu0 0.0
  %4048 = vmatprep.subr.mxu0 0.0
  %4049 = vmatpush2.msra.mxu0 0.0
  %4050 = vmatprep.mubr.f32.mxu0 0.0
  %4051 = vmatmul.mubr.f32.gmra.mxu0 %v434
  %v4052 = vpop.f32.mrf.mxu0
  %v4053 = vadd.f32 %v430, %v4052
  %v4054 = vpop.f32.mrf.mxu0
  %v4055 = vadd.f32 %v430, %v4054
  %4056 = vdwg.mxu0
  %4057 = vmatprep.subr.mxu0 0.0
  %4058 = vmatpush1.msra.mxu0 0.0
  %4059 = vmatprep.subr.mxu0 0.0
  %4060 = vmatpush1.msra.mxu0 0.0
  %4061 = vmatprep.subr.mxu0 0.0
  %4062 = vmatpush1.msra.mxu0 0.0
  %4063 = vmatprep.subr.mxu0 0.0
  %4064 = vmatpush1.msra.mxu0 0.0
  %4065 = vmatprep.subr.mxu0 0.0
  %4066 = vmatpush1.msra.mxu0 0.0
  %4067 = vmatprep.subr.mxu0 0.0
  %4068 = vmatpush1.msra.mxu0 0.0
  %4069 = vmatprep.subr.mxu0 0.0
  %4070 = vmatpush1.msra.mxu0 0.0
  %4071 = vmatprep.subr.mxu0 0.0
  %4072 = vmatpush1.msra.mxu0 0.0
  %4073 = vmatprep.subr.mxu0 0.0
  %4074 = vmatpush1.msra.mxu0 0.0
  %4075 = vmatprep.subr.mxu0 0.0
  %4076 = vmatpush1.msra.mxu0 0.0
  %4077 = vmatprep.subr.mxu0 0.0
  %4078 = vmatpush1.msra.mxu0 0.0
  %4079 = vmatprep.subr.mxu0 0.0
  %4080 = vmatpush1.msra.mxu0 0.0
  %4081 = vmatprep.subr.mxu0 0.0
  %4082 = vmatpush1.msra.mxu0 0.0
  %4083 = vmatprep.subr.mxu0 %v392
  %4084 = vmatpush1.msra.mxu0 %v391
  %4085 = vmatprep.subr.mxu0 %v255
  %4086 = vmatpush1.msra.mxu0 %v254
  %4087 = vmatprep.subr.mxu0 %v118
  %4088 = vmatpush1.msra.mxu0 %v117
  %4089 = vmatprep.subr.mxu0 0.0
  %4090 = vmatpush2.msra.mxu0 0.0
  %4091 = vmatprep.subr.mxu0 0.0
  %4092 = vmatpush2.msra.mxu0 0.0
  %4093 = vmatprep.subr.mxu0 0.0
  %4094 = vmatpush2.msra.mxu0 0.0
  %4095 = vmatprep.subr.mxu0 0.0
  %4096 = vmatpush2.msra.mxu0 0.0
  %4097 = vmatprep.subr.mxu0 0.0
  %4098 = vmatpush2.msra.mxu0 0.0
  %4099 = vmatprep.subr.mxu0 0.0
  %4100 = vmatpush2.msra.mxu0 0.0
  %4101 = vmatprep.subr.mxu0 0.0
  %4102 = vmatpush2.msra.mxu0 0.0
  %4103 = vmatprep.subr.mxu0 0.0
  %4104 = vmatpush2.msra.mxu0 0.0
  %4105 = vmatprep.subr.mxu0 0.0
  %4106 = vmatpush2.msra.mxu0 0.0
  %4107 = vmatprep.subr.mxu0 0.0
  %4108 = vmatpush2.msra.mxu0 0.0
  %4109 = vmatprep.subr.mxu0 0.0
  %4110 = vmatpush2.msra.mxu0 0.0
  %4111 = vmatprep.subr.mxu0 0.0
  %4112 = vmatpush2.msra.mxu0 0.0
  %4113 = vmatprep.subr.mxu0 0.0
  %4114 = vmatpush2.msra.mxu0 0.0
  %4115 = vmatprep.subr.mxu0 0.0
  %4116 = vmatpush2.msra.mxu0 0.0
  %4117 = vmatprep.subr.mxu0 0.0
  %4118 = vmatpush2.msra.mxu0 0.0
  %4119 = vmatprep.subr.mxu0 0.0
  %4120 = vmatpush2.msra.mxu0 0.0
  %4121 = vmatprep.mubr.f32.mxu0 0.0
  %4122 = vmatmul.mubr.f32.gmra.mxu0 %v434
  %v4123 = vpop.f32.mrf.mxu0
  %v4124 = vadd.f32 %v430, %v4123
  %v4125 = vpop.f32.mrf.mxu0
  %v4126 = vadd.f32 %v430, %v4125
  %4127 = vdwg.mxu0
  %4128 = vmatprep.subr.mxu0 0.0
  %4129 = vmatpush1.msra.mxu0 0.0
  %4130 = vmatprep.subr.mxu0 0.0
  %4131 = vmatpush1.msra.mxu0 0.0
  %4132 = vmatprep.subr.mxu0 0.0
  %4133 = vmatpush1.msra.mxu0 0.0
  %4134 = vmatprep.subr.mxu0 0.0
  %4135 = vmatpush1.msra.mxu0 0.0
  %4136 = vmatprep.subr.mxu0 0.0
  %4137 = vmatpush1.msra.mxu0 0.0
  %4138 = vmatprep.subr.mxu0 0.0
  %4139 = vmatpush1.msra.mxu0 0.0
  %4140 = vmatprep.subr.mxu0 0.0
  %4141 = vmatpush1.msra.mxu0 0.0
  %4142 = vmatprep.subr.mxu0 0.0
  %4143 = vmatpush1.msra.mxu0 0.0
  %4144 = vmatprep.subr.mxu0 0.0
  %4145 = vmatpush1.msra.mxu0 0.0
  %4146 = vmatprep.subr.mxu0 0.0
  %4147 = vmatpush1.msra.mxu0 0.0
  %4148 = vmatprep.subr.mxu0 0.0
  %4149 = vmatpush1.msra.mxu0 0.0
  %4150 = vmatprep.subr.mxu0 0.0
  %4151 = vmatpush1.msra.mxu0 0.0
  %4152 = vmatprep.subr.mxu0 0.0
  %4153 = vmatpush1.msra.mxu0 0.0
  %4154 = vmatprep.subr.mxu0 %v394
  %4155 = vmatpush1.msra.mxu0 %v393
  %4156 = vmatprep.subr.mxu0 %v257
  %4157 = vmatpush1.msra.mxu0 %v256
  %4158 = vmatprep.subr.mxu0 %v120
  %4159 = vmatpush1.msra.mxu0 %v119
  %4160 = vmatprep.subr.mxu0 0.0
  %4161 = vmatpush2.msra.mxu0 0.0
  %4162 = vmatprep.subr.mxu0 0.0
  %4163 = vmatpush2.msra.mxu0 0.0
  %4164 = vmatprep.subr.mxu0 0.0
  %4165 = vmatpush2.msra.mxu0 0.0
  %4166 = vmatprep.subr.mxu0 0.0
  %4167 = vmatpush2.msra.mxu0 0.0
  %4168 = vmatprep.subr.mxu0 0.0
  %4169 = vmatpush2.msra.mxu0 0.0
  %4170 = vmatprep.subr.mxu0 0.0
  %4171 = vmatpush2.msra.mxu0 0.0
  %4172 = vmatprep.subr.mxu0 0.0
  %4173 = vmatpush2.msra.mxu0 0.0
  %4174 = vmatprep.subr.mxu0 0.0
  %4175 = vmatpush2.msra.mxu0 0.0
  %4176 = vmatprep.subr.mxu0 0.0
  %4177 = vmatpush2.msra.mxu0 0.0
  %4178 = vmatprep.subr.mxu0 0.0
  %4179 = vmatpush2.msra.mxu0 0.0
  %4180 = vmatprep.subr.mxu0 0.0
  %4181 = vmatpush2.msra.mxu0 0.0
  %4182 = vmatprep.subr.mxu0 0.0
  %4183 = vmatpush2.msra.mxu0 0.0
  %4184 = vmatprep.subr.mxu0 0.0
  %4185 = vmatpush2.msra.mxu0 0.0
  %4186 = vmatprep.subr.mxu0 0.0
  %4187 = vmatpush2.msra.mxu0 0.0
  %4188 = vmatprep.subr.mxu0 0.0
  %4189 = vmatpush2.msra.mxu0 0.0
  %4190 = vmatprep.subr.mxu0 0.0
  %4191 = vmatpush2.msra.mxu0 0.0
  %4192 = vmatprep.mubr.f32.mxu0 0.0
  %4193 = vmatmul.mubr.f32.gmra.mxu0 %v434
  %v4194 = vpop.f32.mrf.mxu0
  %v4195 = vadd.f32 %v430, %v4194
  %v4196 = vpop.f32.mrf.mxu0
  %v4197 = vadd.f32 %v430, %v4196
  %4198 = vdwg.mxu0
  %4199 = vmatprep.subr.mxu0 0.0
  %4200 = vmatpush1.msra.mxu0 0.0
  %4201 = vmatprep.subr.mxu0 0.0
  %4202 = vmatpush1.msra.mxu0 0.0
  %4203 = vmatprep.subr.mxu0 0.0
  %4204 = vmatpush1.msra.mxu0 0.0
  %4205 = vmatprep.subr.mxu0 0.0
  %4206 = vmatpush1.msra.mxu0 0.0
  %4207 = vmatprep.subr.mxu0 0.0
  %4208 = vmatpush1.msra.mxu0 0.0
  %4209 = vmatprep.subr.mxu0 0.0
  %4210 = vmatpush1.msra.mxu0 0.0
  %4211 = vmatprep.subr.mxu0 0.0
  %4212 = vmatpush1.msra.mxu0 0.0
  %4213 = vmatprep.subr.mxu0 0.0
  %4214 = vmatpush1.msra.mxu0 0.0
  %4215 = vmatprep.subr.mxu0 0.0
  %4216 = vmatpush1.msra.mxu0 0.0
  %4217 = vmatprep.subr.mxu0 0.0
  %4218 = vmatpush1.msra.mxu0 0.0
  %4219 = vmatprep.subr.mxu0 0.0
  %4220 = vmatpush1.msra.mxu0 0.0
  %4221 = vmatprep.subr.mxu0 0.0
  %4222 = vmatpush1.msra.mxu0 0.0
  %4223 = vmatprep.subr.mxu0 0.0
  %4224 = vmatpush1.msra.mxu0 0.0
  %4225 = vmatprep.subr.mxu0 %v396
  %4226 = vmatpush1.msra.mxu0 %v395
  %4227 = vmatprep.subr.mxu0 %v259
  %4228 = vmatpush1.msra.mxu0 %v258
  %4229 = vmatprep.subr.mxu0 %v122
  %4230 = vmatpush1.msra.mxu0 %v121
  %4231 = vmatprep.subr.mxu0 0.0
  %4232 = vmatpush2.msra.mxu0 0.0
  %4233 = vmatprep.subr.mxu0 0.0
  %4234 = vmatpush2.msra.mxu0 0.0
  %4235 = vmatprep.subr.mxu0 0.0
  %4236 = vmatpush2.msra.mxu0 0.0
  %4237 = vmatprep.subr.mxu0 0.0
  %4238 = vmatpush2.msra.mxu0 0.0
  %4239 = vmatprep.subr.mxu0 0.0
  %4240 = vmatpush2.msra.mxu0 0.0
  %4241 = vmatprep.subr.mxu0 0.0
  %4242 = vmatpush2.msra.mxu0 0.0
  %4243 = vmatprep.subr.mxu0 0.0
  %4244 = vmatpush2.msra.mxu0 0.0
  %4245 = vmatprep.subr.mxu0 0.0
  %4246 = vmatpush2.msra.mxu0 0.0
  %4247 = vmatprep.subr.mxu0 0.0
  %4248 = vmatpush2.msra.mxu0 0.0
  %4249 = vmatprep.subr.mxu0 0.0
  %4250 = vmatpush2.msra.mxu0 0.0
  %4251 = vmatprep.subr.mxu0 0.0
  %4252 = vmatpush2.msra.mxu0 0.0
  %4253 = vmatprep.subr.mxu0 0.0
  %4254 = vmatpush2.msra.mxu0 0.0
  %4255 = vmatprep.subr.mxu0 0.0
  %4256 = vmatpush2.msra.mxu0 0.0
  %4257 = vmatprep.subr.mxu0 0.0
  %4258 = vmatpush2.msra.mxu0 0.0
  %4259 = vmatprep.subr.mxu0 0.0
  %4260 = vmatpush2.msra.mxu0 0.0
  %4261 = vmatprep.subr.mxu0 0.0
  %4262 = vmatpush2.msra.mxu0 0.0
  %4263 = vmatprep.mubr.f32.mxu0 0.0
  %4264 = vmatmul.mubr.f32.gmra.mxu0 %v434
  %v4265 = vpop.f32.mrf.mxu0
  %v4266 = vadd.f32 %v430, %v4265
  %v4267 = vpop.f32.mrf.mxu0
  %v4268 = vadd.f32 %v430, %v4267
  %4269 = vdwg.mxu0
  %4270 = vmatprep.subr.mxu0 0.0
  %4271 = vmatpush1.msra.mxu0 0.0
  %4272 = vmatprep.subr.mxu0 0.0
  %4273 = vmatpush1.msra.mxu0 0.0
  %4274 = vmatprep.subr.mxu0 0.0
  %4275 = vmatpush1.msra.mxu0 0.0
  %4276 = vmatprep.subr.mxu0 0.0
  %4277 = vmatpush1.msra.mxu0 0.0
  %4278 = vmatprep.subr.mxu0 0.0
  %4279 = vmatpush1.msra.mxu0 0.0
  %4280 = vmatprep.subr.mxu0 0.0
  %4281 = vmatpush1.msra.mxu0 0.0
  %4282 = vmatprep.subr.mxu0 0.0
  %4283 = vmatpush1.msra.mxu0 0.0
  %4284 = vmatprep.subr.mxu0 0.0
  %4285 = vmatpush1.msra.mxu0 0.0
  %4286 = vmatprep.subr.mxu0 0.0
  %4287 = vmatpush1.msra.mxu0 0.0
  %4288 = vmatprep.subr.mxu0 0.0
  %4289 = vmatpush1.msra.mxu0 0.0
  %4290 = vmatprep.subr.mxu0 0.0
  %4291 = vmatpush1.msra.mxu0 0.0
  %4292 = vmatprep.subr.mxu0 0.0
  %4293 = vmatpush1.msra.mxu0 0.0
  %4294 = vmatprep.subr.mxu0 0.0
  %4295 = vmatpush1.msra.mxu0 0.0
  %4296 = vmatprep.subr.mxu0 %v398
  %4297 = vmatpush1.msra.mxu0 %v397
  %4298 = vmatprep.subr.mxu0 %v261
  %4299 = vmatpush1.msra.mxu0 %v260
  %4300 = vmatprep.subr.mxu0 %v124
  %4301 = vmatpush1.msra.mxu0 %v123
  %4302 = vmatprep.subr.mxu0 0.0
  %4303 = vmatpush2.msra.mxu0 0.0
  %4304 = vmatprep.subr.mxu0 0.0
  %4305 = vmatpush2.msra.mxu0 0.0
  %4306 = vmatprep.subr.mxu0 0.0
  %4307 = vmatpush2.msra.mxu0 0.0
  %4308 = vmatprep.subr.mxu0 0.0
  %4309 = vmatpush2.msra.mxu0 0.0
  %4310 = vmatprep.subr.mxu0 0.0
  %4311 = vmatpush2.msra.mxu0 0.0
  %4312 = vmatprep.subr.mxu0 0.0
  %4313 = vmatpush2.msra.mxu0 0.0
  %4314 = vmatprep.subr.mxu0 0.0
  %4315 = vmatpush2.msra.mxu0 0.0
  %4316 = vmatprep.subr.mxu0 0.0
  %4317 = vmatpush2.msra.mxu0 0.0
  %4318 = vmatprep.subr.mxu0 0.0
  %4319 = vmatpush2.msra.mxu0 0.0
  %4320 = vmatprep.subr.mxu0 0.0
  %4321 = vmatpush2.msra.mxu0 0.0
  %4322 = vmatprep.subr.mxu0 0.0
  %4323 = vmatpush2.msra.mxu0 0.0
  %4324 = vmatprep.subr.mxu0 0.0
  %4325 = vmatpush2.msra.mxu0 0.0
  %4326 = vmatprep.subr.mxu0 0.0
  %4327 = vmatpush2.msra.mxu0 0.0
  %4328 = vmatprep.subr.mxu0 0.0
  %4329 = vmatpush2.msra.mxu0 0.0
  %4330 = vmatprep.subr.mxu0 0.0
  %4331 = vmatpush2.msra.mxu0 0.0
  %4332 = vmatprep.subr.mxu0 0.0
  %4333 = vmatpush2.msra.mxu0 0.0
  %4334 = vmatprep.mubr.f32.mxu0 0.0
  %4335 = vmatmul.mubr.f32.gmra.mxu0 %v434
  %v4336 = vpop.f32.mrf.mxu0
  %v4337 = vadd.f32 %v430, %v4336
  %v4338 = vpop.f32.mrf.mxu0
  %v4339 = vadd.f32 %v430, %v4338
  %4340 = vdwg.mxu0
  %4341 = vmatprep.subr.mxu0 0.0
  %4342 = vmatpush1.msra.mxu0 0.0
  %4343 = vmatprep.subr.mxu0 0.0
  %4344 = vmatpush1.msra.mxu0 0.0
  %4345 = vmatprep.subr.mxu0 0.0
  %4346 = vmatpush1.msra.mxu0 0.0
  %4347 = vmatprep.subr.mxu0 0.0
  %4348 = vmatpush1.msra.mxu0 0.0
  %4349 = vmatprep.subr.mxu0 0.0
  %4350 = vmatpush1.msra.mxu0 0.0
  %4351 = vmatprep.subr.mxu0 0.0
  %4352 = vmatpush1.msra.mxu0 0.0
  %4353 = vmatprep.subr.mxu0 0.0
  %4354 = vmatpush1.msra.mxu0 0.0
  %4355 = vmatprep.subr.mxu0 0.0
  %4356 = vmatpush1.msra.mxu0 0.0
  %4357 = vmatprep.subr.mxu0 0.0
  %4358 = vmatpush1.msra.mxu0 0.0
  %4359 = vmatprep.subr.mxu0 0.0
  %4360 = vmatpush1.msra.mxu0 0.0
  %4361 = vmatprep.subr.mxu0 0.0
  %4362 = vmatpush1.msra.mxu0 0.0
  %4363 = vmatprep.subr.mxu0 0.0
  %4364 = vmatpush1.msra.mxu0 0.0
  %4365 = vmatprep.subr.mxu0 0.0
  %4366 = vmatpush1.msra.mxu0 0.0
  %4367 = vmatprep.subr.mxu0 %v400
  %4368 = vmatpush1.msra.mxu0 %v399
  %4369 = vmatprep.subr.mxu0 %v263
  %4370 = vmatpush1.msra.mxu0 %v262
  %4371 = vmatprep.subr.mxu0 %v126
  %4372 = vmatpush1.msra.mxu0 %v125
  %4373 = vmatprep.subr.mxu0 0.0
  %4374 = vmatpush2.msra.mxu0 0.0
  %4375 = vmatprep.subr.mxu0 0.0
  %4376 = vmatpush2.msra.mxu0 0.0
  %4377 = vmatprep.subr.mxu0 0.0
  %4378 = vmatpush2.msra.mxu0 0.0
  %4379 = vmatprep.subr.mxu0 0.0
  %4380 = vmatpush2.msra.mxu0 0.0
  %4381 = vmatprep.subr.mxu0 0.0
  %4382 = vmatpush2.msra.mxu0 0.0
  %4383 = vmatprep.subr.mxu0 0.0
  %4384 = vmatpush2.msra.mxu0 0.0
  %4385 = vmatprep.subr.mxu0 0.0
  %4386 = vmatpush2.msra.mxu0 0.0
  %4387 = vmatprep.subr.mxu0 0.0
  %4388 = vmatpush2.msra.mxu0 0.0
  %4389 = vmatprep.subr.mxu0 0.0
  %4390 = vmatpush2.msra.mxu0 0.0
  %4391 = vmatprep.subr.mxu0 0.0
  %4392 = vmatpush2.msra.mxu0 0.0
  %4393 = vmatprep.subr.mxu0 0.0
  %4394 = vmatpush2.msra.mxu0 0.0
  %4395 = vmatprep.subr.mxu0 0.0
  %4396 = vmatpush2.msra.mxu0 0.0
  %4397 = vmatprep.subr.mxu0 0.0
  %4398 = vmatpush2.msra.mxu0 0.0
  %4399 = vmatprep.subr.mxu0 0.0
  %4400 = vmatpush2.msra.mxu0 0.0
  %4401 = vmatprep.subr.mxu0 0.0
  %4402 = vmatpush2.msra.mxu0 0.0
  %4403 = vmatprep.subr.mxu0 0.0
  %4404 = vmatpush2.msra.mxu0 0.0
  %4405 = vmatprep.mubr.f32.mxu0 0.0
  %4406 = vmatmul.mubr.f32.gmra.mxu0 %v434
  %v4407 = vpop.f32.mrf.mxu0
  %v4408 = vadd.f32 %v430, %v4407
  %v4409 = vpop.f32.mrf.mxu0
  %v4410 = vadd.f32 %v430, %v4409
  %4411 = vdwg.mxu0
  %4412 = vmatprep.subr.mxu0 0.0
  %4413 = vmatpush1.msra.mxu0 0.0
  %4414 = vmatprep.subr.mxu0 0.0
  %4415 = vmatpush1.msra.mxu0 0.0
  %4416 = vmatprep.subr.mxu0 0.0
  %4417 = vmatpush1.msra.mxu0 0.0
  %4418 = vmatprep.subr.mxu0 0.0
  %4419 = vmatpush1.msra.mxu0 0.0
  %4420 = vmatprep.subr.mxu0 0.0
  %4421 = vmatpush1.msra.mxu0 0.0
  %4422 = vmatprep.subr.mxu0 0.0
  %4423 = vmatpush1.msra.mxu0 0.0
  %4424 = vmatprep.subr.mxu0 0.0
  %4425 = vmatpush1.msra.mxu0 0.0
  %4426 = vmatprep.subr.mxu0 0.0
  %4427 = vmatpush1.msra.mxu0 0.0
  %4428 = vmatprep.subr.mxu0 0.0
  %4429 = vmatpush1.msra.mxu0 0.0
  %4430 = vmatprep.subr.mxu0 0.0
  %4431 = vmatpush1.msra.mxu0 0.0
  %4432 = vmatprep.subr.mxu0 0.0
  %4433 = vmatpush1.msra.mxu0 0.0
  %4434 = vmatprep.subr.mxu0 0.0
  %4435 = vmatpush1.msra.mxu0 0.0
  %4436 = vmatprep.subr.mxu0 0.0
  %4437 = vmatpush1.msra.mxu0 0.0
  %4438 = vmatprep.subr.mxu0 %v402
  %4439 = vmatpush1.msra.mxu0 %v401
  %4440 = vmatprep.subr.mxu0 %v265
  %4441 = vmatpush1.msra.mxu0 %v264
  %4442 = vmatprep.subr.mxu0 %v128
  %4443 = vmatpush1.msra.mxu0 %v127
  %4444 = vmatprep.subr.mxu0 0.0
  %4445 = vmatpush2.msra.mxu0 0.0
  %4446 = vmatprep.subr.mxu0 0.0
  %4447 = vmatpush2.msra.mxu0 0.0
  %4448 = vmatprep.subr.mxu0 0.0
  %4449 = vmatpush2.msra.mxu0 0.0
  %4450 = vmatprep.subr.mxu0 0.0
  %4451 = vmatpush2.msra.mxu0 0.0
  %4452 = vmatprep.subr.mxu0 0.0
  %4453 = vmatpush2.msra.mxu0 0.0
  %4454 = vmatprep.subr.mxu0 0.0
  %4455 = vmatpush2.msra.mxu0 0.0
  %4456 = vmatprep.subr.mxu0 0.0
  %4457 = vmatpush2.msra.mxu0 0.0
  %4458 = vmatprep.subr.mxu0 0.0
  %4459 = vmatpush2.msra.mxu0 0.0
  %4460 = vmatprep.subr.mxu0 0.0
  %4461 = vmatpush2.msra.mxu0 0.0
  %4462 = vmatprep.subr.mxu0 0.0
  %4463 = vmatpush2.msra.mxu0 0.0
  %4464 = vmatprep.subr.mxu0 0.0
  %4465 = vmatpush2.msra.mxu0 0.0
  %4466 = vmatprep.subr.mxu0 0.0
  %4467 = vmatpush2.msra.mxu0 0.0
  %4468 = vmatprep.subr.mxu0 0.0
  %4469 = vmatpush2.msra.mxu0 0.0
  %4470 = vmatprep.subr.mxu0 0.0
  %4471 = vmatpush2.msra.mxu0 0.0
  %4472 = vmatprep.subr.mxu0 0.0
  %4473 = vmatpush2.msra.mxu0 0.0
  %4474 = vmatprep.subr.mxu0 0.0
  %4475 = vmatpush2.msra.mxu0 0.0
  %4476 = vmatprep.mubr.f32.mxu0 0.0
  %4477 = vmatmul.mubr.f32.gmra.mxu0 %v434
  %v4478 = vpop.f32.mrf.mxu0
  %v4479 = vadd.f32 %v430, %v4478
  %v4480 = vpop.f32.mrf.mxu0
  %v4481 = vadd.f32 %v430, %v4480
  %4482 = vdwg.mxu0
  %4483 = vmatprep.subr.mxu0 0.0
  %4484 = vmatpush1.msra.mxu0 0.0
  %4485 = vmatprep.subr.mxu0 0.0
  %4486 = vmatpush1.msra.mxu0 0.0
  %4487 = vmatprep.subr.mxu0 0.0
  %4488 = vmatpush1.msra.mxu0 0.0
  %4489 = vmatprep.subr.mxu0 0.0
  %4490 = vmatpush1.msra.mxu0 0.0
  %4491 = vmatprep.subr.mxu0 0.0
  %4492 = vmatpush1.msra.mxu0 0.0
  %4493 = vmatprep.subr.mxu0 0.0
  %4494 = vmatpush1.msra.mxu0 0.0
  %4495 = vmatprep.subr.mxu0 0.0
  %4496 = vmatpush1.msra.mxu0 0.0
  %4497 = vmatprep.subr.mxu0 0.0
  %4498 = vmatpush1.msra.mxu0 0.0
  %4499 = vmatprep.subr.mxu0 0.0
  %4500 = vmatpush1.msra.mxu0 0.0
  %4501 = vmatprep.subr.mxu0 0.0
  %4502 = vmatpush1.msra.mxu0 0.0
  %4503 = vmatprep.subr.mxu0 0.0
  %4504 = vmatpush1.msra.mxu0 0.0
  %4505 = vmatprep.subr.mxu0 0.0
  %4506 = vmatpush1.msra.mxu0 0.0
  %4507 = vmatprep.subr.mxu0 0.0
  %4508 = vmatpush1.msra.mxu0 0.0
  %4509 = vmatprep.subr.mxu0 %v404
  %4510 = vmatpush1.msra.mxu0 %v403
  %4511 = vmatprep.subr.mxu0 %v267
  %4512 = vmatpush1.msra.mxu0 %v266
  %4513 = vmatprep.subr.mxu0 %v130
  %4514 = vmatpush1.msra.mxu0 %v129
  %4515 = vmatprep.subr.mxu0 0.0
  %4516 = vmatpush2.msra.mxu0 0.0
  %4517 = vmatprep.subr.mxu0 0.0
  %4518 = vmatpush2.msra.mxu0 0.0
  %4519 = vmatprep.subr.mxu0 0.0
  %4520 = vmatpush2.msra.mxu0 0.0
  %4521 = vmatprep.subr.mxu0 0.0
  %4522 = vmatpush2.msra.mxu0 0.0
  %4523 = vmatprep.subr.mxu0 0.0
  %4524 = vmatpush2.msra.mxu0 0.0
  %4525 = vmatprep.subr.mxu0 0.0
  %4526 = vmatpush2.msra.mxu0 0.0
  %4527 = vmatprep.subr.mxu0 0.0
  %4528 = vmatpush2.msra.mxu0 0.0
  %4529 = vmatprep.subr.mxu0 0.0
  %4530 = vmatpush2.msra.mxu0 0.0
  %4531 = vmatprep.subr.mxu0 0.0
  %4532 = vmatpush2.msra.mxu0 0.0
  %4533 = vmatprep.subr.mxu0 0.0
  %4534 = vmatpush2.msra.mxu0 0.0
  %4535 = vmatprep.subr.mxu0 0.0
  %4536 = vmatpush2.msra.mxu0 0.0
  %4537 = vmatprep.subr.mxu0 0.0
  %4538 = vmatpush2.msra.mxu0 0.0
  %4539 = vmatprep.subr.mxu0 0.0
  %4540 = vmatpush2.msra.mxu0 0.0
  %4541 = vmatprep.subr.mxu0 0.0
  %4542 = vmatpush2.msra.mxu0 0.0
  %4543 = vmatprep.subr.mxu0 0.0
  %4544 = vmatpush2.msra.mxu0 0.0
  %4545 = vmatprep.subr.mxu0 0.0
  %4546 = vmatpush2.msra.mxu0 0.0
  %4547 = vmatprep.mubr.f32.mxu0 0.0
  %4548 = vmatmul.mubr.f32.gmra.mxu0 %v434
  %v4549 = vpop.f32.mrf.mxu0
  %v4550 = vadd.f32 %v430, %v4549
  %v4551 = vpop.f32.mrf.mxu0
  %v4552 = vadd.f32 %v430, %v4551
  %4553 = vdwg.mxu0
  %4554 = vmatprep.subr.mxu0 0.0
  %4555 = vmatpush1.msra.mxu0 0.0
  %4556 = vmatprep.subr.mxu0 0.0
  %4557 = vmatpush1.msra.mxu0 0.0
  %4558 = vmatprep.subr.mxu0 0.0
  %4559 = vmatpush1.msra.mxu0 0.0
  %4560 = vmatprep.subr.mxu0 0.0
  %4561 = vmatpush1.msra.mxu0 0.0
  %4562 = vmatprep.subr.mxu0 0.0
  %4563 = vmatpush1.msra.mxu0 0.0
  %4564 = vmatprep.subr.mxu0 0.0
  %4565 = vmatpush1.msra.mxu0 0.0
  %4566 = vmatprep.subr.mxu0 0.0
  %4567 = vmatpush1.msra.mxu0 0.0
  %4568 = vmatprep.subr.mxu0 0.0
  %4569 = vmatpush1.msra.mxu0 0.0
  %4570 = vmatprep.subr.mxu0 0.0
  %4571 = vmatpush1.msra.mxu0 0.0
  %4572 = vmatprep.subr.mxu0 0.0
  %4573 = vmatpush1.msra.mxu0 0.0
  %4574 = vmatprep.subr.mxu0 0.0
  %4575 = vmatpush1.msra.mxu0 0.0
  %4576 = vmatprep.subr.mxu0 0.0
  %4577 = vmatpush1.msra.mxu0 0.0
  %4578 = vmatprep.subr.mxu0 0.0
  %4579 = vmatpush1.msra.mxu0 0.0
  %4580 = vmatprep.subr.mxu0 %v406
  %4581 = vmatpush1.msra.mxu0 %v405
  %4582 = vmatprep.subr.mxu0 %v269
  %4583 = vmatpush1.msra.mxu0 %v268
  %4584 = vmatprep.subr.mxu0 %v132
  %4585 = vmatpush1.msra.mxu0 %v131
  %4586 = vmatprep.subr.mxu0 0.0
  %4587 = vmatpush2.msra.mxu0 0.0
  %4588 = vmatprep.subr.mxu0 0.0
  %4589 = vmatpush2.msra.mxu0 0.0
  %4590 = vmatprep.subr.mxu0 0.0
  %4591 = vmatpush2.msra.mxu0 0.0
  %4592 = vmatprep.subr.mxu0 0.0
  %4593 = vmatpush2.msra.mxu0 0.0
  %4594 = vmatprep.subr.mxu0 0.0
  %4595 = vmatpush2.msra.mxu0 0.0
  %4596 = vmatprep.subr.mxu0 0.0
  %4597 = vmatpush2.msra.mxu0 0.0
  %4598 = vmatprep.subr.mxu0 0.0
  %4599 = vmatpush2.msra.mxu0 0.0
  %4600 = vmatprep.subr.mxu0 0.0
  %4601 = vmatpush2.msra.mxu0 0.0
  %4602 = vmatprep.subr.mxu0 0.0
  %4603 = vmatpush2.msra.mxu0 0.0
  %4604 = vmatprep.subr.mxu0 0.0
  %4605 = vmatpush2.msra.mxu0 0.0
  %4606 = vmatprep.subr.mxu0 0.0
  %4607 = vmatpush2.msra.mxu0 0.0
  %4608 = vmatprep.subr.mxu0 0.0
  %4609 = vmatpush2.msra.mxu0 0.0
  %4610 = vmatprep.subr.mxu0 0.0
  %4611 = vmatpush2.msra.mxu0 0.0
  %4612 = vmatprep.subr.mxu0 0.0
  %4613 = vmatpush2.msra.mxu0 0.0
  %4614 = vmatprep.subr.mxu0 0.0
  %4615 = vmatpush2.msra.mxu0 0.0
  %4616 = vmatprep.subr.mxu0 0.0
  %4617 = vmatpush2.msra.mxu0 0.0
  %4618 = vmatprep.mubr.f32.mxu0 0.0
  %4619 = vmatmul.mubr.f32.gmra.mxu0 %v434
  %v4620 = vpop.f32.mrf.mxu0
  %v4621 = vadd.f32 %v430, %v4620
  %v4622 = vpop.f32.mrf.mxu0
  %v4623 = vadd.f32 %v430, %v4622
  %4624 = vdwg.mxu0
  %4625 = vmatprep.subr.mxu0 0.0
  %4626 = vmatpush1.msra.mxu0 0.0
  %4627 = vmatprep.subr.mxu0 0.0
  %4628 = vmatpush1.msra.mxu0 0.0
  %4629 = vmatprep.subr.mxu0 0.0
  %4630 = vmatpush1.msra.mxu0 0.0
  %4631 = vmatprep.subr.mxu0 0.0
  %4632 = vmatpush1.msra.mxu0 0.0
  %4633 = vmatprep.subr.mxu0 0.0
  %4634 = vmatpush1.msra.mxu0 0.0
  %4635 = vmatprep.subr.mxu0 0.0
  %4636 = vmatpush1.msra.mxu0 0.0
  %4637 = vmatprep.subr.mxu0 0.0
  %4638 = vmatpush1.msra.mxu0 0.0
  %4639 = vmatprep.subr.mxu0 0.0
  %4640 = vmatpush1.msra.mxu0 0.0
  %4641 = vmatprep.subr.mxu0 0.0
  %4642 = vmatpush1.msra.mxu0 0.0
  %4643 = vmatprep.subr.mxu0 0.0
  %4644 = vmatpush1.msra.mxu0 0.0
  %4645 = vmatprep.subr.mxu0 0.0
  %4646 = vmatpush1.msra.mxu0 0.0
  %4647 = vmatprep.subr.mxu0 0.0
  %4648 = vmatpush1.msra.mxu0 0.0
  %4649 = vmatprep.subr.mxu0 0.0
  %4650 = vmatpush1.msra.mxu0 0.0
  %4651 = vmatprep.subr.mxu0 %v408
  %4652 = vmatpush1.msra.mxu0 %v407
  %4653 = vmatprep.subr.mxu0 %v271
  %4654 = vmatpush1.msra.mxu0 %v270
  %4655 = vmatprep.subr.mxu0 %v134
  %4656 = vmatpush1.msra.mxu0 %v133
  %4657 = vmatprep.subr.mxu0 0.0
  %4658 = vmatpush2.msra.mxu0 0.0
  %4659 = vmatprep.subr.mxu0 0.0
  %4660 = vmatpush2.msra.mxu0 0.0
  %4661 = vmatprep.subr.mxu0 0.0
  %4662 = vmatpush2.msra.mxu0 0.0
  %4663 = vmatprep.subr.mxu0 0.0
  %4664 = vmatpush2.msra.mxu0 0.0
  %4665 = vmatprep.subr.mxu0 0.0
  %4666 = vmatpush2.msra.mxu0 0.0
  %4667 = vmatprep.subr.mxu0 0.0
  %4668 = vmatpush2.msra.mxu0 0.0
  %4669 = vmatprep.subr.mxu0 0.0
  %4670 = vmatpush2.msra.mxu0 0.0
  %4671 = vmatprep.subr.mxu0 0.0
  %4672 = vmatpush2.msra.mxu0 0.0
  %4673 = vmatprep.subr.mxu0 0.0
  %4674 = vmatpush2.msra.mxu0 0.0
  %4675 = vmatprep.subr.mxu0 0.0
  %4676 = vmatpush2.msra.mxu0 0.0
  %4677 = vmatprep.subr.mxu0 0.0
  %4678 = vmatpush2.msra.mxu0 0.0
  %4679 = vmatprep.subr.mxu0 0.0
  %4680 = vmatpush2.msra.mxu0 0.0
  %4681 = vmatprep.subr.mxu0 0.0
  %4682 = vmatpush2.msra.mxu0 0.0
  %4683 = vmatprep.subr.mxu0 0.0
  %4684 = vmatpush2.msra.mxu0 0.0
  %4685 = vmatprep.subr.mxu0 0.0
  %4686 = vmatpush2.msra.mxu0 0.0
  %4687 = vmatprep.subr.mxu0 0.0
  %4688 = vmatpush2.msra.mxu0 0.0
  %4689 = vmatprep.mubr.f32.mxu0 0.0
  %4690 = vmatmul.mubr.f32.gmra.mxu0 %v434
  %v4691 = vpop.f32.mrf.mxu0
  %v4692 = vadd.f32 %v430, %v4691
  %v4693 = vpop.f32.mrf.mxu0
  %v4694 = vadd.f32 %v430, %v4693
  %4695 = vdwg.mxu0
  %4696 = vmatprep.subr.mxu0 0.0
  %4697 = vmatpush1.msra.mxu0 0.0
  %4698 = vmatprep.subr.mxu0 0.0
  %4699 = vmatpush1.msra.mxu0 0.0
  %4700 = vmatprep.subr.mxu0 0.0
  %4701 = vmatpush1.msra.mxu0 0.0
  %4702 = vmatprep.subr.mxu0 0.0
  %4703 = vmatpush1.msra.mxu0 0.0
  %4704 = vmatprep.subr.mxu0 0.0
  %4705 = vmatpush1.msra.mxu0 0.0
  %4706 = vmatprep.subr.mxu0 0.0
  %4707 = vmatpush1.msra.mxu0 0.0
  %4708 = vmatprep.subr.mxu0 0.0
  %4709 = vmatpush1.msra.mxu0 0.0
  %4710 = vmatprep.subr.mxu0 0.0
  %4711 = vmatpush1.msra.mxu0 0.0
  %4712 = vmatprep.subr.mxu0 0.0
  %4713 = vmatpush1.msra.mxu0 0.0
  %4714 = vmatprep.subr.mxu0 0.0
  %4715 = vmatpush1.msra.mxu0 0.0
  %4716 = vmatprep.subr.mxu0 0.0
  %4717 = vmatpush1.msra.mxu0 0.0
  %4718 = vmatprep.subr.mxu0 0.0
  %4719 = vmatpush1.msra.mxu0 0.0
  %4720 = vmatprep.subr.mxu0 0.0
  %4721 = vmatpush1.msra.mxu0 0.0
  %4722 = vmatprep.subr.mxu0 %v410
  %4723 = vmatpush1.msra.mxu0 %v409
  %4724 = vmatprep.subr.mxu0 %v273
  %4725 = vmatpush1.msra.mxu0 %v272
  %4726 = vmatprep.subr.mxu0 %v136
  %4727 = vmatpush1.msra.mxu0 %v135
  %4728 = vmatprep.subr.mxu0 0.0
  %4729 = vmatpush2.msra.mxu0 0.0
  %4730 = vmatprep.subr.mxu0 0.0
  %4731 = vmatpush2.msra.mxu0 0.0
  %4732 = vmatprep.subr.mxu0 0.0
  %4733 = vmatpush2.msra.mxu0 0.0
  %4734 = vmatprep.subr.mxu0 0.0
  %4735 = vmatpush2.msra.mxu0 0.0
  %4736 = vmatprep.subr.mxu0 0.0
  %4737 = vmatpush2.msra.mxu0 0.0
  %4738 = vmatprep.subr.mxu0 0.0
  %4739 = vmatpush2.msra.mxu0 0.0
  %4740 = vmatprep.subr.mxu0 0.0
  %4741 = vmatpush2.msra.mxu0 0.0
  %4742 = vmatprep.subr.mxu0 0.0
  %4743 = vmatpush2.msra.mxu0 0.0
  %4744 = vmatprep.subr.mxu0 0.0
  %4745 = vmatpush2.msra.mxu0 0.0
  %4746 = vmatprep.subr.mxu0 0.0
  %4747 = vmatpush2.msra.mxu0 0.0
  %4748 = vmatprep.subr.mxu0 0.0
  %4749 = vmatpush2.msra.mxu0 0.0
  %4750 = vmatprep.subr.mxu0 0.0
  %4751 = vmatpush2.msra.mxu0 0.0
  %4752 = vmatprep.subr.mxu0 0.0
  %4753 = vmatpush2.msra.mxu0 0.0
  %4754 = vmatprep.subr.mxu0 0.0
  %4755 = vmatpush2.msra.mxu0 0.0
  %4756 = vmatprep.subr.mxu0 0.0
  %4757 = vmatpush2.msra.mxu0 0.0
  %4758 = vmatprep.subr.mxu0 0.0
  %4759 = vmatpush2.msra.mxu0 0.0
  %4760 = vmatprep.mubr.f32.mxu0 0.0
  %4761 = vmatmul.mubr.f32.gmra.mxu0 %v434
  %v4762 = vpop.f32.mrf.mxu0
  %v4763 = vadd.f32 %v430, %v4762
  %v4764 = vpop.f32.mrf.mxu0
  %v4765 = vadd.f32 %v430, %v4764
  %4766 = vdwg.mxu0
  %4767 = vmatprep.subr.mxu0 0.0
  %4768 = vmatpush1.msra.mxu0 0.0
  %4769 = vmatprep.subr.mxu0 0.0
  %4770 = vmatpush1.msra.mxu0 0.0
  %4771 = vmatprep.subr.mxu0 0.0
  %4772 = vmatpush1.msra.mxu0 0.0
  %4773 = vmatprep.subr.mxu0 0.0
  %4774 = vmatpush1.msra.mxu0 0.0
  %4775 = vmatprep.subr.mxu0 0.0
  %4776 = vmatpush1.msra.mxu0 0.0
  %4777 = vmatprep.subr.mxu0 0.0
  %4778 = vmatpush1.msra.mxu0 0.0
  %4779 = vmatprep.subr.mxu0 0.0
  %4780 = vmatpush1.msra.mxu0 0.0
  %4781 = vmatprep.subr.mxu0 0.0
  %4782 = vmatpush1.msra.mxu0 0.0
  %4783 = vmatprep.subr.mxu0 0.0
  %4784 = vmatpush1.msra.mxu0 0.0
  %4785 = vmatprep.subr.mxu0 0.0
  %4786 = vmatpush1.msra.mxu0 0.0
  %4787 = vmatprep.subr.mxu0 0.0
  %4788 = vmatpush1.msra.mxu0 0.0
  %4789 = vmatprep.subr.mxu0 0.0
  %4790 = vmatpush1.msra.mxu0 0.0
  %4791 = vmatprep.subr.mxu0 0.0
  %4792 = vmatpush1.msra.mxu0 0.0
  %4793 = vmatprep.subr.mxu0 %v412
  %4794 = vmatpush1.msra.mxu0 %v411
  %4795 = vmatprep.subr.mxu0 %v275
  %4796 = vmatpush1.msra.mxu0 %v274
  %4797 = vmatprep.subr.mxu0 %v138
  %4798 = vmatpush1.msra.mxu0 %v137
  %4799 = vmatprep.subr.mxu0 0.0
  %4800 = vmatpush2.msra.mxu0 0.0
  %4801 = vmatprep.subr.mxu0 0.0
  %4802 = vmatpush2.msra.mxu0 0.0
  %4803 = vmatprep.subr.mxu0 0.0
  %4804 = vmatpush2.msra.mxu0 0.0
  %4805 = vmatprep.subr.mxu0 0.0
  %4806 = vmatpush2.msra.mxu0 0.0
  %4807 = vmatprep.subr.mxu0 0.0
  %4808 = vmatpush2.msra.mxu0 0.0
  %4809 = vmatprep.subr.mxu0 0.0
  %4810 = vmatpush2.msra.mxu0 0.0
  %4811 = vmatprep.subr.mxu0 0.0
  %4812 = vmatpush2.msra.mxu0 0.0
  %4813 = vmatprep.subr.mxu0 0.0
  %4814 = vmatpush2.msra.mxu0 0.0
  %4815 = vmatprep.subr.mxu0 0.0
  %4816 = vmatpush2.msra.mxu0 0.0
  %4817 = vmatprep.subr.mxu0 0.0
  %4818 = vmatpush2.msra.mxu0 0.0
  %4819 = vmatprep.subr.mxu0 0.0
  %4820 = vmatpush2.msra.mxu0 0.0
  %4821 = vmatprep.subr.mxu0 0.0
  %4822 = vmatpush2.msra.mxu0 0.0
  %4823 = vmatprep.subr.mxu0 0.0
  %4824 = vmatpush2.msra.mxu0 0.0
  %4825 = vmatprep.subr.mxu0 0.0
  %4826 = vmatpush2.msra.mxu0 0.0
  %4827 = vmatprep.subr.mxu0 0.0
  %4828 = vmatpush2.msra.mxu0 0.0
  %4829 = vmatprep.subr.mxu0 0.0
  %4830 = vmatpush2.msra.mxu0 0.0
  %4831 = vmatprep.mubr.f32.mxu0 0.0
  %4832 = vmatmul.mubr.f32.gmra.mxu0 %v434
  %v4833 = vpop.f32.mrf.mxu0
  %v4834 = vadd.f32 %v430, %v4833
  %v4835 = vpop.f32.mrf.mxu0
  %v4836 = vadd.f32 %v430, %v4835
  %4837 = vdwg.mxu0
  %4838 = vmatprep.subr.mxu0 0.0
  %4839 = vmatpush1.msra.mxu0 0.0
  %4840 = vmatprep.subr.mxu0 0.0
  %4841 = vmatpush1.msra.mxu0 0.0
  %4842 = vmatprep.subr.mxu0 0.0
  %4843 = vmatpush1.msra.mxu0 0.0
  %4844 = vmatprep.subr.mxu0 0.0
  %4845 = vmatpush1.msra.mxu0 0.0
  %4846 = vmatprep.subr.mxu0 0.0
  %4847 = vmatpush1.msra.mxu0 0.0
  %4848 = vmatprep.subr.mxu0 0.0
  %4849 = vmatpush1.msra.mxu0 0.0
  %4850 = vmatprep.subr.mxu0 0.0
  %4851 = vmatpush1.msra.mxu0 0.0
  %4852 = vmatprep.subr.mxu0 0.0
  %4853 = vmatpush1.msra.mxu0 0.0
  %4854 = vmatprep.subr.mxu0 0.0
  %4855 = vmatpush1.msra.mxu0 0.0
  %4856 = vmatprep.subr.mxu0 0.0
  %4857 = vmatpush1.msra.mxu0 0.0
  %4858 = vmatprep.subr.mxu0 0.0
  %4859 = vmatpush1.msra.mxu0 0.0
  %4860 = vmatprep.subr.mxu0 0.0
  %4861 = vmatpush1.msra.mxu0 0.0
  %4862 = vmatprep.subr.mxu0 0.0
  %4863 = vmatpush1.msra.mxu0 0.0
  %4864 = vmatprep.subr.mxu0 %v414
  %4865 = vmatpush1.msra.mxu0 %v413
  %4866 = vmatprep.subr.mxu0 %v277
  %4867 = vmatpush1.msra.mxu0 %v276
  %4868 = vmatprep.subr.mxu0 %v140
  %4869 = vmatpush1.msra.mxu0 %v139
  %4870 = vmatprep.subr.mxu0 0.0
  %4871 = vmatpush2.msra.mxu0 0.0
  %4872 = vmatprep.subr.mxu0 0.0
  %4873 = vmatpush2.msra.mxu0 0.0
  %4874 = vmatprep.subr.mxu0 0.0
  %4875 = vmatpush2.msra.mxu0 0.0
  %4876 = vmatprep.subr.mxu0 0.0
  %4877 = vmatpush2.msra.mxu0 0.0
  %4878 = vmatprep.subr.mxu0 0.0
  %4879 = vmatpush2.msra.mxu0 0.0
  %4880 = vmatprep.subr.mxu0 0.0
  %4881 = vmatpush2.msra.mxu0 0.0
  %4882 = vmatprep.subr.mxu0 0.0
  %4883 = vmatpush2.msra.mxu0 0.0
  %4884 = vmatprep.subr.mxu0 0.0
  %4885 = vmatpush2.msra.mxu0 0.0
  %4886 = vmatprep.subr.mxu0 0.0
  %4887 = vmatpush2.msra.mxu0 0.0
  %4888 = vmatprep.subr.mxu0 0.0
  %4889 = vmatpush2.msra.mxu0 0.0
  %4890 = vmatprep.subr.mxu0 0.0
  %4891 = vmatpush2.msra.mxu0 0.0
  %4892 = vmatprep.subr.mxu0 0.0
  %4893 = vmatpush2.msra.mxu0 0.0
  %4894 = vmatprep.subr.mxu0 0.0
  %4895 = vmatpush2.msra.mxu0 0.0
  %4896 = vmatprep.subr.mxu0 0.0
  %4897 = vmatpush2.msra.mxu0 0.0
  %4898 = vmatprep.subr.mxu0 0.0
  %4899 = vmatpush2.msra.mxu0 0.0
  %4900 = vmatprep.subr.mxu0 0.0
  %4901 = vmatpush2.msra.mxu0 0.0
  %4902 = vmatprep.mubr.f32.mxu0 0.0
  %4903 = vmatmul.mubr.f32.gmra.mxu0 %v434
  %v4904 = vpop.f32.mrf.mxu0
  %v4905 = vadd.f32 %v430, %v4904
  %v4906 = vpop.f32.mrf.mxu0
  %v4907 = vadd.f32 %v430, %v4906
  %4908 = vdwg.mxu0
  %4909 = vmatprep.subr.mxu0 0.0
  %4910 = vmatpush1.msra.mxu0 0.0
  %4911 = vmatprep.subr.mxu0 0.0
  %4912 = vmatpush1.msra.mxu0 0.0
  %4913 = vmatprep.subr.mxu0 0.0
  %4914 = vmatpush1.msra.mxu0 0.0
  %4915 = vmatprep.subr.mxu0 0.0
  %4916 = vmatpush1.msra.mxu0 0.0
  %4917 = vmatprep.subr.mxu0 0.0
  %4918 = vmatpush1.msra.mxu0 0.0
  %4919 = vmatprep.subr.mxu0 0.0
  %4920 = vmatpush1.msra.mxu0 0.0
  %4921 = vmatprep.subr.mxu0 0.0
  %4922 = vmatpush1.msra.mxu0 0.0
  %4923 = vmatprep.subr.mxu0 0.0
  %4924 = vmatpush1.msra.mxu0 0.0
  %4925 = vmatprep.subr.mxu0 0.0
  %4926 = vmatpush1.msra.mxu0 0.0
  %4927 = vmatprep.subr.mxu0 0.0
  %4928 = vmatpush1.msra.mxu0 0.0
  %4929 = vmatprep.subr.mxu0 0.0
  %4930 = vmatpush1.msra.mxu0 0.0
  %4931 = vmatprep.subr.mxu0 0.0
  %4932 = vmatpush1.msra.mxu0 0.0
  %4933 = vmatprep.subr.mxu0 0.0
  %4934 = vmatpush1.msra.mxu0 0.0
  %4935 = vmatprep.subr.mxu0 %v416
  %4936 = vmatpush1.msra.mxu0 %v415
  %4937 = vmatprep.subr.mxu0 %v279
  %4938 = vmatpush1.msra.mxu0 %v278
  %4939 = vmatprep.subr.mxu0 %v142
  %4940 = vmatpush1.msra.mxu0 %v141
  %4941 = vmatprep.subr.mxu0 0.0
  %4942 = vmatpush2.msra.mxu0 0.0
  %4943 = vmatprep.subr.mxu0 0.0
  %4944 = vmatpush2.msra.mxu0 0.0
  %4945 = vmatprep.subr.mxu0 0.0
  %4946 = vmatpush2.msra.mxu0 0.0
  %4947 = vmatprep.subr.mxu0 0.0
  %4948 = vmatpush2.msra.mxu0 0.0
  %4949 = vmatprep.subr.mxu0 0.0
  %4950 = vmatpush2.msra.mxu0 0.0
  %4951 = vmatprep.subr.mxu0 0.0
  %4952 = vmatpush2.msra.mxu0 0.0
  %4953 = vmatprep.subr.mxu0 0.0
  %4954 = vmatpush2.msra.mxu0 0.0
  %4955 = vmatprep.subr.mxu0 0.0
  %4956 = vmatpush2.msra.mxu0 0.0
  %4957 = vmatprep.subr.mxu0 0.0
  %4958 = vmatpush2.msra.mxu0 0.0
  %4959 = vmatprep.subr.mxu0 0.0
  %4960 = vmatpush2.msra.mxu0 0.0
  %4961 = vmatprep.subr.mxu0 0.0
  %4962 = vmatpush2.msra.mxu0 0.0
  %4963 = vmatprep.subr.mxu0 0.0
  %4964 = vmatpush2.msra.mxu0 0.0
  %4965 = vmatprep.subr.mxu0 0.0
  %4966 = vmatpush2.msra.mxu0 0.0
  %4967 = vmatprep.subr.mxu0 0.0
  %4968 = vmatpush2.msra.mxu0 0.0
  %4969 = vmatprep.subr.mxu0 0.0
  %4970 = vmatpush2.msra.mxu0 0.0
  %4971 = vmatprep.subr.mxu0 0.0
  %4972 = vmatpush2.msra.mxu0 0.0
  %4973 = vmatprep.mubr.f32.mxu0 0.0
  %4974 = vmatmul.mubr.f32.gmra.mxu0 %v434
  %v4975 = vpop.f32.mrf.mxu0
  %v4976 = vadd.f32 %v430, %v4975
  %v4977 = vpop.f32.mrf.mxu0
  %v4978 = vadd.f32 %v430, %v4977
  %4979 = vdwg.mxu0
  %4980 = vmatprep.subr.mxu0 0.0
  %4981 = vmatpush1.msra.mxu0 0.0
  %4982 = vmatprep.subr.mxu0 0.0
  %4983 = vmatpush1.msra.mxu0 0.0
  %4984 = vmatprep.subr.mxu0 0.0
  %4985 = vmatpush1.msra.mxu0 0.0
  %4986 = vmatprep.subr.mxu0 0.0
  %4987 = vmatpush1.msra.mxu0 0.0
  %4988 = vmatprep.subr.mxu0 0.0
  %4989 = vmatpush1.msra.mxu0 0.0
  %4990 = vmatprep.subr.mxu0 0.0
  %4991 = vmatpush1.msra.mxu0 0.0
  %4992 = vmatprep.subr.mxu0 0.0
  %4993 = vmatpush1.msra.mxu0 0.0
  %4994 = vmatprep.subr.mxu0 0.0
  %4995 = vmatpush1.msra.mxu0 0.0
  %4996 = vmatprep.subr.mxu0 0.0
  %4997 = vmatpush1.msra.mxu0 0.0
  %4998 = vmatprep.subr.mxu0 0.0
  %4999 = vmatpush1.msra.mxu0 0.0
  %5000 = vmatprep.subr.mxu0 0.0
  %5001 = vmatpush1.msra.mxu0 0.0
  %5002 = vmatprep.subr.mxu0 0.0
  %5003 = vmatpush1.msra.mxu0 0.0
  %5004 = vmatprep.subr.mxu0 0.0
  %5005 = vmatpush1.msra.mxu0 0.0
  %5006 = vmatprep.subr.mxu0 %v418
  %5007 = vmatpush1.msra.mxu0 %v417
  %5008 = vmatprep.subr.mxu0 %v281
  %5009 = vmatpush1.msra.mxu0 %v280
  %5010 = vmatprep.subr.mxu0 %v144
  %5011 = vmatpush1.msra.mxu0 %v143
  %5012 = vmatprep.subr.mxu0 0.0
  %5013 = vmatpush2.msra.mxu0 0.0
  %5014 = vmatprep.subr.mxu0 0.0
  %5015 = vmatpush2.msra.mxu0 0.0
  %5016 = vmatprep.subr.mxu0 0.0
  %5017 = vmatpush2.msra.mxu0 0.0
  %5018 = vmatprep.subr.mxu0 0.0
  %5019 = vmatpush2.msra.mxu0 0.0
  %5020 = vmatprep.subr.mxu0 0.0
  %5021 = vmatpush2.msra.mxu0 0.0
  %5022 = vmatprep.subr.mxu0 0.0
  %5023 = vmatpush2.msra.mxu0 0.0
  %5024 = vmatprep.subr.mxu0 0.0
  %5025 = vmatpush2.msra.mxu0 0.0
  %5026 = vmatprep.subr.mxu0 0.0
  %5027 = vmatpush2.msra.mxu0 0.0
  %5028 = vmatprep.subr.mxu0 0.0
  %5029 = vmatpush2.msra.mxu0 0.0
  %5030 = vmatprep.subr.mxu0 0.0
  %5031 = vmatpush2.msra.mxu0 0.0
  %5032 = vmatprep.subr.mxu0 0.0
  %5033 = vmatpush2.msra.mxu0 0.0
  %5034 = vmatprep.subr.mxu0 0.0
  %5035 = vmatpush2.msra.mxu0 0.0
  %5036 = vmatprep.subr.mxu0 0.0
  %5037 = vmatpush2.msra.mxu0 0.0
  %5038 = vmatprep.subr.mxu0 0.0
  %5039 = vmatpush2.msra.mxu0 0.0
  %5040 = vmatprep.subr.mxu0 0.0
  %5041 = vmatpush2.msra.mxu0 0.0
  %5042 = vmatprep.subr.mxu0 0.0
  %5043 = vmatpush2.msra.mxu0 0.0
  %5044 = vmatprep.mubr.f32.mxu0 0.0
  %5045 = vmatmul.mubr.f32.gmra.mxu0 %v434
  %v5046 = vpop.f32.mrf.mxu0
  %v5047 = vadd.f32 %v430, %v5046
  %v5048 = vpop.f32.mrf.mxu0
  %v5049 = vadd.f32 %v430, %v5048
  %5050 = vdwg.mxu0
  %5051 = vmatprep.subr.mxu0 0.0
  %5052 = vmatpush1.msra.mxu0 0.0
  %5053 = vmatprep.subr.mxu0 0.0
  %5054 = vmatpush1.msra.mxu0 0.0
  %5055 = vmatprep.subr.mxu0 0.0
  %5056 = vmatpush1.msra.mxu0 0.0
  %5057 = vmatprep.subr.mxu0 0.0
  %5058 = vmatpush1.msra.mxu0 0.0
  %5059 = vmatprep.subr.mxu0 0.0
  %5060 = vmatpush1.msra.mxu0 0.0
  %5061 = vmatprep.subr.mxu0 0.0
  %5062 = vmatpush1.msra.mxu0 0.0
  %5063 = vmatprep.subr.mxu0 0.0
  %5064 = vmatpush1.msra.mxu0 0.0
  %5065 = vmatprep.subr.mxu0 0.0
  %5066 = vmatpush1.msra.mxu0 0.0
  %5067 = vmatprep.subr.mxu0 0.0
  %5068 = vmatpush1.msra.mxu0 0.0
  %5069 = vmatprep.subr.mxu0 0.0
  %5070 = vmatpush1.msra.mxu0 0.0
  %5071 = vmatprep.subr.mxu0 0.0
  %5072 = vmatpush1.msra.mxu0 0.0
  %5073 = vmatprep.subr.mxu0 0.0
  %5074 = vmatpush1.msra.mxu0 0.0
  %5075 = vmatprep.subr.mxu0 0.0
  %5076 = vmatpush1.msra.mxu0 0.0
  %5077 = vmatprep.subr.mxu0 %v420
  %5078 = vmatpush1.msra.mxu0 %v419
  %5079 = vmatprep.subr.mxu0 %v283
  %5080 = vmatpush1.msra.mxu0 %v282
  %5081 = vmatprep.subr.mxu0 %v146
  %5082 = vmatpush1.msra.mxu0 %v145
  %5083 = vmatprep.subr.mxu0 0.0
  %5084 = vmatpush2.msra.mxu0 0.0
  %5085 = vmatprep.subr.mxu0 0.0
  %5086 = vmatpush2.msra.mxu0 0.0
  %5087 = vmatprep.subr.mxu0 0.0
  %5088 = vmatpush2.msra.mxu0 0.0
  %5089 = vmatprep.subr.mxu0 0.0
  %5090 = vmatpush2.msra.mxu0 0.0
  %5091 = vmatprep.subr.mxu0 0.0
  %5092 = vmatpush2.msra.mxu0 0.0
  %5093 = vmatprep.subr.mxu0 0.0
  %5094 = vmatpush2.msra.mxu0 0.0
  %5095 = vmatprep.subr.mxu0 0.0
  %5096 = vmatpush2.msra.mxu0 0.0
  %5097 = vmatprep.subr.mxu0 0.0
  %5098 = vmatpush2.msra.mxu0 0.0
  %5099 = vmatprep.subr.mxu0 0.0
  %5100 = vmatpush2.msra.mxu0 0.0
  %5101 = vmatprep.subr.mxu0 0.0
  %5102 = vmatpush2.msra.mxu0 0.0
  %5103 = vmatprep.subr.mxu0 0.0
  %5104 = vmatpush2.msra.mxu0 0.0
  %5105 = vmatprep.subr.mxu0 0.0
  %5106 = vmatpush2.msra.mxu0 0.0
  %5107 = vmatprep.subr.mxu0 0.0
  %5108 = vmatpush2.msra.mxu0 0.0
  %5109 = vmatprep.subr.mxu0 0.0
  %5110 = vmatpush2.msra.mxu0 0.0
  %5111 = vmatprep.subr.mxu0 0.0
  %5112 = vmatpush2.msra.mxu0 0.0
  %5113 = vmatprep.subr.mxu0 0.0
  %5114 = vmatpush2.msra.mxu0 0.0
  %5115 = vmatprep.mubr.f32.mxu0 0.0
  %5116 = vmatmul.mubr.f32.gmra.mxu0 %v434
  %v5117 = vpop.f32.mrf.mxu0
  %v5118 = vadd.f32 %v430, %v5117
  %v5119 = vpop.f32.mrf.mxu0
  %v5120 = vadd.f32 %v430, %v5119
  %5121 = vdwg.mxu0
  %5122 = vmatprep.subr.mxu0 0.0
  %5123 = vmatpush1.msra.mxu0 0.0
  %5124 = vmatprep.subr.mxu0 0.0
  %5125 = vmatpush1.msra.mxu0 0.0
  %5126 = vmatprep.subr.mxu0 0.0
  %5127 = vmatpush1.msra.mxu0 0.0
  %5128 = vmatprep.subr.mxu0 0.0
  %5129 = vmatpush1.msra.mxu0 0.0
  %5130 = vmatprep.subr.mxu0 0.0
  %5131 = vmatpush1.msra.mxu0 0.0
  %5132 = vmatprep.subr.mxu0 0.0
  %5133 = vmatpush1.msra.mxu0 0.0
  %5134 = vmatprep.subr.mxu0 0.0
  %5135 = vmatpush1.msra.mxu0 0.0
  %5136 = vmatprep.subr.mxu0 0.0
  %5137 = vmatpush1.msra.mxu0 0.0
  %5138 = vmatprep.subr.mxu0 0.0
  %5139 = vmatpush1.msra.mxu0 0.0
  %5140 = vmatprep.subr.mxu0 0.0
  %5141 = vmatpush1.msra.mxu0 0.0
  %5142 = vmatprep.subr.mxu0 0.0
  %5143 = vmatpush1.msra.mxu0 0.0
  %5144 = vmatprep.subr.mxu0 0.0
  %5145 = vmatpush1.msra.mxu0 0.0
  %5146 = vmatprep.subr.mxu0 0.0
  %5147 = vmatpush1.msra.mxu0 0.0
  %5148 = vmatprep.subr.mxu0 %v422
  %5149 = vmatpush1.msra.mxu0 %v421
  %5150 = vmatprep.subr.mxu0 %v285
  %5151 = vmatpush1.msra.mxu0 %v284
  %5152 = vmatprep.subr.mxu0 %v148
  %5153 = vmatpush1.msra.mxu0 %v147
  %5154 = vmatprep.subr.mxu0 0.0
  %5155 = vmatpush2.msra.mxu0 0.0
  %5156 = vmatprep.subr.mxu0 0.0
  %5157 = vmatpush2.msra.mxu0 0.0
  %5158 = vmatprep.subr.mxu0 0.0
  %5159 = vmatpush2.msra.mxu0 0.0
  %5160 = vmatprep.subr.mxu0 0.0
  %5161 = vmatpush2.msra.mxu0 0.0
  %5162 = vmatprep.subr.mxu0 0.0
  %5163 = vmatpush2.msra.mxu0 0.0
  %5164 = vmatprep.subr.mxu0 0.0
  %5165 = vmatpush2.msra.mxu0 0.0
  %5166 = vmatprep.subr.mxu0 0.0
  %5167 = vmatpush2.msra.mxu0 0.0
  %5168 = vmatprep.subr.mxu0 0.0
  %5169 = vmatpush2.msra.mxu0 0.0
  %5170 = vmatprep.subr.mxu0 0.0
  %5171 = vmatpush2.msra.mxu0 0.0
  %5172 = vmatprep.subr.mxu0 0.0
  %5173 = vmatpush2.msra.mxu0 0.0
  %5174 = vmatprep.subr.mxu0 0.0
  %5175 = vmatpush2.msra.mxu0 0.0
  %5176 = vmatprep.subr.mxu0 0.0
  %5177 = vmatpush2.msra.mxu0 0.0
  %5178 = vmatprep.subr.mxu0 0.0
  %5179 = vmatpush2.msra.mxu0 0.0
  %5180 = vmatprep.subr.mxu0 0.0
  %5181 = vmatpush2.msra.mxu0 0.0
  %5182 = vmatprep.subr.mxu0 0.0
  %5183 = vmatpush2.msra.mxu0 0.0
  %5184 = vmatprep.subr.mxu0 0.0
  %5185 = vmatpush2.msra.mxu0 0.0
  %5186 = vmatprep.mubr.f32.mxu0 0.0
  %5187 = vmatmul.mubr.f32.gmra.mxu0 %v434
  %v5188 = vpop.f32.mrf.mxu0
  %v5189 = vadd.f32 %v430, %v5188
  %v5190 = vpop.f32.mrf.mxu0
  %v5191 = vadd.f32 %v430, %v5190
  %5192 = vdwg.mxu0
  %5193 = vmatprep.subr.mxu0 0.0
  %5194 = vmatpush1.msra.mxu0 0.0
  %5195 = vmatprep.subr.mxu0 0.0
  %5196 = vmatpush1.msra.mxu0 0.0
  %5197 = vmatprep.subr.mxu0 0.0
  %5198 = vmatpush1.msra.mxu0 0.0
  %5199 = vmatprep.subr.mxu0 0.0
  %5200 = vmatpush1.msra.mxu0 0.0
  %5201 = vmatprep.subr.mxu0 0.0
  %5202 = vmatpush1.msra.mxu0 0.0
  %5203 = vmatprep.subr.mxu0 0.0
  %5204 = vmatpush1.msra.mxu0 0.0
  %5205 = vmatprep.subr.mxu0 0.0
  %5206 = vmatpush1.msra.mxu0 0.0
  %5207 = vmatprep.subr.mxu0 0.0
  %5208 = vmatpush1.msra.mxu0 0.0
  %5209 = vmatprep.subr.mxu0 0.0
  %5210 = vmatpush1.msra.mxu0 0.0
  %5211 = vmatprep.subr.mxu0 0.0
  %5212 = vmatpush1.msra.mxu0 0.0
  %5213 = vmatprep.subr.mxu0 0.0
  %5214 = vmatpush1.msra.mxu0 0.0
  %5215 = vmatprep.subr.mxu0 0.0
  %5216 = vmatpush1.msra.mxu0 0.0
  %5217 = vmatprep.subr.mxu0 0.0
  %5218 = vmatpush1.msra.mxu0 0.0
  %5219 = vmatprep.subr.mxu0 %v424
  %5220 = vmatpush1.msra.mxu0 %v423
  %5221 = vmatprep.subr.mxu0 %v287
  %5222 = vmatpush1.msra.mxu0 %v286
  %5223 = vmatprep.subr.mxu0 %v150
  %5224 = vmatpush1.msra.mxu0 %v149
  %5225 = vmatprep.subr.mxu0 0.0
  %5226 = vmatpush2.msra.mxu0 0.0
  %5227 = vmatprep.subr.mxu0 0.0
  %5228 = vmatpush2.msra.mxu0 0.0
  %5229 = vmatprep.subr.mxu0 0.0
  %5230 = vmatpush2.msra.mxu0 0.0
  %5231 = vmatprep.subr.mxu0 0.0
  %5232 = vmatpush2.msra.mxu0 0.0
  %5233 = vmatprep.subr.mxu0 0.0
  %5234 = vmatpush2.msra.mxu0 0.0
  %5235 = vmatprep.subr.mxu0 0.0
  %5236 = vmatpush2.msra.mxu0 0.0
  %5237 = vmatprep.subr.mxu0 0.0
  %5238 = vmatpush2.msra.mxu0 0.0
  %5239 = vmatprep.subr.mxu0 0.0
  %5240 = vmatpush2.msra.mxu0 0.0
  %5241 = vmatprep.subr.mxu0 0.0
  %5242 = vmatpush2.msra.mxu0 0.0
  %5243 = vmatprep.subr.mxu0 0.0
  %5244 = vmatpush2.msra.mxu0 0.0
  %5245 = vmatprep.subr.mxu0 0.0
  %5246 = vmatpush2.msra.mxu0 0.0
  %5247 = vmatprep.subr.mxu0 0.0
  %5248 = vmatpush2.msra.mxu0 0.0
  %5249 = vmatprep.subr.mxu0 0.0
  %5250 = vmatpush2.msra.mxu0 0.0
  %5251 = vmatprep.subr.mxu0 0.0
  %5252 = vmatpush2.msra.mxu0 0.0
  %5253 = vmatprep.subr.mxu0 0.0
  %5254 = vmatpush2.msra.mxu0 0.0
  %5255 = vmatprep.subr.mxu0 0.0
  %5256 = vmatpush2.msra.mxu0 0.0
  %5257 = vmatprep.mubr.f32.mxu0 0.0
  %5258 = vmatmul.mubr.f32.gmra.mxu0 %v434
  %v5259 = vpop.f32.mrf.mxu0
  %v5260 = vadd.f32 %v430, %v5259
  %v5261 = vpop.f32.mrf.mxu0
  %v5262 = vadd.f32 %v430, %v5261
  %5263 = vdwg.mxu0
  %5264 = vmatprep.subr.mxu0 0.0
  %5265 = vmatpush1.msra.mxu0 0.0
  %5266 = vmatprep.subr.mxu0 0.0
  %5267 = vmatpush1.msra.mxu0 0.0
  %5268 = vmatprep.subr.mxu0 0.0
  %5269 = vmatpush1.msra.mxu0 0.0
  %5270 = vmatprep.subr.mxu0 0.0
  %5271 = vmatpush1.msra.mxu0 0.0
  %5272 = vmatprep.subr.mxu0 0.0
  %5273 = vmatpush1.msra.mxu0 0.0
  %5274 = vmatprep.subr.mxu0 0.0
  %5275 = vmatpush1.msra.mxu0 0.0
  %5276 = vmatprep.subr.mxu0 0.0
  %5277 = vmatpush1.msra.mxu0 0.0
  %5278 = vmatprep.subr.mxu0 0.0
  %5279 = vmatpush1.msra.mxu0 0.0
  %5280 = vmatprep.subr.mxu0 0.0
  %5281 = vmatpush1.msra.mxu0 0.0
  %5282 = vmatprep.subr.mxu0 0.0
  %5283 = vmatpush1.msra.mxu0 0.0
  %5284 = vmatprep.subr.mxu0 0.0
  %5285 = vmatpush1.msra.mxu0 0.0
  %5286 = vmatprep.subr.mxu0 0.0
  %5287 = vmatpush1.msra.mxu0 0.0
  %5288 = vmatprep.subr.mxu0 0.0
  %5289 = vmatpush1.msra.mxu0 0.0
  %5290 = vmatprep.subr.mxu0 0.0
  %5291 = vmatpush1.msra.mxu0 %v425
  %5292 = vmatprep.subr.mxu0 0.0
  %5293 = vmatpush1.msra.mxu0 %v288
  %5294 = vmatprep.subr.mxu0 0.0
  %5295 = vmatpush1.msra.mxu0 %v151
  %5296 = vmatprep.subr.mxu0 0.0
  %5297 = vmatpush2.msra.mxu0 0.0
  %5298 = vmatprep.subr.mxu0 0.0
  %5299 = vmatpush2.msra.mxu0 0.0
  %5300 = vmatprep.subr.mxu0 0.0
  %5301 = vmatpush2.msra.mxu0 0.0
  %5302 = vmatprep.subr.mxu0 0.0
  %5303 = vmatpush2.msra.mxu0 0.0
  %5304 = vmatprep.subr.mxu0 0.0
  %5305 = vmatpush2.msra.mxu0 0.0
  %5306 = vmatprep.subr.mxu0 0.0
  %5307 = vmatpush2.msra.mxu0 0.0
  %5308 = vmatprep.subr.mxu0 0.0
  %5309 = vmatpush2.msra.mxu0 0.0
  %5310 = vmatprep.subr.mxu0 0.0
  %5311 = vmatpush2.msra.mxu0 0.0
  %5312 = vmatprep.subr.mxu0 0.0
  %5313 = vmatpush2.msra.mxu0 0.0
  %5314 = vmatprep.subr.mxu0 0.0
  %5315 = vmatpush2.msra.mxu0 0.0
  %5316 = vmatprep.subr.mxu0 0.0
  %5317 = vmatpush2.msra.mxu0 0.0
  %5318 = vmatprep.subr.mxu0 0.0
  %5319 = vmatpush2.msra.mxu0 0.0
  %5320 = vmatprep.subr.mxu0 0.0
  %5321 = vmatpush2.msra.mxu0 0.0
  %5322 = vmatprep.subr.mxu0 0.0
  %5323 = vmatpush2.msra.mxu0 0.0
  %5324 = vmatprep.subr.mxu0 0.0
  %5325 = vmatpush2.msra.mxu0 0.0
  %5326 = vmatprep.subr.mxu0 0.0
  %5327 = vmatpush2.msra.mxu0 0.0
  %5328 = vmatprep.mubr.f32.mxu0 0.0
  %5329 = vmatmul.mubr.f32.gmra.mxu0 %v434
  %v5330 = vpop.f32.mrf.mxu0
  %v5331 = vadd.f32 %v430, %v5330
  %v5332 = vpop.f32.mrf.mxu0
  %5333 = vdwg.mxu0
  %v5334 = vmax.f32 %v503, 0.0
  %v5335 = vmax.f32 %v505, 0.0
  %v5336 = vmax.f32 %v574, 0.0
  %v5337 = vmax.f32 %v576, 0.0
  %v5338 = vmax.f32 %v645, 0.0
  %v5339 = vmax.f32 %v647, 0.0
  %v5340 = vmax.f32 %v716, 0.0
  %v5341 = vmax.f32 %v718, 0.0
  %v5342 = vmax.f32 %v787, 0.0
  %v5343 = vmax.f32 %v789, 0.0
  %v5344 = vmax.f32 %v858, 0.0
  %v5345 = vmax.f32 %v860, 0.0
  %v5346 = vmax.f32 %v929, 0.0
  %v5347 = vmax.f32 %v931, 0.0
  %v5348 = vmax.f32 %v1000, 0.0
  %v5349 = vmax.f32 %v1002, 0.0
  %v5350 = vmax.f32 %v1071, 0.0
  %v5351 = vmax.f32 %v1073, 0.0
  %v5352 = vmax.f32 %v1142, 0.0
  %v5353 = vmax.f32 %v1144, 0.0
  %v5354 = vmax.f32 %v1213, 0.0
  %v5355 = vmax.f32 %v1215, 0.0
  %v5356 = vmax.f32 %v1284, 0.0
  %v5357 = vmax.f32 %v1286, 0.0
  %v5358 = vmax.f32 %v1355, 0.0
  %v5359 = vmax.f32 %v1357, 0.0
  %v5360 = vmax.f32 %v1426, 0.0
  %v5361 = vmax.f32 %v1428, 0.0
  %v5362 = vmax.f32 %v1497, 0.0
  %v5363 = vmax.f32 %v1499, 0.0
  %v5364 = vmax.f32 %v1568, 0.0
  %v5365 = vmax.f32 %v1570, 0.0
  %v5366 = vmax.f32 %v1639, 0.0
  %v5367 = vmax.f32 %v1641, 0.0
  %v5368 = vmax.f32 %v1710, 0.0
  %v5369 = vmax.f32 %v1712, 0.0
  %v5370 = vmax.f32 %v1781, 0.0
  %v5371 = vmax.f32 %v1783, 0.0
  %v5372 = vmax.f32 %v1852, 0.0
  %v5373 = vmax.f32 %v1854, 0.0
  %v5374 = vmax.f32 %v1923, 0.0
  %v5375 = vmax.f32 %v1925, 0.0
  %v5376 = vmax.f32 %v1994, 0.0
  %v5377 = vmax.f32 %v1996, 0.0
  %v5378 = vmax.f32 %v2065, 0.0
  %v5379 = vmax.f32 %v2067, 0.0
  %v5380 = vmax.f32 %v2136, 0.0
  %v5381 = vmax.f32 %v2138, 0.0
  %v5382 = vmax.f32 %v2207, 0.0
  %v5383 = vmax.f32 %v2209, 0.0
  %v5384 = vmax.f32 %v2278, 0.0
  %v5385 = vmax.f32 %v2280, 0.0
  %v5386 = vmax.f32 %v2349, 0.0
  %v5387 = vmax.f32 %v2351, 0.0
  %v5388 = vmax.f32 %v2420, 0.0
  %v5389 = vmax.f32 %v2422, 0.0
  %v5390 = vmax.f32 %v2491, 0.0
  %v5391 = vmax.f32 %v2493, 0.0
  %v5392 = vmax.f32 %v2562, 0.0
  %v5393 = vmax.f32 %v2564, 0.0
  %v5394 = vmax.f32 %v2633, 0.0
  %v5395 = vmax.f32 %v2635, 0.0
  %v5396 = vmax.f32 %v2704, 0.0
  %v5397 = vmax.f32 %v2706, 0.0
  %v5398 = vmax.f32 %v2775, 0.0
  %v5399 = vmax.f32 %v2777, 0.0
  %v5400 = vmax.f32 %v2846, 0.0
  %v5401 = vmax.f32 %v2848, 0.0
  %v5402 = vmax.f32 %v2917, 0.0
  %v5403 = vmax.f32 %v2919, 0.0
  %v5404 = vmax.f32 %v2988, 0.0
  %v5405 = vmax.f32 %v2990, 0.0
  %v5406 = vmax.f32 %v3059, 0.0
  %v5407 = vmax.f32 %v3061, 0.0
  %v5408 = vmax.f32 %v3130, 0.0
  %v5409 = vmax.f32 %v3132, 0.0
  %v5410 = vmax.f32 %v3201, 0.0
  %v5411 = vmax.f32 %v3203, 0.0
  %v5412 = vmax.f32 %v3272, 0.0
  %v5413 = vmax.f32 %v3274, 0.0
  %v5414 = vmax.f32 %v3343, 0.0
  %v5415 = vmax.f32 %v3345, 0.0
  %v5416 = vmax.f32 %v3414, 0.0
  %v5417 = vmax.f32 %v3416, 0.0
  %v5418 = vmax.f32 %v3485, 0.0
  %v5419 = vmax.f32 %v3487, 0.0
  %v5420 = vmax.f32 %v3556, 0.0
  %v5421 = vmax.f32 %v3558, 0.0
  %v5422 = vmax.f32 %v3627, 0.0
  %v5423 = vmax.f32 %v3629, 0.0
  %v5424 = vmax.f32 %v3698, 0.0
  %v5425 = vmax.f32 %v3700, 0.0
  %v5426 = vmax.f32 %v3769, 0.0
  %v5427 = vmax.f32 %v3771, 0.0
  %v5428 = vmax.f32 %v3840, 0.0
  %v5429 = vmax.f32 %v3842, 0.0
  %v5430 = vmax.f32 %v3911, 0.0
  %v5431 = vmax.f32 %v3913, 0.0
  %v5432 = vmax.f32 %v3982, 0.0
  %v5433 = vmax.f32 %v3984, 0.0
  %v5434 = vmax.f32 %v4053, 0.0
  %v5435 = vmax.f32 %v4055, 0.0
  %v5436 = vmax.f32 %v4124, 0.0
  %v5437 = vmax.f32 %v4126, 0.0
  %v5438 = vmax.f32 %v4195, 0.0
  %v5439 = vmax.f32 %v4197, 0.0
  %v5440 = vmax.f32 %v4266, 0.0
  %v5441 = vmax.f32 %v4268, 0.0
  %v5442 = vmax.f32 %v4337, 0.0
  %v5443 = vmax.f32 %v4339, 0.0
  %v5444 = vmax.f32 %v4408, 0.0
  %v5445 = vmax.f32 %v4410, 0.0
  %v5446 = vmax.f32 %v4479, 0.0
  %v5447 = vmax.f32 %v4481, 0.0
  %v5448 = vmax.f32 %v4550, 0.0
  %v5449 = vmax.f32 %v4552, 0.0
  %v5450 = vmax.f32 %v4621, 0.0
  %v5451 = vmax.f32 %v4623, 0.0
  %v5452 = vmax.f32 %v4692, 0.0
  %v5453 = vmax.f32 %v4694, 0.0
  %v5454 = vmax.f32 %v4763, 0.0
  %v5455 = vmax.f32 %v4765, 0.0
  %v5456 = vmax.f32 %v4834, 0.0
  %v5457 = vmax.f32 %v4836, 0.0
  %v5458 = vmax.f32 %v4905, 0.0
  %v5459 = vmax.f32 %v4907, 0.0
  %v5460 = vmax.f32 %v4976, 0.0
  %v5461 = vmax.f32 %v4978, 0.0
  %v5462 = vmax.f32 %v5047, 0.0
  %v5463 = vmax.f32 %v5049, 0.0
  %v5464 = vmax.f32 %v5118, 0.0
  %v5465 = vmax.f32 %v5120, 0.0
  %v5466 = vmax.f32 %v5189, 0.0
  %v5467 = vmax.f32 %v5191, 0.0
  %v5468 = vmax.f32 %v5260, 0.0
  %v5469 = vmax.f32 %v5262, 0.0
  %v5470 = vmax.f32 %v5331, 0.0
  %5471 = vst [vmem:[%s3] sm:$0xff] %v5334
  %5472 = vst [vmem:[%s3 + $0x8] sm:$0xff] %v5335
  %5473 = vst [vmem:[%s3 + $0x10] sm:$0xff] %v5336
  %5474 = vst [vmem:[%s3 + $0x18] sm:$0xff] %v5337
  %5475 = vst [vmem:[%s3 + $0x20] sm:$0xff] %v5338
  %5476 = vst [vmem:[%s3 + $0x28] sm:$0xff] %v5339
  %5477 = vst [vmem:[%s3 + $0x30] sm:$0xff] %v5340
  %5478 = vst [vmem:[%s3 + $0x38] sm:$0xff] %v5341
  %5479 = vst [vmem:[%s3 + $0x40] sm:$0xff] %v5342
  %5480 = vst [vmem:[%s3 + $0x48] sm:$0xff] %v5343
  %5481 = vst [vmem:[%s3 + $0x50] sm:$0xff] %v5344
  %5482 = vst [vmem:[%s3 + $0x58] sm:$0xff] %v5345
  %5483 = vst [vmem:[%s3 + $0x60] sm:$0xff] %v5346
  %5484 = vst [vmem:[%s3 + $0x68] sm:$0xff] %v5347
  %5485 = vst [vmem:[%s3 + $0x70] sm:$0xff] %v5348
  %5486 = vst [vmem:[%s3 + $0x78] sm:$0xff] %v5349
  %5487 = vst [vmem:[%s3 + $0x80] sm:$0xff] %v5350
  %5488 = vst [vmem:[%s3 + $0x88] sm:$0xff] %v5351
  %5489 = vst [vmem:[%s3 + $0x90] sm:$0xff] %v5352
  %5490 = vst [vmem:[%s3 + $0x98] sm:$0xff] %v5353
  %5491 = vst [vmem:[%s3 + $0xa0] sm:$0xff] %v5354
  %5492 = vst [vmem:[%s3 + $0xa8] sm:$0xff] %v5355
  %5493 = vst [vmem:[%s3 + $0xb0] sm:$0xff] %v5356
  %5494 = vst [vmem:[%s3 + $0xb8] sm:$0xff] %v5357
  %5495 = vst [vmem:[%s3 + $0xc0] sm:$0xff] %v5358
  %5496 = vst [vmem:[%s3 + $0xc8] sm:$0xff] %v5359
  %5497 = vst [vmem:[%s3 + $0xd0] sm:$0xff] %v5360
  %5498 = vst [vmem:[%s3 + $0xd8] sm:$0xff] %v5361
  %5499 = vst [vmem:[%s3 + $0xe0] sm:$0xff] %v5362
  %5500 = vst [vmem:[%s3 + $0xe8] sm:$0xff] %v5363
  %5501 = vst [vmem:[%s3 + $0xf0] sm:$0xff] %v5364
  %5502 = vst [vmem:[%s3 + $0xf8] sm:$0xff] %v5365
  %5503 = vst [vmem:[%s3 + $0x100] sm:$0xff] %v5366
  %5504 = vst [vmem:[%s3 + $0x108] sm:$0xff] %v5367
  %5505 = vst [vmem:[%s3 + $0x110] sm:$0xff] %v5368
  %5506 = vst [vmem:[%s3 + $0x118] sm:$0xff] %v5369
  %5507 = vst [vmem:[%s3 + $0x120] sm:$0xff] %v5370
  %5508 = vst [vmem:[%s3 + $0x128] sm:$0xff] %v5371
  %5509 = vst [vmem:[%s3 + $0x130] sm:$0xff] %v5372
  %5510 = vst [vmem:[%s3 + $0x138] sm:$0xff] %v5373
  %5511 = vst [vmem:[%s3 + $0x140] sm:$0xff] %v5374
  %5512 = vst [vmem:[%s3 + $0x148] sm:$0xff] %v5375
  %5513 = vst [vmem:[%s3 + $0x150] sm:$0xff] %v5376
  %5514 = vst [vmem:[%s3 + $0x158] sm:$0xff] %v5377
  %5515 = vst [vmem:[%s3 + $0x160] sm:$0xff] %v5378
  %5516 = vst [vmem:[%s3 + $0x168] sm:$0xff] %v5379
  %5517 = vst [vmem:[%s3 + $0x170] sm:$0xff] %v5380
  %5518 = vst [vmem:[%s3 + $0x178] sm:$0xff] %v5381
  %5519 = vst [vmem:[%s3 + $0x180] sm:$0xff] %v5382
  %5520 = vst [vmem:[%s3 + $0x188] sm:$0xff] %v5383
  %5521 = vst [vmem:[%s3 + $0x190] sm:$0xff] %v5384
  %5522 = vst [vmem:[%s3 + $0x198] sm:$0xff] %v5385
  %5523 = vst [vmem:[%s3 + $0x1a0] sm:$0xff] %v5386
  %5524 = vst [vmem:[%s3 + $0x1a8] sm:$0xff] %v5387
  %5525 = vst [vmem:[%s3 + $0x1b0] sm:$0xff] %v5388
  %5526 = vst [vmem:[%s3 + $0x1b8] sm:$0xff] %v5389
  %5527 = vst [vmem:[%s3 + $0x1c0] sm:$0xff] %v5390
  %5528 = vst [vmem:[%s3 + $0x1c8] sm:$0xff] %v5391
  %5529 = vst [vmem:[%s3 + $0x1d0] sm:$0xff] %v5392
  %5530 = vst [vmem:[%s3 + $0x1d8] sm:$0xff] %v5393
  %5531 = vst [vmem:[%s3 + $0x1e0] sm:$0xff] %v5394
  %5532 = vst [vmem:[%s3 + $0x1e8] sm:$0xff] %v5395
  %5533 = vst [vmem:[%s3 + $0x1f0] sm:$0xff] %v5396
  %5534 = vst [vmem:[%s3 + $0x1f8] sm:$0xff] %v5397
  %5535 = vst [vmem:[%s3 + $0x200] sm:$0xff] %v5398
  %5536 = vst [vmem:[%s3 + $0x208] sm:$0xff] %v5399
  %5537 = vst [vmem:[%s3 + $0x210] sm:$0xff] %v5400
  %5538 = vst [vmem:[%s3 + $0x218] sm:$0xff] %v5401
  %5539 = vst [vmem:[%s3 + $0x220] sm:$0xff] %v5402
  %5540 = vst [vmem:[%s3 + $0x228] sm:$0xff] %v5403
  %5541 = vst [vmem:[%s3 + $0x230] sm:$0xff] %v5404
  %5542 = vst [vmem:[%s3 + $0x238] sm:$0xff] %v5405
  %5543 = vst [vmem:[%s3 + $0x240] sm:$0xff] %v5406
  %5544 = vst [vmem:[%s3 + $0x248] sm:$0xff] %v5407
  %5545 = vst [vmem:[%s3 + $0x250] sm:$0xff] %v5408
  %5546 = vst [vmem:[%s3 + $0x258] sm:$0xff] %v5409
  %5547 = vst [vmem:[%s3 + $0x260] sm:$0xff] %v5410
  %5548 = vst [vmem:[%s3 + $0x268] sm:$0xff] %v5411
  %5549 = vst [vmem:[%s3 + $0x270] sm:$0xff] %v5412
  %5550 = vst [vmem:[%s3 + $0x278] sm:$0xff] %v5413
  %5551 = vst [vmem:[%s3 + $0x280] sm:$0xff] %v5414
  %5552 = vst [vmem:[%s3 + $0x288] sm:$0xff] %v5415
  %5553 = vst [vmem:[%s3 + $0x290] sm:$0xff] %v5416
  %5554 = vst [vmem:[%s3 + $0x298] sm:$0xff] %v5417
  %5555 = vst [vmem:[%s3 + $0x2a0] sm:$0xff] %v5418
  %5556 = vst [vmem:[%s3 + $0x2a8] sm:$0xff] %v5419
  %5557 = vst [vmem:[%s3 + $0x2b0] sm:$0xff] %v5420
  %5558 = vst [vmem:[%s3 + $0x2b8] sm:$0xff] %v5421
  %5559 = vst [vmem:[%s3 + $0x2c0] sm:$0xff] %v5422
  %5560 = vst [vmem:[%s3 + $0x2c8] sm:$0xff] %v5423
  %5561 = vst [vmem:[%s3 + $0x2d0] sm:$0xff] %v5424
  %5562 = vst [vmem:[%s3 + $0x2d8] sm:$0xff] %v5425
  %5563 = vst [vmem:[%s3 + $0x2e0] sm:$0xff] %v5426
  %5564 = vst [vmem:[%s3 + $0x2e8] sm:$0xff] %v5427
  %5565 = vst [vmem:[%s3 + $0x2f0] sm:$0xff] %v5428
  %5566 = vst [vmem:[%s3 + $0x2f8] sm:$0xff] %v5429
  %5567 = vst [vmem:[%s3 + $0x300] sm:$0xff] %v5430
  %5568 = vst [vmem:[%s3 + $0x308] sm:$0xff] %v5431
  %5569 = vst [vmem:[%s3 + $0x310] sm:$0xff] %v5432
  %5570 = vst [vmem:[%s3 + $0x318] sm:$0xff] %v5433
  %5571 = vst [vmem:[%s3 + $0x320] sm:$0xff] %v5434
  %5572 = vst [vmem:[%s3 + $0x328] sm:$0xff] %v5435
  %5573 = vst [vmem:[%s3 + $0x330] sm:$0xff] %v5436
  %5574 = vst [vmem:[%s3 + $0x338] sm:$0xff] %v5437
  %5575 = vst [vmem:[%s3 + $0x340] sm:$0xff] %v5438
  %5576 = vst [vmem:[%s3 + $0x348] sm:$0xff] %v5439
  %5577 = vst [vmem:[%s3 + $0x350] sm:$0xff] %v5440
  %5578 = vst [vmem:[%s3 + $0x358] sm:$0xff] %v5441
  %5579 = vst [vmem:[%s3 + $0x360] sm:$0xff] %v5442
  %5580 = vst [vmem:[%s3 + $0x368] sm:$0xff] %v5443
  %5581 = vst [vmem:[%s3 + $0x370] sm:$0xff] %v5444
  %5582 = vst [vmem:[%s3 + $0x378] sm:$0xff] %v5445
  %5583 = vst [vmem:[%s3 + $0x380] sm:$0xff] %v5446
  %5584 = vst [vmem:[%s3 + $0x388] sm:$0xff] %v5447
  %5585 = vst [vmem:[%s3 + $0x390] sm:$0xff] %v5448
  %5586 = vst [vmem:[%s3 + $0x398] sm:$0xff] %v5449
  %5587 = vst [vmem:[%s3 + $0x3a0] sm:$0xff] %v5450
  %5588 = vst [vmem:[%s3 + $0x3a8] sm:$0xff] %v5451
  %5589 = vst [vmem:[%s3 + $0x3b0] sm:$0xff] %v5452
  %5590 = vst [vmem:[%s3 + $0x3b8] sm:$0xff] %v5453
  %5591 = vst [vmem:[%s3 + $0x3c0] sm:$0xff] %v5454
  %5592 = vst [vmem:[%s3 + $0x3c8] sm:$0xff] %v5455
  %5593 = vst [vmem:[%s3 + $0x3d0] sm:$0xff] %v5456
  %5594 = vst [vmem:[%s3 + $0x3d8] sm:$0xff] %v5457
  %5595 = vst [vmem:[%s3 + $0x3e0] sm:$0xff] %v5458
  %5596 = vst [vmem:[%s3 + $0x3e8] sm:$0xff] %v5459
  %5597 = vst [vmem:[%s3 + $0x3f0] sm:$0xff] %v5460
  %5598 = vst [vmem:[%s3 + $0x3f8] sm:$0xff] %v5461
  %5599 = vst [vmem:[%s3 + $0x400] sm:$0xff] %v5462
  %5600 = vst [vmem:[%s3 + $0x408] sm:$0xff] %v5463
  %5601 = vst [vmem:[%s3 + $0x410] sm:$0xff] %v5464
  %5602 = vst [vmem:[%s3 + $0x418] sm:$0xff] %v5465
  %5603 = vst [vmem:[%s3 + $0x420] sm:$0xff] %v5466
  %5604 = vst [vmem:[%s3 + $0x428] sm:$0xff] %v5467
  %5605 = vst [vmem:[%s3 + $0x430] sm:$0xff] %v5468
  %5606 = vst [vmem:[%s3 + $0x438] sm:$0xff] %v5469
  %vm5607 = vcmask 130048
  %5608 = vst.msk [vmem:[%s3 + $0x440] sm:$0xff] %vm5607, %v5470
  // Predicated region
  $region14: #{jepa_forward.4} parent=0 // pred_check
    _
  $region15: #{jepa_forward.4} parent=0 // pred_check_branch
    %5610 = sbr.rel (0) target = $region17
  $region16: #{jepa_forward.4} parent=0 // pred_region
    _
  $region17: #{jepa_forward.4} parent=0 // pred_fallthru
    _
  // Predicated region
  $region18: #{jepa_forward.4} parent=0 // pred_check
    _
  $region19: #{jepa_forward.4} parent=0 // pred_check_branch
    %5612 = sbr.rel (0) target = $region21
  $region20: #{jepa_forward.4} parent=0 // pred_region
    _
  $region21: #{jepa_forward.4} parent=0 // pred_fallthru
    _

// kernel: jepa_forward.5
$region0: #{jepa_forward.5}
  #allocation0 [shape = 'u32[]', space=smem, size = 0x4, offset = 0x4, fixed_abs, tag = 'smem constant byte address 0x4 - core index']
  #allocation1 [shape = 'u32[144,128]{1,0:T(1,128)}', space=vmem, size = 0x12000, scoped, tag = 'internal scratch']
  %s0 = inlined_call_operand.vmem [shape: f32[16,200], index: 0, kind: input, shape index: {}]
  %s1 = inlined_call_operand.vmem [shape: f32[200,4624], index: 1, kind: input, shape index: {}]
  %s2 = inlined_call_operand.vmem [shape: f32[16,1], index: 2, kind: input, shape index: {}]
  %s3 = inlined_call_operand.vmem [shape: f32[16,4624], index: 3, kind: output, shape index: {}]
  %s4 = sld [smem:[#allocation0]]
  $region22: #{jepa_forward.5} parent=0
    _
  %s6 = ssub.s32 1, %s4
  %s7 = scalar_select 0, %s6, %s4
  // Predicated region
  $region2: #{jepa_forward.5} parent=0 // pred_check
    _
  $region3: #{jepa_forward.5} parent=0 // pred_check_branch
    %9 = sbr.rel (0) target = $region5
  $region4: #{jepa_forward.5} parent=0 // pred_region
    _
  $region5: #{jepa_forward.5} parent=0 // pred_fallthru
    _
  // Predicated region
  $region6: #{jepa_forward.5} parent=0 // pred_check
    _
  $region7: #{jepa_forward.5} parent=0 // pred_check_branch
    %11 = sbr.rel (0) target = $region9
  $region8: #{jepa_forward.5} parent=0 // pred_region
    _
  $region9: #{jepa_forward.5} parent=0 // pred_fallthru
    _
  // Predicated region
  $region10: #{jepa_forward.5} parent=0 // pred_check
    _
  $region11: #{jepa_forward.5} parent=0 // pred_check_branch
    %13 = sbr.rel (0) target = $region13
  $region12: #{jepa_forward.5} parent=0 // pred_region
    _
  $region13: #{jepa_forward.5} parent=0 // pred_fallthru
    _
  %v14 = vld [vmem:[%s0] sm:$0xff]
  %v15 = vld [vmem:[%s0 + $0x8] sm:$0xff]
  %v16 = vld [vmem:[%s0 + $0x10] sm:$0xff]
  %v17 = vld [vmem:[%s0 + $0x18] sm:$0xff]
  %v18 = vld [vmem:[%s1] sm:$0xff]
  %v19 = vld [vmem:[%s1 + $0x8] sm:$0xff]
  %v20 = vld [vmem:[%s1 + $0x10] sm:$0xff]
  %v21 = vld [vmem:[%s1 + $0x18] sm:$0xff]
  %v22 = vld [vmem:[%s1 + $0x20] sm:$0xff]
  %v23 = vld [vmem:[%s1 + $0x28] sm:$0xff]
  %v24 = vld [vmem:[%s1 + $0x30] sm:$0xff]
  %v25 = vld [vmem:[%s1 + $0x38] sm:$0xff]
  %v26 = vld [vmem:[%s1 + $0x40] sm:$0xff]
  %v27 = vld [vmem:[%s1 + $0x48] sm:$0xff]
  %v28 = vld [vmem:[%s1 + $0x50] sm:$0xff]
  %v29 = vld [vmem:[%s1 + $0x58] sm:$0xff]
  %v30 = vld [vmem:[%s1 + $0x60] sm:$0xff]
  %v31 = vld [vmem:[%s1 + $0x68] sm:$0xff]
  %v32 = vld [vmem:[%s1 + $0x70] sm:$0xff]
  %v33 = vld [vmem:[%s1 + $0x78] sm:$0xff]
  %v34 = vld [vmem:[%s1 + $0x80] sm:$0xff]
  %v35 = vld [vmem:[%s1 + $0x88] sm:$0xff]
  %v36 = vld [vmem:[%s1 + $0x90] sm:$0xff]
  %v37 = vld [vmem:[%s1 + $0x98] sm:$0xff]
  %v38 = vld [vmem:[%s1 + $0xa0] sm:$0xff]
  %v39 = vld [vmem:[%s1 + $0xa8] sm:$0xff]
  %v40 = vld [vmem:[%s1 + $0xb0] sm:$0xff]
  %v41 = vld [vmem:[%s1 + $0xb8] sm:$0xff]
  %v42 = vld [vmem:[%s1 + $0xc0] sm:$0xff]
  %v43 = vld [vmem:[%s1 + $0xc8] sm:$0xff]
  %v44 = vld [vmem:[%s1 + $0xd0] sm:$0xff]
  %v45 = vld [vmem:[%s1 + $0xd8] sm:$0xff]
  %v46 = vld [vmem:[%s1 + $0xe0] sm:$0xff]
  %v47 = vld [vmem:[%s1 + $0xe8] sm:$0xff]
  %v48 = vld [vmem:[%s1 + $0xf0] sm:$0xff]
  %v49 = vld [vmem:[%s1 + $0xf8] sm:$0xff]
  %v50 = vld [vmem:[%s1 + $0x100] sm:$0xff]
  %v51 = vld [vmem:[%s1 + $0x108] sm:$0xff]
  %v52 = vld [vmem:[%s1 + $0x110] sm:$0xff]
  %v53 = vld [vmem:[%s1 + $0x118] sm:$0xff]
  %v54 = vld [vmem:[%s1 + $0x120] sm:$0xff]
  %v55 = vld [vmem:[%s1 + $0x128] sm:$0xff]
  %v56 = vld [vmem:[%s1 + $0x130] sm:$0xff]
  %v57 = vld [vmem:[%s1 + $0x138] sm:$0xff]
  %v58 = vld [vmem:[%s1 + $0x140] sm:$0xff]
  %v59 = vld [vmem:[%s1 + $0x148] sm:$0xff]
  %v60 = vld [vmem:[%s1 + $0x150] sm:$0xff]
  %v61 = vld [vmem:[%s1 + $0x158] sm:$0xff]
  %v62 = vld [vmem:[%s1 + $0x160] sm:$0xff]
  %v63 = vld [vmem:[%s1 + $0x168] sm:$0xff]
  %v64 = vld [vmem:[%s1 + $0x170] sm:$0xff]
  %v65 = vld [vmem:[%s1 + $0x178] sm:$0xff]
  %v66 = vld [vmem:[%s1 + $0x180] sm:$0xff]
  %v67 = vld [vmem:[%s1 + $0x188] sm:$0xff]
  %v68 = vld [vmem:[%s1 + $0x190] sm:$0xff]
  %v69 = vld [vmem:[%s1 + $0x198] sm:$0xff]
  %v70 = vld [vmem:[%s1 + $0x1a0] sm:$0xff]
  %v71 = vld [vmem:[%s1 + $0x1a8] sm:$0xff]
  %v72 = vld [vmem:[%s1 + $0x1b0] sm:$0xff]
  %v73 = vld [vmem:[%s1 + $0x1b8] sm:$0xff]
  %v74 = vld [vmem:[%s1 + $0x1c0] sm:$0xff]
  %v75 = vld [vmem:[%s1 + $0x1c8] sm:$0xff]
  %v76 = vld [vmem:[%s1 + $0x1d0] sm:$0xff]
  %v77 = vld [vmem:[%s1 + $0x1d8] sm:$0xff]
  %v78 = vld [vmem:[%s1 + $0x1e0] sm:$0xff]
  %v79 = vld [vmem:[%s1 + $0x1e8] sm:$0xff]
  %v80 = vld [vmem:[%s1 + $0x1f0] sm:$0xff]
  %v81 = vld [vmem:[%s1 + $0x1f8] sm:$0xff]
  %v82 = vld [vmem:[%s1 + $0x200] sm:$0xff]
  %v83 = vld [vmem:[%s1 + $0x208] sm:$0xff]
  %v84 = vld [vmem:[%s1 + $0x210] sm:$0xff]
  %v85 = vld [vmem:[%s1 + $0x218] sm:$0xff]
  %v86 = vld [vmem:[%s1 + $0x220] sm:$0xff]
  %v87 = vld [vmem:[%s1 + $0x228] sm:$0xff]
  %v88 = vld [vmem:[%s1 + $0x230] sm:$0xff]
  %v89 = vld [vmem:[%s1 + $0x238] sm:$0xff]
  %v90 = vld [vmem:[%s1 + $0x240] sm:$0xff]
  %v91 = vld [vmem:[%s1 + $0x248] sm:$0xff]
  %v92 = vld [vmem:[%s1 + $0x250] sm:$0xff]
  %v93 = vld [vmem:[%s1 + $0x258] sm:$0xff]
  %v94 = vld [vmem:[%s1 + $0x260] sm:$0xff]
  %v95 = vld [vmem:[%s1 + $0x268] sm:$0xff]
  %v96 = vld [vmem:[%s1 + $0x270] sm:$0xff]
  %v97 = vld [vmem:[%s1 + $0x278] sm:$0xff]
  %v98 = vld [vmem:[%s1 + $0x280] sm:$0xff]
  %v99 = vld [vmem:[%s1 + $0x288] sm:$0xff]
  %v100 = vld [vmem:[%s1 + $0x290] sm:$0xff]
  %v101 = vld [vmem:[%s1 + $0x298] sm:$0xff]
  %v102 = vld [vmem:[%s1 + $0x2a0] sm:$0xff]
  %v103 = vld [vmem:[%s1 + $0x2a8] sm:$0xff]
  %v104 = vld [vmem:[%s1 + $0x2b0] sm:$0xff]
  %v105 = vld [vmem:[%s1 + $0x2b8] sm:$0xff]
  %v106 = vld [vmem:[%s1 + $0x2c0] sm:$0xff]
  %v107 = vld [vmem:[%s1 + $0x2c8] sm:$0xff]
  %v108 = vld [vmem:[%s1 + $0x2d0] sm:$0xff]
  %v109 = vld [vmem:[%s1 + $0x2d8] sm:$0xff]
  %v110 = vld [vmem:[%s1 + $0x2e0] sm:$0xff]
  %v111 = vld [vmem:[%s1 + $0x2e8] sm:$0xff]
  %v112 = vld [vmem:[%s1 + $0x2f0] sm:$0xff]
  %v113 = vld [vmem:[%s1 + $0x2f8] sm:$0xff]
  %v114 = vld [vmem:[%s1 + $0x300] sm:$0xff]
  %v115 = vld [vmem:[%s1 + $0x308] sm:$0xff]
  %v116 = vld [vmem:[%s1 + $0x310] sm:$0xff]
  %v117 = vld [vmem:[%s1 + $0x318] sm:$0xff]
  %v118 = vld [vmem:[%s1 + $0x320] sm:$0xff]
  %v119 = vld [vmem:[%s1 + $0x328] sm:$0xff]
  %v120 = vld [vmem:[%s1 + $0x330] sm:$0xff]
  %v121 = vld [vmem:[%s1 + $0x338] sm:$0xff]
  %v122 = vld [vmem:[%s1 + $0x340] sm:$0xff]
  %v123 = vld [vmem:[%s1 + $0x348] sm:$0xff]
  %v124 = vld [vmem:[%s1 + $0x350] sm:$0xff]
  %v125 = vld [vmem:[%s1 + $0x358] sm:$0xff]
  %v126 = vld [vmem:[%s1 + $0x360] sm:$0xff]
  %v127 = vld [vmem:[%s1 + $0x368] sm:$0xff]
  %v128 = vld [vmem:[%s1 + $0x370] sm:$0xff]
  %v129 = vld [vmem:[%s1 + $0x378] sm:$0xff]
  %v130 = vld [vmem:[%s1 + $0x380] sm:$0xff]
  %v131 = vld [vmem:[%s1 + $0x388] sm:$0xff]
  %v132 = vld [vmem:[%s1 + $0x390] sm:$0xff]
  %v133 = vld [vmem:[%s1 + $0x398] sm:$0xff]
  %v134 = vld [vmem:[%s1 + $0x3a0] sm:$0xff]
  %v135 = vld [vmem:[%s1 + $0x3a8] sm:$0xff]
  %v136 = vld [vmem:[%s1 + $0x3b0] sm:$0xff]
  %v137 = vld [vmem:[%s1 + $0x3b8] sm:$0xff]
  %v138 = vld [vmem:[%s1 + $0x3c0] sm:$0xff]
  %v139 = vld [vmem:[%s1 + $0x3c8] sm:$0xff]
  %v140 = vld [vmem:[%s1 + $0x3d0] sm:$0xff]
  %v141 = vld [vmem:[%s1 + $0x3d8] sm:$0xff]
  %v142 = vld [vmem:[%s1 + $0x3e0] sm:$0xff]
  %v143 = vld [vmem:[%s1 + $0x3e8] sm:$0xff]
  %v144 = vld [vmem:[%s1 + $0x3f0] sm:$0xff]
  %v145 = vld [vmem:[%s1 + $0x3f8] sm:$0xff]
  %v146 = vld [vmem:[%s1 + $0x400] sm:$0xff]
  %v147 = vld [vmem:[%s1 + $0x408] sm:$0xff]
  %v148 = vld [vmem:[%s1 + $0x410] sm:$0xff]
  %v149 = vld [vmem:[%s1 + $0x418] sm:$0xff]
  %v150 = vld [vmem:[%s1 + $0x420] sm:$0xff]
  %v151 = vld [vmem:[%s1 + $0x428] sm:$0xff]
  %v152 = vld [vmem:[%s1 + $0x430] sm:$0xff]
  %v153 = vld [vmem:[%s1 + $0x438] sm:$0xff]
  %v154 = vld [vmem:[%s1 + $0x440] sm:$0xff]
  %v155 = vld [vmem:[%s1 + $0x448] sm:$0xff]
  %v156 = vld [vmem:[%s1 + $0x450] sm:$0xff]
  %v157 = vld [vmem:[%s1 + $0x458] sm:$0xff]
  %v158 = vld [vmem:[%s1 + $0x460] sm:$0xff]
  %v159 = vld [vmem:[%s1 + $0x468] sm:$0xff]
  %v160 = vld [vmem:[%s1 + $0x470] sm:$0xff]
  %v161 = vld [vmem:[%s1 + $0x478] sm:$0xff]
  %v162 = vld [vmem:[%s1 + $0x480] sm:$0xff]
  %v163 = vld [vmem:[%s1 + $0x488] sm:$0xff]
  %v164 = vld [vmem:[%s1 + $0x490] sm:$0xff]
  %v165 = vld [vmem:[%s1 + $0x498] sm:$0xff]
  %v166 = vld [vmem:[%s1 + $0x4a0] sm:$0xff]
  %v167 = vld [vmem:[%s1 + $0x4a8] sm:$0xff]
  %v168 = vld [vmem:[%s1 + $0x4b0] sm:$0xff]
  %v169 = vld [vmem:[%s1 + $0x4b8] sm:$0xff]
  %v170 = vld [vmem:[%s1 + $0x4c0] sm:$0xff]
  %v171 = vld [vmem:[%s1 + $0x4c8] sm:$0xff]
  %v172 = vld [vmem:[%s1 + $0x4d0] sm:$0xff]
  %v173 = vld [vmem:[%s1 + $0x4d8] sm:$0xff]
  %v174 = vld [vmem:[%s1 + $0x4e0] sm:$0xff]
  %v175 = vld [vmem:[%s1 + $0x4e8] sm:$0xff]
  %v176 = vld [vmem:[%s1 + $0x4f0] sm:$0xff]
  %v177 = vld [vmem:[%s1 + $0x4f8] sm:$0xff]
  %v178 = vld [vmem:[%s1 + $0x500] sm:$0xff]
  %v179 = vld [vmem:[%s1 + $0x508] sm:$0xff]
  %v180 = vld [vmem:[%s1 + $0x510] sm:$0xff]
  %v181 = vld [vmem:[%s1 + $0x518] sm:$0xff]
  %v182 = vld [vmem:[%s1 + $0x520] sm:$0xff]
  %v183 = vld [vmem:[%s1 + $0x528] sm:$0xff]
  %v184 = vld [vmem:[%s1 + $0x530] sm:$0xff]
  %v185 = vld [vmem:[%s1 + $0x538] sm:$0xff]
  %v186 = vld [vmem:[%s1 + $0x540] sm:$0xff]
  %v187 = vld [vmem:[%s1 + $0x548] sm:$0xff]
  %v188 = vld [vmem:[%s1 + $0x550] sm:$0xff]
  %v189 = vld [vmem:[%s1 + $0x558] sm:$0xff]
  %v190 = vld [vmem:[%s1 + $0x560] sm:$0xff]
  %v191 = vld [vmem:[%s1 + $0x568] sm:$0xff]
  %v192 = vld [vmem:[%s1 + $0x570] sm:$0xff]
  %v193 = vld [vmem:[%s1 + $0x578] sm:$0xff]
  %v194 = vld [vmem:[%s1 + $0x580] sm:$0xff]
  %v195 = vld [vmem:[%s1 + $0x588] sm:$0xff]
  %v196 = vld [vmem:[%s1 + $0x590] sm:$0xff]
  %v197 = vld [vmem:[%s1 + $0x598] sm:$0xff]
  %v198 = vld [vmem:[%s1 + $0x5a0] sm:$0xff]
  %v199 = vld [vmem:[%s1 + $0x5a8] sm:$0xff]
  %v200 = vld [vmem:[%s1 + $0x5b0] sm:$0xff]
  %v201 = vld [vmem:[%s1 + $0x5b8] sm:$0xff]
  %v202 = vld [vmem:[%s1 + $0x5c0] sm:$0xff]
  %v203 = vld [vmem:[%s1 + $0x5c8] sm:$0xff]
  %v204 = vld [vmem:[%s1 + $0x5d0] sm:$0xff]
  %v205 = vld [vmem:[%s1 + $0x5d8] sm:$0xff]
  %v206 = vld [vmem:[%s1 + $0x5e0] sm:$0xff]
  %v207 = vld [vmem:[%s1 + $0x5e8] sm:$0xff]
  %v208 = vld [vmem:[%s1 + $0x5f0] sm:$0xff]
  %v209 = vld [vmem:[%s1 + $0x5f8] sm:$0xff]
  %v210 = vld [vmem:[%s1 + $0x600] sm:$0xff]
  %v211 = vld [vmem:[%s1 + $0x608] sm:$0xff]
  %v212 = vld [vmem:[%s1 + $0x610] sm:$0xff]
  %v213 = vld [vmem:[%s1 + $0x618] sm:$0xff]
  %v214 = vld [vmem:[%s1 + $0x620] sm:$0xff]
  %v215 = vld [vmem:[%s1 + $0x628] sm:$0xff]
  %v216 = vld [vmem:[%s1 + $0x630] sm:$0xff]
  %v217 = vld [vmem:[%s1 + $0x638] sm:$0xff]
  %v218 = vld [vmem:[%s1 + $0x640] sm:$0xff]
  %v219 = vld [vmem:[%s1 + $0x648] sm:$0xff]
  %v220 = vld [vmem:[%s1 + $0x650] sm:$0xff]
  %v221 = vld [vmem:[%s1 + $0x658] sm:$0xff]
  %v222 = vld [vmem:[%s1 + $0x660] sm:$0xff]
  %v223 = vld [vmem:[%s1 + $0x668] sm:$0xff]
  %v224 = vld [vmem:[%s1 + $0x670] sm:$0xff]
  %v225 = vld [vmem:[%s1 + $0x678] sm:$0xff]
  %v226 = vld [vmem:[%s1 + $0x680] sm:$0xff]
  %v227 = vld [vmem:[%s1 + $0x688] sm:$0xff]
  %v228 = vld [vmem:[%s1 + $0x690] sm:$0xff]
  %v229 = vld [vmem:[%s1 + $0x698] sm:$0xff]
  %v230 = vld [vmem:[%s1 + $0x6a0] sm:$0xff]
  %v231 = vld [vmem:[%s1 + $0x6a8] sm:$0xff]
  %v232 = vld [vmem:[%s1 + $0x6b0] sm:$0xff]
  %v233 = vld [vmem:[%s1 + $0x6b8] sm:$0xff]
  %v234 = vld [vmem:[%s1 + $0x6c0] sm:$0xff]
  %v235 = vld [vmem:[%s1 + $0x6c8] sm:$0xff]
  %v236 = vld [vmem:[%s1 + $0x6d0] sm:$0xff]
  %v237 = vld [vmem:[%s1 + $0x6d8] sm:$0xff]
  %v238 = vld [vmem:[%s1 + $0x6e0] sm:$0xff]
  %v239 = vld [vmem:[%s1 + $0x6e8] sm:$0xff]
  %v240 = vld [vmem:[%s1 + $0x6f0] sm:$0xff]
  %v241 = vld [vmem:[%s1 + $0x6f8] sm:$0xff]
  %v242 = vld [vmem:[%s1 + $0x700] sm:$0xff]
  %v243 = vld [vmem:[%s1 + $0x708] sm:$0xff]
  %v244 = vld [vmem:[%s1 + $0x710] sm:$0xff]
  %v245 = vld [vmem:[%s1 + $0x718] sm:$0xff]
  %v246 = vld [vmem:[%s1 + $0x720] sm:$0xff]
  %v247 = vld [vmem:[%s1 + $0x728] sm:$0xff]
  %v248 = vld [vmem:[%s1 + $0x730] sm:$0xff]
  %v249 = vld [vmem:[%s1 + $0x738] sm:$0xff]
  %v250 = vld [vmem:[%s1 + $0x740] sm:$0xff]
  %v251 = vld [vmem:[%s1 + $0x748] sm:$0xff]
  %v252 = vld [vmem:[%s1 + $0x750] sm:$0xff]
  %v253 = vld [vmem:[%s1 + $0x758] sm:$0xff]
  %v254 = vld [vmem:[%s1 + $0x760] sm:$0xff]
  %v255 = vld [vmem:[%s1 + $0x768] sm:$0xff]
  %v256 = vld [vmem:[%s1 + $0x770] sm:$0xff]
  %v257 = vld [vmem:[%s1 + $0x778] sm:$0xff]
  %v258 = vld [vmem:[%s1 + $0x780] sm:$0xff]
  %v259 = vld [vmem:[%s1 + $0x788] sm:$0xff]
  %v260 = vld [vmem:[%s1 + $0x790] sm:$0xff]
  %v261 = vld [vmem:[%s1 + $0x798] sm:$0xff]
  %v262 = vld [vmem:[%s1 + $0x7a0] sm:$0xff]
  %v263 = vld [vmem:[%s1 + $0x7a8] sm:$0xff]
  %v264 = vld [vmem:[%s1 + $0x7b0] sm:$0xff]
  %v265 = vld [vmem:[%s1 + $0x7b8] sm:$0xff]
  %v266 = vld [vmem:[%s1 + $0x7c0] sm:$0xff]
  %v267 = vld [vmem:[%s1 + $0x7c8] sm:$0xff]
  %v268 = vld [vmem:[%s1 + $0x7d0] sm:$0xff]
  %v269 = vld [vmem:[%s1 + $0x7d8] sm:$0xff]
  %v270 = vld [vmem:[%s1 + $0x7e0] sm:$0xff]
  %v271 = vld [vmem:[%s1 + $0x7e8] sm:$0xff]
  %v272 = vld [vmem:[%s1 + $0x7f0] sm:$0xff]
  %v273 = vld [vmem:[%s1 + $0x7f8] sm:$0xff]
  %v274 = vld [vmem:[%s1 + $0x800] sm:$0xff]
  %v275 = vld [vmem:[%s1 + $0x808] sm:$0xff]
  %v276 = vld [vmem:[%s1 + $0x810] sm:$0xff]
  %v277 = vld [vmem:[%s1 + $0x818] sm:$0xff]
  %v278 = vld [vmem:[%s1 + $0x820] sm:$0xff]
  %v279 = vld [vmem:[%s1 + $0x828] sm:$0xff]
  %v280 = vld [vmem:[%s1 + $0x830] sm:$0xff]
  %v281 = vld [vmem:[%s1 + $0x838] sm:$0xff]
  %v282 = vld [vmem:[%s1 + $0x840] sm:$0xff]
  %v283 = vld [vmem:[%s1 + $0x848] sm:$0xff]
  %v284 = vld [vmem:[%s1 + $0x850] sm:$0xff]
  %v285 = vld [vmem:[%s1 + $0x858] sm:$0xff]
  %v286 = vld [vmem:[%s1 + $0x860] sm:$0xff]
  %v287 = vld [vmem:[%s1 + $0x868] sm:$0xff]
  %v288 = vld [vmem:[%s1 + $0x870] sm:$0xff]
  %v289 = vld [vmem:[%s1 + $0x878] sm:$0xff]
  %v290 = vld [vmem:[%s1 + $0x880] sm:$0xff]
  %v291 = vld [vmem:[%s1 + $0x888] sm:$0xff]
  %v292 = vld [vmem:[%s1 + $0x890] sm:$0xff]
  %v293 = vld [vmem:[%s1 + $0x898] sm:$0xff]
  %v294 = vld [vmem:[%s1 + $0x8a0] sm:$0xff]
  %v295 = vld [vmem:[%s1 + $0x8a8] sm:$0xff]
  %v296 = vld [vmem:[%s1 + $0x8b0] sm:$0xff]
  %v297 = vld [vmem:[%s1 + $0x8b8] sm:$0xff]
  %v298 = vld [vmem:[%s1 + $0x8c0] sm:$0xff]
  %v299 = vld [vmem:[%s1 + $0x8c8] sm:$0xff]
  %v300 = vld [vmem:[%s1 + $0x8d0] sm:$0xff]
  %v301 = vld [vmem:[%s1 + $0x8d8] sm:$0xff]
  %v302 = vld [vmem:[%s1 + $0x8e0] sm:$0xff]
  %v303 = vld [vmem:[%s1 + $0x8e8] sm:$0xff]
  %v304 = vld [vmem:[%s1 + $0x8f0] sm:$0xff]
  %v305 = vld [vmem:[%s1 + $0x8f8] sm:$0xff]
  %v306 = vld [vmem:[%s1 + $0x900] sm:$0xff]
  %v307 = vld [vmem:[%s1 + $0x908] sm:$0xff]
  %v308 = vld [vmem:[%s1 + $0x910] sm:$0xff]
  %v309 = vld [vmem:[%s1 + $0x918] sm:$0xff]
  %v310 = vld [vmem:[%s1 + $0x920] sm:$0xff]
  %v311 = vld [vmem:[%s1 + $0x928] sm:$0xff]
  %v312 = vld [vmem:[%s1 + $0x930] sm:$0xff]
  %v313 = vld [vmem:[%s1 + $0x938] sm:$0xff]
  %v314 = vld [vmem:[%s1 + $0x940] sm:$0xff]
  %v315 = vld [vmem:[%s1 + $0x948] sm:$0xff]
  %v316 = vld [vmem:[%s1 + $0x950] sm:$0xff]
  %v317 = vld [vmem:[%s1 + $0x958] sm:$0xff]
  %v318 = vld [vmem:[%s1 + $0x960] sm:$0xff]
  %v319 = vld [vmem:[%s1 + $0x968] sm:$0xff]
  %v320 = vld [vmem:[%s1 + $0x970] sm:$0xff]
  %v321 = vld [vmem:[%s1 + $0x978] sm:$0xff]
  %v322 = vld [vmem:[%s1 + $0x980] sm:$0xff]
  %v323 = vld [vmem:[%s1 + $0x988] sm:$0xff]
  %v324 = vld [vmem:[%s1 + $0x990] sm:$0xff]
  %v325 = vld [vmem:[%s1 + $0x998] sm:$0xff]
  %v326 = vld [vmem:[%s1 + $0x9a0] sm:$0xff]
  %v327 = vld [vmem:[%s1 + $0x9a8] sm:$0xff]
  %v328 = vld [vmem:[%s1 + $0x9b0] sm:$0xff]
  %v329 = vld [vmem:[%s1 + $0x9b8] sm:$0xff]
  %v330 = vld [vmem:[%s1 + $0x9c0] sm:$0xff]
  %v331 = vld [vmem:[%s1 + $0x9c8] sm:$0xff]
  %v332 = vld [vmem:[%s1 + $0x9d0] sm:$0xff]
  %v333 = vld [vmem:[%s1 + $0x9d8] sm:$0xff]
  %v334 = vld [vmem:[%s1 + $0x9e0] sm:$0xff]
  %v335 = vld [vmem:[%s1 + $0x9e8] sm:$0xff]
  %v336 = vld [vmem:[%s1 + $0x9f0] sm:$0xff]
  %v337 = vld [vmem:[%s1 + $0x9f8] sm:$0xff]
  %v338 = vld [vmem:[%s1 + $0xa00] sm:$0xff]
  %v339 = vld [vmem:[%s1 + $0xa08] sm:$0xff]
  %v340 = vld [vmem:[%s1 + $0xa10] sm:$0xff]
  %v341 = vld [vmem:[%s1 + $0xa18] sm:$0xff]
  %v342 = vld [vmem:[%s1 + $0xa20] sm:$0xff]
  %v343 = vld [vmem:[%s1 + $0xa28] sm:$0xff]
  %v344 = vld [vmem:[%s1 + $0xa30] sm:$0xff]
  %v345 = vld [vmem:[%s1 + $0xa38] sm:$0xff]
  %v346 = vld [vmem:[%s1 + $0xa40] sm:$0xff]
  %v347 = vld [vmem:[%s1 + $0xa48] sm:$0xff]
  %v348 = vld [vmem:[%s1 + $0xa50] sm:$0xff]
  %v349 = vld [vmem:[%s1 + $0xa58] sm:$0xff]
  %v350 = vld [vmem:[%s1 + $0xa60] sm:$0xff]
  %v351 = vld [vmem:[%s1 + $0xa68] sm:$0xff]
  %v352 = vld [vmem:[%s1 + $0xa70] sm:$0xff]
  %v353 = vld [vmem:[%s1 + $0xa78] sm:$0xff]
  %v354 = vld [vmem:[%s1 + $0xa80] sm:$0xff]
  %v355 = vld [vmem:[%s1 + $0xa88] sm:$0xff]
  %v356 = vld [vmem:[%s1 + $0xa90] sm:$0xff]
  %v357 = vld [vmem:[%s1 + $0xa98] sm:$0xff]
  %v358 = vld [vmem:[%s1 + $0xaa0] sm:$0xff]
  %v359 = vld [vmem:[%s1 + $0xaa8] sm:$0xff]
  %v360 = vld [vmem:[%s1 + $0xab0] sm:$0xff]
  %v361 = vld [vmem:[%s1 + $0xab8] sm:$0xff]
  %v362 = vld [vmem:[%s1 + $0xac0] sm:$0xff]
  %v363 = vld [vmem:[%s1 + $0xac8] sm:$0xff]
  %v364 = vld [vmem:[%s1 + $0xad0] sm:$0xff]
  %v365 = vld [vmem:[%s1 + $0xad8] sm:$0xff]
  %v366 = vld [vmem:[%s1 + $0xae0] sm:$0xff]
  %v367 = vld [vmem:[%s1 + $0xae8] sm:$0xff]
  %v368 = vld [vmem:[%s1 + $0xaf0] sm:$0xff]
  %v369 = vld [vmem:[%s1 + $0xaf8] sm:$0xff]
  %v370 = vld [vmem:[%s1 + $0xb00] sm:$0xff]
  %v371 = vld [vmem:[%s1 + $0xb08] sm:$0xff]
  %v372 = vld [vmem:[%s1 + $0xb10] sm:$0xff]
  %v373 = vld [vmem:[%s1 + $0xb18] sm:$0xff]
  %v374 = vld [vmem:[%s1 + $0xb20] sm:$0xff]
  %v375 = vld [vmem:[%s1 + $0xb28] sm:$0xff]
  %v376 = vld [vmem:[%s1 + $0xb30] sm:$0xff]
  %v377 = vld [vmem:[%s1 + $0xb38] sm:$0xff]
  %v378 = vld [vmem:[%s1 + $0xb40] sm:$0xff]
  %v379 = vld [vmem:[%s1 + $0xb48] sm:$0xff]
  %v380 = vld [vmem:[%s1 + $0xb50] sm:$0xff]
  %v381 = vld [vmem:[%s1 + $0xb58] sm:$0xff]
  %v382 = vld [vmem:[%s1 + $0xb60] sm:$0xff]
  %v383 = vld [vmem:[%s1 + $0xb68] sm:$0xff]
  %v384 = vld [vmem:[%s1 + $0xb70] sm:$0xff]
  %v385 = vld [vmem:[%s1 + $0xb78] sm:$0xff]
  %v386 = vld [vmem:[%s1 + $0xb80] sm:$0xff]
  %v387 = vld [vmem:[%s1 + $0xb88] sm:$0xff]
  %v388 = vld [vmem:[%s1 + $0xb90] sm:$0xff]
  %v389 = vld [vmem:[%s1 + $0xb98] sm:$0xff]
  %v390 = vld [vmem:[%s1 + $0xba0] sm:$0xff]
  %v391 = vld [vmem:[%s1 + $0xba8] sm:$0xff]
  %v392 = vld [vmem:[%s1 + $0xbb0] sm:$0xff]
  %v393 = vld [vmem:[%s1 + $0xbb8] sm:$0xff]
  %v394 = vld [vmem:[%s1 + $0xbc0] sm:$0xff]
  %v395 = vld [vmem:[%s1 + $0xbc8] sm:$0xff]
  %v396 = vld [vmem:[%s1 + $0xbd0] sm:$0xff]
  %v397 = vld [vmem:[%s1 + $0xbd8] sm:$0xff]
  %v398 = vld [vmem:[%s1 + $0xbe0] sm:$0xff]
  %v399 = vld [vmem:[%s1 + $0xbe8] sm:$0xff]
  %v400 = vld [vmem:[%s1 + $0xbf0] sm:$0xff]
  %v401 = vld [vmem:[%s1 + $0xbf8] sm:$0xff]
  %v402 = vld [vmem:[%s1 + $0xc00] sm:$0xff]
  %v403 = vld [vmem:[%s1 + $0xc08] sm:$0xff]
  %v404 = vld [vmem:[%s1 + $0xc10] sm:$0xff]
  %v405 = vld [vmem:[%s1 + $0xc18] sm:$0xff]
  %v406 = vld [vmem:[%s1 + $0xc20] sm:$0xff]
  %v407 = vld [vmem:[%s1 + $0xc28] sm:$0xff]
  %v408 = vld [vmem:[%s1 + $0xc30] sm:$0xff]
  %v409 = vld [vmem:[%s1 + $0xc38] sm:$0xff]
  %v410 = vld [vmem:[%s1 + $0xc40] sm:$0xff]
  %v411 = vld [vmem:[%s1 + $0xc48] sm:$0xff]
  %v412 = vld [vmem:[%s1 + $0xc50] sm:$0xff]
  %v413 = vld [vmem:[%s1 + $0xc58] sm:$0xff]
  %v414 = vld [vmem:[%s1 + $0xc60] sm:$0xff]
  %v415 = vld [vmem:[%s1 + $0xc68] sm:$0xff]
  %v416 = vld [vmem:[%s1 + $0xc70] sm:$0xff]
  %v417 = vld [vmem:[%s1 + $0xc78] sm:$0xff]
  %v418 = vld [vmem:[%s1 + $0xc80] sm:$0xff]
  %v419 = vld [vmem:[%s1 + $0xc88] sm:$0xff]
  %v420 = vld [vmem:[%s1 + $0xc90] sm:$0xff]
  %v421 = vld [vmem:[%s1 + $0xc98] sm:$0xff]
  %v422 = vld [vmem:[%s1 + $0xca0] sm:$0xff]
  %v423 = vld [vmem:[%s1 + $0xca8] sm:$0xff]
  %v424 = vld [vmem:[%s1 + $0xcb0] sm:$0xff]
  %v425 = vld [vmem:[%s1 + $0xcb8] sm:$0xff]
  %v426 = vld [vmem:[%s1 + $0xcc0] sm:$0xff]
  %v427 = vld [vmem:[%s1 + $0xcc8] sm:$0xff]
  %v428 = vld [vmem:[%s1 + $0xcd0] sm:$0xff]
  %v429 = vld [vmem:[%s1 + $0xcd8] sm:$0xff]
  %v430 = vld [vmem:[%s1 + $0xce0] sm:$0xff]
  %v431 = vld [vmem:[%s1 + $0xce8] sm:$0xff]
  %v432 = vld [vmem:[%s1 + $0xcf0] sm:$0xff]
  %v433 = vld [vmem:[%s1 + $0xcf8] sm:$0xff]
  %v434 = vld [vmem:[%s1 + $0xd00] sm:$0xff]
  %v435 = vld [vmem:[%s1 + $0xd08] sm:$0xff]
  %v436 = vld [vmem:[%s1 + $0xd10] sm:$0xff]
  %v437 = vld [vmem:[%s1 + $0xd18] sm:$0xff]
  %v438 = vld [vmem:[%s1 + $0xd20] sm:$0xff]
  %v439 = vld [vmem:[%s1 + $0xd28] sm:$0xff]
  %v440 = vld [vmem:[%s1 + $0xd30] sm:$0xff]
  %v441 = vld [vmem:[%s1 + $0xd38] sm:$0xff]
  %v442 = vld [vmem:[%s1 + $0xd40] sm:$0xff]
  %v443 = vld [vmem:[%s1 + $0xd48] sm:$0xff]
  %v444 = vld [vmem:[%s1 + $0xd50] sm:$0xff]
  %v445 = vld [vmem:[%s1 + $0xd58] sm:$0xff]
  %v446 = vld [vmem:[%s1 + $0xd60] sm:$0xff]
  %v447 = vld [vmem:[%s1 + $0xd68] sm:$0xff]
  %v448 = vld [vmem:[%s1 + $0xd70] sm:$0xff]
  %v449 = vld [vmem:[%s1 + $0xd78] sm:$0xff]
  %v450 = vld [vmem:[%s1 + $0xd80] sm:$0xff]
  %v451 = vld [vmem:[%s1 + $0xd88] sm:$0xff]
  %v452 = vld [vmem:[%s1 + $0xd90] sm:$0xff]
  %v453 = vld [vmem:[%s1 + $0xd98] sm:$0xff]
  %v454 = vld [vmem:[%s1 + $0xda0] sm:$0xff]
  %v455 = vld [vmem:[%s1 + $0xda8] sm:$0xff]
  %v456 = vld [vmem:[%s1 + $0xdb0] sm:$0xff]
  %v457 = vld [vmem:[%s1 + $0xdb8] sm:$0xff]
  %v458 = vld [vmem:[%s1 + $0xdc0] sm:$0xff]
  %v459 = vld [vmem:[%s1 + $0xdc8] sm:$0xff]
  %v460 = vld [vmem:[%s1 + $0xdd0] sm:$0xff]
  %v461 = vld [vmem:[%s1 + $0xdd8] sm:$0xff]
  %v462 = vld [vmem:[%s1 + $0xde0] sm:$0xff]
  %v463 = vld [vmem:[%s1 + $0xde8] sm:$0xff]
  %v464 = vld [vmem:[%s1 + $0xdf0] sm:$0xff]
  %v465 = vld [vmem:[%s1 + $0xdf8] sm:$0xff]
  %v466 = vld [vmem:[%s1 + $0xe00] sm:$0xff]
  %v467 = vld [vmem:[%s1 + $0xe08] sm:$0xff]
  %v468 = vld [vmem:[%s1 + $0xe10] sm:$0xff]
  %v469 = vld [vmem:[%s1 + $0xe18] sm:$0xff]
  %v470 = vld [vmem:[%s1 + $0xe20] sm:$0xff]
  %v471 = vld [vmem:[%s1 + $0xe28] sm:$0xff]
  %v472 = vld [vmem:[%s1 + $0xe30] sm:$0xff]
  %v473 = vld [vmem:[%s1 + $0xe38] sm:$0xff]
  %v474 = vld [vmem:[%s1 + $0xe40] sm:$0xff]
  %v475 = vld [vmem:[%s1 + $0xe48] sm:$0xff]
  %v476 = vld [vmem:[%s1 + $0xe50] sm:$0xff]
  %v477 = vld [vmem:[%s1 + $0xe58] sm:$0xff]
  %v478 = vld [vmem:[%s1 + $0xe60] sm:$0xff]
  %v479 = vld [vmem:[%s1 + $0xe68] sm:$0xff]
  %v480 = vld [vmem:[%s1 + $0xe70] sm:$0xff]
  %v481 = vld [vmem:[%s1 + $0xe78] sm:$0xff]
  %v482 = vld [vmem:[%s1 + $0xe80] sm:$0xff]
  %v483 = vld [vmem:[%s1 + $0xe88] sm:$0xff]
  %v484 = vld [vmem:[%s1 + $0xe90] sm:$0xff]
  %v485 = vld [vmem:[%s1 + $0xe98] sm:$0xff]
  %v486 = vld [vmem:[%s1 + $0xea0] sm:$0xff]
  %v487 = vld [vmem:[%s1 + $0xea8] sm:$0xff]
  %v488 = vld [vmem:[%s1 + $0xeb0] sm:$0xff]
  %v489 = vld [vmem:[%s1 + $0xeb8] sm:$0xff]
  %v490 = vld [vmem:[%s1 + $0xec0] sm:$0xff]
  %v491 = vld [vmem:[%s1 + $0xec8] sm:$0xff]
  %v492 = vld [vmem:[%s1 + $0xed0] sm:$0xff]
  %v493 = vld [vmem:[%s1 + $0xed8] sm:$0xff]
  %v494 = vld [vmem:[%s1 + $0xee0] sm:$0xff]
  %v495 = vld [vmem:[%s1 + $0xee8] sm:$0xff]
  %v496 = vld [vmem:[%s1 + $0xef0] sm:$0xff]
  %v497 = vld [vmem:[%s1 + $0xef8] sm:$0xff]
  %v498 = vld [vmem:[%s1 + $0xf00] sm:$0xff]
  %v499 = vld [vmem:[%s1 + $0xf08] sm:$0xff]
  %v500 = vld [vmem:[%s1 + $0xf10] sm:$0xff]
  %v501 = vld [vmem:[%s1 + $0xf18] sm:$0xff]
  %v502 = vld [vmem:[%s1 + $0xf20] sm:$0xff]
  %v503 = vld [vmem:[%s1 + $0xf28] sm:$0xff]
  %v504 = vld [vmem:[%s1 + $0xf30] sm:$0xff]
  %v505 = vld [vmem:[%s1 + $0xf38] sm:$0xff]
  %v506 = vld [vmem:[%s1 + $0xf40] sm:$0xff]
  %v507 = vld [vmem:[%s1 + $0xf48] sm:$0xff]
  %v508 = vld [vmem:[%s1 + $0xf50] sm:$0xff]
  %v509 = vld [vmem:[%s1 + $0xf58] sm:$0xff]
  %v510 = vld [vmem:[%s1 + $0xf60] sm:$0xff]
  %v511 = vld [vmem:[%s1 + $0xf68] sm:$0xff]
  %v512 = vld [vmem:[%s1 + $0xf70] sm:$0xff]
  %v513 = vld [vmem:[%s1 + $0xf78] sm:$0xff]
  %v514 = vld [vmem:[%s1 + $0xf80] sm:$0xff]
  %v515 = vld [vmem:[%s1 + $0xf88] sm:$0xff]
  %v516 = vld [vmem:[%s1 + $0xf90] sm:$0xff]
  %v517 = vld [vmem:[%s1 + $0xf98] sm:$0xff]
  %v518 = vld [vmem:[%s1 + $0xfa0] sm:$0xff]
  %v519 = vld [vmem:[%s1 + $0xfa8] sm:$0xff]
  %v520 = vld [vmem:[%s1 + $0xfb0] sm:$0xff]
  %v521 = vld [vmem:[%s1 + $0xfb8] sm:$0xff]
  %v522 = vld [vmem:[%s1 + $0xfc0] sm:$0xff]
  %v523 = vld [vmem:[%s1 + $0xfc8] sm:$0xff]
  %v524 = vld [vmem:[%s1 + $0xfd0] sm:$0xff]
  %v525 = vld [vmem:[%s1 + $0xfd8] sm:$0xff]
  %v526 = vld [vmem:[%s1 + $0xfe0] sm:$0xff]
  %v527 = vld [vmem:[%s1 + $0xfe8] sm:$0xff]
  %v528 = vld [vmem:[%s1 + $0xff0] sm:$0xff]
  %v529 = vld [vmem:[%s1 + $0xff8] sm:$0xff]
  %v530 = vld [vmem:[%s1 + $0x1000] sm:$0xff]
  %v531 = vld [vmem:[%s1 + $0x1008] sm:$0xff]
  %v532 = vld [vmem:[%s1 + $0x1010] sm:$0xff]
  %v533 = vld [vmem:[%s1 + $0x1018] sm:$0xff]
  %v534 = vld [vmem:[%s1 + $0x1020] sm:$0xff]
  %v535 = vld [vmem:[%s1 + $0x1028] sm:$0xff]
  %v536 = vld [vmem:[%s1 + $0x1030] sm:$0xff]
  %v537 = vld [vmem:[%s1 + $0x1038] sm:$0xff]
  %v538 = vld [vmem:[%s1 + $0x1040] sm:$0xff]
  %v539 = vld [vmem:[%s1 + $0x1048] sm:$0xff]
  %v540 = vld [vmem:[%s1 + $0x1050] sm:$0xff]
  %v541 = vld [vmem:[%s1 + $0x1058] sm:$0xff]
  %v542 = vld [vmem:[%s1 + $0x1060] sm:$0xff]
  %v543 = vld [vmem:[%s1 + $0x1068] sm:$0xff]
  %v544 = vld [vmem:[%s1 + $0x1070] sm:$0xff]
  %v545 = vld [vmem:[%s1 + $0x1078] sm:$0xff]
  %v546 = vld [vmem:[%s1 + $0x1080] sm:$0xff]
  %v547 = vld [vmem:[%s1 + $0x1088] sm:$0xff]
  %v548 = vld [vmem:[%s1 + $0x1090] sm:$0xff]
  %v549 = vld [vmem:[%s1 + $0x1098] sm:$0xff]
  %v550 = vld [vmem:[%s1 + $0x10a0] sm:$0xff]
  %v551 = vld [vmem:[%s1 + $0x10a8] sm:$0xff]
  %v552 = vld [vmem:[%s1 + $0x10b0] sm:$0xff]
  %v553 = vld [vmem:[%s1 + $0x10b8] sm:$0xff]
  %v554 = vld [vmem:[%s1 + $0x10c0] sm:$0xff]
  %v555 = vld [vmem:[%s1 + $0x10c8] sm:$0xff]
  %v556 = vld [vmem:[%s1 + $0x10d0] sm:$0xff]
  %v557 = vld [vmem:[%s1 + $0x10d8] sm:$0xff]
  %v558 = vld [vmem:[%s1 + $0x10e0] sm:$0xff]
  %v559 = vld [vmem:[%s1 + $0x10e8] sm:$0xff]
  %v560 = vld [vmem:[%s1 + $0x10f0] sm:$0xff]
  %v561 = vld [vmem:[%s1 + $0x10f8] sm:$0xff]
  %v562 = vld [vmem:[%s1 + $0x1100] sm:$0xff]
  %v563 = vld [vmem:[%s1 + $0x1108] sm:$0xff]
  %v564 = vld [vmem:[%s1 + $0x1110] sm:$0xff]
  %v565 = vld [vmem:[%s1 + $0x1118] sm:$0xff]
  %v566 = vld [vmem:[%s1 + $0x1120] sm:$0xff]
  %v567 = vld [vmem:[%s1 + $0x1128] sm:$0xff]
  %v568 = vld [vmem:[%s1 + $0x1130] sm:$0xff]
  %v569 = vld [vmem:[%s1 + $0x1138] sm:$0xff]
  %v570 = vld [vmem:[%s1 + $0x1140] sm:$0xff]
  %v571 = vld [vmem:[%s1 + $0x1148] sm:$0xff]
  %v572 = vld [vmem:[%s1 + $0x1150] sm:$0xff]
  %v573 = vld [vmem:[%s1 + $0x1158] sm:$0xff]
  %v574 = vld [vmem:[%s1 + $0x1160] sm:$0xff]
  %v575 = vld [vmem:[%s1 + $0x1168] sm:$0xff]
  %v576 = vld [vmem:[%s1 + $0x1170] sm:$0xff]
  %v577 = vld [vmem:[%s1 + $0x1178] sm:$0xff]
  %v578 = vld [vmem:[%s1 + $0x1180] sm:$0xff]
  %v579 = vld [vmem:[%s1 + $0x1188] sm:$0xff]
  %v580 = vld [vmem:[%s1 + $0x1190] sm:$0xff]
  %v581 = vld [vmem:[%s1 + $0x1198] sm:$0xff]
  %v582 = vld [vmem:[%s1 + $0x11a0] sm:$0xff]
  %v583 = vld [vmem:[%s1 + $0x11a8] sm:$0xff]
  %v584 = vld [vmem:[%s1 + $0x11b0] sm:$0xff]
  %v585 = vld [vmem:[%s1 + $0x11b8] sm:$0xff]
  %v586 = vld [vmem:[%s1 + $0x11c0] sm:$0xff]
  %v587 = vld [vmem:[%s1 + $0x11c8] sm:$0xff]
  %v588 = vld [vmem:[%s1 + $0x11d0] sm:$0xff]
  %v589 = vld [vmem:[%s1 + $0x11d8] sm:$0xff]
  %v590 = vld [vmem:[%s1 + $0x11e0] sm:$0xff]
  %v591 = vld [vmem:[%s1 + $0x11e8] sm:$0xff]
  %v592 = vld [vmem:[%s1 + $0x11f0] sm:$0xff]
  %v593 = vld [vmem:[%s1 + $0x11f8] sm:$0xff]
  %v594 = vld [vmem:[%s1 + $0x1200] sm:$0xff]
  %v595 = vld [vmem:[%s1 + $0x1208] sm:$0xff]
  %v596 = vld [vmem:[%s1 + $0x1210] sm:$0xff]
  %v597 = vld [vmem:[%s1 + $0x1218] sm:$0xff]
  %v598 = vld [vmem:[%s1 + $0x1220] sm:$0xff]
  %v599 = vld [vmem:[%s1 + $0x1228] sm:$0xff]
  %v600 = vld [vmem:[%s1 + $0x1230] sm:$0xff]
  %v601 = vld [vmem:[%s1 + $0x1238] sm:$0xff]
  %v602 = vld [vmem:[%s1 + $0x1240] sm:$0xff]
  %v603 = vld [vmem:[%s1 + $0x1248] sm:$0xff]
  %v604 = vld [vmem:[%s1 + $0x1250] sm:$0xff]
  %v605 = vld [vmem:[%s1 + $0x1258] sm:$0xff]
  %v606 = vld [vmem:[%s1 + $0x1260] sm:$0xff]
  %v607 = vld [vmem:[%s1 + $0x1268] sm:$0xff]
  %v608 = vld [vmem:[%s1 + $0x1270] sm:$0xff]
  %v609 = vld [vmem:[%s1 + $0x1278] sm:$0xff]
  %v610 = vld [vmem:[%s1 + $0x1280] sm:$0xff]
  %v611 = vld [vmem:[%s1 + $0x1288] sm:$0xff]
  %v612 = vld [vmem:[%s1 + $0x1290] sm:$0xff]
  %v613 = vld [vmem:[%s1 + $0x1298] sm:$0xff]
  %v614 = vld [vmem:[%s1 + $0x12a0] sm:$0xff]
  %v615 = vld [vmem:[%s1 + $0x12a8] sm:$0xff]
  %v616 = vld [vmem:[%s1 + $0x12b0] sm:$0xff]
  %v617 = vld [vmem:[%s1 + $0x12b8] sm:$0xff]
  %v618 = vld [vmem:[%s1 + $0x12c0] sm:$0xff]
  %v619 = vld [vmem:[%s1 + $0x12c8] sm:$0xff]
  %v620 = vld [vmem:[%s1 + $0x12d0] sm:$0xff]
  %v621 = vld [vmem:[%s1 + $0x12d8] sm:$0xff]
  %v622 = vld [vmem:[%s1 + $0x12e0] sm:$0xff]
  %v623 = vld [vmem:[%s1 + $0x12e8] sm:$0xff]
  %v624 = vld [vmem:[%s1 + $0x12f0] sm:$0xff]
  %v625 = vld [vmem:[%s1 + $0x12f8] sm:$0xff]
  %v626 = vld [vmem:[%s1 + $0x1300] sm:$0xff]
  %v627 = vld [vmem:[%s1 + $0x1308] sm:$0xff]
  %v628 = vld [vmem:[%s1 + $0x1310] sm:$0xff]
  %v629 = vld [vmem:[%s1 + $0x1318] sm:$0xff]
  %v630 = vld [vmem:[%s1 + $0x1320] sm:$0xff]
  %v631 = vld [vmem:[%s1 + $0x1328] sm:$0xff]
  %v632 = vld [vmem:[%s1 + $0x1330] sm:$0xff]
  %v633 = vld [vmem:[%s1 + $0x1338] sm:$0xff]
  %v634 = vld [vmem:[%s1 + $0x1340] sm:$0xff]
  %v635 = vld [vmem:[%s1 + $0x1348] sm:$0xff]
  %v636 = vld [vmem:[%s1 + $0x1350] sm:$0xff]
  %v637 = vld [vmem:[%s1 + $0x1358] sm:$0xff]
  %v638 = vld [vmem:[%s1 + $0x1360] sm:$0xff]
  %v639 = vld [vmem:[%s1 + $0x1368] sm:$0xff]
  %v640 = vld [vmem:[%s1 + $0x1370] sm:$0xff]
  %v641 = vld [vmem:[%s1 + $0x1378] sm:$0xff]
  %v642 = vld [vmem:[%s1 + $0x1380] sm:$0xff]
  %v643 = vld [vmem:[%s1 + $0x1388] sm:$0xff]
  %v644 = vld [vmem:[%s1 + $0x1390] sm:$0xff]
  %v645 = vld [vmem:[%s1 + $0x1398] sm:$0xff]
  %v646 = vld [vmem:[%s1 + $0x13a0] sm:$0xff]
  %v647 = vld [vmem:[%s1 + $0x13a8] sm:$0xff]
  %v648 = vld [vmem:[%s1 + $0x13b0] sm:$0xff]
  %v649 = vld [vmem:[%s1 + $0x13b8] sm:$0xff]
  %v650 = vld [vmem:[%s1 + $0x13c0] sm:$0xff]
  %v651 = vld [vmem:[%s1 + $0x13c8] sm:$0xff]
  %v652 = vld [vmem:[%s1 + $0x13d0] sm:$0xff]
  %v653 = vld [vmem:[%s1 + $0x13d8] sm:$0xff]
  %v654 = vld [vmem:[%s1 + $0x13e0] sm:$0xff]
  %v655 = vld [vmem:[%s1 + $0x13e8] sm:$0xff]
  %v656 = vld [vmem:[%s1 + $0x13f0] sm:$0xff]
  %v657 = vld [vmem:[%s1 + $0x13f8] sm:$0xff]
  %v658 = vld [vmem:[%s1 + $0x1400] sm:$0xff]
  %v659 = vld [vmem:[%s1 + $0x1408] sm:$0xff]
  %v660 = vld [vmem:[%s1 + $0x1410] sm:$0xff]
  %v661 = vld [vmem:[%s1 + $0x1418] sm:$0xff]
  %v662 = vld [vmem:[%s1 + $0x1420] sm:$0xff]
  %v663 = vld [vmem:[%s1 + $0x1428] sm:$0xff]
  %v664 = vld [vmem:[%s1 + $0x1430] sm:$0xff]
  %v665 = vld [vmem:[%s1 + $0x1438] sm:$0xff]
  %v666 = vld [vmem:[%s1 + $0x1440] sm:$0xff]
  %v667 = vld [vmem:[%s1 + $0x1448] sm:$0xff]
  %v668 = vld [vmem:[%s1 + $0x1450] sm:$0xff]
  %v669 = vld [vmem:[%s1 + $0x1458] sm:$0xff]
  %v670 = vld [vmem:[%s1 + $0x1460] sm:$0xff]
  %v671 = vld [vmem:[%s1 + $0x1468] sm:$0xff]
  %v672 = vld [vmem:[%s1 + $0x1470] sm:$0xff]
  %v673 = vld [vmem:[%s1 + $0x1478] sm:$0xff]
  %v674 = vld [vmem:[%s1 + $0x1480] sm:$0xff]
  %v675 = vld [vmem:[%s1 + $0x1488] sm:$0xff]
  %v676 = vld [vmem:[%s1 + $0x1490] sm:$0xff]
  %v677 = vld [vmem:[%s1 + $0x1498] sm:$0xff]
  %v678 = vld [vmem:[%s1 + $0x14a0] sm:$0xff]
  %v679 = vld [vmem:[%s1 + $0x14a8] sm:$0xff]
  %v680 = vld [vmem:[%s1 + $0x14b0] sm:$0xff]
  %v681 = vld [vmem:[%s1 + $0x14b8] sm:$0xff]
  %v682 = vld [vmem:[%s1 + $0x14c0] sm:$0xff]
  %v683 = vld [vmem:[%s1 + $0x14c8] sm:$0xff]
  %v684 = vld [vmem:[%s1 + $0x14d0] sm:$0xff]
  %v685 = vld [vmem:[%s1 + $0x14d8] sm:$0xff]
  %v686 = vld [vmem:[%s1 + $0x14e0] sm:$0xff]
  %v687 = vld [vmem:[%s1 + $0x14e8] sm:$0xff]
  %v688 = vld [vmem:[%s1 + $0x14f0] sm:$0xff]
  %v689 = vld [vmem:[%s1 + $0x14f8] sm:$0xff]
  %v690 = vld [vmem:[%s1 + $0x1500] sm:$0xff]
  %v691 = vld [vmem:[%s1 + $0x1508] sm:$0xff]
  %v692 = vld [vmem:[%s1 + $0x1510] sm:$0xff]
  %v693 = vld [vmem:[%s1 + $0x1518] sm:$0xff]
  %v694 = vld [vmem:[%s1 + $0x1520] sm:$0xff]
  %v695 = vld [vmem:[%s1 + $0x1528] sm:$0xff]
  %v696 = vld [vmem:[%s1 + $0x1530] sm:$0xff]
  %v697 = vld [vmem:[%s1 + $0x1538] sm:$0xff]
  %v698 = vld [vmem:[%s1 + $0x1540] sm:$0xff]
  %v699 = vld [vmem:[%s1 + $0x1548] sm:$0xff]
  %v700 = vld [vmem:[%s1 + $0x1550] sm:$0xff]
  %v701 = vld [vmem:[%s1 + $0x1558] sm:$0xff]
  %v702 = vld [vmem:[%s1 + $0x1560] sm:$0xff]
  %v703 = vld [vmem:[%s1 + $0x1568] sm:$0xff]
  %v704 = vld [vmem:[%s1 + $0x1570] sm:$0xff]
  %v705 = vld [vmem:[%s1 + $0x1578] sm:$0xff]
  %v706 = vld [vmem:[%s1 + $0x1580] sm:$0xff]
  %v707 = vld [vmem:[%s1 + $0x1588] sm:$0xff]
  %v708 = vld [vmem:[%s1 + $0x1590] sm:$0xff]
  %v709 = vld [vmem:[%s1 + $0x1598] sm:$0xff]
  %v710 = vld [vmem:[%s1 + $0x15a0] sm:$0xff]
  %v711 = vld [vmem:[%s1 + $0x15a8] sm:$0xff]
  %v712 = vld [vmem:[%s1 + $0x15b0] sm:$0xff]
  %v713 = vld [vmem:[%s1 + $0x15b8] sm:$0xff]
  %v714 = vld [vmem:[%s1 + $0x15c0] sm:$0xff]
  %v715 = vld [vmem:[%s1 + $0x15c8] sm:$0xff]
  %v716 = vld [vmem:[%s1 + $0x15d0] sm:$0xff]
  %v717 = vld [vmem:[%s1 + $0x15d8] sm:$0xff]
  %v718 = vld [vmem:[%s1 + $0x15e0] sm:$0xff]
  %v719 = vld [vmem:[%s1 + $0x15e8] sm:$0xff]
  %v720 = vld [vmem:[%s1 + $0x15f0] sm:$0xff]
  %v721 = vld [vmem:[%s1 + $0x15f8] sm:$0xff]
  %v722 = vld [vmem:[%s1 + $0x1600] sm:$0xff]
  %v723 = vld [vmem:[%s1 + $0x1608] sm:$0xff]
  %v724 = vld [vmem:[%s1 + $0x1610] sm:$0xff]
  %v725 = vld [vmem:[%s1 + $0x1618] sm:$0xff]
  %v726 = vld [vmem:[%s1 + $0x1620] sm:$0xff]
  %v727 = vld [vmem:[%s1 + $0x1628] sm:$0xff]
  %v728 = vld [vmem:[%s1 + $0x1630] sm:$0xff]
  %v729 = vld [vmem:[%s1 + $0x1638] sm:$0xff]
  %v730 = vld [vmem:[%s1 + $0x1640] sm:$0xff]
  %v731 = vld [vmem:[%s1 + $0x1648] sm:$0xff]
  %v732 = vld [vmem:[%s1 + $0x1650] sm:$0xff]
  %v733 = vld [vmem:[%s1 + $0x1658] sm:$0xff]
  %v734 = vld [vmem:[%s1 + $0x1660] sm:$0xff]
  %v735 = vld [vmem:[%s1 + $0x1668] sm:$0xff]
  %v736 = vld [vmem:[%s1 + $0x1670] sm:$0xff]
  %v737 = vld [vmem:[%s1 + $0x1678] sm:$0xff]
  %v738 = vld [vmem:[%s1 + $0x1680] sm:$0xff]
  %v739 = vld [vmem:[%s1 + $0x1688] sm:$0xff]
  %v740 = vld [vmem:[%s1 + $0x1690] sm:$0xff]
  %v741 = vld [vmem:[%s1 + $0x1698] sm:$0xff]
  %v742 = vld [vmem:[%s1 + $0x16a0] sm:$0xff]
  %v743 = vld [vmem:[%s1 + $0x16a8] sm:$0xff]
  %v744 = vld [vmem:[%s1 + $0x16b0] sm:$0xff]
  %v745 = vld [vmem:[%s1 + $0x16b8] sm:$0xff]
  %v746 = vld [vmem:[%s1 + $0x16c0] sm:$0xff]
  %v747 = vld [vmem:[%s1 + $0x16c8] sm:$0xff]
  %v748 = vld [vmem:[%s1 + $0x16d0] sm:$0xff]
  %v749 = vld [vmem:[%s1 + $0x16d8] sm:$0xff]
  %v750 = vld [vmem:[%s1 + $0x16e0] sm:$0xff]
  %v751 = vld [vmem:[%s1 + $0x16e8] sm:$0xff]
  %v752 = vld [vmem:[%s1 + $0x16f0] sm:$0xff]
  %v753 = vld [vmem:[%s1 + $0x16f8] sm:$0xff]
  %v754 = vld [vmem:[%s1 + $0x1700] sm:$0xff]
  %v755 = vld [vmem:[%s1 + $0x1708] sm:$0xff]
  %v756 = vld [vmem:[%s1 + $0x1710] sm:$0xff]
  %v757 = vld [vmem:[%s1 + $0x1718] sm:$0xff]
  %v758 = vld [vmem:[%s1 + $0x1720] sm:$0xff]
  %v759 = vld [vmem:[%s1 + $0x1728] sm:$0xff]
  %v760 = vld [vmem:[%s1 + $0x1730] sm:$0xff]
  %v761 = vld [vmem:[%s1 + $0x1738] sm:$0xff]
  %v762 = vld [vmem:[%s1 + $0x1740] sm:$0xff]
  %v763 = vld [vmem:[%s1 + $0x1748] sm:$0xff]
  %v764 = vld [vmem:[%s1 + $0x1750] sm:$0xff]
  %v765 = vld [vmem:[%s1 + $0x1758] sm:$0xff]
  %v766 = vld [vmem:[%s1 + $0x1760] sm:$0xff]
  %v767 = vld [vmem:[%s1 + $0x1768] sm:$0xff]
  %v768 = vld [vmem:[%s1 + $0x1770] sm:$0xff]
  %v769 = vld [vmem:[%s1 + $0x1778] sm:$0xff]
  %v770 = vld [vmem:[%s1 + $0x1780] sm:$0xff]
  %v771 = vld [vmem:[%s1 + $0x1788] sm:$0xff]
  %v772 = vld [vmem:[%s1 + $0x1790] sm:$0xff]
  %v773 = vld [vmem:[%s1 + $0x1798] sm:$0xff]
  %v774 = vld [vmem:[%s1 + $0x17a0] sm:$0xff]
  %v775 = vld [vmem:[%s1 + $0x17a8] sm:$0xff]
  %v776 = vld [vmem:[%s1 + $0x17b0] sm:$0xff]
  %v777 = vld [vmem:[%s1 + $0x17b8] sm:$0xff]
  %v778 = vld [vmem:[%s1 + $0x17c0] sm:$0xff]
  %v779 = vld [vmem:[%s1 + $0x17c8] sm:$0xff]
  %v780 = vld [vmem:[%s1 + $0x17d0] sm:$0xff]
  %v781 = vld [vmem:[%s1 + $0x17d8] sm:$0xff]
  %v782 = vld [vmem:[%s1 + $0x17e0] sm:$0xff]
  %v783 = vld [vmem:[%s1 + $0x17e8] sm:$0xff]
  %v784 = vld [vmem:[%s1 + $0x17f0] sm:$0xff]
  %v785 = vld [vmem:[%s1 + $0x17f8] sm:$0xff]
  %v786 = vld [vmem:[%s1 + $0x1800] sm:$0xff]
  %v787 = vld [vmem:[%s1 + $0x1808] sm:$0xff]
  %v788 = vld [vmem:[%s1 + $0x1810] sm:$0xff]
  %v789 = vld [vmem:[%s1 + $0x1818] sm:$0xff]
  %v790 = vld [vmem:[%s1 + $0x1820] sm:$0xff]
  %v791 = vld [vmem:[%s1 + $0x1828] sm:$0xff]
  %v792 = vld [vmem:[%s1 + $0x1830] sm:$0xff]
  %v793 = vld [vmem:[%s1 + $0x1838] sm:$0xff]
  %v794 = vld [vmem:[%s1 + $0x1840] sm:$0xff]
  %v795 = vld [vmem:[%s1 + $0x1848] sm:$0xff]
  %v796 = vld [vmem:[%s1 + $0x1850] sm:$0xff]
  %v797 = vld [vmem:[%s1 + $0x1858] sm:$0xff]
  %v798 = vld [vmem:[%s1 + $0x1860] sm:$0xff]
  %v799 = vld [vmem:[%s1 + $0x1868] sm:$0xff]
  %v800 = vld [vmem:[%s1 + $0x1870] sm:$0xff]
  %v801 = vld [vmem:[%s1 + $0x1878] sm:$0xff]
  %v802 = vld [vmem:[%s1 + $0x1880] sm:$0xff]
  %v803 = vld [vmem:[%s1 + $0x1888] sm:$0xff]
  %v804 = vld [vmem:[%s1 + $0x1890] sm:$0xff]
  %v805 = vld [vmem:[%s1 + $0x1898] sm:$0xff]
  %v806 = vld [vmem:[%s1 + $0x18a0] sm:$0xff]
  %v807 = vld [vmem:[%s1 + $0x18a8] sm:$0xff]
  %v808 = vld [vmem:[%s1 + $0x18b0] sm:$0xff]
  %v809 = vld [vmem:[%s1 + $0x18b8] sm:$0xff]
  %v810 = vld [vmem:[%s1 + $0x18c0] sm:$0xff]
  %v811 = vld [vmem:[%s1 + $0x18c8] sm:$0xff]
  %v812 = vld [vmem:[%s1 + $0x18d0] sm:$0xff]
  %v813 = vld [vmem:[%s1 + $0x18d8] sm:$0xff]
  %v814 = vld [vmem:[%s1 + $0x18e0] sm:$0xff]
  %v815 = vld [vmem:[%s1 + $0x18e8] sm:$0xff]
  %v816 = vld [vmem:[%s1 + $0x18f0] sm:$0xff]
  %v817 = vld [vmem:[%s1 + $0x18f8] sm:$0xff]
  %v818 = vld [vmem:[%s1 + $0x1900] sm:$0xff]
  %v819 = vld [vmem:[%s1 + $0x1908] sm:$0xff]
  %v820 = vld [vmem:[%s1 + $0x1910] sm:$0xff]
  %v821 = vld [vmem:[%s1 + $0x1918] sm:$0xff]
  %v822 = vld [vmem:[%s1 + $0x1920] sm:$0xff]
  %v823 = vld [vmem:[%s1 + $0x1928] sm:$0xff]
  %v824 = vld [vmem:[%s1 + $0x1930] sm:$0xff]
  %v825 = vld [vmem:[%s1 + $0x1938] sm:$0xff]
  %v826 = vld [vmem:[%s1 + $0x1940] sm:$0xff]
  %v827 = vld [vmem:[%s1 + $0x1948] sm:$0xff]
  %v828 = vld [vmem:[%s1 + $0x1950] sm:$0xff]
  %v829 = vld [vmem:[%s1 + $0x1958] sm:$0xff]
  %v830 = vld [vmem:[%s1 + $0x1960] sm:$0xff]
  %v831 = vld [vmem:[%s1 + $0x1968] sm:$0xff]
  %v832 = vld [vmem:[%s1 + $0x1970] sm:$0xff]
  %v833 = vld [vmem:[%s1 + $0x1978] sm:$0xff]
  %v834 = vld [vmem:[%s1 + $0x1980] sm:$0xff]
  %v835 = vld [vmem:[%s1 + $0x1988] sm:$0xff]
  %v836 = vld [vmem:[%s1 + $0x1990] sm:$0xff]
  %v837 = vld [vmem:[%s1 + $0x1998] sm:$0xff]
  %v838 = vld [vmem:[%s1 + $0x19a0] sm:$0xff]
  %v839 = vld [vmem:[%s1 + $0x19a8] sm:$0xff]
  %v840 = vld [vmem:[%s1 + $0x19b0] sm:$0xff]
  %v841 = vld [vmem:[%s1 + $0x19b8] sm:$0xff]
  %v842 = vld [vmem:[%s1 + $0x19c0] sm:$0xff]
  %v843 = vld [vmem:[%s1 + $0x19c8] sm:$0xff]
  %v844 = vld [vmem:[%s1 + $0x19d0] sm:$0xff]
  %v845 = vld [vmem:[%s1 + $0x19d8] sm:$0xff]
  %v846 = vld [vmem:[%s1 + $0x19e0] sm:$0xff]
  %v847 = vld [vmem:[%s1 + $0x19e8] sm:$0xff]
  %v848 = vld [vmem:[%s1 + $0x19f0] sm:$0xff]
  %v849 = vld [vmem:[%s1 + $0x19f8] sm:$0xff]
  %v850 = vld [vmem:[%s1 + $0x1a00] sm:$0xff]
  %v851 = vld [vmem:[%s1 + $0x1a08] sm:$0xff]
  %v852 = vld [vmem:[%s1 + $0x1a10] sm:$0xff]
  %v853 = vld [vmem:[%s1 + $0x1a18] sm:$0xff]
  %v854 = vld [vmem:[%s1 + $0x1a20] sm:$0xff]
  %v855 = vld [vmem:[%s1 + $0x1a28] sm:$0xff]
  %v856 = vld [vmem:[%s1 + $0x1a30] sm:$0xff]
  %v857 = vld [vmem:[%s1 + $0x1a38] sm:$0xff]
  %v858 = vld [vmem:[%s1 + $0x1a40] sm:$0xff]
  %v859 = vld [vmem:[%s1 + $0x1a48] sm:$0xff]
  %v860 = vld [vmem:[%s1 + $0x1a50] sm:$0xff]
  %v861 = vld [vmem:[%s1 + $0x1a58] sm:$0xff]
  %v862 = vld [vmem:[%s1 + $0x1a60] sm:$0xff]
  %v863 = vld [vmem:[%s1 + $0x1a68] sm:$0xff]
  %v864 = vld [vmem:[%s1 + $0x1a70] sm:$0xff]
  %v865 = vld [vmem:[%s1 + $0x1a78] sm:$0xff]
  %v866 = vld [vmem:[%s1 + $0x1a80] sm:$0xff]
  %v867 = vld [vmem:[%s1 + $0x1a88] sm:$0xff]
  %v868 = vld [vmem:[%s1 + $0x1a90] sm:$0xff]
  %v869 = vld [vmem:[%s1 + $0x1a98] sm:$0xff]
  %v870 = vld [vmem:[%s1 + $0x1aa0] sm:$0xff]
  %v871 = vld [vmem:[%s1 + $0x1aa8] sm:$0xff]
  %v872 = vld [vmem:[%s1 + $0x1ab0] sm:$0xff]
  %v873 = vld [vmem:[%s1 + $0x1ab8] sm:$0xff]
  %v874 = vld [vmem:[%s1 + $0x1ac0] sm:$0xff]
  %v875 = vld [vmem:[%s1 + $0x1ac8] sm:$0xff]
  %v876 = vld [vmem:[%s1 + $0x1ad0] sm:$0xff]
  %v877 = vld [vmem:[%s1 + $0x1ad8] sm:$0xff]
  %v878 = vld [vmem:[%s1 + $0x1ae0] sm:$0xff]
  %v879 = vld [vmem:[%s1 + $0x1ae8] sm:$0xff]
  %v880 = vld [vmem:[%s1 + $0x1af0] sm:$0xff]
  %v881 = vld [vmem:[%s1 + $0x1af8] sm:$0xff]
  %v882 = vld [vmem:[%s1 + $0x1b00] sm:$0xff]
  %v883 = vld [vmem:[%s1 + $0x1b08] sm:$0xff]
  %v884 = vld [vmem:[%s1 + $0x1b10] sm:$0xff]
  %v885 = vld [vmem:[%s1 + $0x1b18] sm:$0xff]
  %v886 = vld [vmem:[%s1 + $0x1b20] sm:$0xff]
  %v887 = vld [vmem:[%s1 + $0x1b28] sm:$0xff]
  %v888 = vld [vmem:[%s1 + $0x1b30] sm:$0xff]
  %v889 = vld [vmem:[%s1 + $0x1b38] sm:$0xff]
  %v890 = vld [vmem:[%s1 + $0x1b40] sm:$0xff]
  %v891 = vld [vmem:[%s1 + $0x1b48] sm:$0xff]
  %v892 = vld [vmem:[%s1 + $0x1b50] sm:$0xff]
  %v893 = vld [vmem:[%s1 + $0x1b58] sm:$0xff]
  %v894 = vld [vmem:[%s1 + $0x1b60] sm:$0xff]
  %v895 = vld [vmem:[%s1 + $0x1b68] sm:$0xff]
  %v896 = vld [vmem:[%s1 + $0x1b70] sm:$0xff]
  %v897 = vld [vmem:[%s1 + $0x1b78] sm:$0xff]
  %v898 = vld [vmem:[%s1 + $0x1b80] sm:$0xff]
  %v899 = vld [vmem:[%s1 + $0x1b88] sm:$0xff]
  %v900 = vld [vmem:[%s1 + $0x1b90] sm:$0xff]
  %v901 = vld [vmem:[%s1 + $0x1b98] sm:$0xff]
  %v902 = vld [vmem:[%s1 + $0x1ba0] sm:$0xff]
  %v903 = vld [vmem:[%s1 + $0x1ba8] sm:$0xff]
  %v904 = vld [vmem:[%s1 + $0x1bb0] sm:$0xff]
  %v905 = vld [vmem:[%s1 + $0x1bb8] sm:$0xff]
  %v906 = vld [vmem:[%s1 + $0x1bc0] sm:$0xff]
  %v907 = vld [vmem:[%s1 + $0x1bc8] sm:$0xff]
  %v908 = vld [vmem:[%s1 + $0x1bd0] sm:$0xff]
  %v909 = vld [vmem:[%s1 + $0x1bd8] sm:$0xff]
  %v910 = vld [vmem:[%s1 + $0x1be0] sm:$0xff]
  %v911 = vld [vmem:[%s1 + $0x1be8] sm:$0xff]
  %v912 = vld [vmem:[%s1 + $0x1bf0] sm:$0xff]
  %v913 = vld [vmem:[%s1 + $0x1bf8] sm:$0xff]
  %v914 = vld [vmem:[%s1 + $0x1c00] sm:$0xff]
  %v915 = vld [vmem:[%s1 + $0x1c08] sm:$0xff]
  %v916 = vld [vmem:[%s1 + $0x1c10] sm:$0xff]
  %v917 = vld [vmem:[%s1 + $0x1c18] sm:$0xff]
  %v918 = vld [vmem:[%s1 + $0x1c20] sm:$0xff]
  %v919 = vld [vmem:[%s1 + $0x1c28] sm:$0xff]
  %v920 = vld [vmem:[%s1 + $0x1c30] sm:$0xff]
  %v921 = vld [vmem:[%s1 + $0x1c38] sm:$0xff]
  %v922 = vld [vmem:[%s1 + $0x1c40] sm:$0xff]
  %v923 = vld [vmem:[%s1 + $0x1c48] sm:$0xff]
  %v924 = vld [vmem:[%s1 + $0x1c50] sm:$0xff]
  %v925 = vld [vmem:[%s1 + $0x1c58] sm:$0xff]
  %v926 = vld [vmem:[%s1 + $0x1c60] sm:$0xff]
  %v927 = vld [vmem:[%s1 + $0x1c68] sm:$0xff]
  %v928 = vld [vmem:[%s1 + $0x1c70] sm:$0xff]
  %v929 = vld [vmem:[%s1 + $0x1c78] sm:$0xff]
  %v930 = vld [vmem:[%s1 + $0x1c80] sm:$0xff]
  %v931 = vld [vmem:[%s1 + $0x1c88] sm:$0xff]
  %v932 = vld [vmem:[%s1 + $0x1c90] sm:$0xff]
  %v933 = vld [vmem:[%s1 + $0x1c98] sm:$0xff]
  %v934 = vld [vmem:[%s1 + $0x1ca0] sm:$0xff]
  %v935 = vld [vmem:[%s1 + $0x1ca8] sm:$0xff]
  %v936 = vld [vmem:[%s1 + $0x1cb0] sm:$0xff]
  %v937 = vld [vmem:[%s1 + $0x1cb8] sm:$0xff]
  %v938 = vld [vmem:[%s1 + $0x1cc0] sm:$0xff]
  %v939 = vld [vmem:[%s1 + $0x1cc8] sm:$0xff]
  %v940 = vld [vmem:[%s1 + $0x1cd0] sm:$0xff]
  %v941 = vld [vmem:[%s1 + $0x1cd8] sm:$0xff]
  %v942 = vld [vmem:[%s1 + $0x1ce0] sm:$0xff]
  %v943 = vld [vmem:[%s2] sm:$0xff]
  %v944 = vld [vmem:[%s2 + $0x8] sm:$0xff]
  %946 = vset.pattern.permute.xlu0 0
  %947 = vperm.xlu0 %946, %v943
  %v948 = vpop.permute.xlu0 %947
  %951 = vset.pattern.permute.xlu0 0
  %952 = vperm.xlu0 %951, %v944
  %v953 = vpop.permute.xlu0 %952
  %vm955 = vcmask 588800
  %v957 = vsel %vm955, %v15, 0
  %v960 = vsel %vm955, %v17, 0
  %962 = vmatprep.subr.mxu0 %v574
  %963 = vmatpush1.msra.mxu0 %v573
  %964 = vmatprep.subr.mxu0 %v537
  %965 = vmatpush1.msra.mxu0 %v536
  %966 = vmatprep.subr.mxu0 %v500
  %967 = vmatpush1.msra.mxu0 %v499
  %968 = vmatprep.subr.mxu0 %v463
  %969 = vmatpush1.msra.mxu0 %v462
  %970 = vmatprep.subr.mxu0 %v426
  %971 = vmatpush1.msra.mxu0 %v425
  %972 = vmatprep.subr.mxu0 %v389
  %973 = vmatpush1.msra.mxu0 %v388
  %974 = vmatprep.subr.mxu0 %v352
  %975 = vmatpush1.msra.mxu0 %v351
  %976 = vmatprep.subr.mxu0 %v315
  %977 = vmatpush1.msra.mxu0 %v314
  %978 = vmatprep.subr.mxu0 %v278
  %979 = vmatpush1.msra.mxu0 %v277
  %980 = vmatprep.subr.mxu0 %v241
  %981 = vmatpush1.msra.mxu0 %v240
  %982 = vmatprep.subr.mxu0 %v204
  %983 = vmatpush1.msra.mxu0 %v203
  %984 = vmatprep.subr.mxu0 %v167
  %985 = vmatpush1.msra.mxu0 %v166
  %986 = vmatprep.subr.mxu0 %v130
  %987 = vmatpush1.msra.mxu0 %v129
  %988 = vmatprep.subr.mxu0 %v93
  %989 = vmatpush1.msra.mxu0 %v92
  %990 = vmatprep.subr.mxu0 %v56
  %991 = vmatpush1.msra.mxu0 %v55
  %992 = vmatprep.subr.mxu0 %v19
  %993 = vmatpush1.msra.mxu0 %v18
  %994 = vmatprep.subr.mxu0 0.0
  %995 = vmatpush2.msra.mxu0 0.0
  %996 = vmatprep.subr.mxu0 0.0
  %997 = vmatpush2.msra.mxu0 0.0
  %998 = vmatprep.subr.mxu0 0.0
  %999 = vmatpush2.msra.mxu0 0.0
  %1000 = vmatprep.subr.mxu0 0.0
  %1001 = vmatpush2.msra.mxu0 0.0
  %1002 = vmatprep.subr.mxu0 0.0
  %1003 = vmatpush2.msra.mxu0 0.0
  %1004 = vmatprep.subr.mxu0 0.0
  %1005 = vmatpush2.msra.mxu0 0.0
  %1006 = vmatprep.subr.mxu0 0.0
  %1007 = vmatpush2.msra.mxu0 0.0
  %1008 = vmatprep.subr.mxu0 %v907
  %1009 = vmatpush2.msra.mxu0 %v906
  %1010 = vmatprep.subr.mxu0 %v870
  %1011 = vmatpush2.msra.mxu0 %v869
  %1012 = vmatprep.subr.mxu0 %v833
  %1013 = vmatpush2.msra.mxu0 %v832
  %1014 = vmatprep.subr.mxu0 %v796
  %1015 = vmatpush2.msra.mxu0 %v795
  %1016 = vmatprep.subr.mxu0 %v759
  %1017 = vmatpush2.msra.mxu0 %v758
  %1018 = vmatprep.subr.mxu0 %v722
  %1019 = vmatpush2.msra.mxu0 %v721
  %1020 = vmatprep.subr.mxu0 %v685
  %1021 = vmatpush2.msra.mxu0 %v684
  %1022 = vmatprep.subr.mxu0 %v648
  %1023 = vmatpush2.msra.mxu0 %v647
  %1024 = vmatprep.subr.mxu0 %v611
  %1025 = vmatpush2.msra.mxu0 %v610
  %1026 = vmatprep.mubr.f32.mxu0 %v957
  %1027 = vmatmul.mubr.f32.gmra.mxu0 %v14
  %v1028 = vpop.f32.mrf.mxu0
  %v1029 = vadd.f32 %v948, %v1028
  %v1030 = vpop.f32.mrf.mxu0
  %v1031 = vadd.f32 %v948, %v1030
  %1032 = vmatprep.mubr.f32.mxu0 %v960
  %1033 = vmatmul.mubr.f32.gmra.mxu0 %v16
  %v1034 = vpop.f32.mrf.mxu0
  %v1035 = vadd.f32 %v953, %v1034
  %v1036 = vpop.f32.mrf.mxu0
  %v1037 = vadd.f32 %v953, %v1036
  %1038 = vdwg.mxu0
  %1039 = vmatprep.subr.mxu0 %v576
  %1040 = vmatpush1.msra.mxu0 %v575
  %1041 = vmatprep.subr.mxu0 %v539
  %1042 = vmatpush1.msra.mxu0 %v538
  %1043 = vmatprep.subr.mxu0 %v502
  %1044 = vmatpush1.msra.mxu0 %v501
  %1045 = vmatprep.subr.mxu0 %v465
  %1046 = vmatpush1.msra.mxu0 %v464
  %1047 = vmatprep.subr.mxu0 %v428
  %1048 = vmatpush1.msra.mxu0 %v427
  %1049 = vmatprep.subr.mxu0 %v391
  %1050 = vmatpush1.msra.mxu0 %v390
  %1051 = vmatprep.subr.mxu0 %v354
  %1052 = vmatpush1.msra.mxu0 %v353
  %1053 = vmatprep.subr.mxu0 %v317
  %1054 = vmatpush1.msra.mxu0 %v316
  %1055 = vmatprep.subr.mxu0 %v280
  %1056 = vmatpush1.msra.mxu0 %v279
  %1057 = vmatprep.subr.mxu0 %v243
  %1058 = vmatpush1.msra.mxu0 %v242
  %1059 = vmatprep.subr.mxu0 %v206
  %1060 = vmatpush1.msra.mxu0 %v205
  %1061 = vmatprep.subr.mxu0 %v169
  %1062 = vmatpush1.msra.mxu0 %v168
  %1063 = vmatprep.subr.mxu0 %v132
  %1064 = vmatpush1.msra.mxu0 %v131
  %1065 = vmatprep.subr.mxu0 %v95
  %1066 = vmatpush1.msra.mxu0 %v94
  %1067 = vmatprep.subr.mxu0 %v58
  %1068 = vmatpush1.msra.mxu0 %v57
  %1069 = vmatprep.subr.mxu0 %v21
  %1070 = vmatpush1.msra.mxu0 %v20
  %1071 = vmatprep.subr.mxu0 0.0
  %1072 = vmatpush2.msra.mxu0 0.0
  %1073 = vmatprep.subr.mxu0 0.0
  %1074 = vmatpush2.msra.mxu0 0.0
  %1075 = vmatprep.subr.mxu0 0.0
  %1076 = vmatpush2.msra.mxu0 0.0
  %1077 = vmatprep.subr.mxu0 0.0
  %1078 = vmatpush2.msra.mxu0 0.0
  %1079 = vmatprep.subr.mxu0 0.0
  %1080 = vmatpush2.msra.mxu0 0.0
  %1081 = vmatprep.subr.mxu0 0.0
  %1082 = vmatpush2.msra.mxu0 0.0
  %1083 = vmatprep.subr.mxu0 0.0
  %1084 = vmatpush2.msra.mxu0 0.0
  %1085 = vmatprep.subr.mxu0 %v909
  %1086 = vmatpush2.msra.mxu0 %v908
  %1087 = vmatprep.subr.mxu0 %v872
  %1088 = vmatpush2.msra.mxu0 %v871
  %1089 = vmatprep.subr.mxu0 %v835
  %1090 = vmatpush2.msra.mxu0 %v834
  %1091 = vmatprep.subr.mxu0 %v798
  %1092 = vmatpush2.msra.mxu0 %v797
  %1093 = vmatprep.subr.mxu0 %v761
  %1094 = vmatpush2.msra.mxu0 %v760
  %1095 = vmatprep.subr.mxu0 %v724
  %1096 = vmatpush2.msra.mxu0 %v723
  %1097 = vmatprep.subr.mxu0 %v687
  %1098 = vmatpush2.msra.mxu0 %v686
  %1099 = vmatprep.subr.mxu0 %v650
  %1100 = vmatpush2.msra.mxu0 %v649
  %1101 = vmatprep.subr.mxu0 %v613
  %1102 = vmatpush2.msra.mxu0 %v612
  %1103 = vmatprep.mubr.f32.mxu0 %v957
  %1104 = vmatmul.mubr.f32.gmra.mxu0 %v14
  %v1105 = vpop.f32.mrf.mxu0
  %v1106 = vadd.f32 %v948, %v1105
  %v1107 = vpop.f32.mrf.mxu0
  %v1108 = vadd.f32 %v948, %v1107
  %1109 = vmatprep.mubr.f32.mxu0 %v960
  %1110 = vmatmul.mubr.f32.gmra.mxu0 %v16
  %v1111 = vpop.f32.mrf.mxu0
  %v1112 = vadd.f32 %v953, %v1111
  %v1113 = vpop.f32.mrf.mxu0
  %v1114 = vadd.f32 %v953, %v1113
  %1115 = vdwg.mxu0
  %1116 = vmatprep.subr.mxu0 %v578
  %1117 = vmatpush1.msra.mxu0 %v577
  %1118 = vmatprep.subr.mxu0 %v541
  %1119 = vmatpush1.msra.mxu0 %v540
  %1120 = vmatprep.subr.mxu0 %v504
  %1121 = vmatpush1.msra.mxu0 %v503
  %1122 = vmatprep.subr.mxu0 %v467
  %1123 = vmatpush1.msra.mxu0 %v466
  %1124 = vmatprep.subr.mxu0 %v430
  %1125 = vmatpush1.msra.mxu0 %v429
  %1126 = vmatprep.subr.mxu0 %v393
  %1127 = vmatpush1.msra.mxu0 %v392
  %1128 = vmatprep.subr.mxu0 %v356
  %1129 = vmatpush1.msra.mxu0 %v355
  %1130 = vmatprep.subr.mxu0 %v319
  %1131 = vmatpush1.msra.mxu0 %v318
  %1132 = vmatprep.subr.mxu0 %v282
  %1133 = vmatpush1.msra.mxu0 %v281
  %1134 = vmatprep.subr.mxu0 %v245
  %1135 = vmatpush1.msra.mxu0 %v244
  %1136 = vmatprep.subr.mxu0 %v208
  %1137 = vmatpush1.msra.mxu0 %v207
  %1138 = vmatprep.subr.mxu0 %v171
  %1139 = vmatpush1.msra.mxu0 %v170
  %1140 = vmatprep.subr.mxu0 %v134
  %1141 = vmatpush1.msra.mxu0 %v133
  %1142 = vmatprep.subr.mxu0 %v97
  %1143 = vmatpush1.msra.mxu0 %v96
  %1144 = vmatprep.subr.mxu0 %v60
  %1145 = vmatpush1.msra.mxu0 %v59
  %1146 = vmatprep.subr.mxu0 %v23
  %1147 = vmatpush1.msra.mxu0 %v22
  %1148 = vmatprep.subr.mxu0 0.0
  %1149 = vmatpush2.msra.mxu0 0.0
  %1150 = vmatprep.subr.mxu0 0.0
  %1151 = vmatpush2.msra.mxu0 0.0
  %1152 = vmatprep.subr.mxu0 0.0
  %1153 = vmatpush2.msra.mxu0 0.0
  %1154 = vmatprep.subr.mxu0 0.0
  %1155 = vmatpush2.msra.mxu0 0.0
  %1156 = vmatprep.subr.mxu0 0.0
  %1157 = vmatpush2.msra.mxu0 0.0
  %1158 = vmatprep.subr.mxu0 0.0
  %1159 = vmatpush2.msra.mxu0 0.0
  %1160 = vmatprep.subr.mxu0 0.0
  %1161 = vmatpush2.msra.mxu0 0.0
  %1162 = vmatprep.subr.mxu0 %v911
  %1163 = vmatpush2.msra.mxu0 %v910
  %1164 = vmatprep.subr.mxu0 %v874
  %1165 = vmatpush2.msra.mxu0 %v873
  %1166 = vmatprep.subr.mxu0 %v837
  %1167 = vmatpush2.msra.mxu0 %v836
  %1168 = vmatprep.subr.mxu0 %v800
  %1169 = vmatpush2.msra.mxu0 %v799
  %1170 = vmatprep.subr.mxu0 %v763
  %1171 = vmatpush2.msra.mxu0 %v762
  %1172 = vmatprep.subr.mxu0 %v726
  %1173 = vmatpush2.msra.mxu0 %v725
  %1174 = vmatprep.subr.mxu0 %v689
  %1175 = vmatpush2.msra.mxu0 %v688
  %1176 = vmatprep.subr.mxu0 %v652
  %1177 = vmatpush2.msra.mxu0 %v651
  %1178 = vmatprep.subr.mxu0 %v615
  %1179 = vmatpush2.msra.mxu0 %v614
  %1180 = vmatprep.mubr.f32.mxu0 %v957
  %1181 = vmatmul.mubr.f32.gmra.mxu0 %v14
  %v1182 = vpop.f32.mrf.mxu0
  %v1183 = vadd.f32 %v948, %v1182
  %v1184 = vpop.f32.mrf.mxu0
  %v1185 = vadd.f32 %v948, %v1184
  %1186 = vmatprep.mubr.f32.mxu0 %v960
  %1187 = vmatmul.mubr.f32.gmra.mxu0 %v16
  %v1188 = vpop.f32.mrf.mxu0
  %v1189 = vadd.f32 %v953, %v1188
  %v1190 = vpop.f32.mrf.mxu0
  %v1191 = vadd.f32 %v953, %v1190
  %1192 = vdwg.mxu0
  %1193 = vmatprep.subr.mxu0 %v580
  %1194 = vmatpush1.msra.mxu0 %v579
  %1195 = vmatprep.subr.mxu0 %v543
  %1196 = vmatpush1.msra.mxu0 %v542
  %1197 = vmatprep.subr.mxu0 %v506
  %1198 = vmatpush1.msra.mxu0 %v505
  %1199 = vmatprep.subr.mxu0 %v469
  %1200 = vmatpush1.msra.mxu0 %v468
  %1201 = vmatprep.subr.mxu0 %v432
  %1202 = vmatpush1.msra.mxu0 %v431
  %1203 = vmatprep.subr.mxu0 %v395
  %1204 = vmatpush1.msra.mxu0 %v394
  %1205 = vmatprep.subr.mxu0 %v358
  %1206 = vmatpush1.msra.mxu0 %v357
  %1207 = vmatprep.subr.mxu0 %v321
  %1208 = vmatpush1.msra.mxu0 %v320
  %1209 = vmatprep.subr.mxu0 %v284
  %1210 = vmatpush1.msra.mxu0 %v283
  %1211 = vmatprep.subr.mxu0 %v247
  %1212 = vmatpush1.msra.mxu0 %v246
  %1213 = vmatprep.subr.mxu0 %v210
  %1214 = vmatpush1.msra.mxu0 %v209
  %1215 = vmatprep.subr.mxu0 %v173
  %1216 = vmatpush1.msra.mxu0 %v172
  %1217 = vmatprep.subr.mxu0 %v136
  %1218 = vmatpush1.msra.mxu0 %v135
  %1219 = vmatprep.subr.mxu0 %v99
  %1220 = vmatpush1.msra.mxu0 %v98
  %1221 = vmatprep.subr.mxu0 %v62
  %1222 = vmatpush1.msra.mxu0 %v61
  %1223 = vmatprep.subr.mxu0 %v25
  %1224 = vmatpush1.msra.mxu0 %v24
  %1225 = vmatprep.subr.mxu0 0.0
  %1226 = vmatpush2.msra.mxu0 0.0
  %1227 = vmatprep.subr.mxu0 0.0
  %1228 = vmatpush2.msra.mxu0 0.0
  %1229 = vmatprep.subr.mxu0 0.0
  %1230 = vmatpush2.msra.mxu0 0.0
  %1231 = vmatprep.subr.mxu0 0.0
  %1232 = vmatpush2.msra.mxu0 0.0
  %1233 = vmatprep.subr.mxu0 0.0
  %1234 = vmatpush2.msra.mxu0 0.0
  %1235 = vmatprep.subr.mxu0 0.0
  %1236 = vmatpush2.msra.mxu0 0.0
  %1237 = vmatprep.subr.mxu0 0.0
  %1238 = vmatpush2.msra.mxu0 0.0
  %1239 = vmatprep.subr.mxu0 %v913
  %1240 = vmatpush2.msra.mxu0 %v912
  %1241 = vmatprep.subr.mxu0 %v876
  %1242 = vmatpush2.msra.mxu0 %v875
  %1243 = vmatprep.subr.mxu0 %v839
  %1244 = vmatpush2.msra.mxu0 %v838
  %1245 = vmatprep.subr.mxu0 %v802
  %1246 = vmatpush2.msra.mxu0 %v801
  %1247 = vmatprep.subr.mxu0 %v765
  %1248 = vmatpush2.msra.mxu0 %v764
  %1249 = vmatprep.subr.mxu0 %v728
  %1250 = vmatpush2.msra.mxu0 %v727
  %1251 = vmatprep.subr.mxu0 %v691
  %1252 = vmatpush2.msra.mxu0 %v690
  %1253 = vmatprep.subr.mxu0 %v654
  %1254 = vmatpush2.msra.mxu0 %v653
  %1255 = vmatprep.subr.mxu0 %v617
  %1256 = vmatpush2.msra.mxu0 %v616
  %1257 = vmatprep.mubr.f32.mxu0 %v957
  %1258 = vmatmul.mubr.f32.gmra.mxu0 %v14
  %v1259 = vpop.f32.mrf.mxu0
  %v1260 = vadd.f32 %v948, %v1259
  %v1261 = vpop.f32.mrf.mxu0
  %v1262 = vadd.f32 %v948, %v1261
  %1263 = vmatprep.mubr.f32.mxu0 %v960
  %1264 = vmatmul.mubr.f32.gmra.mxu0 %v16
  %v1265 = vpop.f32.mrf.mxu0
  %v1266 = vadd.f32 %v953, %v1265
  %v1267 = vpop.f32.mrf.mxu0
  %v1268 = vadd.f32 %v953, %v1267
  %1269 = vdwg.mxu0
  %1270 = vmatprep.subr.mxu0 %v582
  %1271 = vmatpush1.msra.mxu0 %v581
  %1272 = vmatprep.subr.mxu0 %v545
  %1273 = vmatpush1.msra.mxu0 %v544
  %1274 = vmatprep.subr.mxu0 %v508
  %1275 = vmatpush1.msra.mxu0 %v507
  %1276 = vmatprep.subr.mxu0 %v471
  %1277 = vmatpush1.msra.mxu0 %v470
  %1278 = vmatprep.subr.mxu0 %v434
  %1279 = vmatpush1.msra.mxu0 %v433
  %1280 = vmatprep.subr.mxu0 %v397
  %1281 = vmatpush1.msra.mxu0 %v396
  %1282 = vmatprep.subr.mxu0 %v360
  %1283 = vmatpush1.msra.mxu0 %v359
  %1284 = vmatprep.subr.mxu0 %v323
  %1285 = vmatpush1.msra.mxu0 %v322
  %1286 = vmatprep.subr.mxu0 %v286
  %1287 = vmatpush1.msra.mxu0 %v285
  %1288 = vmatprep.subr.mxu0 %v249
  %1289 = vmatpush1.msra.mxu0 %v248
  %1290 = vmatprep.subr.mxu0 %v212
  %1291 = vmatpush1.msra.mxu0 %v211
  %1292 = vmatprep.subr.mxu0 %v175
  %1293 = vmatpush1.msra.mxu0 %v174
  %1294 = vmatprep.subr.mxu0 %v138
  %1295 = vmatpush1.msra.mxu0 %v137
  %1296 = vmatprep.subr.mxu0 %v101
  %1297 = vmatpush1.msra.mxu0 %v100
  %1298 = vmatprep.subr.mxu0 %v64
  %1299 = vmatpush1.msra.mxu0 %v63
  %1300 = vmatprep.subr.mxu0 %v27
  %1301 = vmatpush1.msra.mxu0 %v26
  %1302 = vmatprep.subr.mxu0 0.0
  %1303 = vmatpush2.msra.mxu0 0.0
  %1304 = vmatprep.subr.mxu0 0.0
  %1305 = vmatpush2.msra.mxu0 0.0
  %1306 = vmatprep.subr.mxu0 0.0
  %1307 = vmatpush2.msra.mxu0 0.0
  %1308 = vmatprep.subr.mxu0 0.0
  %1309 = vmatpush2.msra.mxu0 0.0
  %1310 = vmatprep.subr.mxu0 0.0
  %1311 = vmatpush2.msra.mxu0 0.0
  %1312 = vmatprep.subr.mxu0 0.0
  %1313 = vmatpush2.msra.mxu0 0.0
  %1314 = vmatprep.subr.mxu0 0.0
  %1315 = vmatpush2.msra.mxu0 0.0
  %1316 = vmatprep.subr.mxu0 %v915
  %1317 = vmatpush2.msra.mxu0 %v914
  %1318 = vmatprep.subr.mxu0 %v878
  %1319 = vmatpush2.msra.mxu0 %v877
  %1320 = vmatprep.subr.mxu0 %v841
  %1321 = vmatpush2.msra.mxu0 %v840
  %1322 = vmatprep.subr.mxu0 %v804
  %1323 = vmatpush2.msra.mxu0 %v803
  %1324 = vmatprep.subr.mxu0 %v767
  %1325 = vmatpush2.msra.mxu0 %v766
  %1326 = vmatprep.subr.mxu0 %v730
  %1327 = vmatpush2.msra.mxu0 %v729
  %1328 = vmatprep.subr.mxu0 %v693
  %1329 = vmatpush2.msra.mxu0 %v692
  %1330 = vmatprep.subr.mxu0 %v656
  %1331 = vmatpush2.msra.mxu0 %v655
  %1332 = vmatprep.subr.mxu0 %v619
  %1333 = vmatpush2.msra.mxu0 %v618
  %1334 = vmatprep.mubr.f32.mxu0 %v957
  %1335 = vmatmul.mubr.f32.gmra.mxu0 %v14
  %v1336 = vpop.f32.mrf.mxu0
  %v1337 = vadd.f32 %v948, %v1336
  %v1338 = vpop.f32.mrf.mxu0
  %v1339 = vadd.f32 %v948, %v1338
  %1340 = vmatprep.mubr.f32.mxu0 %v960
  %1341 = vmatmul.mubr.f32.gmra.mxu0 %v16
  %v1342 = vpop.f32.mrf.mxu0
  %v1343 = vadd.f32 %v953, %v1342
  %v1344 = vpop.f32.mrf.mxu0
  %v1345 = vadd.f32 %v953, %v1344
  %1346 = vdwg.mxu0
  %1347 = vmatprep.subr.mxu0 %v584
  %1348 = vmatpush1.msra.mxu0 %v583
  %1349 = vmatprep.subr.mxu0 %v547
  %1350 = vmatpush1.msra.mxu0 %v546
  %1351 = vmatprep.subr.mxu0 %v510
  %1352 = vmatpush1.msra.mxu0 %v509
  %1353 = vmatprep.subr.mxu0 %v473
  %1354 = vmatpush1.msra.mxu0 %v472
  %1355 = vmatprep.subr.mxu0 %v436
  %1356 = vmatpush1.msra.mxu0 %v435
  %1357 = vmatprep.subr.mxu0 %v399
  %1358 = vmatpush1.msra.mxu0 %v398
  %1359 = vmatprep.subr.mxu0 %v362
  %1360 = vmatpush1.msra.mxu0 %v361
  %1361 = vmatprep.subr.mxu0 %v325
  %1362 = vmatpush1.msra.mxu0 %v324
  %1363 = vmatprep.subr.mxu0 %v288
  %1364 = vmatpush1.msra.mxu0 %v287
  %1365 = vmatprep.subr.mxu0 %v251
  %1366 = vmatpush1.msra.mxu0 %v250
  %1367 = vmatprep.subr.mxu0 %v214
  %1368 = vmatpush1.msra.mxu0 %v213
  %1369 = vmatprep.subr.mxu0 %v177
  %1370 = vmatpush1.msra.mxu0 %v176
  %1371 = vmatprep.subr.mxu0 %v140
  %1372 = vmatpush1.msra.mxu0 %v139
  %1373 = vmatprep.subr.mxu0 %v103
  %1374 = vmatpush1.msra.mxu0 %v102
  %1375 = vmatprep.subr.mxu0 %v66
  %1376 = vmatpush1.msra.mxu0 %v65
  %1377 = vmatprep.subr.mxu0 %v29
  %1378 = vmatpush1.msra.mxu0 %v28
  %1379 = vmatprep.subr.mxu0 0.0
  %1380 = vmatpush2.msra.mxu0 0.0
  %1381 = vmatprep.subr.mxu0 0.0
  %1382 = vmatpush2.msra.mxu0 0.0
  %1383 = vmatprep.subr.mxu0 0.0
  %1384 = vmatpush2.msra.mxu0 0.0
  %1385 = vmatprep.subr.mxu0 0.0
  %1386 = vmatpush2.msra.mxu0 0.0
  %1387 = vmatprep.subr.mxu0 0.0
  %1388 = vmatpush2.msra.mxu0 0.0
  %1389 = vmatprep.subr.mxu0 0.0
  %1390 = vmatpush2.msra.mxu0 0.0
  %1391 = vmatprep.subr.mxu0 0.0
  %1392 = vmatpush2.msra.mxu0 0.0
  %1393 = vmatprep.subr.mxu0 %v917
  %1394 = vmatpush2.msra.mxu0 %v916
  %1395 = vmatprep.subr.mxu0 %v880
  %1396 = vmatpush2.msra.mxu0 %v879
  %1397 = vmatprep.subr.mxu0 %v843
  %1398 = vmatpush2.msra.mxu0 %v842
  %1399 = vmatprep.subr.mxu0 %v806
  %1400 = vmatpush2.msra.mxu0 %v805
  %1401 = vmatprep.subr.mxu0 %v769
  %1402 = vmatpush2.msra.mxu0 %v768
  %1403 = vmatprep.subr.mxu0 %v732
  %1404 = vmatpush2.msra.mxu0 %v731
  %1405 = vmatprep.subr.mxu0 %v695
  %1406 = vmatpush2.msra.mxu0 %v694
  %1407 = vmatprep.subr.mxu0 %v658
  %1408 = vmatpush2.msra.mxu0 %v657
  %1409 = vmatprep.subr.mxu0 %v621
  %1410 = vmatpush2.msra.mxu0 %v620
  %1411 = vmatprep.mubr.f32.mxu0 %v957
  %1412 = vmatmul.mubr.f32.gmra.mxu0 %v14
  %v1413 = vpop.f32.mrf.mxu0
  %v1414 = vadd.f32 %v948, %v1413
  %v1415 = vpop.f32.mrf.mxu0
  %v1416 = vadd.f32 %v948, %v1415
  %1417 = vmatprep.mubr.f32.mxu0 %v960
  %1418 = vmatmul.mubr.f32.gmra.mxu0 %v16
  %v1419 = vpop.f32.mrf.mxu0
  %v1420 = vadd.f32 %v953, %v1419
  %v1421 = vpop.f32.mrf.mxu0
  %v1422 = vadd.f32 %v953, %v1421
  %1423 = vdwg.mxu0
  %1424 = vmatprep.subr.mxu0 %v586
  %1425 = vmatpush1.msra.mxu0 %v585
  %1426 = vmatprep.subr.mxu0 %v549
  %1427 = vmatpush1.msra.mxu0 %v548
  %1428 = vmatprep.subr.mxu0 %v512
  %1429 = vmatpush1.msra.mxu0 %v511
  %1430 = vmatprep.subr.mxu0 %v475
  %1431 = vmatpush1.msra.mxu0 %v474
  %1432 = vmatprep.subr.mxu0 %v438
  %1433 = vmatpush1.msra.mxu0 %v437
  %1434 = vmatprep.subr.mxu0 %v401
  %1435 = vmatpush1.msra.mxu0 %v400
  %1436 = vmatprep.subr.mxu0 %v364
  %1437 = vmatpush1.msra.mxu0 %v363
  %1438 = vmatprep.subr.mxu0 %v327
  %1439 = vmatpush1.msra.mxu0 %v326
  %1440 = vmatprep.subr.mxu0 %v290
  %1441 = vmatpush1.msra.mxu0 %v289
  %1442 = vmatprep.subr.mxu0 %v253
  %1443 = vmatpush1.msra.mxu0 %v252
  %1444 = vmatprep.subr.mxu0 %v216
  %1445 = vmatpush1.msra.mxu0 %v215
  %1446 = vmatprep.subr.mxu0 %v179
  %1447 = vmatpush1.msra.mxu0 %v178
  %1448 = vmatprep.subr.mxu0 %v142
  %1449 = vmatpush1.msra.mxu0 %v141
  %1450 = vmatprep.subr.mxu0 %v105
  %1451 = vmatpush1.msra.mxu0 %v104
  %1452 = vmatprep.subr.mxu0 %v68
  %1453 = vmatpush1.msra.mxu0 %v67
  %1454 = vmatprep.subr.mxu0 %v31
  %1455 = vmatpush1.msra.mxu0 %v30
  %1456 = vmatprep.subr.mxu0 0.0
  %1457 = vmatpush2.msra.mxu0 0.0
  %1458 = vmatprep.subr.mxu0 0.0
  %1459 = vmatpush2.msra.mxu0 0.0
  %1460 = vmatprep.subr.mxu0 0.0
  %1461 = vmatpush2.msra.mxu0 0.0
  %1462 = vmatprep.subr.mxu0 0.0
  %1463 = vmatpush2.msra.mxu0 0.0
  %1464 = vmatprep.subr.mxu0 0.0
  %1465 = vmatpush2.msra.mxu0 0.0
  %1466 = vmatprep.subr.mxu0 0.0
  %1467 = vmatpush2.msra.mxu0 0.0
  %1468 = vmatprep.subr.mxu0 0.0
  %1469 = vmatpush2.msra.mxu0 0.0
  %1470 = vmatprep.subr.mxu0 %v919
  %1471 = vmatpush2.msra.mxu0 %v918
  %1472 = vmatprep.subr.mxu0 %v882
  %1473 = vmatpush2.msra.mxu0 %v881
  %1474 = vmatprep.subr.mxu0 %v845
  %1475 = vmatpush2.msra.mxu0 %v844
  %1476 = vmatprep.subr.mxu0 %v808
  %1477 = vmatpush2.msra.mxu0 %v807
  %1478 = vmatprep.subr.mxu0 %v771
  %1479 = vmatpush2.msra.mxu0 %v770
  %1480 = vmatprep.subr.mxu0 %v734
  %1481 = vmatpush2.msra.mxu0 %v733
  %1482 = vmatprep.subr.mxu0 %v697
  %1483 = vmatpush2.msra.mxu0 %v696
  %1484 = vmatprep.subr.mxu0 %v660
  %1485 = vmatpush2.msra.mxu0 %v659
  %1486 = vmatprep.subr.mxu0 %v623
  %1487 = vmatpush2.msra.mxu0 %v622
  %1488 = vmatprep.mubr.f32.mxu0 %v957
  %1489 = vmatmul.mubr.f32.gmra.mxu0 %v14
  %v1490 = vpop.f32.mrf.mxu0
  %v1491 = vadd.f32 %v948, %v1490
  %v1492 = vpop.f32.mrf.mxu0
  %v1493 = vadd.f32 %v948, %v1492
  %1494 = vmatprep.mubr.f32.mxu0 %v960
  %1495 = vmatmul.mubr.f32.gmra.mxu0 %v16
  %v1496 = vpop.f32.mrf.mxu0
  %v1497 = vadd.f32 %v953, %v1496
  %v1498 = vpop.f32.mrf.mxu0
  %v1499 = vadd.f32 %v953, %v1498
  %1500 = vdwg.mxu0
  %1501 = vmatprep.subr.mxu0 %v588
  %1502 = vmatpush1.msra.mxu0 %v587
  %1503 = vmatprep.subr.mxu0 %v551
  %1504 = vmatpush1.msra.mxu0 %v550
  %1505 = vmatprep.subr.mxu0 %v514
  %1506 = vmatpush1.msra.mxu0 %v513
  %1507 = vmatprep.subr.mxu0 %v477
  %1508 = vmatpush1.msra.mxu0 %v476
  %1509 = vmatprep.subr.mxu0 %v440
  %1510 = vmatpush1.msra.mxu0 %v439
  %1511 = vmatprep.subr.mxu0 %v403
  %1512 = vmatpush1.msra.mxu0 %v402
  %1513 = vmatprep.subr.mxu0 %v366
  %1514 = vmatpush1.msra.mxu0 %v365
  %1515 = vmatprep.subr.mxu0 %v329
  %1516 = vmatpush1.msra.mxu0 %v328
  %1517 = vmatprep.subr.mxu0 %v292
  %1518 = vmatpush1.msra.mxu0 %v291
  %1519 = vmatprep.subr.mxu0 %v255
  %1520 = vmatpush1.msra.mxu0 %v254
  %1521 = vmatprep.subr.mxu0 %v218
  %1522 = vmatpush1.msra.mxu0 %v217
  %1523 = vmatprep.subr.mxu0 %v181
  %1524 = vmatpush1.msra.mxu0 %v180
  %1525 = vmatprep.subr.mxu0 %v144
  %1526 = vmatpush1.msra.mxu0 %v143
  %1527 = vmatprep.subr.mxu0 %v107
  %1528 = vmatpush1.msra.mxu0 %v106
  %1529 = vmatprep.subr.mxu0 %v70
  %1530 = vmatpush1.msra.mxu0 %v69
  %1531 = vmatprep.subr.mxu0 %v33
  %1532 = vmatpush1.msra.mxu0 %v32
  %1533 = vmatprep.subr.mxu0 0.0
  %1534 = vmatpush2.msra.mxu0 0.0
  %1535 = vmatprep.subr.mxu0 0.0
  %1536 = vmatpush2.msra.mxu0 0.0
  %1537 = vmatprep.subr.mxu0 0.0
  %1538 = vmatpush2.msra.mxu0 0.0
  %1539 = vmatprep.subr.mxu0 0.0
  %1540 = vmatpush2.msra.mxu0 0.0
  %1541 = vmatprep.subr.mxu0 0.0
  %1542 = vmatpush2.msra.mxu0 0.0
  %1543 = vmatprep.subr.mxu0 0.0
  %1544 = vmatpush2.msra.mxu0 0.0
  %1545 = vmatprep.subr.mxu0 0.0
  %1546 = vmatpush2.msra.mxu0 0.0
  %1547 = vmatprep.subr.mxu0 %v921
  %1548 = vmatpush2.msra.mxu0 %v920
  %1549 = vmatprep.subr.mxu0 %v884
  %1550 = vmatpush2.msra.mxu0 %v883
  %1551 = vmatprep.subr.mxu0 %v847
  %1552 = vmatpush2.msra.mxu0 %v846
  %1553 = vmatprep.subr.mxu0 %v810
  %1554 = vmatpush2.msra.mxu0 %v809
  %1555 = vmatprep.subr.mxu0 %v773
  %1556 = vmatpush2.msra.mxu0 %v772
  %1557 = vmatprep.subr.mxu0 %v736
  %1558 = vmatpush2.msra.mxu0 %v735
  %1559 = vmatprep.subr.mxu0 %v699
  %1560 = vmatpush2.msra.mxu0 %v698
  %1561 = vmatprep.subr.mxu0 %v662
  %1562 = vmatpush2.msra.mxu0 %v661
  %1563 = vmatprep.subr.mxu0 %v625
  %1564 = vmatpush2.msra.mxu0 %v624
  %1565 = vmatprep.mubr.f32.mxu0 %v957
  %1566 = vmatmul.mubr.f32.gmra.mxu0 %v14
  %v1567 = vpop.f32.mrf.mxu0
  %v1568 = vadd.f32 %v948, %v1567
  %v1569 = vpop.f32.mrf.mxu0
  %v1570 = vadd.f32 %v948, %v1569
  %1571 = vmatprep.mubr.f32.mxu0 %v960
  %1572 = vmatmul.mubr.f32.gmra.mxu0 %v16
  %v1573 = vpop.f32.mrf.mxu0
  %v1574 = vadd.f32 %v953, %v1573
  %v1575 = vpop.f32.mrf.mxu0
  %v1576 = vadd.f32 %v953, %v1575
  %1577 = vdwg.mxu0
  %1578 = vmatprep.subr.mxu0 %v590
  %1579 = vmatpush1.msra.mxu0 %v589
  %1580 = vmatprep.subr.mxu0 %v553
  %1581 = vmatpush1.msra.mxu0 %v552
  %1582 = vmatprep.subr.mxu0 %v516
  %1583 = vmatpush1.msra.mxu0 %v515
  %1584 = vmatprep.subr.mxu0 %v479
  %1585 = vmatpush1.msra.mxu0 %v478
  %1586 = vmatprep.subr.mxu0 %v442
  %1587 = vmatpush1.msra.mxu0 %v441
  %1588 = vmatprep.subr.mxu0 %v405
  %1589 = vmatpush1.msra.mxu0 %v404
  %1590 = vmatprep.subr.mxu0 %v368
  %1591 = vmatpush1.msra.mxu0 %v367
  %1592 = vmatprep.subr.mxu0 %v331
  %1593 = vmatpush1.msra.mxu0 %v330
  %1594 = vmatprep.subr.mxu0 %v294
  %1595 = vmatpush1.msra.mxu0 %v293
  %1596 = vmatprep.subr.mxu0 %v257
  %1597 = vmatpush1.msra.mxu0 %v256
  %1598 = vmatprep.subr.mxu0 %v220
  %1599 = vmatpush1.msra.mxu0 %v219
  %1600 = vmatprep.subr.mxu0 %v183
  %1601 = vmatpush1.msra.mxu0 %v182
  %1602 = vmatprep.subr.mxu0 %v146
  %1603 = vmatpush1.msra.mxu0 %v145
  %1604 = vmatprep.subr.mxu0 %v109
  %1605 = vmatpush1.msra.mxu0 %v108
  %1606 = vmatprep.subr.mxu0 %v72
  %1607 = vmatpush1.msra.mxu0 %v71
  %1608 = vmatprep.subr.mxu0 %v35
  %1609 = vmatpush1.msra.mxu0 %v34
  %1610 = vmatprep.subr.mxu0 0.0
  %1611 = vmatpush2.msra.mxu0 0.0
  %1612 = vmatprep.subr.mxu0 0.0
  %1613 = vmatpush2.msra.mxu0 0.0
  %1614 = vmatprep.subr.mxu0 0.0
  %1615 = vmatpush2.msra.mxu0 0.0
  %1616 = vmatprep.subr.mxu0 0.0
  %1617 = vmatpush2.msra.mxu0 0.0
  %1618 = vmatprep.subr.mxu0 0.0
  %1619 = vmatpush2.msra.mxu0 0.0
  %1620 = vmatprep.subr.mxu0 0.0
  %1621 = vmatpush2.msra.mxu0 0.0
  %1622 = vmatprep.subr.mxu0 0.0
  %1623 = vmatpush2.msra.mxu0 0.0
  %1624 = vmatprep.subr.mxu0 %v923
  %1625 = vmatpush2.msra.mxu0 %v922
  %1626 = vmatprep.subr.mxu0 %v886
  %1627 = vmatpush2.msra.mxu0 %v885
  %1628 = vmatprep.subr.mxu0 %v849
  %1629 = vmatpush2.msra.mxu0 %v848
  %1630 = vmatprep.subr.mxu0 %v812
  %1631 = vmatpush2.msra.mxu0 %v811
  %1632 = vmatprep.subr.mxu0 %v775
  %1633 = vmatpush2.msra.mxu0 %v774
  %1634 = vmatprep.subr.mxu0 %v738
  %1635 = vmatpush2.msra.mxu0 %v737
  %1636 = vmatprep.subr.mxu0 %v701
  %1637 = vmatpush2.msra.mxu0 %v700
  %1638 = vmatprep.subr.mxu0 %v664
  %1639 = vmatpush2.msra.mxu0 %v663
  %1640 = vmatprep.subr.mxu0 %v627
  %1641 = vmatpush2.msra.mxu0 %v626
  %1642 = vmatprep.mubr.f32.mxu0 %v957
  %1643 = vmatmul.mubr.f32.gmra.mxu0 %v14
  %v1644 = vpop.f32.mrf.mxu0
  %v1645 = vadd.f32 %v948, %v1644
  %v1646 = vpop.f32.mrf.mxu0
  %v1647 = vadd.f32 %v948, %v1646
  %1648 = vmatprep.mubr.f32.mxu0 %v960
  %1649 = vmatmul.mubr.f32.gmra.mxu0 %v16
  %v1650 = vpop.f32.mrf.mxu0
  %v1651 = vadd.f32 %v953, %v1650
  %v1652 = vpop.f32.mrf.mxu0
  %v1653 = vadd.f32 %v953, %v1652
  %1654 = vdwg.mxu0
  %1655 = vmatprep.subr.mxu0 %v592
  %1656 = vmatpush1.msra.mxu0 %v591
  %1657 = vmatprep.subr.mxu0 %v555
  %1658 = vmatpush1.msra.mxu0 %v554
  %1659 = vmatprep.subr.mxu0 %v518
  %1660 = vmatpush1.msra.mxu0 %v517
  %1661 = vmatprep.subr.mxu0 %v481
  %1662 = vmatpush1.msra.mxu0 %v480
  %1663 = vmatprep.subr.mxu0 %v444
  %1664 = vmatpush1.msra.mxu0 %v443
  %1665 = vmatprep.subr.mxu0 %v407
  %1666 = vmatpush1.msra.mxu0 %v406
  %1667 = vmatprep.subr.mxu0 %v370
  %1668 = vmatpush1.msra.mxu0 %v369
  %1669 = vmatprep.subr.mxu0 %v333
  %1670 = vmatpush1.msra.mxu0 %v332
  %1671 = vmatprep.subr.mxu0 %v296
  %1672 = vmatpush1.msra.mxu0 %v295
  %1673 = vmatprep.subr.mxu0 %v259
  %1674 = vmatpush1.msra.mxu0 %v258
  %1675 = vmatprep.subr.mxu0 %v222
  %1676 = vmatpush1.msra.mxu0 %v221
  %1677 = vmatprep.subr.mxu0 %v185
  %1678 = vmatpush1.msra.mxu0 %v184
  %1679 = vmatprep.subr.mxu0 %v148
  %1680 = vmatpush1.msra.mxu0 %v147
  %1681 = vmatprep.subr.mxu0 %v111
  %1682 = vmatpush1.msra.mxu0 %v110
  %1683 = vmatprep.subr.mxu0 %v74
  %1684 = vmatpush1.msra.mxu0 %v73
  %1685 = vmatprep.subr.mxu0 %v37
  %1686 = vmatpush1.msra.mxu0 %v36
  %1687 = vmatprep.subr.mxu0 0.0
  %1688 = vmatpush2.msra.mxu0 0.0
  %1689 = vmatprep.subr.mxu0 0.0
  %1690 = vmatpush2.msra.mxu0 0.0
  %1691 = vmatprep.subr.mxu0 0.0
  %1692 = vmatpush2.msra.mxu0 0.0
  %1693 = vmatprep.subr.mxu0 0.0
  %1694 = vmatpush2.msra.mxu0 0.0
  %1695 = vmatprep.subr.mxu0 0.0
  %1696 = vmatpush2.msra.mxu0 0.0
  %1697 = vmatprep.subr.mxu0 0.0
  %1698 = vmatpush2.msra.mxu0 0.0
  %1699 = vmatprep.subr.mxu0 0.0
  %1700 = vmatpush2.msra.mxu0 0.0
  %1701 = vmatprep.subr.mxu0 %v925
  %1702 = vmatpush2.msra.mxu0 %v924
  %1703 = vmatprep.subr.mxu0 %v888
  %1704 = vmatpush2.msra.mxu0 %v887
  %1705 = vmatprep.subr.mxu0 %v851
  %1706 = vmatpush2.msra.mxu0 %v850
  %1707 = vmatprep.subr.mxu0 %v814
  %1708 = vmatpush2.msra.mxu0 %v813
  %1709 = vmatprep.subr.mxu0 %v777
  %1710 = vmatpush2.msra.mxu0 %v776
  %1711 = vmatprep.subr.mxu0 %v740
  %1712 = vmatpush2.msra.mxu0 %v739
  %1713 = vmatprep.subr.mxu0 %v703
  %1714 = vmatpush2.msra.mxu0 %v702
  %1715 = vmatprep.subr.mxu0 %v666
  %1716 = vmatpush2.msra.mxu0 %v665
  %1717 = vmatprep.subr.mxu0 %v629
  %1718 = vmatpush2.msra.mxu0 %v628
  %1719 = vmatprep.mubr.f32.mxu0 %v957
  %1720 = vmatmul.mubr.f32.gmra.mxu0 %v14
  %v1721 = vpop.f32.mrf.mxu0
  %v1722 = vadd.f32 %v948, %v1721
  %v1723 = vpop.f32.mrf.mxu0
  %v1724 = vadd.f32 %v948, %v1723
  %1725 = vmatprep.mubr.f32.mxu0 %v960
  %1726 = vmatmul.mubr.f32.gmra.mxu0 %v16
  %v1727 = vpop.f32.mrf.mxu0
  %v1728 = vadd.f32 %v953, %v1727
  %v1729 = vpop.f32.mrf.mxu0
  %v1730 = vadd.f32 %v953, %v1729
  %1731 = vdwg.mxu0
  %1732 = vmatprep.subr.mxu0 %v594
  %1733 = vmatpush1.msra.mxu0 %v593
  %1734 = vmatprep.subr.mxu0 %v557
  %1735 = vmatpush1.msra.mxu0 %v556
  %1736 = vmatprep.subr.mxu0 %v520
  %1737 = vmatpush1.msra.mxu0 %v519
  %1738 = vmatprep.subr.mxu0 %v483
  %1739 = vmatpush1.msra.mxu0 %v482
  %1740 = vmatprep.subr.mxu0 %v446
  %1741 = vmatpush1.msra.mxu0 %v445
  %1742 = vmatprep.subr.mxu0 %v409
  %1743 = vmatpush1.msra.mxu0 %v408
  %1744 = vmatprep.subr.mxu0 %v372
  %1745 = vmatpush1.msra.mxu0 %v371
  %1746 = vmatprep.subr.mxu0 %v335
  %1747 = vmatpush1.msra.mxu0 %v334
  %1748 = vmatprep.subr.mxu0 %v298
  %1749 = vmatpush1.msra.mxu0 %v297
  %1750 = vmatprep.subr.mxu0 %v261
  %1751 = vmatpush1.msra.mxu0 %v260
  %1752 = vmatprep.subr.mxu0 %v224
  %1753 = vmatpush1.msra.mxu0 %v223
  %1754 = vmatprep.subr.mxu0 %v187
  %1755 = vmatpush1.msra.mxu0 %v186
  %1756 = vmatprep.subr.mxu0 %v150
  %1757 = vmatpush1.msra.mxu0 %v149
  %1758 = vmatprep.subr.mxu0 %v113
  %1759 = vmatpush1.msra.mxu0 %v112
  %1760 = vmatprep.subr.mxu0 %v76
  %1761 = vmatpush1.msra.mxu0 %v75
  %1762 = vmatprep.subr.mxu0 %v39
  %1763 = vmatpush1.msra.mxu0 %v38
  %1764 = vmatprep.subr.mxu0 0.0
  %1765 = vmatpush2.msra.mxu0 0.0
  %1766 = vmatprep.subr.mxu0 0.0
  %1767 = vmatpush2.msra.mxu0 0.0
  %1768 = vmatprep.subr.mxu0 0.0
  %1769 = vmatpush2.msra.mxu0 0.0
  %1770 = vmatprep.subr.mxu0 0.0
  %1771 = vmatpush2.msra.mxu0 0.0
  %1772 = vmatprep.subr.mxu0 0.0
  %1773 = vmatpush2.msra.mxu0 0.0
  %1774 = vmatprep.subr.mxu0 0.0
  %1775 = vmatpush2.msra.mxu0 0.0
  %1776 = vmatprep.subr.mxu0 0.0
  %1777 = vmatpush2.msra.mxu0 0.0
  %1778 = vmatprep.subr.mxu0 %v927
  %1779 = vmatpush2.msra.mxu0 %v926
  %1780 = vmatprep.subr.mxu0 %v890
  %1781 = vmatpush2.msra.mxu0 %v889
  %1782 = vmatprep.subr.mxu0 %v853
  %1783 = vmatpush2.msra.mxu0 %v852
  %1784 = vmatprep.subr.mxu0 %v816
  %1785 = vmatpush2.msra.mxu0 %v815
  %1786 = vmatprep.subr.mxu0 %v779
  %1787 = vmatpush2.msra.mxu0 %v778
  %1788 = vmatprep.subr.mxu0 %v742
  %1789 = vmatpush2.msra.mxu0 %v741
  %1790 = vmatprep.subr.mxu0 %v705
  %1791 = vmatpush2.msra.mxu0 %v704
  %1792 = vmatprep.subr.mxu0 %v668
  %1793 = vmatpush2.msra.mxu0 %v667
  %1794 = vmatprep.subr.mxu0 %v631
  %1795 = vmatpush2.msra.mxu0 %v630
  %1796 = vmatprep.mubr.f32.mxu0 %v957
  %1797 = vmatmul.mubr.f32.gmra.mxu0 %v14
  %v1798 = vpop.f32.mrf.mxu0
  %v1799 = vadd.f32 %v948, %v1798
  %v1800 = vpop.f32.mrf.mxu0
  %v1801 = vadd.f32 %v948, %v1800
  %1802 = vmatprep.mubr.f32.mxu0 %v960
  %1803 = vmatmul.mubr.f32.gmra.mxu0 %v16
  %v1804 = vpop.f32.mrf.mxu0
  %v1805 = vadd.f32 %v953, %v1804
  %v1806 = vpop.f32.mrf.mxu0
  %v1807 = vadd.f32 %v953, %v1806
  %1808 = vdwg.mxu0
  %1809 = vmatprep.subr.mxu0 %v596
  %1810 = vmatpush1.msra.mxu0 %v595
  %1811 = vmatprep.subr.mxu0 %v559
  %1812 = vmatpush1.msra.mxu0 %v558
  %1813 = vmatprep.subr.mxu0 %v522
  %1814 = vmatpush1.msra.mxu0 %v521
  %1815 = vmatprep.subr.mxu0 %v485
  %1816 = vmatpush1.msra.mxu0 %v484
  %1817 = vmatprep.subr.mxu0 %v448
  %1818 = vmatpush1.msra.mxu0 %v447
  %1819 = vmatprep.subr.mxu0 %v411
  %1820 = vmatpush1.msra.mxu0 %v410
  %1821 = vmatprep.subr.mxu0 %v374
  %1822 = vmatpush1.msra.mxu0 %v373
  %1823 = vmatprep.subr.mxu0 %v337
  %1824 = vmatpush1.msra.mxu0 %v336
  %1825 = vmatprep.subr.mxu0 %v300
  %1826 = vmatpush1.msra.mxu0 %v299
  %1827 = vmatprep.subr.mxu0 %v263
  %1828 = vmatpush1.msra.mxu0 %v262
  %1829 = vmatprep.subr.mxu0 %v226
  %1830 = vmatpush1.msra.mxu0 %v225
  %1831 = vmatprep.subr.mxu0 %v189
  %1832 = vmatpush1.msra.mxu0 %v188
  %1833 = vmatprep.subr.mxu0 %v152
  %1834 = vmatpush1.msra.mxu0 %v151
  %1835 = vmatprep.subr.mxu0 %v115
  %1836 = vmatpush1.msra.mxu0 %v114
  %1837 = vmatprep.subr.mxu0 %v78
  %1838 = vmatpush1.msra.mxu0 %v77
  %1839 = vmatprep.subr.mxu0 %v41
  %1840 = vmatpush1.msra.mxu0 %v40
  %1841 = vmatprep.subr.mxu0 0.0
  %1842 = vmatpush2.msra.mxu0 0.0
  %1843 = vmatprep.subr.mxu0 0.0
  %1844 = vmatpush2.msra.mxu0 0.0
  %1845 = vmatprep.subr.mxu0 0.0
  %1846 = vmatpush2.msra.mxu0 0.0
  %1847 = vmatprep.subr.mxu0 0.0
  %1848 = vmatpush2.msra.mxu0 0.0
  %1849 = vmatprep.subr.mxu0 0.0
  %1850 = vmatpush2.msra.mxu0 0.0
  %1851 = vmatprep.subr.mxu0 0.0
  %1852 = vmatpush2.msra.mxu0 0.0
  %1853 = vmatprep.subr.mxu0 0.0
  %1854 = vmatpush2.msra.mxu0 0.0
  %1855 = vmatprep.subr.mxu0 %v929
  %1856 = vmatpush2.msra.mxu0 %v928
  %1857 = vmatprep.subr.mxu0 %v892
  %1858 = vmatpush2.msra.mxu0 %v891
  %1859 = vmatprep.subr.mxu0 %v855
  %1860 = vmatpush2.msra.mxu0 %v854
  %1861 = vmatprep.subr.mxu0 %v818
  %1862 = vmatpush2.msra.mxu0 %v817
  %1863 = vmatprep.subr.mxu0 %v781
  %1864 = vmatpush2.msra.mxu0 %v780
  %1865 = vmatprep.subr.mxu0 %v744
  %1866 = vmatpush2.msra.mxu0 %v743
  %1867 = vmatprep.subr.mxu0 %v707
  %1868 = vmatpush2.msra.mxu0 %v706
  %1869 = vmatprep.subr.mxu0 %v670
  %1870 = vmatpush2.msra.mxu0 %v669
  %1871 = vmatprep.subr.mxu0 %v633
  %1872 = vmatpush2.msra.mxu0 %v632
  %1873 = vmatprep.mubr.f32.mxu0 %v957
  %1874 = vmatmul.mubr.f32.gmra.mxu0 %v14
  %v1875 = vpop.f32.mrf.mxu0
  %v1876 = vadd.f32 %v948, %v1875
  %v1877 = vpop.f32.mrf.mxu0
  %v1878 = vadd.f32 %v948, %v1877
  %1879 = vmatprep.mubr.f32.mxu0 %v960
  %1880 = vmatmul.mubr.f32.gmra.mxu0 %v16
  %v1881 = vpop.f32.mrf.mxu0
  %v1882 = vadd.f32 %v953, %v1881
  %v1883 = vpop.f32.mrf.mxu0
  %v1884 = vadd.f32 %v953, %v1883
  %1885 = vdwg.mxu0
  %1886 = vmatprep.subr.mxu0 %v598
  %1887 = vmatpush1.msra.mxu0 %v597
  %1888 = vmatprep.subr.mxu0 %v561
  %1889 = vmatpush1.msra.mxu0 %v560
  %1890 = vmatprep.subr.mxu0 %v524
  %1891 = vmatpush1.msra.mxu0 %v523
  %1892 = vmatprep.subr.mxu0 %v487
  %1893 = vmatpush1.msra.mxu0 %v486
  %1894 = vmatprep.subr.mxu0 %v450
  %1895 = vmatpush1.msra.mxu0 %v449
  %1896 = vmatprep.subr.mxu0 %v413
  %1897 = vmatpush1.msra.mxu0 %v412
  %1898 = vmatprep.subr.mxu0 %v376
  %1899 = vmatpush1.msra.mxu0 %v375
  %1900 = vmatprep.subr.mxu0 %v339
  %1901 = vmatpush1.msra.mxu0 %v338
  %1902 = vmatprep.subr.mxu0 %v302
  %1903 = vmatpush1.msra.mxu0 %v301
  %1904 = vmatprep.subr.mxu0 %v265
  %1905 = vmatpush1.msra.mxu0 %v264
  %1906 = vmatprep.subr.mxu0 %v228
  %1907 = vmatpush1.msra.mxu0 %v227
  %1908 = vmatprep.subr.mxu0 %v191
  %1909 = vmatpush1.msra.mxu0 %v190
  %1910 = vmatprep.subr.mxu0 %v154
  %1911 = vmatpush1.msra.mxu0 %v153
  %1912 = vmatprep.subr.mxu0 %v117
  %1913 = vmatpush1.msra.mxu0 %v116
  %1914 = vmatprep.subr.mxu0 %v80
  %1915 = vmatpush1.msra.mxu0 %v79
  %1916 = vmatprep.subr.mxu0 %v43
  %1917 = vmatpush1.msra.mxu0 %v42
  %1918 = vmatprep.subr.mxu0 0.0
  %1919 = vmatpush2.msra.mxu0 0.0
  %1920 = vmatprep.subr.mxu0 0.0
  %1921 = vmatpush2.msra.mxu0 0.0
  %1922 = vmatprep.subr.mxu0 0.0
  %1923 = vmatpush2.msra.mxu0 0.0
  %1924 = vmatprep.subr.mxu0 0.0
  %1925 = vmatpush2.msra.mxu0 0.0
  %1926 = vmatprep.subr.mxu0 0.0
  %1927 = vmatpush2.msra.mxu0 0.0
  %1928 = vmatprep.subr.mxu0 0.0
  %1929 = vmatpush2.msra.mxu0 0.0
  %1930 = vmatprep.subr.mxu0 0.0
  %1931 = vmatpush2.msra.mxu0 0.0
  %1932 = vmatprep.subr.mxu0 %v931
  %1933 = vmatpush2.msra.mxu0 %v930
  %1934 = vmatprep.subr.mxu0 %v894
  %1935 = vmatpush2.msra.mxu0 %v893
  %1936 = vmatprep.subr.mxu0 %v857
  %1937 = vmatpush2.msra.mxu0 %v856
  %1938 = vmatprep.subr.mxu0 %v820
  %1939 = vmatpush2.msra.mxu0 %v819
  %1940 = vmatprep.subr.mxu0 %v783
  %1941 = vmatpush2.msra.mxu0 %v782
  %1942 = vmatprep.subr.mxu0 %v746
  %1943 = vmatpush2.msra.mxu0 %v745
  %1944 = vmatprep.subr.mxu0 %v709
  %1945 = vmatpush2.msra.mxu0 %v708
  %1946 = vmatprep.subr.mxu0 %v672
  %1947 = vmatpush2.msra.mxu0 %v671
  %1948 = vmatprep.subr.mxu0 %v635
  %1949 = vmatpush2.msra.mxu0 %v634
  %1950 = vmatprep.mubr.f32.mxu0 %v957
  %1951 = vmatmul.mubr.f32.gmra.mxu0 %v14
  %v1952 = vpop.f32.mrf.mxu0
  %v1953 = vadd.f32 %v948, %v1952
  %v1954 = vpop.f32.mrf.mxu0
  %v1955 = vadd.f32 %v948, %v1954
  %1956 = vmatprep.mubr.f32.mxu0 %v960
  %1957 = vmatmul.mubr.f32.gmra.mxu0 %v16
  %v1958 = vpop.f32.mrf.mxu0
  %v1959 = vadd.f32 %v953, %v1958
  %v1960 = vpop.f32.mrf.mxu0
  %v1961 = vadd.f32 %v953, %v1960
  %1962 = vdwg.mxu0
  %1963 = vmatprep.subr.mxu0 %v600
  %1964 = vmatpush1.msra.mxu0 %v599
  %1965 = vmatprep.subr.mxu0 %v563
  %1966 = vmatpush1.msra.mxu0 %v562
  %1967 = vmatprep.subr.mxu0 %v526
  %1968 = vmatpush1.msra.mxu0 %v525
  %1969 = vmatprep.subr.mxu0 %v489
  %1970 = vmatpush1.msra.mxu0 %v488
  %1971 = vmatprep.subr.mxu0 %v452
  %1972 = vmatpush1.msra.mxu0 %v451
  %1973 = vmatprep.subr.mxu0 %v415
  %1974 = vmatpush1.msra.mxu0 %v414
  %1975 = vmatprep.subr.mxu0 %v378
  %1976 = vmatpush1.msra.mxu0 %v377
  %1977 = vmatprep.subr.mxu0 %v341
  %1978 = vmatpush1.msra.mxu0 %v340
  %1979 = vmatprep.subr.mxu0 %v304
  %1980 = vmatpush1.msra.mxu0 %v303
  %1981 = vmatprep.subr.mxu0 %v267
  %1982 = vmatpush1.msra.mxu0 %v266
  %1983 = vmatprep.subr.mxu0 %v230
  %1984 = vmatpush1.msra.mxu0 %v229
  %1985 = vmatprep.subr.mxu0 %v193
  %1986 = vmatpush1.msra.mxu0 %v192
  %1987 = vmatprep.subr.mxu0 %v156
  %1988 = vmatpush1.msra.mxu0 %v155
  %1989 = vmatprep.subr.mxu0 %v119
  %1990 = vmatpush1.msra.mxu0 %v118
  %1991 = vmatprep.subr.mxu0 %v82
  %1992 = vmatpush1.msra.mxu0 %v81
  %1993 = vmatprep.subr.mxu0 %v45
  %1994 = vmatpush1.msra.mxu0 %v44
  %1995 = vmatprep.subr.mxu0 0.0
  %1996 = vmatpush2.msra.mxu0 0.0
  %1997 = vmatprep.subr.mxu0 0.0
  %1998 = vmatpush2.msra.mxu0 0.0
  %1999 = vmatprep.subr.mxu0 0.0
  %2000 = vmatpush2.msra.mxu0 0.0
  %2001 = vmatprep.subr.mxu0 0.0
  %2002 = vmatpush2.msra.mxu0 0.0
  %2003 = vmatprep.subr.mxu0 0.0
  %2004 = vmatpush2.msra.mxu0 0.0
  %2005 = vmatprep.subr.mxu0 0.0
  %2006 = vmatpush2.msra.mxu0 0.0
  %2007 = vmatprep.subr.mxu0 0.0
  %2008 = vmatpush2.msra.mxu0 0.0
  %2009 = vmatprep.subr.mxu0 %v933
  %2010 = vmatpush2.msra.mxu0 %v932
  %2011 = vmatprep.subr.mxu0 %v896
  %2012 = vmatpush2.msra.mxu0 %v895
  %2013 = vmatprep.subr.mxu0 %v859
  %2014 = vmatpush2.msra.mxu0 %v858
  %2015 = vmatprep.subr.mxu0 %v822
  %2016 = vmatpush2.msra.mxu0 %v821
  %2017 = vmatprep.subr.mxu0 %v785
  %2018 = vmatpush2.msra.mxu0 %v784
  %2019 = vmatprep.subr.mxu0 %v748
  %2020 = vmatpush2.msra.mxu0 %v747
  %2021 = vmatprep.subr.mxu0 %v711
  %2022 = vmatpush2.msra.mxu0 %v710
  %2023 = vmatprep.subr.mxu0 %v674
  %2024 = vmatpush2.msra.mxu0 %v673
  %2025 = vmatprep.subr.mxu0 %v637
  %2026 = vmatpush2.msra.mxu0 %v636
  %2027 = vmatprep.mubr.f32.mxu0 %v957
  %2028 = vmatmul.mubr.f32.gmra.mxu0 %v14
  %v2029 = vpop.f32.mrf.mxu0
  %v2030 = vadd.f32 %v948, %v2029
  %v2031 = vpop.f32.mrf.mxu0
  %v2032 = vadd.f32 %v948, %v2031
  %2033 = vmatprep.mubr.f32.mxu0 %v960
  %2034 = vmatmul.mubr.f32.gmra.mxu0 %v16
  %v2035 = vpop.f32.mrf.mxu0
  %v2036 = vadd.f32 %v953, %v2035
  %v2037 = vpop.f32.mrf.mxu0
  %v2038 = vadd.f32 %v953, %v2037
  %2039 = vdwg.mxu0
  %2040 = vmatprep.subr.mxu0 %v602
  %2041 = vmatpush1.msra.mxu0 %v601
  %2042 = vmatprep.subr.mxu0 %v565
  %2043 = vmatpush1.msra.mxu0 %v564
  %2044 = vmatprep.subr.mxu0 %v528
  %2045 = vmatpush1.msra.mxu0 %v527
  %2046 = vmatprep.subr.mxu0 %v491
  %2047 = vmatpush1.msra.mxu0 %v490
  %2048 = vmatprep.subr.mxu0 %v454
  %2049 = vmatpush1.msra.mxu0 %v453
  %2050 = vmatprep.subr.mxu0 %v417
  %2051 = vmatpush1.msra.mxu0 %v416
  %2052 = vmatprep.subr.mxu0 %v380
  %2053 = vmatpush1.msra.mxu0 %v379
  %2054 = vmatprep.subr.mxu0 %v343
  %2055 = vmatpush1.msra.mxu0 %v342
  %2056 = vmatprep.subr.mxu0 %v306
  %2057 = vmatpush1.msra.mxu0 %v305
  %2058 = vmatprep.subr.mxu0 %v269
  %2059 = vmatpush1.msra.mxu0 %v268
  %2060 = vmatprep.subr.mxu0 %v232
  %2061 = vmatpush1.msra.mxu0 %v231
  %2062 = vmatprep.subr.mxu0 %v195
  %2063 = vmatpush1.msra.mxu0 %v194
  %2064 = vmatprep.subr.mxu0 %v158
  %2065 = vmatpush1.msra.mxu0 %v157
  %2066 = vmatprep.subr.mxu0 %v121
  %2067 = vmatpush1.msra.mxu0 %v120
  %2068 = vmatprep.subr.mxu0 %v84
  %2069 = vmatpush1.msra.mxu0 %v83
  %2070 = vmatprep.subr.mxu0 %v47
  %2071 = vmatpush1.msra.mxu0 %v46
  %2072 = vmatprep.subr.mxu0 0.0
  %2073 = vmatpush2.msra.mxu0 0.0
  %2074 = vmatprep.subr.mxu0 0.0
  %2075 = vmatpush2.msra.mxu0 0.0
  %2076 = vmatprep.subr.mxu0 0.0
  %2077 = vmatpush2.msra.mxu0 0.0
  %2078 = vmatprep.subr.mxu0 0.0
  %2079 = vmatpush2.msra.mxu0 0.0
  %2080 = vmatprep.subr.mxu0 0.0
  %2081 = vmatpush2.msra.mxu0 0.0
  %2082 = vmatprep.subr.mxu0 0.0
  %2083 = vmatpush2.msra.mxu0 0.0
  %2084 = vmatprep.subr.mxu0 0.0
  %2085 = vmatpush2.msra.mxu0 0.0
  %2086 = vmatprep.subr.mxu0 %v935
  %2087 = vmatpush2.msra.mxu0 %v934
  %2088 = vmatprep.subr.mxu0 %v898
  %2089 = vmatpush2.msra.mxu0 %v897
  %2090 = vmatprep.subr.mxu0 %v861
  %2091 = vmatpush2.msra.mxu0 %v860
  %2092 = vmatprep.subr.mxu0 %v824
  %2093 = vmatpush2.msra.mxu0 %v823
  %2094 = vmatprep.subr.mxu0 %v787
  %2095 = vmatpush2.msra.mxu0 %v786
  %2096 = vmatprep.subr.mxu0 %v750
  %2097 = vmatpush2.msra.mxu0 %v749
  %2098 = vmatprep.subr.mxu0 %v713
  %2099 = vmatpush2.msra.mxu0 %v712
  %2100 = vmatprep.subr.mxu0 %v676
  %2101 = vmatpush2.msra.mxu0 %v675
  %2102 = vmatprep.subr.mxu0 %v639
  %2103 = vmatpush2.msra.mxu0 %v638
  %2104 = vmatprep.mubr.f32.mxu0 %v957
  %2105 = vmatmul.mubr.f32.gmra.mxu0 %v14
  %v2106 = vpop.f32.mrf.mxu0
  %v2107 = vadd.f32 %v948, %v2106
  %v2108 = vpop.f32.mrf.mxu0
  %v2109 = vadd.f32 %v948, %v2108
  %2110 = vmatprep.mubr.f32.mxu0 %v960
  %2111 = vmatmul.mubr.f32.gmra.mxu0 %v16
  %v2112 = vpop.f32.mrf.mxu0
  %v2113 = vadd.f32 %v953, %v2112
  %v2114 = vpop.f32.mrf.mxu0
  %v2115 = vadd.f32 %v953, %v2114
  %2116 = vdwg.mxu0
  %2117 = vmatprep.subr.mxu0 %v604
  %2118 = vmatpush1.msra.mxu0 %v603
  %2119 = vmatprep.subr.mxu0 %v567
  %2120 = vmatpush1.msra.mxu0 %v566
  %2121 = vmatprep.subr.mxu0 %v530
  %2122 = vmatpush1.msra.mxu0 %v529
  %2123 = vmatprep.subr.mxu0 %v493
  %2124 = vmatpush1.msra.mxu0 %v492
  %2125 = vmatprep.subr.mxu0 %v456
  %2126 = vmatpush1.msra.mxu0 %v455
  %2127 = vmatprep.subr.mxu0 %v419
  %2128 = vmatpush1.msra.mxu0 %v418
  %2129 = vmatprep.subr.mxu0 %v382
  %2130 = vmatpush1.msra.mxu0 %v381
  %2131 = vmatprep.subr.mxu0 %v345
  %2132 = vmatpush1.msra.mxu0 %v344
  %2133 = vmatprep.subr.mxu0 %v308
  %2134 = vmatpush1.msra.mxu0 %v307
  %2135 = vmatprep.subr.mxu0 %v271
  %2136 = vmatpush1.msra.mxu0 %v270
  %2137 = vmatprep.subr.mxu0 %v234
  %2138 = vmatpush1.msra.mxu0 %v233
  %2139 = vmatprep.subr.mxu0 %v197
  %2140 = vmatpush1.msra.mxu0 %v196
  %2141 = vmatprep.subr.mxu0 %v160
  %2142 = vmatpush1.msra.mxu0 %v159
  %2143 = vmatprep.subr.mxu0 %v123
  %2144 = vmatpush1.msra.mxu0 %v122
  %2145 = vmatprep.subr.mxu0 %v86
  %2146 = vmatpush1.msra.mxu0 %v85
  %2147 = vmatprep.subr.mxu0 %v49
  %2148 = vmatpush1.msra.mxu0 %v48
  %2149 = vmatprep.subr.mxu0 0.0
  %2150 = vmatpush2.msra.mxu0 0.0
  %2151 = vmatprep.subr.mxu0 0.0
  %2152 = vmatpush2.msra.mxu0 0.0
  %2153 = vmatprep.subr.mxu0 0.0
  %2154 = vmatpush2.msra.mxu0 0.0
  %2155 = vmatprep.subr.mxu0 0.0
  %2156 = vmatpush2.msra.mxu0 0.0
  %2157 = vmatprep.subr.mxu0 0.0
  %2158 = vmatpush2.msra.mxu0 0.0
  %2159 = vmatprep.subr.mxu0 0.0
  %2160 = vmatpush2.msra.mxu0 0.0
  %2161 = vmatprep.subr.mxu0 0.0
  %2162 = vmatpush2.msra.mxu0 0.0
  %2163 = vmatprep.subr.mxu0 %v937
  %2164 = vmatpush2.msra.mxu0 %v936
  %2165 = vmatprep.subr.mxu0 %v900
  %2166 = vmatpush2.msra.mxu0 %v899
  %2167 = vmatprep.subr.mxu0 %v863
  %2168 = vmatpush2.msra.mxu0 %v862
  %2169 = vmatprep.subr.mxu0 %v826
  %2170 = vmatpush2.msra.mxu0 %v825
  %2171 = vmatprep.subr.mxu0 %v789
  %2172 = vmatpush2.msra.mxu0 %v788
  %2173 = vmatprep.subr.mxu0 %v752
  %2174 = vmatpush2.msra.mxu0 %v751
  %2175 = vmatprep.subr.mxu0 %v715
  %2176 = vmatpush2.msra.mxu0 %v714
  %2177 = vmatprep.subr.mxu0 %v678
  %2178 = vmatpush2.msra.mxu0 %v677
  %2179 = vmatprep.subr.mxu0 %v641
  %2180 = vmatpush2.msra.mxu0 %v640
  %2181 = vmatprep.mubr.f32.mxu0 %v957
  %2182 = vmatmul.mubr.f32.gmra.mxu0 %v14
  %v2183 = vpop.f32.mrf.mxu0
  %v2184 = vadd.f32 %v948, %v2183
  %v2185 = vpop.f32.mrf.mxu0
  %v2186 = vadd.f32 %v948, %v2185
  %2187 = vmatprep.mubr.f32.mxu0 %v960
  %2188 = vmatmul.mubr.f32.gmra.mxu0 %v16
  %v2189 = vpop.f32.mrf.mxu0
  %v2190 = vadd.f32 %v953, %v2189
  %v2191 = vpop.f32.mrf.mxu0
  %v2192 = vadd.f32 %v953, %v2191
  %2193 = vdwg.mxu0
  %2194 = vmatprep.subr.mxu0 %v606
  %2195 = vmatpush1.msra.mxu0 %v605
  %2196 = vmatprep.subr.mxu0 %v569
  %2197 = vmatpush1.msra.mxu0 %v568
  %2198 = vmatprep.subr.mxu0 %v532
  %2199 = vmatpush1.msra.mxu0 %v531
  %2200 = vmatprep.subr.mxu0 %v495
  %2201 = vmatpush1.msra.mxu0 %v494
  %2202 = vmatprep.subr.mxu0 %v458
  %2203 = vmatpush1.msra.mxu0 %v457
  %2204 = vmatprep.subr.mxu0 %v421
  %2205 = vmatpush1.msra.mxu0 %v420
  %2206 = vmatprep.subr.mxu0 %v384
  %2207 = vmatpush1.msra.mxu0 %v383
  %2208 = vmatprep.subr.mxu0 %v347
  %2209 = vmatpush1.msra.mxu0 %v346
  %2210 = vmatprep.subr.mxu0 %v310
  %2211 = vmatpush1.msra.mxu0 %v309
  %2212 = vmatprep.subr.mxu0 %v273
  %2213 = vmatpush1.msra.mxu0 %v272
  %2214 = vmatprep.subr.mxu0 %v236
  %2215 = vmatpush1.msra.mxu0 %v235
  %2216 = vmatprep.subr.mxu0 %v199
  %2217 = vmatpush1.msra.mxu0 %v198
  %2218 = vmatprep.subr.mxu0 %v162
  %2219 = vmatpush1.msra.mxu0 %v161
  %2220 = vmatprep.subr.mxu0 %v125
  %2221 = vmatpush1.msra.mxu0 %v124
  %2222 = vmatprep.subr.mxu0 %v88
  %2223 = vmatpush1.msra.mxu0 %v87
  %2224 = vmatprep.subr.mxu0 %v51
  %2225 = vmatpush1.msra.mxu0 %v50
  %2226 = vmatprep.subr.mxu0 0.0
  %2227 = vmatpush2.msra.mxu0 0.0
  %2228 = vmatprep.subr.mxu0 0.0
  %2229 = vmatpush2.msra.mxu0 0.0
  %2230 = vmatprep.subr.mxu0 0.0
  %2231 = vmatpush2.msra.mxu0 0.0
  %2232 = vmatprep.subr.mxu0 0.0
  %2233 = vmatpush2.msra.mxu0 0.0
  %2234 = vmatprep.subr.mxu0 0.0
  %2235 = vmatpush2.msra.mxu0 0.0
  %2236 = vmatprep.subr.mxu0 0.0
  %2237 = vmatpush2.msra.mxu0 0.0
  %2238 = vmatprep.subr.mxu0 0.0
  %2239 = vmatpush2.msra.mxu0 0.0
  %2240 = vmatprep.subr.mxu0 %v939
  %2241 = vmatpush2.msra.mxu0 %v938
  %2242 = vmatprep.subr.mxu0 %v902
  %2243 = vmatpush2.msra.mxu0 %v901
  %2244 = vmatprep.subr.mxu0 %v865
  %2245 = vmatpush2.msra.mxu0 %v864
  %2246 = vmatprep.subr.mxu0 %v828
  %2247 = vmatpush2.msra.mxu0 %v827
  %2248 = vmatprep.subr.mxu0 %v791
  %2249 = vmatpush2.msra.mxu0 %v790
  %2250 = vmatprep.subr.mxu0 %v754
  %2251 = vmatpush2.msra.mxu0 %v753
  %2252 = vmatprep.subr.mxu0 %v717
  %2253 = vmatpush2.msra.mxu0 %v716
  %2254 = vmatprep.subr.mxu0 %v680
  %2255 = vmatpush2.msra.mxu0 %v679
  %2256 = vmatprep.subr.mxu0 %v643
  %2257 = vmatpush2.msra.mxu0 %v642
  %2258 = vmatprep.mubr.f32.mxu0 %v957
  %2259 = vmatmul.mubr.f32.gmra.mxu0 %v14
  %v2260 = vpop.f32.mrf.mxu0
  %v2261 = vadd.f32 %v948, %v2260
  %v2262 = vpop.f32.mrf.mxu0
  %v2263 = vadd.f32 %v948, %v2262
  %2264 = vmatprep.mubr.f32.mxu0 %v960
  %2265 = vmatmul.mubr.f32.gmra.mxu0 %v16
  %v2266 = vpop.f32.mrf.mxu0
  %v2267 = vadd.f32 %v953, %v2266
  %v2268 = vpop.f32.mrf.mxu0
  %v2269 = vadd.f32 %v953, %v2268
  %2270 = vdwg.mxu0
  %2271 = vmatprep.subr.mxu0 %v608
  %2272 = vmatpush1.msra.mxu0 %v607
  %2273 = vmatprep.subr.mxu0 %v571
  %2274 = vmatpush1.msra.mxu0 %v570
  %2275 = vmatprep.subr.mxu0 %v534
  %2276 = vmatpush1.msra.mxu0 %v533
  %2277 = vmatprep.subr.mxu0 %v497
  %2278 = vmatpush1.msra.mxu0 %v496
  %2279 = vmatprep.subr.mxu0 %v460
  %2280 = vmatpush1.msra.mxu0 %v459
  %2281 = vmatprep.subr.mxu0 %v423
  %2282 = vmatpush1.msra.mxu0 %v422
  %2283 = vmatprep.subr.mxu0 %v386
  %2284 = vmatpush1.msra.mxu0 %v385
  %2285 = vmatprep.subr.mxu0 %v349
  %2286 = vmatpush1.msra.mxu0 %v348
  %2287 = vmatprep.subr.mxu0 %v312
  %2288 = vmatpush1.msra.mxu0 %v311
  %2289 = vmatprep.subr.mxu0 %v275
  %2290 = vmatpush1.msra.mxu0 %v274
  %2291 = vmatprep.subr.mxu0 %v238
  %2292 = vmatpush1.msra.mxu0 %v237
  %2293 = vmatprep.subr.mxu0 %v201
  %2294 = vmatpush1.msra.mxu0 %v200
  %2295 = vmatprep.subr.mxu0 %v164
  %2296 = vmatpush1.msra.mxu0 %v163
  %2297 = vmatprep.subr.mxu0 %v127
  %2298 = vmatpush1.msra.mxu0 %v126
  %2299 = vmatprep.subr.mxu0 %v90
  %2300 = vmatpush1.msra.mxu0 %v89
  %2301 = vmatprep.subr.mxu0 %v53
  %2302 = vmatpush1.msra.mxu0 %v52
  %2303 = vmatprep.subr.mxu0 0.0
  %2304 = vmatpush2.msra.mxu0 0.0
  %2305 = vmatprep.subr.mxu0 0.0
  %2306 = vmatpush2.msra.mxu0 0.0
  %2307 = vmatprep.subr.mxu0 0.0
  %2308 = vmatpush2.msra.mxu0 0.0
  %2309 = vmatprep.subr.mxu0 0.0
  %2310 = vmatpush2.msra.mxu0 0.0
  %2311 = vmatprep.subr.mxu0 0.0
  %2312 = vmatpush2.msra.mxu0 0.0
  %2313 = vmatprep.subr.mxu0 0.0
  %2314 = vmatpush2.msra.mxu0 0.0
  %2315 = vmatprep.subr.mxu0 0.0
  %2316 = vmatpush2.msra.mxu0 0.0
  %2317 = vmatprep.subr.mxu0 %v941
  %2318 = vmatpush2.msra.mxu0 %v940
  %2319 = vmatprep.subr.mxu0 %v904
  %2320 = vmatpush2.msra.mxu0 %v903
  %2321 = vmatprep.subr.mxu0 %v867
  %2322 = vmatpush2.msra.mxu0 %v866
  %2323 = vmatprep.subr.mxu0 %v830
  %2324 = vmatpush2.msra.mxu0 %v829
  %2325 = vmatprep.subr.mxu0 %v793
  %2326 = vmatpush2.msra.mxu0 %v792
  %2327 = vmatprep.subr.mxu0 %v756
  %2328 = vmatpush2.msra.mxu0 %v755
  %2329 = vmatprep.subr.mxu0 %v719
  %2330 = vmatpush2.msra.mxu0 %v718
  %2331 = vmatprep.subr.mxu0 %v682
  %2332 = vmatpush2.msra.mxu0 %v681
  %2333 = vmatprep.subr.mxu0 %v645
  %2334 = vmatpush2.msra.mxu0 %v644
  %2335 = vmatprep.mubr.f32.mxu0 %v957
  %2336 = vmatmul.mubr.f32.gmra.mxu0 %v14
  %v2337 = vpop.f32.mrf.mxu0
  %v2338 = vadd.f32 %v948, %v2337
  %v2339 = vpop.f32.mrf.mxu0
  %v2340 = vadd.f32 %v948, %v2339
  %2341 = vmatprep.mubr.f32.mxu0 %v960
  %2342 = vmatmul.mubr.f32.gmra.mxu0 %v16
  %v2343 = vpop.f32.mrf.mxu0
  %v2344 = vadd.f32 %v953, %v2343
  %v2345 = vpop.f32.mrf.mxu0
  %v2346 = vadd.f32 %v953, %v2345
  %2347 = vdwg.mxu0
  %2348 = vmatprep.subr.mxu0 0.0
  %2349 = vmatpush1.msra.mxu0 %v609
  %2350 = vmatprep.subr.mxu0 0.0
  %2351 = vmatpush1.msra.mxu0 %v572
  %2352 = vmatprep.subr.mxu0 0.0
  %2353 = vmatpush1.msra.mxu0 %v535
  %2354 = vmatprep.subr.mxu0 0.0
  %2355 = vmatpush1.msra.mxu0 %v498
  %2356 = vmatprep.subr.mxu0 0.0
  %2357 = vmatpush1.msra.mxu0 %v461
  %2358 = vmatprep.subr.mxu0 0.0
  %2359 = vmatpush1.msra.mxu0 %v424
  %2360 = vmatprep.subr.mxu0 0.0
  %2361 = vmatpush1.msra.mxu0 %v387
  %2362 = vmatprep.subr.mxu0 0.0
  %2363 = vmatpush1.msra.mxu0 %v350
  %2364 = vmatprep.subr.mxu0 0.0
  %2365 = vmatpush1.msra.mxu0 %v313
  %2366 = vmatprep.subr.mxu0 0.0
  %2367 = vmatpush1.msra.mxu0 %v276
  %2368 = vmatprep.subr.mxu0 0.0
  %2369 = vmatpush1.msra.mxu0 %v239
  %2370 = vmatprep.subr.mxu0 0.0
  %2371 = vmatpush1.msra.mxu0 %v202
  %2372 = vmatprep.subr.mxu0 0.0
  %2373 = vmatpush1.msra.mxu0 %v165
  %2374 = vmatprep.subr.mxu0 0.0
  %2375 = vmatpush1.msra.mxu0 %v128
  %2376 = vmatprep.subr.mxu0 0.0
  %2377 = vmatpush1.msra.mxu0 %v91
  %2378 = vmatprep.subr.mxu0 0.0
  %2379 = vmatpush1.msra.mxu0 %v54
  %2380 = vmatprep.subr.mxu0 0.0
  %2381 = vmatpush2.msra.mxu0 0.0
  %2382 = vmatprep.subr.mxu0 0.0
  %2383 = vmatpush2.msra.mxu0 0.0
  %2384 = vmatprep.subr.mxu0 0.0
  %2385 = vmatpush2.msra.mxu0 0.0
  %2386 = vmatprep.subr.mxu0 0.0
  %2387 = vmatpush2.msra.mxu0 0.0
  %2388 = vmatprep.subr.mxu0 0.0
  %2389 = vmatpush2.msra.mxu0 0.0
  %2390 = vmatprep.subr.mxu0 0.0
  %2391 = vmatpush2.msra.mxu0 0.0
  %2392 = vmatprep.subr.mxu0 0.0
  %2393 = vmatpush2.msra.mxu0 0.0
  %2394 = vmatprep.subr.mxu0 0.0
  %2395 = vmatpush2.msra.mxu0 %v942
  %2396 = vmatprep.subr.mxu0 0.0
  %2397 = vmatpush2.msra.mxu0 %v905
  %2398 = vmatprep.subr.mxu0 0.0
  %2399 = vmatpush2.msra.mxu0 %v868
  %2400 = vmatprep.subr.mxu0 0.0
  %2401 = vmatpush2.msra.mxu0 %v831
  %2402 = vmatprep.subr.mxu0 0.0
  %2403 = vmatpush2.msra.mxu0 %v794
  %2404 = vmatprep.subr.mxu0 0.0
  %2405 = vmatpush2.msra.mxu0 %v757
  %2406 = vmatprep.subr.mxu0 0.0
  %2407 = vmatpush2.msra.mxu0 %v720
  %2408 = vmatprep.subr.mxu0 0.0
  %2409 = vmatpush2.msra.mxu0 %v683
  %2410 = vmatprep.subr.mxu0 0.0
  %2411 = vmatpush2.msra.mxu0 %v646
  %2412 = vmatprep.mubr.f32.mxu0 %v957
  %2413 = vmatmul.mubr.f32.gmra.mxu0 %v14
  %v2414 = vpop.f32.mrf.mxu0
  %v2415 = vadd.f32 %v948, %v2414
  %v2416 = vpop.f32.mrf.mxu0
  %2417 = vmatprep.mubr.f32.mxu0 %v960
  %2418 = vmatmul.mubr.f32.gmra.mxu0 %v16
  %v2419 = vpop.f32.mrf.mxu0
  %v2420 = vadd.f32 %v953, %v2419
  %v2421 = vpop.f32.mrf.mxu0
  %2422 = vdwg.mxu0
  %v2423 = vmax.f32 %v1029, 0.0
  %v2424 = vmax.f32 %v1031, 0.0
  %v2425 = vmax.f32 %v1106, 0.0
  %v2426 = vmax.f32 %v1108, 0.0
  %v2427 = vmax.f32 %v1183, 0.0
  %v2428 = vmax.f32 %v1185, 0.0
  %v2429 = vmax.f32 %v1260, 0.0
  %v2430 = vmax.f32 %v1262, 0.0
  %v2431 = vmax.f32 %v1337, 0.0
  %v2432 = vmax.f32 %v1339, 0.0
  %v2433 = vmax.f32 %v1414, 0.0
  %v2434 = vmax.f32 %v1416, 0.0
  %v2435 = vmax.f32 %v1491, 0.0
  %v2436 = vmax.f32 %v1493, 0.0
  %v2437 = vmax.f32 %v1568, 0.0
  %v2438 = vmax.f32 %v1570, 0.0
  %v2439 = vmax.f32 %v1645, 0.0
  %v2440 = vmax.f32 %v1647, 0.0
  %v2441 = vmax.f32 %v1722, 0.0
  %v2442 = vmax.f32 %v1724, 0.0
  %v2443 = vmax.f32 %v1799, 0.0
  %v2444 = vmax.f32 %v1801, 0.0
  %v2445 = vmax.f32 %v1876, 0.0
  %v2446 = vmax.f32 %v1878, 0.0
  %v2447 = vmax.f32 %v1953, 0.0
  %v2448 = vmax.f32 %v1955, 0.0
  %v2449 = vmax.f32 %v2030, 0.0
  %v2450 = vmax.f32 %v2032, 0.0
  %v2451 = vmax.f32 %v2107, 0.0
  %v2452 = vmax.f32 %v2109, 0.0
  %v2453 = vmax.f32 %v2184, 0.0
  %v2454 = vmax.f32 %v2186, 0.0
  %v2455 = vmax.f32 %v2261, 0.0
  %v2456 = vmax.f32 %v2263, 0.0
  %v2457 = vmax.f32 %v2338, 0.0
  %v2458 = vmax.f32 %v2340, 0.0
  %v2459 = vmax.f32 %v2415, 0.0
  %v2460 = vmax.f32 %v1035, 0.0
  %v2461 = vmax.f32 %v1037, 0.0
  %v2462 = vmax.f32 %v1112, 0.0
  %v2463 = vmax.f32 %v1114, 0.0
  %v2464 = vmax.f32 %v1189, 0.0
  %v2465 = vmax.f32 %v1191, 0.0
  %v2466 = vmax.f32 %v1266, 0.0
  %v2467 = vmax.f32 %v1268, 0.0
  %v2468 = vmax.f32 %v1343, 0.0
  %v2469 = vmax.f32 %v1345, 0.0
  %v2470 = vmax.f32 %v1420, 0.0
  %v2471 = vmax.f32 %v1422, 0.0
  %v2472 = vmax.f32 %v1497, 0.0
  %v2473 = vmax.f32 %v1499, 0.0
  %v2474 = vmax.f32 %v1574, 0.0
  %v2475 = vmax.f32 %v1576, 0.0
  %v2476 = vmax.f32 %v1651, 0.0
  %v2477 = vmax.f32 %v1653, 0.0
  %v2478 = vmax.f32 %v1728, 0.0
  %v2479 = vmax.f32 %v1730, 0.0
  %v2480 = vmax.f32 %v1805, 0.0
  %v2481 = vmax.f32 %v1807, 0.0
  %v2482 = vmax.f32 %v1882, 0.0
  %v2483 = vmax.f32 %v1884, 0.0
  %v2484 = vmax.f32 %v1959, 0.0
  %v2485 = vmax.f32 %v1961, 0.0
  %v2486 = vmax.f32 %v2036, 0.0
  %v2487 = vmax.f32 %v2038, 0.0
  %v2488 = vmax.f32 %v2113, 0.0
  %v2489 = vmax.f32 %v2115, 0.0
  %v2490 = vmax.f32 %v2190, 0.0
  %v2491 = vmax.f32 %v2192, 0.0
  %v2492 = vmax.f32 %v2267, 0.0
  %v2493 = vmax.f32 %v2269, 0.0
  %v2494 = vmax.f32 %v2344, 0.0
  %v2495 = vmax.f32 %v2346, 0.0
  %v2496 = vmax.f32 %v2420, 0.0
  %2497 = vst [vmem:[%s3] sm:$0xff] %v2423
  %2498 = vst [vmem:[%s3 + $0x8] sm:$0xff] %v2424
  %2499 = vst [vmem:[%s3 + $0x10] sm:$0xff] %v2425
  %2500 = vst [vmem:[%s3 + $0x18] sm:$0xff] %v2426
  %2501 = vst [vmem:[%s3 + $0x20] sm:$0xff] %v2427
  %2502 = vst [vmem:[%s3 + $0x28] sm:$0xff] %v2428
  %2503 = vst [vmem:[%s3 + $0x30] sm:$0xff] %v2429
  %2504 = vst [vmem:[%s3 + $0x38] sm:$0xff] %v2430
  %2505 = vst [vmem:[%s3 + $0x40] sm:$0xff] %v2431
  %2506 = vst [vmem:[%s3 + $0x48] sm:$0xff] %v2432
  %2507 = vst [vmem:[%s3 + $0x50] sm:$0xff] %v2433
  %2508 = vst [vmem:[%s3 + $0x58] sm:$0xff] %v2434
  %2509 = vst [vmem:[%s3 + $0x60] sm:$0xff] %v2435
  %2510 = vst [vmem:[%s3 + $0x68] sm:$0xff] %v2436
  %2511 = vst [vmem:[%s3 + $0x70] sm:$0xff] %v2437
  %2512 = vst [vmem:[%s3 + $0x78] sm:$0xff] %v2438
  %2513 = vst [vmem:[%s3 + $0x80] sm:$0xff] %v2439
  %2514 = vst [vmem:[%s3 + $0x88] sm:$0xff] %v2440
  %2515 = vst [vmem:[%s3 + $0x90] sm:$0xff] %v2441
  %2516 = vst [vmem:[%s3 + $0x98] sm:$0xff] %v2442
  %2517 = vst [vmem:[%s3 + $0xa0] sm:$0xff] %v2443
  %2518 = vst [vmem:[%s3 + $0xa8] sm:$0xff] %v2444
  %2519 = vst [vmem:[%s3 + $0xb0] sm:$0xff] %v2445
  %2520 = vst [vmem:[%s3 + $0xb8] sm:$0xff] %v2446
  %2521 = vst [vmem:[%s3 + $0xc0] sm:$0xff] %v2447
  %2522 = vst [vmem:[%s3 + $0xc8] sm:$0xff] %v2448
  %2523 = vst [vmem:[%s3 + $0xd0] sm:$0xff] %v2449
  %2524 = vst [vmem:[%s3 + $0xd8] sm:$0xff] %v2450
  %2525 = vst [vmem:[%s3 + $0xe0] sm:$0xff] %v2451
  %2526 = vst [vmem:[%s3 + $0xe8] sm:$0xff] %v2452
  %2527 = vst [vmem:[%s3 + $0xf0] sm:$0xff] %v2453
  %2528 = vst [vmem:[%s3 + $0xf8] sm:$0xff] %v2454
  %2529 = vst [vmem:[%s3 + $0x100] sm:$0xff] %v2455
  %2530 = vst [vmem:[%s3 + $0x108] sm:$0xff] %v2456
  %2531 = vst [vmem:[%s3 + $0x110] sm:$0xff] %v2457
  %2532 = vst [vmem:[%s3 + $0x118] sm:$0xff] %v2458
  %vm2533 = vcmask 130048
  %2534 = vst.msk [vmem:[%s3 + $0x120] sm:$0xff] %vm2533, %v2459
  %2535 = vst [vmem:[%s3 + $0x128] sm:$0xff] %v2460
  %2536 = vst [vmem:[%s3 + $0x130] sm:$0xff] %v2461
  %2537 = vst [vmem:[%s3 + $0x138] sm:$0xff] %v2462
  %2538 = vst [vmem:[%s3 + $0x140] sm:$0xff] %v2463
  %2539 = vst [vmem:[%s3 + $0x148] sm:$0xff] %v2464
  %2540 = vst [vmem:[%s3 + $0x150] sm:$0xff] %v2465
  %2541 = vst [vmem:[%s3 + $0x158] sm:$0xff] %v2466
  %2542 = vst [vmem:[%s3 + $0x160] sm:$0xff] %v2467
  %2543 = vst [vmem:[%s3 + $0x168] sm:$0xff] %v2468
  %2544 = vst [vmem:[%s3 + $0x170] sm:$0xff] %v2469
  %2545 = vst [vmem:[%s3 + $0x178] sm:$0xff] %v2470
  %2546 = vst [vmem:[%s3 + $0x180] sm:$0xff] %v2471
  %2547 = vst [vmem:[%s3 + $0x188] sm:$0xff] %v2472
  %2548 = vst [vmem:[%s3 + $0x190] sm:$0xff] %v2473
  %2549 = vst [vmem:[%s3 + $0x198] sm:$0xff] %v2474
  %2550 = vst [vmem:[%s3 + $0x1a0] sm:$0xff] %v2475
  %2551 = vst [vmem:[%s3 + $0x1a8] sm:$0xff] %v2476
  %2552 = vst [vmem:[%s3 + $0x1b0] sm:$0xff] %v2477
  %2553 = vst [vmem:[%s3 + $0x1b8] sm:$0xff] %v2478
  %2554 = vst [vmem:[%s3 + $0x1c0] sm:$0xff] %v2479
  %2555 = vst [vmem:[%s3 + $0x1c8] sm:$0xff] %v2480
  %2556 = vst [vmem:[%s3 + $0x1d0] sm:$0xff] %v2481
  %2557 = vst [vmem:[%s3 + $0x1d8] sm:$0xff] %v2482
  %2558 = vst [vmem:[%s3 + $0x1e0] sm:$0xff] %v2483
  %2559 = vst [vmem:[%s3 + $0x1e8] sm:$0xff] %v2484
  %2560 = vst [vmem:[%s3 + $0x1f0] sm:$0xff] %v2485
  %2561 = vst [vmem:[%s3 + $0x1f8] sm:$0xff] %v2486
  %2562 = vst [vmem:[%s3 + $0x200] sm:$0xff] %v2487
  %2563 = vst [vmem:[%s3 + $0x208] sm:$0xff] %v2488
  %2564 = vst [vmem:[%s3 + $0x210] sm:$0xff] %v2489
  %2565 = vst [vmem:[%s3 + $0x218] sm:$0xff] %v2490
  %2566 = vst [vmem:[%s3 + $0x220] sm:$0xff] %v2491
  %2567 = vst [vmem:[%s3 + $0x228] sm:$0xff] %v2492
  %2568 = vst [vmem:[%s3 + $0x230] sm:$0xff] %v2493
  %2569 = vst [vmem:[%s3 + $0x238] sm:$0xff] %v2494
  %2570 = vst [vmem:[%s3 + $0x240] sm:$0xff] %v2495
  %2571 = vst.msk [vmem:[%s3 + $0x248] sm:$0xff] %vm2533, %v2496
  // Predicated region
  $region14: #{jepa_forward.5} parent=0 // pred_check
    _
  $region15: #{jepa_forward.5} parent=0 // pred_check_branch
    %2573 = sbr.rel (0) target = $region17
  $region16: #{jepa_forward.5} parent=0 // pred_region
    _
  $region17: #{jepa_forward.5} parent=0 // pred_fallthru
    _
  // Predicated region
  $region18: #{jepa_forward.5} parent=0 // pred_check
    _
  $region19: #{jepa_forward.5} parent=0 // pred_check_branch
    %2575 = sbr.rel (0) target = $region21
  $region20: #{jepa_forward.5} parent=0 // pred_region
    _
  $region21: #{jepa_forward.5} parent=0 // pred_fallthru
    _

// kernel: jepa_forward.6
$region0: #{jepa_forward.6}
  #allocation0 [shape = 'u32[]', space=smem, size = 0x4, offset = 0x4, fixed_abs, tag = 'smem constant byte address 0x4 - core index']
  #allocation1 [shape = 'u32[144,128]{1,0:T(1,128)}', space=vmem, size = 0x12000, scoped, tag = 'internal scratch']
  %s0 = inlined_call_operand.vmem [shape: f32[16,4624], index: 0, kind: input, shape index: {}]
  %s1 = inlined_call_operand.vmem [shape: f32[4624,128], index: 1, kind: input, shape index: {}]
  %s2 = inlined_call_operand.vmem [shape: f32[1,128], index: 2, kind: input, shape index: {}]
  %s3 = inlined_call_operand.vmem [shape: f32[16,128], index: 3, kind: output, shape index: {}]
  %s4 = sld [smem:[#allocation0]]
  $region22: #{jepa_forward.6} parent=0
    _
  %s6 = ssub.s32 1, %s4
  %s7 = scalar_select 0, %s6, %s4
  // Predicated region
  $region2: #{jepa_forward.6} parent=0 // pred_check
    _
  $region3: #{jepa_forward.6} parent=0 // pred_check_branch
    %9 = sbr.rel (0) target = $region5
  $region4: #{jepa_forward.6} parent=0 // pred_region
    _
  $region5: #{jepa_forward.6} parent=0 // pred_fallthru
    _
  // Predicated region
  $region6: #{jepa_forward.6} parent=0 // pred_check
    _
  $region7: #{jepa_forward.6} parent=0 // pred_check_branch
    %11 = sbr.rel (0) target = $region9
  $region8: #{jepa_forward.6} parent=0 // pred_region
    _
  $region9: #{jepa_forward.6} parent=0 // pred_fallthru
    _
  // Predicated region
  $region10: #{jepa_forward.6} parent=0 // pred_check
    _
  $region11: #{jepa_forward.6} parent=0 // pred_check_branch
    %13 = sbr.rel (0) target = $region13
  $region12: #{jepa_forward.6} parent=0 // pred_region
    _
  $region13: #{jepa_forward.6} parent=0 // pred_fallthru
    _
  %v14 = vld [vmem:[%s0] sm:$0xff]
  %v15 = vld [vmem:[%s0 + $0x8] sm:$0xff]
  %v16 = vld [vmem:[%s0 + $0x10] sm:$0xff]
  %v17 = vld [vmem:[%s0 + $0x18] sm:$0xff]
  %v18 = vld [vmem:[%s0 + $0x20] sm:$0xff]
  %v19 = vld [vmem:[%s0 + $0x28] sm:$0xff]
  %v20 = vld [vmem:[%s0 + $0x30] sm:$0xff]
  %v21 = vld [vmem:[%s0 + $0x38] sm:$0xff]
  %v22 = vld [vmem:[%s0 + $0x40] sm:$0xff]
  %v23 = vld [vmem:[%s0 + $0x48] sm:$0xff]
  %v24 = vld [vmem:[%s0 + $0x50] sm:$0xff]
  %v25 = vld [vmem:[%s0 + $0x58] sm:$0xff]
  %v26 = vld [vmem:[%s0 + $0x60] sm:$0xff]
  %v27 = vld [vmem:[%s0 + $0x68] sm:$0xff]
  %v28 = vld [vmem:[%s0 + $0x70] sm:$0xff]
  %v29 = vld [vmem:[%s0 + $0x78] sm:$0xff]
  %v30 = vld [vmem:[%s0 + $0x80] sm:$0xff]
  %v31 = vld [vmem:[%s0 + $0x88] sm:$0xff]
  %v32 = vld [vmem:[%s0 + $0x90] sm:$0xff]
  %v33 = vld [vmem:[%s0 + $0x98] sm:$0xff]
  %v34 = vld [vmem:[%s0 + $0xa0] sm:$0xff]
  %v35 = vld [vmem:[%s0 + $0xa8] sm:$0xff]
  %v36 = vld [vmem:[%s0 + $0xb0] sm:$0xff]
  %v37 = vld [vmem:[%s0 + $0xb8] sm:$0xff]
  %v38 = vld [vmem:[%s0 + $0xc0] sm:$0xff]
  %v39 = vld [vmem:[%s0 + $0xc8] sm:$0xff]
  %v40 = vld [vmem:[%s0 + $0xd0] sm:$0xff]
  %v41 = vld [vmem:[%s0 + $0xd8] sm:$0xff]
  %v42 = vld [vmem:[%s0 + $0xe0] sm:$0xff]
  %v43 = vld [vmem:[%s0 + $0xe8] sm:$0xff]
  %v44 = vld [vmem:[%s0 + $0xf0] sm:$0xff]
  %v45 = vld [vmem:[%s0 + $0xf8] sm:$0xff]
  %v46 = vld [vmem:[%s0 + $0x100] sm:$0xff]
  %v47 = vld [vmem:[%s0 + $0x108] sm:$0xff]
  %v48 = vld [vmem:[%s0 + $0x110] sm:$0xff]
  %v49 = vld [vmem:[%s0 + $0x118] sm:$0xff]
  %v50 = vld [vmem:[%s0 + $0x120] sm:$0xff]
  %v51 = vld [vmem:[%s0 + $0x128] sm:$0xff]
  %v52 = vld [vmem:[%s0 + $0x130] sm:$0xff]
  %v53 = vld [vmem:[%s0 + $0x138] sm:$0xff]
  %v54 = vld [vmem:[%s0 + $0x140] sm:$0xff]
  %v55 = vld [vmem:[%s0 + $0x148] sm:$0xff]
  %v56 = vld [vmem:[%s0 + $0x150] sm:$0xff]
  %v57 = vld [vmem:[%s0 + $0x158] sm:$0xff]
  %v58 = vld [vmem:[%s0 + $0x160] sm:$0xff]
  %v59 = vld [vmem:[%s0 + $0x168] sm:$0xff]
  %v60 = vld [vmem:[%s0 + $0x170] sm:$0xff]
  %v61 = vld [vmem:[%s0 + $0x178] sm:$0xff]
  %v62 = vld [vmem:[%s0 + $0x180] sm:$0xff]
  %v63 = vld [vmem:[%s0 + $0x188] sm:$0xff]
  %v64 = vld [vmem:[%s0 + $0x190] sm:$0xff]
  %v65 = vld [vmem:[%s0 + $0x198] sm:$0xff]
  %v66 = vld [vmem:[%s0 + $0x1a0] sm:$0xff]
  %v67 = vld [vmem:[%s0 + $0x1a8] sm:$0xff]
  %v68 = vld [vmem:[%s0 + $0x1b0] sm:$0xff]
  %v69 = vld [vmem:[%s0 + $0x1b8] sm:$0xff]
  %v70 = vld [vmem:[%s0 + $0x1c0] sm:$0xff]
  %v71 = vld [vmem:[%s0 + $0x1c8] sm:$0xff]
  %v72 = vld [vmem:[%s0 + $0x1d0] sm:$0xff]
  %v73 = vld [vmem:[%s0 + $0x1d8] sm:$0xff]
  %v74 = vld [vmem:[%s0 + $0x1e0] sm:$0xff]
  %v75 = vld [vmem:[%s0 + $0x1e8] sm:$0xff]
  %v76 = vld [vmem:[%s0 + $0x1f0] sm:$0xff]
  %v77 = vld [vmem:[%s0 + $0x1f8] sm:$0xff]
  %v78 = vld [vmem:[%s0 + $0x200] sm:$0xff]
  %v79 = vld [vmem:[%s0 + $0x208] sm:$0xff]
  %v80 = vld [vmem:[%s0 + $0x210] sm:$0xff]
  %v81 = vld [vmem:[%s0 + $0x218] sm:$0xff]
  %v82 = vld [vmem:[%s0 + $0x220] sm:$0xff]
  %v83 = vld [vmem:[%s0 + $0x228] sm:$0xff]
  %v84 = vld [vmem:[%s0 + $0x230] sm:$0xff]
  %v85 = vld [vmem:[%s0 + $0x238] sm:$0xff]
  %v86 = vld [vmem:[%s0 + $0x240] sm:$0xff]
  %v87 = vld [vmem:[%s0 + $0x248] sm:$0xff]
  %v88 = vld [vmem:[%s1] sm:$0xff]
  %v89 = vld [vmem:[%s1 + $0x8] sm:$0xff]
  %v90 = vld [vmem:[%s1 + $0x10] sm:$0xff]
  %v91 = vld [vmem:[%s1 + $0x18] sm:$0xff]
  %v92 = vld [vmem:[%s1 + $0x20] sm:$0xff]
  %v93 = vld [vmem:[%s1 + $0x28] sm:$0xff]
  %v94 = vld [vmem:[%s1 + $0x30] sm:$0xff]
  %v95 = vld [vmem:[%s1 + $0x38] sm:$0xff]
  %v96 = vld [vmem:[%s1 + $0x40] sm:$0xff]
  %v97 = vld [vmem:[%s1 + $0x48] sm:$0xff]
  %v98 = vld [vmem:[%s1 + $0x50] sm:$0xff]
  %v99 = vld [vmem:[%s1 + $0x58] sm:$0xff]
  %v100 = vld [vmem:[%s1 + $0x60] sm:$0xff]
  %v101 = vld [vmem:[%s1 + $0x68] sm:$0xff]
  %v102 = vld [vmem:[%s1 + $0x70] sm:$0xff]
  %v103 = vld [vmem:[%s1 + $0x78] sm:$0xff]
  %v104 = vld [vmem:[%s1 + $0x80] sm:$0xff]
  %v105 = vld [vmem:[%s1 + $0x88] sm:$0xff]
  %v106 = vld [vmem:[%s1 + $0x90] sm:$0xff]
  %v107 = vld [vmem:[%s1 + $0x98] sm:$0xff]
  %v108 = vld [vmem:[%s1 + $0xa0] sm:$0xff]
  %v109 = vld [vmem:[%s1 + $0xa8] sm:$0xff]
  %v110 = vld [vmem:[%s1 + $0xb0] sm:$0xff]
  %v111 = vld [vmem:[%s1 + $0xb8] sm:$0xff]
  %v112 = vld [vmem:[%s1 + $0xc0] sm:$0xff]
  %v113 = vld [vmem:[%s1 + $0xc8] sm:$0xff]
  %v114 = vld [vmem:[%s1 + $0xd0] sm:$0xff]
  %v115 = vld [vmem:[%s1 + $0xd8] sm:$0xff]
  %v116 = vld [vmem:[%s1 + $0xe0] sm:$0xff]
  %v117 = vld [vmem:[%s1 + $0xe8] sm:$0xff]
  %v118 = vld [vmem:[%s1 + $0xf0] sm:$0xff]
  %v119 = vld [vmem:[%s1 + $0xf8] sm:$0xff]
  %v120 = vld [vmem:[%s1 + $0x100] sm:$0xff]
  %v121 = vld [vmem:[%s1 + $0x108] sm:$0xff]
  %v122 = vld [vmem:[%s1 + $0x110] sm:$0xff]
  %v123 = vld [vmem:[%s1 + $0x118] sm:$0xff]
  %v124 = vld [vmem:[%s1 + $0x120] sm:$0xff]
  %v125 = vld [vmem:[%s1 + $0x128] sm:$0xff]
  %v126 = vld [vmem:[%s1 + $0x130] sm:$0xff]
  %v127 = vld [vmem:[%s1 + $0x138] sm:$0xff]
  %v128 = vld [vmem:[%s1 + $0x140] sm:$0xff]
  %v129 = vld [vmem:[%s1 + $0x148] sm:$0xff]
  %v130 = vld [vmem:[%s1 + $0x150] sm:$0xff]
  %v131 = vld [vmem:[%s1 + $0x158] sm:$0xff]
  %v132 = vld [vmem:[%s1 + $0x160] sm:$0xff]
  %v133 = vld [vmem:[%s1 + $0x168] sm:$0xff]
  %v134 = vld [vmem:[%s1 + $0x170] sm:$0xff]
  %v135 = vld [vmem:[%s1 + $0x178] sm:$0xff]
  %v136 = vld [vmem:[%s1 + $0x180] sm:$0xff]
  %v137 = vld [vmem:[%s1 + $0x188] sm:$0xff]
  %v138 = vld [vmem:[%s1 + $0x190] sm:$0xff]
  %v139 = vld [vmem:[%s1 + $0x198] sm:$0xff]
  %v140 = vld [vmem:[%s1 + $0x1a0] sm:$0xff]
  %v141 = vld [vmem:[%s1 + $0x1a8] sm:$0xff]
  %v142 = vld [vmem:[%s1 + $0x1b0] sm:$0xff]
  %v143 = vld [vmem:[%s1 + $0x1b8] sm:$0xff]
  %v144 = vld [vmem:[%s1 + $0x1c0] sm:$0xff]
  %v145 = vld [vmem:[%s1 + $0x1c8] sm:$0xff]
  %v146 = vld [vmem:[%s1 + $0x1d0] sm:$0xff]
  %v147 = vld [vmem:[%s1 + $0x1d8] sm:$0xff]
  %v148 = vld [vmem:[%s1 + $0x1e0] sm:$0xff]
  %v149 = vld [vmem:[%s1 + $0x1e8] sm:$0xff]
  %v150 = vld [vmem:[%s1 + $0x1f0] sm:$0xff]
  %v151 = vld [vmem:[%s1 + $0x1f8] sm:$0xff]
  %v152 = vld [vmem:[%s1 + $0x200] sm:$0xff]
  %v153 = vld [vmem:[%s1 + $0x208] sm:$0xff]
  %v154 = vld [vmem:[%s1 + $0x210] sm:$0xff]
  %v155 = vld [vmem:[%s1 + $0x218] sm:$0xff]
  %v156 = vld [vmem:[%s1 + $0x220] sm:$0xff]
  %v157 = vld [vmem:[%s1 + $0x228] sm:$0xff]
  %v158 = vld [vmem:[%s1 + $0x230] sm:$0xff]
  %v159 = vld [vmem:[%s1 + $0x238] sm:$0xff]
  %v160 = vld [vmem:[%s1 + $0x240] sm:$0xff]
  %v161 = vld [vmem:[%s1 + $0x248] sm:$0xff]
  %v162 = vld [vmem:[%s1 + $0x250] sm:$0xff]
  %v163 = vld [vmem:[%s1 + $0x258] sm:$0xff]
  %v164 = vld [vmem:[%s1 + $0x260] sm:$0xff]
  %v165 = vld [vmem:[%s1 + $0x268] sm:$0xff]
  %v166 = vld [vmem:[%s1 + $0x270] sm:$0xff]
  %v167 = vld [vmem:[%s1 + $0x278] sm:$0xff]
  %v168 = vld [vmem:[%s1 + $0x280] sm:$0xff]
  %v169 = vld [vmem:[%s1 + $0x288] sm:$0xff]
  %v170 = vld [vmem:[%s1 + $0x290] sm:$0xff]
  %v171 = vld [vmem:[%s1 + $0x298] sm:$0xff]
  %v172 = vld [vmem:[%s1 + $0x2a0] sm:$0xff]
  %v173 = vld [vmem:[%s1 + $0x2a8] sm:$0xff]
  %v174 = vld [vmem:[%s1 + $0x2b0] sm:$0xff]
  %v175 = vld [vmem:[%s1 + $0x2b8] sm:$0xff]
  %v176 = vld [vmem:[%s1 + $0x2c0] sm:$0xff]
  %v177 = vld [vmem:[%s1 + $0x2c8] sm:$0xff]
  %v178 = vld [vmem:[%s1 + $0x2d0] sm:$0xff]
  %v179 = vld [vmem:[%s1 + $0x2d8] sm:$0xff]
  %v180 = vld [vmem:[%s1 + $0x2e0] sm:$0xff]
  %v181 = vld [vmem:[%s1 + $0x2e8] sm:$0xff]
  %v182 = vld [vmem:[%s1 + $0x2f0] sm:$0xff]
  %v183 = vld [vmem:[%s1 + $0x2f8] sm:$0xff]
  %v184 = vld [vmem:[%s1 + $0x300] sm:$0xff]
  %v185 = vld [vmem:[%s1 + $0x308] sm:$0xff]
  %v186 = vld [vmem:[%s1 + $0x310] sm:$0xff]
  %v187 = vld [vmem:[%s1 + $0x318] sm:$0xff]
  %v188 = vld [vmem:[%s1 + $0x320] sm:$0xff]
  %v189 = vld [vmem:[%s1 + $0x328] sm:$0xff]
  %v190 = vld [vmem:[%s1 + $0x330] sm:$0xff]
  %v191 = vld [vmem:[%s1 + $0x338] sm:$0xff]
  %v192 = vld [vmem:[%s1 + $0x340] sm:$0xff]
  %v193 = vld [vmem:[%s1 + $0x348] sm:$0xff]
  %v194 = vld [vmem:[%s1 + $0x350] sm:$0xff]
  %v195 = vld [vmem:[%s1 + $0x358] sm:$0xff]
  %v196 = vld [vmem:[%s1 + $0x360] sm:$0xff]
  %v197 = vld [vmem:[%s1 + $0x368] sm:$0xff]
  %v198 = vld [vmem:[%s1 + $0x370] sm:$0xff]
  %v199 = vld [vmem:[%s1 + $0x378] sm:$0xff]
  %v200 = vld [vmem:[%s1 + $0x380] sm:$0xff]
  %v201 = vld [vmem:[%s1 + $0x388] sm:$0xff]
  %v202 = vld [vmem:[%s1 + $0x390] sm:$0xff]
  %v203 = vld [vmem:[%s1 + $0x398] sm:$0xff]
  %v204 = vld [vmem:[%s1 + $0x3a0] sm:$0xff]
  %v205 = vld [vmem:[%s1 + $0x3a8] sm:$0xff]
  %v206 = vld [vmem:[%s1 + $0x3b0] sm:$0xff]
  %v207 = vld [vmem:[%s1 + $0x3b8] sm:$0xff]
  %v208 = vld [vmem:[%s1 + $0x3c0] sm:$0xff]
  %v209 = vld [vmem:[%s1 + $0x3c8] sm:$0xff]
  %v210 = vld [vmem:[%s1 + $0x3d0] sm:$0xff]
  %v211 = vld [vmem:[%s1 + $0x3d8] sm:$0xff]
  %v212 = vld [vmem:[%s1 + $0x3e0] sm:$0xff]
  %v213 = vld [vmem:[%s1 + $0x3e8] sm:$0xff]
  %v214 = vld [vmem:[%s1 + $0x3f0] sm:$0xff]
  %v215 = vld [vmem:[%s1 + $0x3f8] sm:$0xff]
  %v216 = vld [vmem:[%s1 + $0x400] sm:$0xff]
  %v217 = vld [vmem:[%s1 + $0x408] sm:$0xff]
  %v218 = vld [vmem:[%s1 + $0x410] sm:$0xff]
  %v219 = vld [vmem:[%s1 + $0x418] sm:$0xff]
  %v220 = vld [vmem:[%s1 + $0x420] sm:$0xff]
  %v221 = vld [vmem:[%s1 + $0x428] sm:$0xff]
  %v222 = vld [vmem:[%s1 + $0x430] sm:$0xff]
  %v223 = vld [vmem:[%s1 + $0x438] sm:$0xff]
  %v224 = vld [vmem:[%s1 + $0x440] sm:$0xff]
  %v225 = vld [vmem:[%s1 + $0x448] sm:$0xff]
  %v226 = vld [vmem:[%s1 + $0x450] sm:$0xff]
  %v227 = vld [vmem:[%s1 + $0x458] sm:$0xff]
  %v228 = vld [vmem:[%s1 + $0x460] sm:$0xff]
  %v229 = vld [vmem:[%s1 + $0x468] sm:$0xff]
  %v230 = vld [vmem:[%s1 + $0x470] sm:$0xff]
  %v231 = vld [vmem:[%s1 + $0x478] sm:$0xff]
  %v232 = vld [vmem:[%s1 + $0x480] sm:$0xff]
  %v233 = vld [vmem:[%s1 + $0x488] sm:$0xff]
  %v234 = vld [vmem:[%s1 + $0x490] sm:$0xff]
  %v235 = vld [vmem:[%s1 + $0x498] sm:$0xff]
  %v236 = vld [vmem:[%s1 + $0x4a0] sm:$0xff]
  %v237 = vld [vmem:[%s1 + $0x4a8] sm:$0xff]
  %v238 = vld [vmem:[%s1 + $0x4b0] sm:$0xff]
  %v239 = vld [vmem:[%s1 + $0x4b8] sm:$0xff]
  %v240 = vld [vmem:[%s1 + $0x4c0] sm:$0xff]
  %v241 = vld [vmem:[%s1 + $0x4c8] sm:$0xff]
  %v242 = vld [vmem:[%s1 + $0x4d0] sm:$0xff]
  %v243 = vld [vmem:[%s1 + $0x4d8] sm:$0xff]
  %v244 = vld [vmem:[%s1 + $0x4e0] sm:$0xff]
  %v245 = vld [vmem:[%s1 + $0x4e8] sm:$0xff]
  %v246 = vld [vmem:[%s1 + $0x4f0] sm:$0xff]
  %v247 = vld [vmem:[%s1 + $0x4f8] sm:$0xff]
  %v248 = vld [vmem:[%s1 + $0x500] sm:$0xff]
  %v249 = vld [vmem:[%s1 + $0x508] sm:$0xff]
  %v250 = vld [vmem:[%s1 + $0x510] sm:$0xff]
  %v251 = vld [vmem:[%s1 + $0x518] sm:$0xff]
  %v252 = vld [vmem:[%s1 + $0x520] sm:$0xff]
  %v253 = vld [vmem:[%s1 + $0x528] sm:$0xff]
  %v254 = vld [vmem:[%s1 + $0x530] sm:$0xff]
  %v255 = vld [vmem:[%s1 + $0x538] sm:$0xff]
  %v256 = vld [vmem:[%s1 + $0x540] sm:$0xff]
  %v257 = vld [vmem:[%s1 + $0x548] sm:$0xff]
  %v258 = vld [vmem:[%s1 + $0x550] sm:$0xff]
  %v259 = vld [vmem:[%s1 + $0x558] sm:$0xff]
  %v260 = vld [vmem:[%s1 + $0x560] sm:$0xff]
  %v261 = vld [vmem:[%s1 + $0x568] sm:$0xff]
  %v262 = vld [vmem:[%s1 + $0x570] sm:$0xff]
  %v263 = vld [vmem:[%s1 + $0x578] sm:$0xff]
  %v264 = vld [vmem:[%s1 + $0x580] sm:$0xff]
  %v265 = vld [vmem:[%s1 + $0x588] sm:$0xff]
  %v266 = vld [vmem:[%s1 + $0x590] sm:$0xff]
  %v267 = vld [vmem:[%s1 + $0x598] sm:$0xff]
  %v268 = vld [vmem:[%s1 + $0x5a0] sm:$0xff]
  %v269 = vld [vmem:[%s1 + $0x5a8] sm:$0xff]
  %v270 = vld [vmem:[%s1 + $0x5b0] sm:$0xff]
  %v271 = vld [vmem:[%s1 + $0x5b8] sm:$0xff]
  %v272 = vld [vmem:[%s1 + $0x5c0] sm:$0xff]
  %v273 = vld [vmem:[%s1 + $0x5c8] sm:$0xff]
  %v274 = vld [vmem:[%s1 + $0x5d0] sm:$0xff]
  %v275 = vld [vmem:[%s1 + $0x5d8] sm:$0xff]
  %v276 = vld [vmem:[%s1 + $0x5e0] sm:$0xff]
  %v277 = vld [vmem:[%s1 + $0x5e8] sm:$0xff]
  %v278 = vld [vmem:[%s1 + $0x5f0] sm:$0xff]
  %v279 = vld [vmem:[%s1 + $0x5f8] sm:$0xff]
  %v280 = vld [vmem:[%s1 + $0x600] sm:$0xff]
  %v281 = vld [vmem:[%s1 + $0x608] sm:$0xff]
  %v282 = vld [vmem:[%s1 + $0x610] sm:$0xff]
  %v283 = vld [vmem:[%s1 + $0x618] sm:$0xff]
  %v284 = vld [vmem:[%s1 + $0x620] sm:$0xff]
  %v285 = vld [vmem:[%s1 + $0x628] sm:$0xff]
  %v286 = vld [vmem:[%s1 + $0x630] sm:$0xff]
  %v287 = vld [vmem:[%s1 + $0x638] sm:$0xff]
  %v288 = vld [vmem:[%s1 + $0x640] sm:$0xff]
  %v289 = vld [vmem:[%s1 + $0x648] sm:$0xff]
  %v290 = vld [vmem:[%s1 + $0x650] sm:$0xff]
  %v291 = vld [vmem:[%s1 + $0x658] sm:$0xff]
  %v292 = vld [vmem:[%s1 + $0x660] sm:$0xff]
  %v293 = vld [vmem:[%s1 + $0x668] sm:$0xff]
  %v294 = vld [vmem:[%s1 + $0x670] sm:$0xff]
  %v295 = vld [vmem:[%s1 + $0x678] sm:$0xff]
  %v296 = vld [vmem:[%s1 + $0x680] sm:$0xff]
  %v297 = vld [vmem:[%s1 + $0x688] sm:$0xff]
  %v298 = vld [vmem:[%s1 + $0x690] sm:$0xff]
  %v299 = vld [vmem:[%s1 + $0x698] sm:$0xff]
  %v300 = vld [vmem:[%s1 + $0x6a0] sm:$0xff]
  %v301 = vld [vmem:[%s1 + $0x6a8] sm:$0xff]
  %v302 = vld [vmem:[%s1 + $0x6b0] sm:$0xff]
  %v303 = vld [vmem:[%s1 + $0x6b8] sm:$0xff]
  %v304 = vld [vmem:[%s1 + $0x6c0] sm:$0xff]
  %v305 = vld [vmem:[%s1 + $0x6c8] sm:$0xff]
  %v306 = vld [vmem:[%s1 + $0x6d0] sm:$0xff]
  %v307 = vld [vmem:[%s1 + $0x6d8] sm:$0xff]
  %v308 = vld [vmem:[%s1 + $0x6e0] sm:$0xff]
  %v309 = vld [vmem:[%s1 + $0x6e8] sm:$0xff]
  %v310 = vld [vmem:[%s1 + $0x6f0] sm:$0xff]
  %v311 = vld [vmem:[%s1 + $0x6f8] sm:$0xff]
  %v312 = vld [vmem:[%s1 + $0x700] sm:$0xff]
  %v313 = vld [vmem:[%s1 + $0x708] sm:$0xff]
  %v314 = vld [vmem:[%s1 + $0x710] sm:$0xff]
  %v315 = vld [vmem:[%s1 + $0x718] sm:$0xff]
  %v316 = vld [vmem:[%s1 + $0x720] sm:$0xff]
  %v317 = vld [vmem:[%s1 + $0x728] sm:$0xff]
  %v318 = vld [vmem:[%s1 + $0x730] sm:$0xff]
  %v319 = vld [vmem:[%s1 + $0x738] sm:$0xff]
  %v320 = vld [vmem:[%s1 + $0x740] sm:$0xff]
  %v321 = vld [vmem:[%s1 + $0x748] sm:$0xff]
  %v322 = vld [vmem:[%s1 + $0x750] sm:$0xff]
  %v323 = vld [vmem:[%s1 + $0x758] sm:$0xff]
  %v324 = vld [vmem:[%s1 + $0x760] sm:$0xff]
  %v325 = vld [vmem:[%s1 + $0x768] sm:$0xff]
  %v326 = vld [vmem:[%s1 + $0x770] sm:$0xff]
  %v327 = vld [vmem:[%s1 + $0x778] sm:$0xff]
  %v328 = vld [vmem:[%s1 + $0x780] sm:$0xff]
  %v329 = vld [vmem:[%s1 + $0x788] sm:$0xff]
  %v330 = vld [vmem:[%s1 + $0x790] sm:$0xff]
  %v331 = vld [vmem:[%s1 + $0x798] sm:$0xff]
  %v332 = vld [vmem:[%s1 + $0x7a0] sm:$0xff]
  %v333 = vld [vmem:[%s1 + $0x7a8] sm:$0xff]
  %v334 = vld [vmem:[%s1 + $0x7b0] sm:$0xff]
  %v335 = vld [vmem:[%s1 + $0x7b8] sm:$0xff]
  %v336 = vld [vmem:[%s1 + $0x7c0] sm:$0xff]
  %v337 = vld [vmem:[%s1 + $0x7c8] sm:$0xff]
  %v338 = vld [vmem:[%s1 + $0x7d0] sm:$0xff]
  %v339 = vld [vmem:[%s1 + $0x7d8] sm:$0xff]
  %v340 = vld [vmem:[%s1 + $0x7e0] sm:$0xff]
  %v341 = vld [vmem:[%s1 + $0x7e8] sm:$0xff]
  %v342 = vld [vmem:[%s1 + $0x7f0] sm:$0xff]
  %v343 = vld [vmem:[%s1 + $0x7f8] sm:$0xff]
  %v344 = vld [vmem:[%s1 + $0x800] sm:$0xff]
  %v345 = vld [vmem:[%s1 + $0x808] sm:$0xff]
  %v346 = vld [vmem:[%s1 + $0x810] sm:$0xff]
  %v347 = vld [vmem:[%s1 + $0x818] sm:$0xff]
  %v348 = vld [vmem:[%s1 + $0x820] sm:$0xff]
  %v349 = vld [vmem:[%s1 + $0x828] sm:$0xff]
  %v350 = vld [vmem:[%s1 + $0x830] sm:$0xff]
  %v351 = vld [vmem:[%s1 + $0x838] sm:$0xff]
  %v352 = vld [vmem:[%s1 + $0x840] sm:$0xff]
  %v353 = vld [vmem:[%s1 + $0x848] sm:$0xff]
  %v354 = vld [vmem:[%s1 + $0x850] sm:$0xff]
  %v355 = vld [vmem:[%s1 + $0x858] sm:$0xff]
  %v356 = vld [vmem:[%s1 + $0x860] sm:$0xff]
  %v357 = vld [vmem:[%s1 + $0x868] sm:$0xff]
  %v358 = vld [vmem:[%s1 + $0x870] sm:$0xff]
  %v359 = vld [vmem:[%s1 + $0x878] sm:$0xff]
  %v360 = vld [vmem:[%s1 + $0x880] sm:$0xff]
  %v361 = vld [vmem:[%s1 + $0x888] sm:$0xff]
  %v362 = vld [vmem:[%s1 + $0x890] sm:$0xff]
  %v363 = vld [vmem:[%s1 + $0x898] sm:$0xff]
  %v364 = vld [vmem:[%s1 + $0x8a0] sm:$0xff]
  %v365 = vld [vmem:[%s1 + $0x8a8] sm:$0xff]
  %v366 = vld [vmem:[%s1 + $0x8b0] sm:$0xff]
  %v367 = vld [vmem:[%s1 + $0x8b8] sm:$0xff]
  %v368 = vld [vmem:[%s1 + $0x8c0] sm:$0xff]
  %v369 = vld [vmem:[%s1 + $0x8c8] sm:$0xff]
  %v370 = vld [vmem:[%s1 + $0x8d0] sm:$0xff]
  %v371 = vld [vmem:[%s1 + $0x8d8] sm:$0xff]
  %v372 = vld [vmem:[%s1 + $0x8e0] sm:$0xff]
  %v373 = vld [vmem:[%s1 + $0x8e8] sm:$0xff]
  %v374 = vld [vmem:[%s1 + $0x8f0] sm:$0xff]
  %v375 = vld [vmem:[%s1 + $0x8f8] sm:$0xff]
  %v376 = vld [vmem:[%s1 + $0x900] sm:$0xff]
  %v377 = vld [vmem:[%s1 + $0x908] sm:$0xff]
  %v378 = vld [vmem:[%s1 + $0x910] sm:$0xff]
  %v379 = vld [vmem:[%s1 + $0x918] sm:$0xff]
  %v380 = vld [vmem:[%s1 + $0x920] sm:$0xff]
  %v381 = vld [vmem:[%s1 + $0x928] sm:$0xff]
  %v382 = vld [vmem:[%s1 + $0x930] sm:$0xff]
  %v383 = vld [vmem:[%s1 + $0x938] sm:$0xff]
  %v384 = vld [vmem:[%s1 + $0x940] sm:$0xff]
  %v385 = vld [vmem:[%s1 + $0x948] sm:$0xff]
  %v386 = vld [vmem:[%s1 + $0x950] sm:$0xff]
  %v387 = vld [vmem:[%s1 + $0x958] sm:$0xff]
  %v388 = vld [vmem:[%s1 + $0x960] sm:$0xff]
  %v389 = vld [vmem:[%s1 + $0x968] sm:$0xff]
  %v390 = vld [vmem:[%s1 + $0x970] sm:$0xff]
  %v391 = vld [vmem:[%s1 + $0x978] sm:$0xff]
  %v392 = vld [vmem:[%s1 + $0x980] sm:$0xff]
  %v393 = vld [vmem:[%s1 + $0x988] sm:$0xff]
  %v394 = vld [vmem:[%s1 + $0x990] sm:$0xff]
  %v395 = vld [vmem:[%s1 + $0x998] sm:$0xff]
  %v396 = vld [vmem:[%s1 + $0x9a0] sm:$0xff]
  %v397 = vld [vmem:[%s1 + $0x9a8] sm:$0xff]
  %v398 = vld [vmem:[%s1 + $0x9b0] sm:$0xff]
  %v399 = vld [vmem:[%s1 + $0x9b8] sm:$0xff]
  %v400 = vld [vmem:[%s1 + $0x9c0] sm:$0xff]
  %v401 = vld [vmem:[%s1 + $0x9c8] sm:$0xff]
  %v402 = vld [vmem:[%s1 + $0x9d0] sm:$0xff]
  %v403 = vld [vmem:[%s1 + $0x9d8] sm:$0xff]
  %v404 = vld [vmem:[%s1 + $0x9e0] sm:$0xff]
  %v405 = vld [vmem:[%s1 + $0x9e8] sm:$0xff]
  %v406 = vld [vmem:[%s1 + $0x9f0] sm:$0xff]
  %v407 = vld [vmem:[%s1 + $0x9f8] sm:$0xff]
  %v408 = vld [vmem:[%s1 + $0xa00] sm:$0xff]
  %v409 = vld [vmem:[%s1 + $0xa08] sm:$0xff]
  %v410 = vld [vmem:[%s1 + $0xa10] sm:$0xff]
  %v411 = vld [vmem:[%s1 + $0xa18] sm:$0xff]
  %v412 = vld [vmem:[%s1 + $0xa20] sm:$0xff]
  %v413 = vld [vmem:[%s1 + $0xa28] sm:$0xff]
  %v414 = vld [vmem:[%s1 + $0xa30] sm:$0xff]
  %v415 = vld [vmem:[%s1 + $0xa38] sm:$0xff]
  %v416 = vld [vmem:[%s1 + $0xa40] sm:$0xff]
  %v417 = vld [vmem:[%s1 + $0xa48] sm:$0xff]
  %v418 = vld [vmem:[%s1 + $0xa50] sm:$0xff]
  %v419 = vld [vmem:[%s1 + $0xa58] sm:$0xff]
  %v420 = vld [vmem:[%s1 + $0xa60] sm:$0xff]
  %v421 = vld [vmem:[%s1 + $0xa68] sm:$0xff]
  %v422 = vld [vmem:[%s1 + $0xa70] sm:$0xff]
  %v423 = vld [vmem:[%s1 + $0xa78] sm:$0xff]
  %v424 = vld [vmem:[%s1 + $0xa80] sm:$0xff]
  %v425 = vld [vmem:[%s1 + $0xa88] sm:$0xff]
  %v426 = vld [vmem:[%s1 + $0xa90] sm:$0xff]
  %v427 = vld [vmem:[%s1 + $0xa98] sm:$0xff]
  %v428 = vld [vmem:[%s1 + $0xaa0] sm:$0xff]
  %v429 = vld [vmem:[%s1 + $0xaa8] sm:$0xff]
  %v430 = vld [vmem:[%s1 + $0xab0] sm:$0xff]
  %v431 = vld [vmem:[%s1 + $0xab8] sm:$0xff]
  %v432 = vld [vmem:[%s1 + $0xac0] sm:$0xff]
  %v433 = vld [vmem:[%s1 + $0xac8] sm:$0xff]
  %v434 = vld [vmem:[%s1 + $0xad0] sm:$0xff]
  %v435 = vld [vmem:[%s1 + $0xad8] sm:$0xff]
  %v436 = vld [vmem:[%s1 + $0xae0] sm:$0xff]
  %v437 = vld [vmem:[%s1 + $0xae8] sm:$0xff]
  %v438 = vld [vmem:[%s1 + $0xaf0] sm:$0xff]
  %v439 = vld [vmem:[%s1 + $0xaf8] sm:$0xff]
  %v440 = vld [vmem:[%s1 + $0xb00] sm:$0xff]
  %v441 = vld [vmem:[%s1 + $0xb08] sm:$0xff]
  %v442 = vld [vmem:[%s1 + $0xb10] sm:$0xff]
  %v443 = vld [vmem:[%s1 + $0xb18] sm:$0xff]
  %v444 = vld [vmem:[%s1 + $0xb20] sm:$0xff]
  %v445 = vld [vmem:[%s1 + $0xb28] sm:$0xff]
  %v446 = vld [vmem:[%s1 + $0xb30] sm:$0xff]
  %v447 = vld [vmem:[%s1 + $0xb38] sm:$0xff]
  %v448 = vld [vmem:[%s1 + $0xb40] sm:$0xff]
  %v449 = vld [vmem:[%s1 + $0xb48] sm:$0xff]
  %v450 = vld [vmem:[%s1 + $0xb50] sm:$0xff]
  %v451 = vld [vmem:[%s1 + $0xb58] sm:$0xff]
  %v452 = vld [vmem:[%s1 + $0xb60] sm:$0xff]
  %v453 = vld [vmem:[%s1 + $0xb68] sm:$0xff]
  %v454 = vld [vmem:[%s1 + $0xb70] sm:$0xff]
  %v455 = vld [vmem:[%s1 + $0xb78] sm:$0xff]
  %v456 = vld [vmem:[%s1 + $0xb80] sm:$0xff]
  %v457 = vld [vmem:[%s1 + $0xb88] sm:$0xff]
  %v458 = vld [vmem:[%s1 + $0xb90] sm:$0xff]
  %v459 = vld [vmem:[%s1 + $0xb98] sm:$0xff]
  %v460 = vld [vmem:[%s1 + $0xba0] sm:$0xff]
  %v461 = vld [vmem:[%s1 + $0xba8] sm:$0xff]
  %v462 = vld [vmem:[%s1 + $0xbb0] sm:$0xff]
  %v463 = vld [vmem:[%s1 + $0xbb8] sm:$0xff]
  %v464 = vld [vmem:[%s1 + $0xbc0] sm:$0xff]
  %v465 = vld [vmem:[%s1 + $0xbc8] sm:$0xff]
  %v466 = vld [vmem:[%s1 + $0xbd0] sm:$0xff]
  %v467 = vld [vmem:[%s1 + $0xbd8] sm:$0xff]
  %v468 = vld [vmem:[%s1 + $0xbe0] sm:$0xff]
  %v469 = vld [vmem:[%s1 + $0xbe8] sm:$0xff]
  %v470 = vld [vmem:[%s1 + $0xbf0] sm:$0xff]
  %v471 = vld [vmem:[%s1 + $0xbf8] sm:$0xff]
  %v472 = vld [vmem:[%s1 + $0xc00] sm:$0xff]
  %v473 = vld [vmem:[%s1 + $0xc08] sm:$0xff]
  %v474 = vld [vmem:[%s1 + $0xc10] sm:$0xff]
  %v475 = vld [vmem:[%s1 + $0xc18] sm:$0xff]
  %v476 = vld [vmem:[%s1 + $0xc20] sm:$0xff]
  %v477 = vld [vmem:[%s1 + $0xc28] sm:$0xff]
  %v478 = vld [vmem:[%s1 + $0xc30] sm:$0xff]
  %v479 = vld [vmem:[%s1 + $0xc38] sm:$0xff]
  %v480 = vld [vmem:[%s1 + $0xc40] sm:$0xff]
  %v481 = vld [vmem:[%s1 + $0xc48] sm:$0xff]
  %v482 = vld [vmem:[%s1 + $0xc50] sm:$0xff]
  %v483 = vld [vmem:[%s1 + $0xc58] sm:$0xff]
  %v484 = vld [vmem:[%s1 + $0xc60] sm:$0xff]
  %v485 = vld [vmem:[%s1 + $0xc68] sm:$0xff]
  %v486 = vld [vmem:[%s1 + $0xc70] sm:$0xff]
  %v487 = vld [vmem:[%s1 + $0xc78] sm:$0xff]
  %v488 = vld [vmem:[%s1 + $0xc80] sm:$0xff]
  %v489 = vld [vmem:[%s1 + $0xc88] sm:$0xff]
  %v490 = vld [vmem:[%s1 + $0xc90] sm:$0xff]
  %v491 = vld [vmem:[%s1 + $0xc98] sm:$0xff]
  %v492 = vld [vmem:[%s1 + $0xca0] sm:$0xff]
  %v493 = vld [vmem:[%s1 + $0xca8] sm:$0xff]
  %v494 = vld [vmem:[%s1 + $0xcb0] sm:$0xff]
  %v495 = vld [vmem:[%s1 + $0xcb8] sm:$0xff]
  %v496 = vld [vmem:[%s1 + $0xcc0] sm:$0xff]
  %v497 = vld [vmem:[%s1 + $0xcc8] sm:$0xff]
  %v498 = vld [vmem:[%s1 + $0xcd0] sm:$0xff]
  %v499 = vld [vmem:[%s1 + $0xcd8] sm:$0xff]
  %v500 = vld [vmem:[%s1 + $0xce0] sm:$0xff]
  %v501 = vld [vmem:[%s1 + $0xce8] sm:$0xff]
  %v502 = vld [vmem:[%s1 + $0xcf0] sm:$0xff]
  %v503 = vld [vmem:[%s1 + $0xcf8] sm:$0xff]
  %v504 = vld [vmem:[%s1 + $0xd00] sm:$0xff]
  %v505 = vld [vmem:[%s1 + $0xd08] sm:$0xff]
  %v506 = vld [vmem:[%s1 + $0xd10] sm:$0xff]
  %v507 = vld [vmem:[%s1 + $0xd18] sm:$0xff]
  %v508 = vld [vmem:[%s1 + $0xd20] sm:$0xff]
  %v509 = vld [vmem:[%s1 + $0xd28] sm:$0xff]
  %v510 = vld [vmem:[%s1 + $0xd30] sm:$0xff]
  %v511 = vld [vmem:[%s1 + $0xd38] sm:$0xff]
  %v512 = vld [vmem:[%s1 + $0xd40] sm:$0xff]
  %v513 = vld [vmem:[%s1 + $0xd48] sm:$0xff]
  %v514 = vld [vmem:[%s1 + $0xd50] sm:$0xff]
  %v515 = vld [vmem:[%s1 + $0xd58] sm:$0xff]
  %v516 = vld [vmem:[%s1 + $0xd60] sm:$0xff]
  %v517 = vld [vmem:[%s1 + $0xd68] sm:$0xff]
  %v518 = vld [vmem:[%s1 + $0xd70] sm:$0xff]
  %v519 = vld [vmem:[%s1 + $0xd78] sm:$0xff]
  %v520 = vld [vmem:[%s1 + $0xd80] sm:$0xff]
  %v521 = vld [vmem:[%s1 + $0xd88] sm:$0xff]
  %v522 = vld [vmem:[%s1 + $0xd90] sm:$0xff]
  %v523 = vld [vmem:[%s1 + $0xd98] sm:$0xff]
  %v524 = vld [vmem:[%s1 + $0xda0] sm:$0xff]
  %v525 = vld [vmem:[%s1 + $0xda8] sm:$0xff]
  %v526 = vld [vmem:[%s1 + $0xdb0] sm:$0xff]
  %v527 = vld [vmem:[%s1 + $0xdb8] sm:$0xff]
  %v528 = vld [vmem:[%s1 + $0xdc0] sm:$0xff]
  %v529 = vld [vmem:[%s1 + $0xdc8] sm:$0xff]
  %v530 = vld [vmem:[%s1 + $0xdd0] sm:$0xff]
  %v531 = vld [vmem:[%s1 + $0xdd8] sm:$0xff]
  %v532 = vld [vmem:[%s1 + $0xde0] sm:$0xff]
  %v533 = vld [vmem:[%s1 + $0xde8] sm:$0xff]
  %v534 = vld [vmem:[%s1 + $0xdf0] sm:$0xff]
  %v535 = vld [vmem:[%s1 + $0xdf8] sm:$0xff]
  %v536 = vld [vmem:[%s1 + $0xe00] sm:$0xff]
  %v537 = vld [vmem:[%s1 + $0xe08] sm:$0xff]
  %v538 = vld [vmem:[%s1 + $0xe10] sm:$0xff]
  %v539 = vld [vmem:[%s1 + $0xe18] sm:$0xff]
  %v540 = vld [vmem:[%s1 + $0xe20] sm:$0xff]
  %v541 = vld [vmem:[%s1 + $0xe28] sm:$0xff]
  %v542 = vld [vmem:[%s1 + $0xe30] sm:$0xff]
  %v543 = vld [vmem:[%s1 + $0xe38] sm:$0xff]
  %v544 = vld [vmem:[%s1 + $0xe40] sm:$0xff]
  %v545 = vld [vmem:[%s1 + $0xe48] sm:$0xff]
  %v546 = vld [vmem:[%s1 + $0xe50] sm:$0xff]
  %v547 = vld [vmem:[%s1 + $0xe58] sm:$0xff]
  %v548 = vld [vmem:[%s1 + $0xe60] sm:$0xff]
  %v549 = vld [vmem:[%s1 + $0xe68] sm:$0xff]
  %v550 = vld [vmem:[%s1 + $0xe70] sm:$0xff]
  %v551 = vld [vmem:[%s1 + $0xe78] sm:$0xff]
  %v552 = vld [vmem:[%s1 + $0xe80] sm:$0xff]
  %v553 = vld [vmem:[%s1 + $0xe88] sm:$0xff]
  %v554 = vld [vmem:[%s1 + $0xe90] sm:$0xff]
  %v555 = vld [vmem:[%s1 + $0xe98] sm:$0xff]
  %v556 = vld [vmem:[%s1 + $0xea0] sm:$0xff]
  %v557 = vld [vmem:[%s1 + $0xea8] sm:$0xff]
  %v558 = vld [vmem:[%s1 + $0xeb0] sm:$0xff]
  %v559 = vld [vmem:[%s1 + $0xeb8] sm:$0xff]
  %v560 = vld [vmem:[%s1 + $0xec0] sm:$0xff]
  %v561 = vld [vmem:[%s1 + $0xec8] sm:$0xff]
  %v562 = vld [vmem:[%s1 + $0xed0] sm:$0xff]
  %v563 = vld [vmem:[%s1 + $0xed8] sm:$0xff]
  %v564 = vld [vmem:[%s1 + $0xee0] sm:$0xff]
  %v565 = vld [vmem:[%s1 + $0xee8] sm:$0xff]
  %v566 = vld [vmem:[%s1 + $0xef0] sm:$0xff]
  %v567 = vld [vmem:[%s1 + $0xef8] sm:$0xff]
  %v568 = vld [vmem:[%s1 + $0xf00] sm:$0xff]
  %v569 = vld [vmem:[%s1 + $0xf08] sm:$0xff]
  %v570 = vld [vmem:[%s1 + $0xf10] sm:$0xff]
  %v571 = vld [vmem:[%s1 + $0xf18] sm:$0xff]
  %v572 = vld [vmem:[%s1 + $0xf20] sm:$0xff]
  %v573 = vld [vmem:[%s1 + $0xf28] sm:$0xff]
  %v574 = vld [vmem:[%s1 + $0xf30] sm:$0xff]
  %v575 = vld [vmem:[%s1 + $0xf38] sm:$0xff]
  %v576 = vld [vmem:[%s1 + $0xf40] sm:$0xff]
  %v577 = vld [vmem:[%s1 + $0xf48] sm:$0xff]
  %v578 = vld [vmem:[%s1 + $0xf50] sm:$0xff]
  %v579 = vld [vmem:[%s1 + $0xf58] sm:$0xff]
  %v580 = vld [vmem:[%s1 + $0xf60] sm:$0xff]
  %v581 = vld [vmem:[%s1 + $0xf68] sm:$0xff]
  %v582 = vld [vmem:[%s1 + $0xf70] sm:$0xff]
  %v583 = vld [vmem:[%s1 + $0xf78] sm:$0xff]
  %v584 = vld [vmem:[%s1 + $0xf80] sm:$0xff]
  %v585 = vld [vmem:[%s1 + $0xf88] sm:$0xff]
  %v586 = vld [vmem:[%s1 + $0xf90] sm:$0xff]
  %v587 = vld [vmem:[%s1 + $0xf98] sm:$0xff]
  %v588 = vld [vmem:[%s1 + $0xfa0] sm:$0xff]
  %v589 = vld [vmem:[%s1 + $0xfa8] sm:$0xff]
  %v590 = vld [vmem:[%s1 + $0xfb0] sm:$0xff]
  %v591 = vld [vmem:[%s1 + $0xfb8] sm:$0xff]
  %v592 = vld [vmem:[%s1 + $0xfc0] sm:$0xff]
  %v593 = vld [vmem:[%s1 + $0xfc8] sm:$0xff]
  %v594 = vld [vmem:[%s1 + $0xfd0] sm:$0xff]
  %v595 = vld [vmem:[%s1 + $0xfd8] sm:$0xff]
  %v596 = vld [vmem:[%s1 + $0xfe0] sm:$0xff]
  %v597 = vld [vmem:[%s1 + $0xfe8] sm:$0xff]
  %v598 = vld [vmem:[%s1 + $0xff0] sm:$0xff]
  %v599 = vld [vmem:[%s1 + $0xff8] sm:$0xff]
  %v600 = vld [vmem:[%s1 + $0x1000] sm:$0xff]
  %v601 = vld [vmem:[%s1 + $0x1008] sm:$0xff]
  %v602 = vld [vmem:[%s1 + $0x1010] sm:$0xff]
  %v603 = vld [vmem:[%s1 + $0x1018] sm:$0xff]
  %v604 = vld [vmem:[%s1 + $0x1020] sm:$0xff]
  %v605 = vld [vmem:[%s1 + $0x1028] sm:$0xff]
  %v606 = vld [vmem:[%s1 + $0x1030] sm:$0xff]
  %v607 = vld [vmem:[%s1 + $0x1038] sm:$0xff]
  %v608 = vld [vmem:[%s1 + $0x1040] sm:$0xff]
  %v609 = vld [vmem:[%s1 + $0x1048] sm:$0xff]
  %v610 = vld [vmem:[%s1 + $0x1050] sm:$0xff]
  %v611 = vld [vmem:[%s1 + $0x1058] sm:$0xff]
  %v612 = vld [vmem:[%s1 + $0x1060] sm:$0xff]
  %v613 = vld [vmem:[%s1 + $0x1068] sm:$0xff]
  %v614 = vld [vmem:[%s1 + $0x1070] sm:$0xff]
  %v615 = vld [vmem:[%s1 + $0x1078] sm:$0xff]
  %v616 = vld [vmem:[%s1 + $0x1080] sm:$0xff]
  %v617 = vld [vmem:[%s1 + $0x1088] sm:$0xff]
  %v618 = vld [vmem:[%s1 + $0x1090] sm:$0xff]
  %v619 = vld [vmem:[%s1 + $0x1098] sm:$0xff]
  %v620 = vld [vmem:[%s1 + $0x10a0] sm:$0xff]
  %v621 = vld [vmem:[%s1 + $0x10a8] sm:$0xff]
  %v622 = vld [vmem:[%s1 + $0x10b0] sm:$0xff]
  %v623 = vld [vmem:[%s1 + $0x10b8] sm:$0xff]
  %v624 = vld [vmem:[%s1 + $0x10c0] sm:$0xff]
  %v625 = vld [vmem:[%s1 + $0x10c8] sm:$0xff]
  %v626 = vld [vmem:[%s1 + $0x10d0] sm:$0xff]
  %v627 = vld [vmem:[%s1 + $0x10d8] sm:$0xff]
  %v628 = vld [vmem:[%s1 + $0x10e0] sm:$0xff]
  %v629 = vld [vmem:[%s1 + $0x10e8] sm:$0xff]
  %v630 = vld [vmem:[%s1 + $0x10f0] sm:$0xff]
  %v631 = vld [vmem:[%s1 + $0x10f8] sm:$0xff]
  %v632 = vld [vmem:[%s1 + $0x1100] sm:$0xff]
  %v633 = vld [vmem:[%s1 + $0x1108] sm:$0xff]
  %v634 = vld [vmem:[%s1 + $0x1110] sm:$0xff]
  %v635 = vld [vmem:[%s1 + $0x1118] sm:$0xff]
  %v636 = vld [vmem:[%s1 + $0x1120] sm:$0xff]
  %v637 = vld [vmem:[%s1 + $0x1128] sm:$0xff]
  %v638 = vld [vmem:[%s1 + $0x1130] sm:$0xff]
  %v639 = vld [vmem:[%s1 + $0x1138] sm:$0xff]
  %v640 = vld [vmem:[%s1 + $0x1140] sm:$0xff]
  %v641 = vld [vmem:[%s1 + $0x1148] sm:$0xff]
  %v642 = vld [vmem:[%s1 + $0x1150] sm:$0xff]
  %v643 = vld [vmem:[%s1 + $0x1158] sm:$0xff]
  %v644 = vld [vmem:[%s1 + $0x1160] sm:$0xff]
  %v645 = vld [vmem:[%s1 + $0x1168] sm:$0xff]
  %v646 = vld [vmem:[%s1 + $0x1170] sm:$0xff]
  %v647 = vld [vmem:[%s1 + $0x1178] sm:$0xff]
  %v648 = vld [vmem:[%s1 + $0x1180] sm:$0xff]
  %v649 = vld [vmem:[%s1 + $0x1188] sm:$0xff]
  %v650 = vld [vmem:[%s1 + $0x1190] sm:$0xff]
  %v651 = vld [vmem:[%s1 + $0x1198] sm:$0xff]
  %v652 = vld [vmem:[%s1 + $0x11a0] sm:$0xff]
  %v653 = vld [vmem:[%s1 + $0x11a8] sm:$0xff]
  %v654 = vld [vmem:[%s1 + $0x11b0] sm:$0xff]
  %v655 = vld [vmem:[%s1 + $0x11b8] sm:$0xff]
  %v656 = vld [vmem:[%s1 + $0x11c0] sm:$0xff]
  %v657 = vld [vmem:[%s1 + $0x11c8] sm:$0xff]
  %v658 = vld [vmem:[%s1 + $0x11d0] sm:$0xff]
  %v659 = vld [vmem:[%s1 + $0x11d8] sm:$0xff]
  %v660 = vld [vmem:[%s1 + $0x11e0] sm:$0xff]
  %v661 = vld [vmem:[%s1 + $0x11e8] sm:$0xff]
  %v662 = vld [vmem:[%s1 + $0x11f0] sm:$0xff]
  %v663 = vld [vmem:[%s1 + $0x11f8] sm:$0xff]
  %v664 = vld [vmem:[%s1 + $0x1200] sm:$0xff]
  %v665 = vld [vmem:[%s1 + $0x1208] sm:$0xff]
  %v666 = vld [vmem:[%s2] sm:$0x1]
  %v668 = vlaneseq
  %v669 = vshrl.u32 %v668, 7
  %v670 = vsub.s32 0, %v669
  %v671 = vrot.slane %v666, %v670
  %vm673 = vcmask 130048
  %v675 = vsel %vm673, %v50, 0
  %v678 = vsel %vm673, %v87, 0
  %680 = vmatprep.subr.mxu0 0.0
  %681 = vmatpush1.msra.mxu0 %v103
  %682 = vmatprep.subr.mxu0 0.0
  %683 = vmatpush1.msra.mxu0 %v102
  %684 = vmatprep.subr.mxu0 0.0
  %685 = vmatpush1.msra.mxu0 %v101
  %686 = vmatprep.subr.mxu0 0.0
  %687 = vmatpush1.msra.mxu0 %v100
  %688 = vmatprep.subr.mxu0 0.0
  %689 = vmatpush1.msra.mxu0 %v99
  %690 = vmatprep.subr.mxu0 0.0
  %691 = vmatpush1.msra.mxu0 %v98
  %692 = vmatprep.subr.mxu0 0.0
  %693 = vmatpush1.msra.mxu0 %v97
  %694 = vmatprep.subr.mxu0 0.0
  %695 = vmatpush1.msra.mxu0 %v96
  %696 = vmatprep.subr.mxu0 0.0
  %697 = vmatpush1.msra.mxu0 %v95
  %698 = vmatprep.subr.mxu0 0.0
  %699 = vmatpush1.msra.mxu0 %v94
  %700 = vmatprep.subr.mxu0 0.0
  %701 = vmatpush1.msra.mxu0 %v93
  %702 = vmatprep.subr.mxu0 0.0
  %703 = vmatpush1.msra.mxu0 %v92
  %704 = vmatprep.subr.mxu0 0.0
  %705 = vmatpush1.msra.mxu0 %v91
  %706 = vmatprep.subr.mxu0 0.0
  %707 = vmatpush1.msra.mxu0 %v90
  %708 = vmatprep.subr.mxu0 0.0
  %709 = vmatpush1.msra.mxu0 %v89
  %710 = vmatprep.subr.mxu0 0.0
  %711 = vmatpush1.msra.mxu0 %v88
  %712 = vmatprep.subr.mxu0 0.0
  %713 = vmatpush2.msra.mxu0 %v119
  %714 = vmatprep.subr.mxu0 0.0
  %715 = vmatpush2.msra.mxu0 %v118
  %716 = vmatprep.subr.mxu0 0.0
  %717 = vmatpush2.msra.mxu0 %v117
  %718 = vmatprep.subr.mxu0 0.0
  %719 = vmatpush2.msra.mxu0 %v116
  %720 = vmatprep.subr.mxu0 0.0
  %721 = vmatpush2.msra.mxu0 %v115
  %722 = vmatprep.subr.mxu0 0.0
  %723 = vmatpush2.msra.mxu0 %v114
  %724 = vmatprep.subr.mxu0 0.0
  %725 = vmatpush2.msra.mxu0 %v113
  %726 = vmatprep.subr.mxu0 0.0
  %727 = vmatpush2.msra.mxu0 %v112
  %728 = vmatprep.subr.mxu0 0.0
  %729 = vmatpush2.msra.mxu0 %v111
  %730 = vmatprep.subr.mxu0 0.0
  %731 = vmatpush2.msra.mxu0 %v110
  %732 = vmatprep.subr.mxu0 0.0
  %733 = vmatpush2.msra.mxu0 %v109
  %734 = vmatprep.subr.mxu0 0.0
  %735 = vmatpush2.msra.mxu0 %v108
  %736 = vmatprep.subr.mxu0 0.0
  %737 = vmatpush2.msra.mxu0 %v107
  %738 = vmatprep.subr.mxu0 0.0
  %739 = vmatpush2.msra.mxu0 %v106
  %740 = vmatprep.subr.mxu0 0.0
  %741 = vmatpush2.msra.mxu0 %v105
  %742 = vmatprep.subr.mxu0 0.0
  %743 = vmatpush2.msra.mxu0 %v104
  %744 = vmatprep.mubr.f32.mxu0 %v15
  %745 = vmatmul.mubr.f32.gmra.mxu0 %v14
  %v746 = vpop.f32.mrf.mxu0
  %v747 = vadd.f32 %v671, %v746
  %v748 = vpop.f32.mrf.mxu0
  %749 = vmatprep.mubr.f32.mxu0 %v52
  %750 = vmatmul.mubr.f32.gmra.mxu0 %v51
  %v751 = vpop.f32.mrf.mxu0
  %v752 = vadd.f32 %v671, %v751
  %v753 = vpop.f32.mrf.mxu0
  %754 = vdwg.mxu0
  %755 = vmatprep.subr.mxu0 0.0
  %756 = vmatpush1.msra.mxu0 %v135
  %757 = vmatprep.subr.mxu0 0.0
  %758 = vmatpush1.msra.mxu0 %v134
  %759 = vmatprep.subr.mxu0 0.0
  %760 = vmatpush1.msra.mxu0 %v133
  %761 = vmatprep.subr.mxu0 0.0
  %762 = vmatpush1.msra.mxu0 %v132
  %763 = vmatprep.subr.mxu0 0.0
  %764 = vmatpush1.msra.mxu0 %v131
  %765 = vmatprep.subr.mxu0 0.0
  %766 = vmatpush1.msra.mxu0 %v130
  %767 = vmatprep.subr.mxu0 0.0
  %768 = vmatpush1.msra.mxu0 %v129
  %769 = vmatprep.subr.mxu0 0.0
  %770 = vmatpush1.msra.mxu0 %v128
  %771 = vmatprep.subr.mxu0 0.0
  %772 = vmatpush1.msra.mxu0 %v127
  %773 = vmatprep.subr.mxu0 0.0
  %774 = vmatpush1.msra.mxu0 %v126
  %775 = vmatprep.subr.mxu0 0.0
  %776 = vmatpush1.msra.mxu0 %v125
  %777 = vmatprep.subr.mxu0 0.0
  %778 = vmatpush1.msra.mxu0 %v124
  %779 = vmatprep.subr.mxu0 0.0
  %780 = vmatpush1.msra.mxu0 %v123
  %781 = vmatprep.subr.mxu0 0.0
  %782 = vmatpush1.msra.mxu0 %v122
  %783 = vmatprep.subr.mxu0 0.0
  %784 = vmatpush1.msra.mxu0 %v121
  %785 = vmatprep.subr.mxu0 0.0
  %786 = vmatpush1.msra.mxu0 %v120
  %787 = vmatprep.subr.mxu0 0.0
  %788 = vmatpush2.msra.mxu0 %v151
  %789 = vmatprep.subr.mxu0 0.0
  %790 = vmatpush2.msra.mxu0 %v150
  %791 = vmatprep.subr.mxu0 0.0
  %792 = vmatpush2.msra.mxu0 %v149
  %793 = vmatprep.subr.mxu0 0.0
  %794 = vmatpush2.msra.mxu0 %v148
  %795 = vmatprep.subr.mxu0 0.0
  %796 = vmatpush2.msra.mxu0 %v147
  %797 = vmatprep.subr.mxu0 0.0
  %798 = vmatpush2.msra.mxu0 %v146
  %799 = vmatprep.subr.mxu0 0.0
  %800 = vmatpush2.msra.mxu0 %v145
  %801 = vmatprep.subr.mxu0 0.0
  %802 = vmatpush2.msra.mxu0 %v144
  %803 = vmatprep.subr.mxu0 0.0
  %804 = vmatpush2.msra.mxu0 %v143
  %805 = vmatprep.subr.mxu0 0.0
  %806 = vmatpush2.msra.mxu0 %v142
  %807 = vmatprep.subr.mxu0 0.0
  %808 = vmatpush2.msra.mxu0 %v141
  %809 = vmatprep.subr.mxu0 0.0
  %810 = vmatpush2.msra.mxu0 %v140
  %811 = vmatprep.subr.mxu0 0.0
  %812 = vmatpush2.msra.mxu0 %v139
  %813 = vmatprep.subr.mxu0 0.0
  %814 = vmatpush2.msra.mxu0 %v138
  %815 = vmatprep.subr.mxu0 0.0
  %816 = vmatpush2.msra.mxu0 %v137
  %817 = vmatprep.subr.mxu0 0.0
  %818 = vmatpush2.msra.mxu0 %v136
  %819 = vmatprep.mubr.f32.mxu0 %v17
  %820 = vmatmul.mubr.f32.gmra.mxu0 %v16
  %v821 = vpop.f32.mrf.mxu0
  %v822 = vadd.f32 %v747, %v821
  %v823 = vpop.f32.mrf.mxu0
  %824 = vmatprep.mubr.f32.mxu0 %v54
  %825 = vmatmul.mubr.f32.gmra.mxu0 %v53
  %v826 = vpop.f32.mrf.mxu0
  %v827 = vadd.f32 %v752, %v826
  %v828 = vpop.f32.mrf.mxu0
  %829 = vdwg.mxu0
  %830 = vmatprep.subr.mxu0 0.0
  %831 = vmatpush1.msra.mxu0 %v167
  %832 = vmatprep.subr.mxu0 0.0
  %833 = vmatpush1.msra.mxu0 %v166
  %834 = vmatprep.subr.mxu0 0.0
  %835 = vmatpush1.msra.mxu0 %v165
  %836 = vmatprep.subr.mxu0 0.0
  %837 = vmatpush1.msra.mxu0 %v164
  %838 = vmatprep.subr.mxu0 0.0
  %839 = vmatpush1.msra.mxu0 %v163
  %840 = vmatprep.subr.mxu0 0.0
  %841 = vmatpush1.msra.mxu0 %v162
  %842 = vmatprep.subr.mxu0 0.0
  %843 = vmatpush1.msra.mxu0 %v161
  %844 = vmatprep.subr.mxu0 0.0
  %845 = vmatpush1.msra.mxu0 %v160
  %846 = vmatprep.subr.mxu0 0.0
  %847 = vmatpush1.msra.mxu0 %v159
  %848 = vmatprep.subr.mxu0 0.0
  %849 = vmatpush1.msra.mxu0 %v158
  %850 = vmatprep.subr.mxu0 0.0
  %851 = vmatpush1.msra.mxu0 %v157
  %852 = vmatprep.subr.mxu0 0.0
  %853 = vmatpush1.msra.mxu0 %v156
  %854 = vmatprep.subr.mxu0 0.0
  %855 = vmatpush1.msra.mxu0 %v155
  %856 = vmatprep.subr.mxu0 0.0
  %857 = vmatpush1.msra.mxu0 %v154
  %858 = vmatprep.subr.mxu0 0.0
  %859 = vmatpush1.msra.mxu0 %v153
  %860 = vmatprep.subr.mxu0 0.0
  %861 = vmatpush1.msra.mxu0 %v152
  %862 = vmatprep.subr.mxu0 0.0
  %863 = vmatpush2.msra.mxu0 %v183
  %864 = vmatprep.subr.mxu0 0.0
  %865 = vmatpush2.msra.mxu0 %v182
  %866 = vmatprep.subr.mxu0 0.0
  %867 = vmatpush2.msra.mxu0 %v181
  %868 = vmatprep.subr.mxu0 0.0
  %869 = vmatpush2.msra.mxu0 %v180
  %870 = vmatprep.subr.mxu0 0.0
  %871 = vmatpush2.msra.mxu0 %v179
  %872 = vmatprep.subr.mxu0 0.0
  %873 = vmatpush2.msra.mxu0 %v178
  %874 = vmatprep.subr.mxu0 0.0
  %875 = vmatpush2.msra.mxu0 %v177
  %876 = vmatprep.subr.mxu0 0.0
  %877 = vmatpush2.msra.mxu0 %v176
  %878 = vmatprep.subr.mxu0 0.0
  %879 = vmatpush2.msra.mxu0 %v175
  %880 = vmatprep.subr.mxu0 0.0
  %881 = vmatpush2.msra.mxu0 %v174
  %882 = vmatprep.subr.mxu0 0.0
  %883 = vmatpush2.msra.mxu0 %v173
  %884 = vmatprep.subr.mxu0 0.0
  %885 = vmatpush2.msra.mxu0 %v172
  %886 = vmatprep.subr.mxu0 0.0
  %887 = vmatpush2.msra.mxu0 %v171
  %888 = vmatprep.subr.mxu0 0.0
  %889 = vmatpush2.msra.mxu0 %v170
  %890 = vmatprep.subr.mxu0 0.0
  %891 = vmatpush2.msra.mxu0 %v169
  %892 = vmatprep.subr.mxu0 0.0
  %893 = vmatpush2.msra.mxu0 %v168
  %894 = vmatprep.mubr.f32.mxu0 %v19
  %895 = vmatmul.mubr.f32.gmra.mxu0 %v18
  %v896 = vpop.f32.mrf.mxu0
  %v897 = vadd.f32 %v822, %v896
  %v898 = vpop.f32.mrf.mxu0
  %899 = vmatprep.mubr.f32.mxu0 %v56
  %900 = vmatmul.mubr.f32.gmra.mxu0 %v55
  %v901 = vpop.f32.mrf.mxu0
  %v902 = vadd.f32 %v827, %v901
  %v903 = vpop.f32.mrf.mxu0
  %904 = vdwg.mxu0
  %905 = vmatprep.subr.mxu0 0.0
  %906 = vmatpush1.msra.mxu0 %v199
  %907 = vmatprep.subr.mxu0 0.0
  %908 = vmatpush1.msra.mxu0 %v198
  %909 = vmatprep.subr.mxu0 0.0
  %910 = vmatpush1.msra.mxu0 %v197
  %911 = vmatprep.subr.mxu0 0.0
  %912 = vmatpush1.msra.mxu0 %v196
  %913 = vmatprep.subr.mxu0 0.0
  %914 = vmatpush1.msra.mxu0 %v195
  %915 = vmatprep.subr.mxu0 0.0
  %916 = vmatpush1.msra.mxu0 %v194
  %917 = vmatprep.subr.mxu0 0.0
  %918 = vmatpush1.msra.mxu0 %v193
  %919 = vmatprep.subr.mxu0 0.0
  %920 = vmatpush1.msra.mxu0 %v192
  %921 = vmatprep.subr.mxu0 0.0
  %922 = vmatpush1.msra.mxu0 %v191
  %923 = vmatprep.subr.mxu0 0.0
  %924 = vmatpush1.msra.mxu0 %v190
  %925 = vmatprep.subr.mxu0 0.0
  %926 = vmatpush1.msra.mxu0 %v189
  %927 = vmatprep.subr.mxu0 0.0
  %928 = vmatpush1.msra.mxu0 %v188
  %929 = vmatprep.subr.mxu0 0.0
  %930 = vmatpush1.msra.mxu0 %v187
  %931 = vmatprep.subr.mxu0 0.0
  %932 = vmatpush1.msra.mxu0 %v186
  %933 = vmatprep.subr.mxu0 0.0
  %934 = vmatpush1.msra.mxu0 %v185
  %935 = vmatprep.subr.mxu0 0.0
  %936 = vmatpush1.msra.mxu0 %v184
  %937 = vmatprep.subr.mxu0 0.0
  %938 = vmatpush2.msra.mxu0 %v215
  %939 = vmatprep.subr.mxu0 0.0
  %940 = vmatpush2.msra.mxu0 %v214
  %941 = vmatprep.subr.mxu0 0.0
  %942 = vmatpush2.msra.mxu0 %v213
  %943 = vmatprep.subr.mxu0 0.0
  %944 = vmatpush2.msra.mxu0 %v212
  %945 = vmatprep.subr.mxu0 0.0
  %946 = vmatpush2.msra.mxu0 %v211
  %947 = vmatprep.subr.mxu0 0.0
  %948 = vmatpush2.msra.mxu0 %v210
  %949 = vmatprep.subr.mxu0 0.0
  %950 = vmatpush2.msra.mxu0 %v209
  %951 = vmatprep.subr.mxu0 0.0
  %952 = vmatpush2.msra.mxu0 %v208
  %953 = vmatprep.subr.mxu0 0.0
  %954 = vmatpush2.msra.mxu0 %v207
  %955 = vmatprep.subr.mxu0 0.0
  %956 = vmatpush2.msra.mxu0 %v206
  %957 = vmatprep.subr.mxu0 0.0
  %958 = vmatpush2.msra.mxu0 %v205
  %959 = vmatprep.subr.mxu0 0.0
  %960 = vmatpush2.msra.mxu0 %v204
  %961 = vmatprep.subr.mxu0 0.0
  %962 = vmatpush2.msra.mxu0 %v203
  %963 = vmatprep.subr.mxu0 0.0
  %964 = vmatpush2.msra.mxu0 %v202
  %965 = vmatprep.subr.mxu0 0.0
  %966 = vmatpush2.msra.mxu0 %v201
  %967 = vmatprep.subr.mxu0 0.0
  %968 = vmatpush2.msra.mxu0 %v200
  %969 = vmatprep.mubr.f32.mxu0 %v21
  %970 = vmatmul.mubr.f32.gmra.mxu0 %v20
  %v971 = vpop.f32.mrf.mxu0
  %v972 = vadd.f32 %v897, %v971
  %v973 = vpop.f32.mrf.mxu0
  %974 = vmatprep.mubr.f32.mxu0 %v58
  %975 = vmatmul.mubr.f32.gmra.mxu0 %v57
  %v976 = vpop.f32.mrf.mxu0
  %v977 = vadd.f32 %v902, %v976
  %v978 = vpop.f32.mrf.mxu0
  %979 = vdwg.mxu0
  %980 = vmatprep.subr.mxu0 0.0
  %981 = vmatpush1.msra.mxu0 %v231
  %982 = vmatprep.subr.mxu0 0.0
  %983 = vmatpush1.msra.mxu0 %v230
  %984 = vmatprep.subr.mxu0 0.0
  %985 = vmatpush1.msra.mxu0 %v229
  %986 = vmatprep.subr.mxu0 0.0
  %987 = vmatpush1.msra.mxu0 %v228
  %988 = vmatprep.subr.mxu0 0.0
  %989 = vmatpush1.msra.mxu0 %v227
  %990 = vmatprep.subr.mxu0 0.0
  %991 = vmatpush1.msra.mxu0 %v226
  %992 = vmatprep.subr.mxu0 0.0
  %993 = vmatpush1.msra.mxu0 %v225
  %994 = vmatprep.subr.mxu0 0.0
  %995 = vmatpush1.msra.mxu0 %v224
  %996 = vmatprep.subr.mxu0 0.0
  %997 = vmatpush1.msra.mxu0 %v223
  %998 = vmatprep.subr.mxu0 0.0
  %999 = vmatpush1.msra.mxu0 %v222
  %1000 = vmatprep.subr.mxu0 0.0
  %1001 = vmatpush1.msra.mxu0 %v221
  %1002 = vmatprep.subr.mxu0 0.0
  %1003 = vmatpush1.msra.mxu0 %v220
  %1004 = vmatprep.subr.mxu0 0.0
  %1005 = vmatpush1.msra.mxu0 %v219
  %1006 = vmatprep.subr.mxu0 0.0
  %1007 = vmatpush1.msra.mxu0 %v218
  %1008 = vmatprep.subr.mxu0 0.0
  %1009 = vmatpush1.msra.mxu0 %v217
  %1010 = vmatprep.subr.mxu0 0.0
  %1011 = vmatpush1.msra.mxu0 %v216
  %1012 = vmatprep.subr.mxu0 0.0
  %1013 = vmatpush2.msra.mxu0 %v247
  %1014 = vmatprep.subr.mxu0 0.0
  %1015 = vmatpush2.msra.mxu0 %v246
  %1016 = vmatprep.subr.mxu0 0.0
  %1017 = vmatpush2.msra.mxu0 %v245
  %1018 = vmatprep.subr.mxu0 0.0
  %1019 = vmatpush2.msra.mxu0 %v244
  %1020 = vmatprep.subr.mxu0 0.0
  %1021 = vmatpush2.msra.mxu0 %v243
  %1022 = vmatprep.subr.mxu0 0.0
  %1023 = vmatpush2.msra.mxu0 %v242
  %1024 = vmatprep.subr.mxu0 0.0
  %1025 = vmatpush2.msra.mxu0 %v241
  %1026 = vmatprep.subr.mxu0 0.0
  %1027 = vmatpush2.msra.mxu0 %v240
  %1028 = vmatprep.subr.mxu0 0.0
  %1029 = vmatpush2.msra.mxu0 %v239
  %1030 = vmatprep.subr.mxu0 0.0
  %1031 = vmatpush2.msra.mxu0 %v238
  %1032 = vmatprep.subr.mxu0 0.0
  %1033 = vmatpush2.msra.mxu0 %v237
  %1034 = vmatprep.subr.mxu0 0.0
  %1035 = vmatpush2.msra.mxu0 %v236
  %1036 = vmatprep.subr.mxu0 0.0
  %1037 = vmatpush2.msra.mxu0 %v235
  %1038 = vmatprep.subr.mxu0 0.0
  %1039 = vmatpush2.msra.mxu0 %v234
  %1040 = vmatprep.subr.mxu0 0.0
  %1041 = vmatpush2.msra.mxu0 %v233
  %1042 = vmatprep.subr.mxu0 0.0
  %1043 = vmatpush2.msra.mxu0 %v232
  %1044 = vmatprep.mubr.f32.mxu0 %v23
  %1045 = vmatmul.mubr.f32.gmra.mxu0 %v22
  %v1046 = vpop.f32.mrf.mxu0
  %v1047 = vadd.f32 %v972, %v1046
  %v1048 = vpop.f32.mrf.mxu0
  %1049 = vmatprep.mubr.f32.mxu0 %v60
  %1050 = vmatmul.mubr.f32.gmra.mxu0 %v59
  %v1051 = vpop.f32.mrf.mxu0
  %v1052 = vadd.f32 %v977, %v1051
  %v1053 = vpop.f32.mrf.mxu0
  %1054 = vdwg.mxu0
  %1055 = vmatprep.subr.mxu0 0.0
  %1056 = vmatpush1.msra.mxu0 %v263
  %1057 = vmatprep.subr.mxu0 0.0
  %1058 = vmatpush1.msra.mxu0 %v262
  %1059 = vmatprep.subr.mxu0 0.0
  %1060 = vmatpush1.msra.mxu0 %v261
  %1061 = vmatprep.subr.mxu0 0.0
  %1062 = vmatpush1.msra.mxu0 %v260
  %1063 = vmatprep.subr.mxu0 0.0
  %1064 = vmatpush1.msra.mxu0 %v259
  %1065 = vmatprep.subr.mxu0 0.0
  %1066 = vmatpush1.msra.mxu0 %v258
  %1067 = vmatprep.subr.mxu0 0.0
  %1068 = vmatpush1.msra.mxu0 %v257
  %1069 = vmatprep.subr.mxu0 0.0
  %1070 = vmatpush1.msra.mxu0 %v256
  %1071 = vmatprep.subr.mxu0 0.0
  %1072 = vmatpush1.msra.mxu0 %v255
  %1073 = vmatprep.subr.mxu0 0.0
  %1074 = vmatpush1.msra.mxu0 %v254
  %1075 = vmatprep.subr.mxu0 0.0
  %1076 = vmatpush1.msra.mxu0 %v253
  %1077 = vmatprep.subr.mxu0 0.0
  %1078 = vmatpush1.msra.mxu0 %v252
  %1079 = vmatprep.subr.mxu0 0.0
  %1080 = vmatpush1.msra.mxu0 %v251
  %1081 = vmatprep.subr.mxu0 0.0
  %1082 = vmatpush1.msra.mxu0 %v250
  %1083 = vmatprep.subr.mxu0 0.0
  %1084 = vmatpush1.msra.mxu0 %v249
  %1085 = vmatprep.subr.mxu0 0.0
  %1086 = vmatpush1.msra.mxu0 %v248
  %1087 = vmatprep.subr.mxu0 0.0
  %1088 = vmatpush2.msra.mxu0 %v279
  %1089 = vmatprep.subr.mxu0 0.0
  %1090 = vmatpush2.msra.mxu0 %v278
  %1091 = vmatprep.subr.mxu0 0.0
  %1092 = vmatpush2.msra.mxu0 %v277
  %1093 = vmatprep.subr.mxu0 0.0
  %1094 = vmatpush2.msra.mxu0 %v276
  %1095 = vmatprep.subr.mxu0 0.0
  %1096 = vmatpush2.msra.mxu0 %v275
  %1097 = vmatprep.subr.mxu0 0.0
  %1098 = vmatpush2.msra.mxu0 %v274
  %1099 = vmatprep.subr.mxu0 0.0
  %1100 = vmatpush2.msra.mxu0 %v273
  %1101 = vmatprep.subr.mxu0 0.0
  %1102 = vmatpush2.msra.mxu0 %v272
  %1103 = vmatprep.subr.mxu0 0.0
  %1104 = vmatpush2.msra.mxu0 %v271
  %1105 = vmatprep.subr.mxu0 0.0
  %1106 = vmatpush2.msra.mxu0 %v270
  %1107 = vmatprep.subr.mxu0 0.0
  %1108 = vmatpush2.msra.mxu0 %v269
  %1109 = vmatprep.subr.mxu0 0.0
  %1110 = vmatpush2.msra.mxu0 %v268
  %1111 = vmatprep.subr.mxu0 0.0
  %1112 = vmatpush2.msra.mxu0 %v267
  %1113 = vmatprep.subr.mxu0 0.0
  %1114 = vmatpush2.msra.mxu0 %v266
  %1115 = vmatprep.subr.mxu0 0.0
  %1116 = vmatpush2.msra.mxu0 %v265
  %1117 = vmatprep.subr.mxu0 0.0
  %1118 = vmatpush2.msra.mxu0 %v264
  %1119 = vmatprep.mubr.f32.mxu0 %v25
  %1120 = vmatmul.mubr.f32.gmra.mxu0 %v24
  %v1121 = vpop.f32.mrf.mxu0
  %v1122 = vadd.f32 %v1047, %v1121
  %v1123 = vpop.f32.mrf.mxu0
  %1124 = vmatprep.mubr.f32.mxu0 %v62
  %1125 = vmatmul.mubr.f32.gmra.mxu0 %v61
  %v1126 = vpop.f32.mrf.mxu0
  %v1127 = vadd.f32 %v1052, %v1126
  %v1128 = vpop.f32.mrf.mxu0
  %1129 = vdwg.mxu0
  %1130 = vmatprep.subr.mxu0 0.0
  %1131 = vmatpush1.msra.mxu0 %v295
  %1132 = vmatprep.subr.mxu0 0.0
  %1133 = vmatpush1.msra.mxu0 %v294
  %1134 = vmatprep.subr.mxu0 0.0
  %1135 = vmatpush1.msra.mxu0 %v293
  %1136 = vmatprep.subr.mxu0 0.0
  %1137 = vmatpush1.msra.mxu0 %v292
  %1138 = vmatprep.subr.mxu0 0.0
  %1139 = vmatpush1.msra.mxu0 %v291
  %1140 = vmatprep.subr.mxu0 0.0
  %1141 = vmatpush1.msra.mxu0 %v290
  %1142 = vmatprep.subr.mxu0 0.0
  %1143 = vmatpush1.msra.mxu0 %v289
  %1144 = vmatprep.subr.mxu0 0.0
  %1145 = vmatpush1.msra.mxu0 %v288
  %1146 = vmatprep.subr.mxu0 0.0
  %1147 = vmatpush1.msra.mxu0 %v287
  %1148 = vmatprep.subr.mxu0 0.0
  %1149 = vmatpush1.msra.mxu0 %v286
  %1150 = vmatprep.subr.mxu0 0.0
  %1151 = vmatpush1.msra.mxu0 %v285
  %1152 = vmatprep.subr.mxu0 0.0
  %1153 = vmatpush1.msra.mxu0 %v284
  %1154 = vmatprep.subr.mxu0 0.0
  %1155 = vmatpush1.msra.mxu0 %v283
  %1156 = vmatprep.subr.mxu0 0.0
  %1157 = vmatpush1.msra.mxu0 %v282
  %1158 = vmatprep.subr.mxu0 0.0
  %1159 = vmatpush1.msra.mxu0 %v281
  %1160 = vmatprep.subr.mxu0 0.0
  %1161 = vmatpush1.msra.mxu0 %v280
  %1162 = vmatprep.subr.mxu0 0.0
  %1163 = vmatpush2.msra.mxu0 %v311
  %1164 = vmatprep.subr.mxu0 0.0
  %1165 = vmatpush2.msra.mxu0 %v310
  %1166 = vmatprep.subr.mxu0 0.0
  %1167 = vmatpush2.msra.mxu0 %v309
  %1168 = vmatprep.subr.mxu0 0.0
  %1169 = vmatpush2.msra.mxu0 %v308
  %1170 = vmatprep.subr.mxu0 0.0
  %1171 = vmatpush2.msra.mxu0 %v307
  %1172 = vmatprep.subr.mxu0 0.0
  %1173 = vmatpush2.msra.mxu0 %v306
  %1174 = vmatprep.subr.mxu0 0.0
  %1175 = vmatpush2.msra.mxu0 %v305
  %1176 = vmatprep.subr.mxu0 0.0
  %1177 = vmatpush2.msra.mxu0 %v304
  %1178 = vmatprep.subr.mxu0 0.0
  %1179 = vmatpush2.msra.mxu0 %v303
  %1180 = vmatprep.subr.mxu0 0.0
  %1181 = vmatpush2.msra.mxu0 %v302
  %1182 = vmatprep.subr.mxu0 0.0
  %1183 = vmatpush2.msra.mxu0 %v301
  %1184 = vmatprep.subr.mxu0 0.0
  %1185 = vmatpush2.msra.mxu0 %v300
  %1186 = vmatprep.subr.mxu0 0.0
  %1187 = vmatpush2.msra.mxu0 %v299
  %1188 = vmatprep.subr.mxu0 0.0
  %1189 = vmatpush2.msra.mxu0 %v298
  %1190 = vmatprep.subr.mxu0 0.0
  %1191 = vmatpush2.msra.mxu0 %v297
  %1192 = vmatprep.subr.mxu0 0.0
  %1193 = vmatpush2.msra.mxu0 %v296
  %1194 = vmatprep.mubr.f32.mxu0 %v27
  %1195 = vmatmul.mubr.f32.gmra.mxu0 %v26
  %v1196 = vpop.f32.mrf.mxu0
  %v1197 = vadd.f32 %v1122, %v1196
  %v1198 = vpop.f32.mrf.mxu0
  %1199 = vmatprep.mubr.f32.mxu0 %v64
  %1200 = vmatmul.mubr.f32.gmra.mxu0 %v63
  %v1201 = vpop.f32.mrf.mxu0
  %v1202 = vadd.f32 %v1127, %v1201
  %v1203 = vpop.f32.mrf.mxu0
  %1204 = vdwg.mxu0
  %1205 = vmatprep.subr.mxu0 0.0
  %1206 = vmatpush1.msra.mxu0 %v327
  %1207 = vmatprep.subr.mxu0 0.0
  %1208 = vmatpush1.msra.mxu0 %v326
  %1209 = vmatprep.subr.mxu0 0.0
  %1210 = vmatpush1.msra.mxu0 %v325
  %1211 = vmatprep.subr.mxu0 0.0
  %1212 = vmatpush1.msra.mxu0 %v324
  %1213 = vmatprep.subr.mxu0 0.0
  %1214 = vmatpush1.msra.mxu0 %v323
  %1215 = vmatprep.subr.mxu0 0.0
  %1216 = vmatpush1.msra.mxu0 %v322
  %1217 = vmatprep.subr.mxu0 0.0
  %1218 = vmatpush1.msra.mxu0 %v321
  %1219 = vmatprep.subr.mxu0 0.0
  %1220 = vmatpush1.msra.mxu0 %v320
  %1221 = vmatprep.subr.mxu0 0.0
  %1222 = vmatpush1.msra.mxu0 %v319
  %1223 = vmatprep.subr.mxu0 0.0
  %1224 = vmatpush1.msra.mxu0 %v318
  %1225 = vmatprep.subr.mxu0 0.0
  %1226 = vmatpush1.msra.mxu0 %v317
  %1227 = vmatprep.subr.mxu0 0.0
  %1228 = vmatpush1.msra.mxu0 %v316
  %1229 = vmatprep.subr.mxu0 0.0
  %1230 = vmatpush1.msra.mxu0 %v315
  %1231 = vmatprep.subr.mxu0 0.0
  %1232 = vmatpush1.msra.mxu0 %v314
  %1233 = vmatprep.subr.mxu0 0.0
  %1234 = vmatpush1.msra.mxu0 %v313
  %1235 = vmatprep.subr.mxu0 0.0
  %1236 = vmatpush1.msra.mxu0 %v312
  %1237 = vmatprep.subr.mxu0 0.0
  %1238 = vmatpush2.msra.mxu0 %v343
  %1239 = vmatprep.subr.mxu0 0.0
  %1240 = vmatpush2.msra.mxu0 %v342
  %1241 = vmatprep.subr.mxu0 0.0
  %1242 = vmatpush2.msra.mxu0 %v341
  %1243 = vmatprep.subr.mxu0 0.0
  %1244 = vmatpush2.msra.mxu0 %v340
  %1245 = vmatprep.subr.mxu0 0.0
  %1246 = vmatpush2.msra.mxu0 %v339
  %1247 = vmatprep.subr.mxu0 0.0
  %1248 = vmatpush2.msra.mxu0 %v338
  %1249 = vmatprep.subr.mxu0 0.0
  %1250 = vmatpush2.msra.mxu0 %v337
  %1251 = vmatprep.subr.mxu0 0.0
  %1252 = vmatpush2.msra.mxu0 %v336
  %1253 = vmatprep.subr.mxu0 0.0
  %1254 = vmatpush2.msra.mxu0 %v335
  %1255 = vmatprep.subr.mxu0 0.0
  %1256 = vmatpush2.msra.mxu0 %v334
  %1257 = vmatprep.subr.mxu0 0.0
  %1258 = vmatpush2.msra.mxu0 %v333
  %1259 = vmatprep.subr.mxu0 0.0
  %1260 = vmatpush2.msra.mxu0 %v332
  %1261 = vmatprep.subr.mxu0 0.0
  %1262 = vmatpush2.msra.mxu0 %v331
  %1263 = vmatprep.subr.mxu0 0.0
  %1264 = vmatpush2.msra.mxu0 %v330
  %1265 = vmatprep.subr.mxu0 0.0
  %1266 = vmatpush2.msra.mxu0 %v329
  %1267 = vmatprep.subr.mxu0 0.0
  %1268 = vmatpush2.msra.mxu0 %v328
  %1269 = vmatprep.mubr.f32.mxu0 %v29
  %1270 = vmatmul.mubr.f32.gmra.mxu0 %v28
  %v1271 = vpop.f32.mrf.mxu0
  %v1272 = vadd.f32 %v1197, %v1271
  %v1273 = vpop.f32.mrf.mxu0
  %1274 = vmatprep.mubr.f32.mxu0 %v66
  %1275 = vmatmul.mubr.f32.gmra.mxu0 %v65
  %v1276 = vpop.f32.mrf.mxu0
  %v1277 = vadd.f32 %v1202, %v1276
  %v1278 = vpop.f32.mrf.mxu0
  %1279 = vdwg.mxu0
  %1280 = vmatprep.subr.mxu0 0.0
  %1281 = vmatpush1.msra.mxu0 %v359
  %1282 = vmatprep.subr.mxu0 0.0
  %1283 = vmatpush1.msra.mxu0 %v358
  %1284 = vmatprep.subr.mxu0 0.0
  %1285 = vmatpush1.msra.mxu0 %v357
  %1286 = vmatprep.subr.mxu0 0.0
  %1287 = vmatpush1.msra.mxu0 %v356
  %1288 = vmatprep.subr.mxu0 0.0
  %1289 = vmatpush1.msra.mxu0 %v355
  %1290 = vmatprep.subr.mxu0 0.0
  %1291 = vmatpush1.msra.mxu0 %v354
  %1292 = vmatprep.subr.mxu0 0.0
  %1293 = vmatpush1.msra.mxu0 %v353
  %1294 = vmatprep.subr.mxu0 0.0
  %1295 = vmatpush1.msra.mxu0 %v352
  %1296 = vmatprep.subr.mxu0 0.0
  %1297 = vmatpush1.msra.mxu0 %v351
  %1298 = vmatprep.subr.mxu0 0.0
  %1299 = vmatpush1.msra.mxu0 %v350
  %1300 = vmatprep.subr.mxu0 0.0
  %1301 = vmatpush1.msra.mxu0 %v349
  %1302 = vmatprep.subr.mxu0 0.0
  %1303 = vmatpush1.msra.mxu0 %v348
  %1304 = vmatprep.subr.mxu0 0.0
  %1305 = vmatpush1.msra.mxu0 %v347
  %1306 = vmatprep.subr.mxu0 0.0
  %1307 = vmatpush1.msra.mxu0 %v346
  %1308 = vmatprep.subr.mxu0 0.0
  %1309 = vmatpush1.msra.mxu0 %v345
  %1310 = vmatprep.subr.mxu0 0.0
  %1311 = vmatpush1.msra.mxu0 %v344
  %1312 = vmatprep.subr.mxu0 0.0
  %1313 = vmatpush2.msra.mxu0 %v375
  %1314 = vmatprep.subr.mxu0 0.0
  %1315 = vmatpush2.msra.mxu0 %v374
  %1316 = vmatprep.subr.mxu0 0.0
  %1317 = vmatpush2.msra.mxu0 %v373
  %1318 = vmatprep.subr.mxu0 0.0
  %1319 = vmatpush2.msra.mxu0 %v372
  %1320 = vmatprep.subr.mxu0 0.0
  %1321 = vmatpush2.msra.mxu0 %v371
  %1322 = vmatprep.subr.mxu0 0.0
  %1323 = vmatpush2.msra.mxu0 %v370
  %1324 = vmatprep.subr.mxu0 0.0
  %1325 = vmatpush2.msra.mxu0 %v369
  %1326 = vmatprep.subr.mxu0 0.0
  %1327 = vmatpush2.msra.mxu0 %v368
  %1328 = vmatprep.subr.mxu0 0.0
  %1329 = vmatpush2.msra.mxu0 %v367
  %1330 = vmatprep.subr.mxu0 0.0
  %1331 = vmatpush2.msra.mxu0 %v366
  %1332 = vmatprep.subr.mxu0 0.0
  %1333 = vmatpush2.msra.mxu0 %v365
  %1334 = vmatprep.subr.mxu0 0.0
  %1335 = vmatpush2.msra.mxu0 %v364
  %1336 = vmatprep.subr.mxu0 0.0
  %1337 = vmatpush2.msra.mxu0 %v363
  %1338 = vmatprep.subr.mxu0 0.0
  %1339 = vmatpush2.msra.mxu0 %v362
  %1340 = vmatprep.subr.mxu0 0.0
  %1341 = vmatpush2.msra.mxu0 %v361
  %1342 = vmatprep.subr.mxu0 0.0
  %1343 = vmatpush2.msra.mxu0 %v360
  %1344 = vmatprep.mubr.f32.mxu0 %v31
  %1345 = vmatmul.mubr.f32.gmra.mxu0 %v30
  %v1346 = vpop.f32.mrf.mxu0
  %v1347 = vadd.f32 %v1272, %v1346
  %v1348 = vpop.f32.mrf.mxu0
  %1349 = vmatprep.mubr.f32.mxu0 %v68
  %1350 = vmatmul.mubr.f32.gmra.mxu0 %v67
  %v1351 = vpop.f32.mrf.mxu0
  %v1352 = vadd.f32 %v1277, %v1351
  %v1353 = vpop.f32.mrf.mxu0
  %1354 = vdwg.mxu0
  %1355 = vmatprep.subr.mxu0 0.0
  %1356 = vmatpush1.msra.mxu0 %v391
  %1357 = vmatprep.subr.mxu0 0.0
  %1358 = vmatpush1.msra.mxu0 %v390
  %1359 = vmatprep.subr.mxu0 0.0
  %1360 = vmatpush1.msra.mxu0 %v389
  %1361 = vmatprep.subr.mxu0 0.0
  %1362 = vmatpush1.msra.mxu0 %v388
  %1363 = vmatprep.subr.mxu0 0.0
  %1364 = vmatpush1.msra.mxu0 %v387
  %1365 = vmatprep.subr.mxu0 0.0
  %1366 = vmatpush1.msra.mxu0 %v386
  %1367 = vmatprep.subr.mxu0 0.0
  %1368 = vmatpush1.msra.mxu0 %v385
  %1369 = vmatprep.subr.mxu0 0.0
  %1370 = vmatpush1.msra.mxu0 %v384
  %1371 = vmatprep.subr.mxu0 0.0
  %1372 = vmatpush1.msra.mxu0 %v383
  %1373 = vmatprep.subr.mxu0 0.0
  %1374 = vmatpush1.msra.mxu0 %v382
  %1375 = vmatprep.subr.mxu0 0.0
  %1376 = vmatpush1.msra.mxu0 %v381
  %1377 = vmatprep.subr.mxu0 0.0
  %1378 = vmatpush1.msra.mxu0 %v380
  %1379 = vmatprep.subr.mxu0 0.0
  %1380 = vmatpush1.msra.mxu0 %v379
  %1381 = vmatprep.subr.mxu0 0.0
  %1382 = vmatpush1.msra.mxu0 %v378
  %1383 = vmatprep.subr.mxu0 0.0
  %1384 = vmatpush1.msra.mxu0 %v377
  %1385 = vmatprep.subr.mxu0 0.0
  %1386 = vmatpush1.msra.mxu0 %v376
  %1387 = vmatprep.subr.mxu0 0.0
  %1388 = vmatpush2.msra.mxu0 %v407
  %1389 = vmatprep.subr.mxu0 0.0
  %1390 = vmatpush2.msra.mxu0 %v406
  %1391 = vmatprep.subr.mxu0 0.0
  %1392 = vmatpush2.msra.mxu0 %v405
  %1393 = vmatprep.subr.mxu0 0.0
  %1394 = vmatpush2.msra.mxu0 %v404
  %1395 = vmatprep.subr.mxu0 0.0
  %1396 = vmatpush2.msra.mxu0 %v403
  %1397 = vmatprep.subr.mxu0 0.0
  %1398 = vmatpush2.msra.mxu0 %v402
  %1399 = vmatprep.subr.mxu0 0.0
  %1400 = vmatpush2.msra.mxu0 %v401
  %1401 = vmatprep.subr.mxu0 0.0
  %1402 = vmatpush2.msra.mxu0 %v400
  %1403 = vmatprep.subr.mxu0 0.0
  %1404 = vmatpush2.msra.mxu0 %v399
  %1405 = vmatprep.subr.mxu0 0.0
  %1406 = vmatpush2.msra.mxu0 %v398
  %1407 = vmatprep.subr.mxu0 0.0
  %1408 = vmatpush2.msra.mxu0 %v397
  %1409 = vmatprep.subr.mxu0 0.0
  %1410 = vmatpush2.msra.mxu0 %v396
  %1411 = vmatprep.subr.mxu0 0.0
  %1412 = vmatpush2.msra.mxu0 %v395
  %1413 = vmatprep.subr.mxu0 0.0
  %1414 = vmatpush2.msra.mxu0 %v394
  %1415 = vmatprep.subr.mxu0 0.0
  %1416 = vmatpush2.msra.mxu0 %v393
  %1417 = vmatprep.subr.mxu0 0.0
  %1418 = vmatpush2.msra.mxu0 %v392
  %1419 = vmatprep.mubr.f32.mxu0 %v33
  %1420 = vmatmul.mubr.f32.gmra.mxu0 %v32
  %v1421 = vpop.f32.mrf.mxu0
  %v1422 = vadd.f32 %v1347, %v1421
  %v1423 = vpop.f32.mrf.mxu0
  %1424 = vmatprep.mubr.f32.mxu0 %v70
  %1425 = vmatmul.mubr.f32.gmra.mxu0 %v69
  %v1426 = vpop.f32.mrf.mxu0
  %v1427 = vadd.f32 %v1352, %v1426
  %v1428 = vpop.f32.mrf.mxu0
  %1429 = vdwg.mxu0
  %1430 = vmatprep.subr.mxu0 0.0
  %1431 = vmatpush1.msra.mxu0 %v423
  %1432 = vmatprep.subr.mxu0 0.0
  %1433 = vmatpush1.msra.mxu0 %v422
  %1434 = vmatprep.subr.mxu0 0.0
  %1435 = vmatpush1.msra.mxu0 %v421
  %1436 = vmatprep.subr.mxu0 0.0
  %1437 = vmatpush1.msra.mxu0 %v420
  %1438 = vmatprep.subr.mxu0 0.0
  %1439 = vmatpush1.msra.mxu0 %v419
  %1440 = vmatprep.subr.mxu0 0.0
  %1441 = vmatpush1.msra.mxu0 %v418
  %1442 = vmatprep.subr.mxu0 0.0
  %1443 = vmatpush1.msra.mxu0 %v417
  %1444 = vmatprep.subr.mxu0 0.0
  %1445 = vmatpush1.msra.mxu0 %v416
  %1446 = vmatprep.subr.mxu0 0.0
  %1447 = vmatpush1.msra.mxu0 %v415
  %1448 = vmatprep.subr.mxu0 0.0
  %1449 = vmatpush1.msra.mxu0 %v414
  %1450 = vmatprep.subr.mxu0 0.0
  %1451 = vmatpush1.msra.mxu0 %v413
  %1452 = vmatprep.subr.mxu0 0.0
  %1453 = vmatpush1.msra.mxu0 %v412
  %1454 = vmatprep.subr.mxu0 0.0
  %1455 = vmatpush1.msra.mxu0 %v411
  %1456 = vmatprep.subr.mxu0 0.0
  %1457 = vmatpush1.msra.mxu0 %v410
  %1458 = vmatprep.subr.mxu0 0.0
  %1459 = vmatpush1.msra.mxu0 %v409
  %1460 = vmatprep.subr.mxu0 0.0
  %1461 = vmatpush1.msra.mxu0 %v408
  %1462 = vmatprep.subr.mxu0 0.0
  %1463 = vmatpush2.msra.mxu0 %v439
  %1464 = vmatprep.subr.mxu0 0.0
  %1465 = vmatpush2.msra.mxu0 %v438
  %1466 = vmatprep.subr.mxu0 0.0
  %1467 = vmatpush2.msra.mxu0 %v437
  %1468 = vmatprep.subr.mxu0 0.0
  %1469 = vmatpush2.msra.mxu0 %v436
  %1470 = vmatprep.subr.mxu0 0.0
  %1471 = vmatpush2.msra.mxu0 %v435
  %1472 = vmatprep.subr.mxu0 0.0
  %1473 = vmatpush2.msra.mxu0 %v434
  %1474 = vmatprep.subr.mxu0 0.0
  %1475 = vmatpush2.msra.mxu0 %v433
  %1476 = vmatprep.subr.mxu0 0.0
  %1477 = vmatpush2.msra.mxu0 %v432
  %1478 = vmatprep.subr.mxu0 0.0
  %1479 = vmatpush2.msra.mxu0 %v431
  %1480 = vmatprep.subr.mxu0 0.0
  %1481 = vmatpush2.msra.mxu0 %v430
  %1482 = vmatprep.subr.mxu0 0.0
  %1483 = vmatpush2.msra.mxu0 %v429
  %1484 = vmatprep.subr.mxu0 0.0
  %1485 = vmatpush2.msra.mxu0 %v428
  %1486 = vmatprep.subr.mxu0 0.0
  %1487 = vmatpush2.msra.mxu0 %v427
  %1488 = vmatprep.subr.mxu0 0.0
  %1489 = vmatpush2.msra.mxu0 %v426
  %1490 = vmatprep.subr.mxu0 0.0
  %1491 = vmatpush2.msra.mxu0 %v425
  %1492 = vmatprep.subr.mxu0 0.0
  %1493 = vmatpush2.msra.mxu0 %v424
  %1494 = vmatprep.mubr.f32.mxu0 %v35
  %1495 = vmatmul.mubr.f32.gmra.mxu0 %v34
  %v1496 = vpop.f32.mrf.mxu0
  %v1497 = vadd.f32 %v1422, %v1496
  %v1498 = vpop.f32.mrf.mxu0
  %1499 = vmatprep.mubr.f32.mxu0 %v72
  %1500 = vmatmul.mubr.f32.gmra.mxu0 %v71
  %v1501 = vpop.f32.mrf.mxu0
  %v1502 = vadd.f32 %v1427, %v1501
  %v1503 = vpop.f32.mrf.mxu0
  %1504 = vdwg.mxu0
  %1505 = vmatprep.subr.mxu0 0.0
  %1506 = vmatpush1.msra.mxu0 %v455
  %1507 = vmatprep.subr.mxu0 0.0
  %1508 = vmatpush1.msra.mxu0 %v454
  %1509 = vmatprep.subr.mxu0 0.0
  %1510 = vmatpush1.msra.mxu0 %v453
  %1511 = vmatprep.subr.mxu0 0.0
  %1512 = vmatpush1.msra.mxu0 %v452
  %1513 = vmatprep.subr.mxu0 0.0
  %1514 = vmatpush1.msra.mxu0 %v451
  %1515 = vmatprep.subr.mxu0 0.0
  %1516 = vmatpush1.msra.mxu0 %v450
  %1517 = vmatprep.subr.mxu0 0.0
  %1518 = vmatpush1.msra.mxu0 %v449
  %1519 = vmatprep.subr.mxu0 0.0
  %1520 = vmatpush1.msra.mxu0 %v448
  %1521 = vmatprep.subr.mxu0 0.0
  %1522 = vmatpush1.msra.mxu0 %v447
  %1523 = vmatprep.subr.mxu0 0.0
  %1524 = vmatpush1.msra.mxu0 %v446
  %1525 = vmatprep.subr.mxu0 0.0
  %1526 = vmatpush1.msra.mxu0 %v445
  %1527 = vmatprep.subr.mxu0 0.0
  %1528 = vmatpush1.msra.mxu0 %v444
  %1529 = vmatprep.subr.mxu0 0.0
  %1530 = vmatpush1.msra.mxu0 %v443
  %1531 = vmatprep.subr.mxu0 0.0
  %1532 = vmatpush1.msra.mxu0 %v442
  %1533 = vmatprep.subr.mxu0 0.0
  %1534 = vmatpush1.msra.mxu0 %v441
  %1535 = vmatprep.subr.mxu0 0.0
  %1536 = vmatpush1.msra.mxu0 %v440
  %1537 = vmatprep.subr.mxu0 0.0
  %1538 = vmatpush2.msra.mxu0 %v471
  %1539 = vmatprep.subr.mxu0 0.0
  %1540 = vmatpush2.msra.mxu0 %v470
  %1541 = vmatprep.subr.mxu0 0.0
  %1542 = vmatpush2.msra.mxu0 %v469
  %1543 = vmatprep.subr.mxu0 0.0
  %1544 = vmatpush2.msra.mxu0 %v468
  %1545 = vmatprep.subr.mxu0 0.0
  %1546 = vmatpush2.msra.mxu0 %v467
  %1547 = vmatprep.subr.mxu0 0.0
  %1548 = vmatpush2.msra.mxu0 %v466
  %1549 = vmatprep.subr.mxu0 0.0
  %1550 = vmatpush2.msra.mxu0 %v465
  %1551 = vmatprep.subr.mxu0 0.0
  %1552 = vmatpush2.msra.mxu0 %v464
  %1553 = vmatprep.subr.mxu0 0.0
  %1554 = vmatpush2.msra.mxu0 %v463
  %1555 = vmatprep.subr.mxu0 0.0
  %1556 = vmatpush2.msra.mxu0 %v462
  %1557 = vmatprep.subr.mxu0 0.0
  %1558 = vmatpush2.msra.mxu0 %v461
  %1559 = vmatprep.subr.mxu0 0.0
  %1560 = vmatpush2.msra.mxu0 %v460
  %1561 = vmatprep.subr.mxu0 0.0
  %1562 = vmatpush2.msra.mxu0 %v459
  %1563 = vmatprep.subr.mxu0 0.0
  %1564 = vmatpush2.msra.mxu0 %v458
  %1565 = vmatprep.subr.mxu0 0.0
  %1566 = vmatpush2.msra.mxu0 %v457
  %1567 = vmatprep.subr.mxu0 0.0
  %1568 = vmatpush2.msra.mxu0 %v456
  %1569 = vmatprep.mubr.f32.mxu0 %v37
  %1570 = vmatmul.mubr.f32.gmra.mxu0 %v36
  %v1571 = vpop.f32.mrf.mxu0
  %v1572 = vadd.f32 %v1497, %v1571
  %v1573 = vpop.f32.mrf.mxu0
  %1574 = vmatprep.mubr.f32.mxu0 %v74
  %1575 = vmatmul.mubr.f32.gmra.mxu0 %v73
  %v1576 = vpop.f32.mrf.mxu0
  %v1577 = vadd.f32 %v1502, %v1576
  %v1578 = vpop.f32.mrf.mxu0
  %1579 = vdwg.mxu0
  %1580 = vmatprep.subr.mxu0 0.0
  %1581 = vmatpush1.msra.mxu0 %v487
  %1582 = vmatprep.subr.mxu0 0.0
  %1583 = vmatpush1.msra.mxu0 %v486
  %1584 = vmatprep.subr.mxu0 0.0
  %1585 = vmatpush1.msra.mxu0 %v485
  %1586 = vmatprep.subr.mxu0 0.0
  %1587 = vmatpush1.msra.mxu0 %v484
  %1588 = vmatprep.subr.mxu0 0.0
  %1589 = vmatpush1.msra.mxu0 %v483
  %1590 = vmatprep.subr.mxu0 0.0
  %1591 = vmatpush1.msra.mxu0 %v482
  %1592 = vmatprep.subr.mxu0 0.0
  %1593 = vmatpush1.msra.mxu0 %v481
  %1594 = vmatprep.subr.mxu0 0.0
  %1595 = vmatpush1.msra.mxu0 %v480
  %1596 = vmatprep.subr.mxu0 0.0
  %1597 = vmatpush1.msra.mxu0 %v479
  %1598 = vmatprep.subr.mxu0 0.0
  %1599 = vmatpush1.msra.mxu0 %v478
  %1600 = vmatprep.subr.mxu0 0.0
  %1601 = vmatpush1.msra.mxu0 %v477
  %1602 = vmatprep.subr.mxu0 0.0
  %1603 = vmatpush1.msra.mxu0 %v476
  %1604 = vmatprep.subr.mxu0 0.0
  %1605 = vmatpush1.msra.mxu0 %v475
  %1606 = vmatprep.subr.mxu0 0.0
  %1607 = vmatpush1.msra.mxu0 %v474
  %1608 = vmatprep.subr.mxu0 0.0
  %1609 = vmatpush1.msra.mxu0 %v473
  %1610 = vmatprep.subr.mxu0 0.0
  %1611 = vmatpush1.msra.mxu0 %v472
  %1612 = vmatprep.subr.mxu0 0.0
  %1613 = vmatpush2.msra.mxu0 %v503
  %1614 = vmatprep.subr.mxu0 0.0
  %1615 = vmatpush2.msra.mxu0 %v502
  %1616 = vmatprep.subr.mxu0 0.0
  %1617 = vmatpush2.msra.mxu0 %v501
  %1618 = vmatprep.subr.mxu0 0.0
  %1619 = vmatpush2.msra.mxu0 %v500
  %1620 = vmatprep.subr.mxu0 0.0
  %1621 = vmatpush2.msra.mxu0 %v499
  %1622 = vmatprep.subr.mxu0 0.0
  %1623 = vmatpush2.msra.mxu0 %v498
  %1624 = vmatprep.subr.mxu0 0.0
  %1625 = vmatpush2.msra.mxu0 %v497
  %1626 = vmatprep.subr.mxu0 0.0
  %1627 = vmatpush2.msra.mxu0 %v496
  %1628 = vmatprep.subr.mxu0 0.0
  %1629 = vmatpush2.msra.mxu0 %v495
  %1630 = vmatprep.subr.mxu0 0.0
  %1631 = vmatpush2.msra.mxu0 %v494
  %1632 = vmatprep.subr.mxu0 0.0
  %1633 = vmatpush2.msra.mxu0 %v493
  %1634 = vmatprep.subr.mxu0 0.0
  %1635 = vmatpush2.msra.mxu0 %v492
  %1636 = vmatprep.subr.mxu0 0.0
  %1637 = vmatpush2.msra.mxu0 %v491
  %1638 = vmatprep.subr.mxu0 0.0
  %1639 = vmatpush2.msra.mxu0 %v490
  %1640 = vmatprep.subr.mxu0 0.0
  %1641 = vmatpush2.msra.mxu0 %v489
  %1642 = vmatprep.subr.mxu0 0.0
  %1643 = vmatpush2.msra.mxu0 %v488
  %1644 = vmatprep.mubr.f32.mxu0 %v39
  %1645 = vmatmul.mubr.f32.gmra.mxu0 %v38
  %v1646 = vpop.f32.mrf.mxu0
  %v1647 = vadd.f32 %v1572, %v1646
  %v1648 = vpop.f32.mrf.mxu0
  %1649 = vmatprep.mubr.f32.mxu0 %v76
  %1650 = vmatmul.mubr.f32.gmra.mxu0 %v75
  %v1651 = vpop.f32.mrf.mxu0
  %v1652 = vadd.f32 %v1577, %v1651
  %v1653 = vpop.f32.mrf.mxu0
  %1654 = vdwg.mxu0
  %1655 = vmatprep.subr.mxu0 0.0
  %1656 = vmatpush1.msra.mxu0 %v519
  %1657 = vmatprep.subr.mxu0 0.0
  %1658 = vmatpush1.msra.mxu0 %v518
  %1659 = vmatprep.subr.mxu0 0.0
  %1660 = vmatpush1.msra.mxu0 %v517
  %1661 = vmatprep.subr.mxu0 0.0
  %1662 = vmatpush1.msra.mxu0 %v516
  %1663 = vmatprep.subr.mxu0 0.0
  %1664 = vmatpush1.msra.mxu0 %v515
  %1665 = vmatprep.subr.mxu0 0.0
  %1666 = vmatpush1.msra.mxu0 %v514
  %1667 = vmatprep.subr.mxu0 0.0
  %1668 = vmatpush1.msra.mxu0 %v513
  %1669 = vmatprep.subr.mxu0 0.0
  %1670 = vmatpush1.msra.mxu0 %v512
  %1671 = vmatprep.subr.mxu0 0.0
  %1672 = vmatpush1.msra.mxu0 %v511
  %1673 = vmatprep.subr.mxu0 0.0
  %1674 = vmatpush1.msra.mxu0 %v510
  %1675 = vmatprep.subr.mxu0 0.0
  %1676 = vmatpush1.msra.mxu0 %v509
  %1677 = vmatprep.subr.mxu0 0.0
  %1678 = vmatpush1.msra.mxu0 %v508
  %1679 = vmatprep.subr.mxu0 0.0
  %1680 = vmatpush1.msra.mxu0 %v507
  %1681 = vmatprep.subr.mxu0 0.0
  %1682 = vmatpush1.msra.mxu0 %v506
  %1683 = vmatprep.subr.mxu0 0.0
  %1684 = vmatpush1.msra.mxu0 %v505
  %1685 = vmatprep.subr.mxu0 0.0
  %1686 = vmatpush1.msra.mxu0 %v504
  %1687 = vmatprep.subr.mxu0 0.0
  %1688 = vmatpush2.msra.mxu0 %v535
  %1689 = vmatprep.subr.mxu0 0.0
  %1690 = vmatpush2.msra.mxu0 %v534
  %1691 = vmatprep.subr.mxu0 0.0
  %1692 = vmatpush2.msra.mxu0 %v533
  %1693 = vmatprep.subr.mxu0 0.0
  %1694 = vmatpush2.msra.mxu0 %v532
  %1695 = vmatprep.subr.mxu0 0.0
  %1696 = vmatpush2.msra.mxu0 %v531
  %1697 = vmatprep.subr.mxu0 0.0
  %1698 = vmatpush2.msra.mxu0 %v530
  %1699 = vmatprep.subr.mxu0 0.0
  %1700 = vmatpush2.msra.mxu0 %v529
  %1701 = vmatprep.subr.mxu0 0.0
  %1702 = vmatpush2.msra.mxu0 %v528
  %1703 = vmatprep.subr.mxu0 0.0
  %1704 = vmatpush2.msra.mxu0 %v527
  %1705 = vmatprep.subr.mxu0 0.0
  %1706 = vmatpush2.msra.mxu0 %v526
  %1707 = vmatprep.subr.mxu0 0.0
  %1708 = vmatpush2.msra.mxu0 %v525
  %1709 = vmatprep.subr.mxu0 0.0
  %1710 = vmatpush2.msra.mxu0 %v524
  %1711 = vmatprep.subr.mxu0 0.0
  %1712 = vmatpush2.msra.mxu0 %v523
  %1713 = vmatprep.subr.mxu0 0.0
  %1714 = vmatpush2.msra.mxu0 %v522
  %1715 = vmatprep.subr.mxu0 0.0
  %1716 = vmatpush2.msra.mxu0 %v521
  %1717 = vmatprep.subr.mxu0 0.0
  %1718 = vmatpush2.msra.mxu0 %v520
  %1719 = vmatprep.mubr.f32.mxu0 %v41
  %1720 = vmatmul.mubr.f32.gmra.mxu0 %v40
  %v1721 = vpop.f32.mrf.mxu0
  %v1722 = vadd.f32 %v1647, %v1721
  %v1723 = vpop.f32.mrf.mxu0
  %1724 = vmatprep.mubr.f32.mxu0 %v78
  %1725 = vmatmul.mubr.f32.gmra.mxu0 %v77
  %v1726 = vpop.f32.mrf.mxu0
  %v1727 = vadd.f32 %v1652, %v1726
  %v1728 = vpop.f32.mrf.mxu0
  %1729 = vdwg.mxu0
  %1730 = vmatprep.subr.mxu0 0.0
  %1731 = vmatpush1.msra.mxu0 %v551
  %1732 = vmatprep.subr.mxu0 0.0
  %1733 = vmatpush1.msra.mxu0 %v550
  %1734 = vmatprep.subr.mxu0 0.0
  %1735 = vmatpush1.msra.mxu0 %v549
  %1736 = vmatprep.subr.mxu0 0.0
  %1737 = vmatpush1.msra.mxu0 %v548
  %1738 = vmatprep.subr.mxu0 0.0
  %1739 = vmatpush1.msra.mxu0 %v547
  %1740 = vmatprep.subr.mxu0 0.0
  %1741 = vmatpush1.msra.mxu0 %v546
  %1742 = vmatprep.subr.mxu0 0.0
  %1743 = vmatpush1.msra.mxu0 %v545
  %1744 = vmatprep.subr.mxu0 0.0
  %1745 = vmatpush1.msra.mxu0 %v544
  %1746 = vmatprep.subr.mxu0 0.0
  %1747 = vmatpush1.msra.mxu0 %v543
  %1748 = vmatprep.subr.mxu0 0.0
  %1749 = vmatpush1.msra.mxu0 %v542
  %1750 = vmatprep.subr.mxu0 0.0
  %1751 = vmatpush1.msra.mxu0 %v541
  %1752 = vmatprep.subr.mxu0 0.0
  %1753 = vmatpush1.msra.mxu0 %v540
  %1754 = vmatprep.subr.mxu0 0.0
  %1755 = vmatpush1.msra.mxu0 %v539
  %1756 = vmatprep.subr.mxu0 0.0
  %1757 = vmatpush1.msra.mxu0 %v538
  %1758 = vmatprep.subr.mxu0 0.0
  %1759 = vmatpush1.msra.mxu0 %v537
  %1760 = vmatprep.subr.mxu0 0.0
  %1761 = vmatpush1.msra.mxu0 %v536
  %1762 = vmatprep.subr.mxu0 0.0
  %1763 = vmatpush2.msra.mxu0 %v567
  %1764 = vmatprep.subr.mxu0 0.0
  %1765 = vmatpush2.msra.mxu0 %v566
  %1766 = vmatprep.subr.mxu0 0.0
  %1767 = vmatpush2.msra.mxu0 %v565
  %1768 = vmatprep.subr.mxu0 0.0
  %1769 = vmatpush2.msra.mxu0 %v564
  %1770 = vmatprep.subr.mxu0 0.0
  %1771 = vmatpush2.msra.mxu0 %v563
  %1772 = vmatprep.subr.mxu0 0.0
  %1773 = vmatpush2.msra.mxu0 %v562
  %1774 = vmatprep.subr.mxu0 0.0
  %1775 = vmatpush2.msra.mxu0 %v561
  %1776 = vmatprep.subr.mxu0 0.0
  %1777 = vmatpush2.msra.mxu0 %v560
  %1778 = vmatprep.subr.mxu0 0.0
  %1779 = vmatpush2.msra.mxu0 %v559
  %1780 = vmatprep.subr.mxu0 0.0
  %1781 = vmatpush2.msra.mxu0 %v558
  %1782 = vmatprep.subr.mxu0 0.0
  %1783 = vmatpush2.msra.mxu0 %v557
  %1784 = vmatprep.subr.mxu0 0.0
  %1785 = vmatpush2.msra.mxu0 %v556
  %1786 = vmatprep.subr.mxu0 0.0
  %1787 = vmatpush2.msra.mxu0 %v555
  %1788 = vmatprep.subr.mxu0 0.0
  %1789 = vmatpush2.msra.mxu0 %v554
  %1790 = vmatprep.subr.mxu0 0.0
  %1791 = vmatpush2.msra.mxu0 %v553
  %1792 = vmatprep.subr.mxu0 0.0
  %1793 = vmatpush2.msra.mxu0 %v552
  %1794 = vmatprep.mubr.f32.mxu0 %v43
  %1795 = vmatmul.mubr.f32.gmra.mxu0 %v42
  %v1796 = vpop.f32.mrf.mxu0
  %v1797 = vadd.f32 %v1722, %v1796
  %v1798 = vpop.f32.mrf.mxu0
  %1799 = vmatprep.mubr.f32.mxu0 %v80
  %1800 = vmatmul.mubr.f32.gmra.mxu0 %v79
  %v1801 = vpop.f32.mrf.mxu0
  %v1802 = vadd.f32 %v1727, %v1801
  %v1803 = vpop.f32.mrf.mxu0
  %1804 = vdwg.mxu0
  %1805 = vmatprep.subr.mxu0 0.0
  %1806 = vmatpush1.msra.mxu0 %v583
  %1807 = vmatprep.subr.mxu0 0.0
  %1808 = vmatpush1.msra.mxu0 %v582
  %1809 = vmatprep.subr.mxu0 0.0
  %1810 = vmatpush1.msra.mxu0 %v581
  %1811 = vmatprep.subr.mxu0 0.0
  %1812 = vmatpush1.msra.mxu0 %v580
  %1813 = vmatprep.subr.mxu0 0.0
  %1814 = vmatpush1.msra.mxu0 %v579
  %1815 = vmatprep.subr.mxu0 0.0
  %1816 = vmatpush1.msra.mxu0 %v578
  %1817 = vmatprep.subr.mxu0 0.0
  %1818 = vmatpush1.msra.mxu0 %v577
  %1819 = vmatprep.subr.mxu0 0.0
  %1820 = vmatpush1.msra.mxu0 %v576
  %1821 = vmatprep.subr.mxu0 0.0
  %1822 = vmatpush1.msra.mxu0 %v575
  %1823 = vmatprep.subr.mxu0 0.0
  %1824 = vmatpush1.msra.mxu0 %v574
  %1825 = vmatprep.subr.mxu0 0.0
  %1826 = vmatpush1.msra.mxu0 %v573
  %1827 = vmatprep.subr.mxu0 0.0
  %1828 = vmatpush1.msra.mxu0 %v572
  %1829 = vmatprep.subr.mxu0 0.0
  %1830 = vmatpush1.msra.mxu0 %v571
  %1831 = vmatprep.subr.mxu0 0.0
  %1832 = vmatpush1.msra.mxu0 %v570
  %1833 = vmatprep.subr.mxu0 0.0
  %1834 = vmatpush1.msra.mxu0 %v569
  %1835 = vmatprep.subr.mxu0 0.0
  %1836 = vmatpush1.msra.mxu0 %v568
  %1837 = vmatprep.subr.mxu0 0.0
  %1838 = vmatpush2.msra.mxu0 %v599
  %1839 = vmatprep.subr.mxu0 0.0
  %1840 = vmatpush2.msra.mxu0 %v598
  %1841 = vmatprep.subr.mxu0 0.0
  %1842 = vmatpush2.msra.mxu0 %v597
  %1843 = vmatprep.subr.mxu0 0.0
  %1844 = vmatpush2.msra.mxu0 %v596
  %1845 = vmatprep.subr.mxu0 0.0
  %1846 = vmatpush2.msra.mxu0 %v595
  %1847 = vmatprep.subr.mxu0 0.0
  %1848 = vmatpush2.msra.mxu0 %v594
  %1849 = vmatprep.subr.mxu0 0.0
  %1850 = vmatpush2.msra.mxu0 %v593
  %1851 = vmatprep.subr.mxu0 0.0
  %1852 = vmatpush2.msra.mxu0 %v592
  %1853 = vmatprep.subr.mxu0 0.0
  %1854 = vmatpush2.msra.mxu0 %v591
  %1855 = vmatprep.subr.mxu0 0.0
  %1856 = vmatpush2.msra.mxu0 %v590
  %1857 = vmatprep.subr.mxu0 0.0
  %1858 = vmatpush2.msra.mxu0 %v589
  %1859 = vmatprep.subr.mxu0 0.0
  %1860 = vmatpush2.msra.mxu0 %v588
  %1861 = vmatprep.subr.mxu0 0.0
  %1862 = vmatpush2.msra.mxu0 %v587
  %1863 = vmatprep.subr.mxu0 0.0
  %1864 = vmatpush2.msra.mxu0 %v586
  %1865 = vmatprep.subr.mxu0 0.0
  %1866 = vmatpush2.msra.mxu0 %v585
  %1867 = vmatprep.subr.mxu0 0.0
  %1868 = vmatpush2.msra.mxu0 %v584
  %1869 = vmatprep.mubr.f32.mxu0 %v45
  %1870 = vmatmul.mubr.f32.gmra.mxu0 %v44
  %v1871 = vpop.f32.mrf.mxu0
  %v1872 = vadd.f32 %v1797, %v1871
  %v1873 = vpop.f32.mrf.mxu0
  %1874 = vmatprep.mubr.f32.mxu0 %v82
  %1875 = vmatmul.mubr.f32.gmra.mxu0 %v81
  %v1876 = vpop.f32.mrf.mxu0
  %v1877 = vadd.f32 %v1802, %v1876
  %v1878 = vpop.f32.mrf.mxu0
  %1879 = vdwg.mxu0
  %1880 = vmatprep.subr.mxu0 0.0
  %1881 = vmatpush1.msra.mxu0 %v615
  %1882 = vmatprep.subr.mxu0 0.0
  %1883 = vmatpush1.msra.mxu0 %v614
  %1884 = vmatprep.subr.mxu0 0.0
  %1885 = vmatpush1.msra.mxu0 %v613
  %1886 = vmatprep.subr.mxu0 0.0
  %1887 = vmatpush1.msra.mxu0 %v612
  %1888 = vmatprep.subr.mxu0 0.0
  %1889 = vmatpush1.msra.mxu0 %v611
  %1890 = vmatprep.subr.mxu0 0.0
  %1891 = vmatpush1.msra.mxu0 %v610
  %1892 = vmatprep.subr.mxu0 0.0
  %1893 = vmatpush1.msra.mxu0 %v609
  %1894 = vmatprep.subr.mxu0 0.0
  %1895 = vmatpush1.msra.mxu0 %v608
  %1896 = vmatprep.subr.mxu0 0.0
  %1897 = vmatpush1.msra.mxu0 %v607
  %1898 = vmatprep.subr.mxu0 0.0
  %1899 = vmatpush1.msra.mxu0 %v606
  %1900 = vmatprep.subr.mxu0 0.0
  %1901 = vmatpush1.msra.mxu0 %v605
  %1902 = vmatprep.subr.mxu0 0.0
  %1903 = vmatpush1.msra.mxu0 %v604
  %1904 = vmatprep.subr.mxu0 0.0
  %1905 = vmatpush1.msra.mxu0 %v603
  %1906 = vmatprep.subr.mxu0 0.0
  %1907 = vmatpush1.msra.mxu0 %v602
  %1908 = vmatprep.subr.mxu0 0.0
  %1909 = vmatpush1.msra.mxu0 %v601
  %1910 = vmatprep.subr.mxu0 0.0
  %1911 = vmatpush1.msra.mxu0 %v600
  %1912 = vmatprep.subr.mxu0 0.0
  %1913 = vmatpush2.msra.mxu0 %v631
  %1914 = vmatprep.subr.mxu0 0.0
  %1915 = vmatpush2.msra.mxu0 %v630
  %1916 = vmatprep.subr.mxu0 0.0
  %1917 = vmatpush2.msra.mxu0 %v629
  %1918 = vmatprep.subr.mxu0 0.0
  %1919 = vmatpush2.msra.mxu0 %v628
  %1920 = vmatprep.subr.mxu0 0.0
  %1921 = vmatpush2.msra.mxu0 %v627
  %1922 = vmatprep.subr.mxu0 0.0
  %1923 = vmatpush2.msra.mxu0 %v626
  %1924 = vmatprep.subr.mxu0 0.0
  %1925 = vmatpush2.msra.mxu0 %v625
  %1926 = vmatprep.subr.mxu0 0.0
  %1927 = vmatpush2.msra.mxu0 %v624
  %1928 = vmatprep.subr.mxu0 0.0
  %1929 = vmatpush2.msra.mxu0 %v623
  %1930 = vmatprep.subr.mxu0 0.0
  %1931 = vmatpush2.msra.mxu0 %v622
  %1932 = vmatprep.subr.mxu0 0.0
  %1933 = vmatpush2.msra.mxu0 %v621
  %1934 = vmatprep.subr.mxu0 0.0
  %1935 = vmatpush2.msra.mxu0 %v620
  %1936 = vmatprep.subr.mxu0 0.0
  %1937 = vmatpush2.msra.mxu0 %v619
  %1938 = vmatprep.subr.mxu0 0.0
  %1939 = vmatpush2.msra.mxu0 %v618
  %1940 = vmatprep.subr.mxu0 0.0
  %1941 = vmatpush2.msra.mxu0 %v617
  %1942 = vmatprep.subr.mxu0 0.0
  %1943 = vmatpush2.msra.mxu0 %v616
  %1944 = vmatprep.mubr.f32.mxu0 %v47
  %1945 = vmatmul.mubr.f32.gmra.mxu0 %v46
  %v1946 = vpop.f32.mrf.mxu0
  %v1947 = vadd.f32 %v1872, %v1946
  %v1948 = vpop.f32.mrf.mxu0
  %1949 = vmatprep.mubr.f32.mxu0 %v84
  %1950 = vmatmul.mubr.f32.gmra.mxu0 %v83
  %v1951 = vpop.f32.mrf.mxu0
  %v1952 = vadd.f32 %v1877, %v1951
  %v1953 = vpop.f32.mrf.mxu0
  %1954 = vdwg.mxu0
  %1955 = vmatprep.subr.mxu0 0.0
  %1956 = vmatpush1.msra.mxu0 %v647
  %1957 = vmatprep.subr.mxu0 0.0
  %1958 = vmatpush1.msra.mxu0 %v646
  %1959 = vmatprep.subr.mxu0 0.0
  %1960 = vmatpush1.msra.mxu0 %v645
  %1961 = vmatprep.subr.mxu0 0.0
  %1962 = vmatpush1.msra.mxu0 %v644
  %1963 = vmatprep.subr.mxu0 0.0
  %1964 = vmatpush1.msra.mxu0 %v643
  %1965 = vmatprep.subr.mxu0 0.0
  %1966 = vmatpush1.msra.mxu0 %v642
  %1967 = vmatprep.subr.mxu0 0.0
  %1968 = vmatpush1.msra.mxu0 %v641
  %1969 = vmatprep.subr.mxu0 0.0
  %1970 = vmatpush1.msra.mxu0 %v640
  %1971 = vmatprep.subr.mxu0 0.0
  %1972 = vmatpush1.msra.mxu0 %v639
  %1973 = vmatprep.subr.mxu0 0.0
  %1974 = vmatpush1.msra.mxu0 %v638
  %1975 = vmatprep.subr.mxu0 0.0
  %1976 = vmatpush1.msra.mxu0 %v637
  %1977 = vmatprep.subr.mxu0 0.0
  %1978 = vmatpush1.msra.mxu0 %v636
  %1979 = vmatprep.subr.mxu0 0.0
  %1980 = vmatpush1.msra.mxu0 %v635
  %1981 = vmatprep.subr.mxu0 0.0
  %1982 = vmatpush1.msra.mxu0 %v634
  %1983 = vmatprep.subr.mxu0 0.0
  %1984 = vmatpush1.msra.mxu0 %v633
  %1985 = vmatprep.subr.mxu0 0.0
  %1986 = vmatpush1.msra.mxu0 %v632
  %1987 = vmatprep.subr.mxu0 0.0
  %1988 = vmatpush2.msra.mxu0 %v663
  %1989 = vmatprep.subr.mxu0 0.0
  %1990 = vmatpush2.msra.mxu0 %v662
  %1991 = vmatprep.subr.mxu0 0.0
  %1992 = vmatpush2.msra.mxu0 %v661
  %1993 = vmatprep.subr.mxu0 0.0
  %1994 = vmatpush2.msra.mxu0 %v660
  %1995 = vmatprep.subr.mxu0 0.0
  %1996 = vmatpush2.msra.mxu0 %v659
  %1997 = vmatprep.subr.mxu0 0.0
  %1998 = vmatpush2.msra.mxu0 %v658
  %1999 = vmatprep.subr.mxu0 0.0
  %2000 = vmatpush2.msra.mxu0 %v657
  %2001 = vmatprep.subr.mxu0 0.0
  %2002 = vmatpush2.msra.mxu0 %v656
  %2003 = vmatprep.subr.mxu0 0.0
  %2004 = vmatpush2.msra.mxu0 %v655
  %2005 = vmatprep.subr.mxu0 0.0
  %2006 = vmatpush2.msra.mxu0 %v654
  %2007 = vmatprep.subr.mxu0 0.0
  %2008 = vmatpush2.msra.mxu0 %v653
  %2009 = vmatprep.subr.mxu0 0.0
  %2010 = vmatpush2.msra.mxu0 %v652
  %2011 = vmatprep.subr.mxu0 0.0
  %2012 = vmatpush2.msra.mxu0 %v651
  %2013 = vmatprep.subr.mxu0 0.0
  %2014 = vmatpush2.msra.mxu0 %v650
  %2015 = vmatprep.subr.mxu0 0.0
  %2016 = vmatpush2.msra.mxu0 %v649
  %2017 = vmatprep.subr.mxu0 0.0
  %2018 = vmatpush2.msra.mxu0 %v648
  %2019 = vmatprep.mubr.f32.mxu0 %v49
  %2020 = vmatmul.mubr.f32.gmra.mxu0 %v48
  %v2021 = vpop.f32.mrf.mxu0
  %v2022 = vadd.f32 %v1947, %v2021
  %v2023 = vpop.f32.mrf.mxu0
  %2024 = vmatprep.mubr.f32.mxu0 %v86
  %2025 = vmatmul.mubr.f32.gmra.mxu0 %v85
  %v2026 = vpop.f32.mrf.mxu0
  %v2027 = vadd.f32 %v1952, %v2026
  %v2028 = vpop.f32.mrf.mxu0
  %2029 = vdwg.mxu0
  %2030 = vmatprep.subr.mxu0 0.0
  %2031 = vmatpush1.msra.mxu0 0.0
  %2032 = vmatprep.subr.mxu0 0.0
  %2033 = vmatpush1.msra.mxu0 0.0
  %2034 = vmatprep.subr.mxu0 0.0
  %2035 = vmatpush1.msra.mxu0 0.0
  %2036 = vmatprep.subr.mxu0 0.0
  %2037 = vmatpush1.msra.mxu0 0.0
  %2038 = vmatprep.subr.mxu0 0.0
  %2039 = vmatpush1.msra.mxu0 0.0
  %2040 = vmatprep.subr.mxu0 0.0
  %2041 = vmatpush1.msra.mxu0 0.0
  %2042 = vmatprep.subr.mxu0 0.0
  %2043 = vmatpush1.msra.mxu0 0.0
  %2044 = vmatprep.subr.mxu0 0.0
  %2045 = vmatpush1.msra.mxu0 0.0
  %2046 = vmatprep.subr.mxu0 0.0
  %2047 = vmatpush1.msra.mxu0 0.0
  %2048 = vmatprep.subr.mxu0 0.0
  %2049 = vmatpush1.msra.mxu0 0.0
  %2050 = vmatprep.subr.mxu0 0.0
  %2051 = vmatpush1.msra.mxu0 0.0
  %2052 = vmatprep.subr.mxu0 0.0
  %2053 = vmatpush1.msra.mxu0 0.0
  %2054 = vmatprep.subr.mxu0 0.0
  %2055 = vmatpush1.msra.mxu0 0.0
  %2056 = vmatprep.subr.mxu0 0.0
  %2057 = vmatpush1.msra.mxu0 0.0
  %2058 = vmatprep.subr.mxu0 0.0
  %2059 = vmatpush1.msra.mxu0 %v665
  %2060 = vmatprep.subr.mxu0 0.0
  %2061 = vmatpush1.msra.mxu0 %v664
  %2062 = vmatprep.subr.mxu0 0.0
  %2063 = vmatpush2.msra.mxu0 0.0
  %2064 = vmatprep.subr.mxu0 0.0
  %2065 = vmatpush2.msra.mxu0 0.0
  %2066 = vmatprep.subr.mxu0 0.0
  %2067 = vmatpush2.msra.mxu0 0.0
  %2068 = vmatprep.subr.mxu0 0.0
  %2069 = vmatpush2.msra.mxu0 0.0
  %2070 = vmatprep.subr.mxu0 0.0
  %2071 = vmatpush2.msra.mxu0 0.0
  %2072 = vmatprep.subr.mxu0 0.0
  %2073 = vmatpush2.msra.mxu0 0.0
  %2074 = vmatprep.subr.mxu0 0.0
  %2075 = vmatpush2.msra.mxu0 0.0
  %2076 = vmatprep.subr.mxu0 0.0
  %2077 = vmatpush2.msra.mxu0 0.0
  %2078 = vmatprep.subr.mxu0 0.0
  %2079 = vmatpush2.msra.mxu0 0.0
  %2080 = vmatprep.subr.mxu0 0.0
  %2081 = vmatpush2.msra.mxu0 0.0
  %2082 = vmatprep.subr.mxu0 0.0
  %2083 = vmatpush2.msra.mxu0 0.0
  %2084 = vmatprep.subr.mxu0 0.0
  %2085 = vmatpush2.msra.mxu0 0.0
  %2086 = vmatprep.subr.mxu0 0.0
  %2087 = vmatpush2.msra.mxu0 0.0
  %2088 = vmatprep.subr.mxu0 0.0
  %2089 = vmatpush2.msra.mxu0 0.0
  %2090 = vmatprep.subr.mxu0 0.0
  %2091 = vmatpush2.msra.mxu0 0.0
  %2092 = vmatprep.subr.mxu0 0.0
  %2093 = vmatpush2.msra.mxu0 0.0
  %2094 = vmatprep.mubr.f32.mxu0 0.0
  %2095 = vmatmul.mubr.f32.gmra.mxu0 %v675
  %v2096 = vpop.f32.mrf.mxu0
  %v2097 = vadd.f32 %v2022, %v2096
  %v2098 = vpop.f32.mrf.mxu0
  %2099 = vmatprep.mubr.f32.mxu0 0.0
  %2100 = vmatmul.mubr.f32.gmra.mxu0 %v678
  %v2101 = vpop.f32.mrf.mxu0
  %v2102 = vadd.f32 %v2027, %v2101
  %v2103 = vpop.f32.mrf.mxu0
  %2104 = vdwg.mxu0
  %2105 = vst [vmem:[%s3] sm:$0xff] %v2097
  %2106 = vst [vmem:[%s3 + $0x8] sm:$0xff] %v2102
  // Predicated region
  $region14: #{jepa_forward.6} parent=0 // pred_check
    _
  $region15: #{jepa_forward.6} parent=0 // pred_check_branch
    %2108 = sbr.rel (0) target = $region17
  $region16: #{jepa_forward.6} parent=0 // pred_region
    _
  $region17: #{jepa_forward.6} parent=0 // pred_fallthru
    _
  // Predicated region
  $region18: #{jepa_forward.6} parent=0 // pred_check
    _
  $region19: #{jepa_forward.6} parent=0 // pred_check_branch
    %2110 = sbr.rel (0) target = $region21
  $region20: #{jepa_forward.6} parent=0 // pred_region
    _
  $region21: #{jepa_forward.6} parent=0 // pred_fallthru
    _

// kernel: jepa_forward.7
$region0: #{jepa_forward.7}
  #allocation0 [shape = 'u32[]', space=smem, size = 0x4, offset = 0x4, fixed_abs, tag = 'smem constant byte address 0x4 - core index']
  #allocation1 [shape = 'u32[144,128]{1,0:T(1,128)}', space=vmem, size = 0x12000, scoped, tag = 'internal scratch']
  %s0 = inlined_call_operand.vmem [shape: f32[14,136], index: 0, kind: input, shape index: {}]
  %s1 = inlined_call_operand.vmem [shape: f32[136,128], index: 1, kind: input, shape index: {}]
  %s2 = inlined_call_operand.vmem [shape: f32[1,128], index: 2, kind: input, shape index: {}]
  %s3 = inlined_call_operand.vmem [shape: f32[14,128], index: 3, kind: output, shape index: {}]
  %s4 = sld [smem:[#allocation0]]
  $region22: #{jepa_forward.7} parent=0
    _
  %s6 = ssub.s32 1, %s4
  %s7 = scalar_select 0, %s6, %s4
  // Predicated region
  $region2: #{jepa_forward.7} parent=0 // pred_check
    _
  $region3: #{jepa_forward.7} parent=0 // pred_check_branch
    %9 = sbr.rel (0) target = $region5
  $region4: #{jepa_forward.7} parent=0 // pred_region
    _
  $region5: #{jepa_forward.7} parent=0 // pred_fallthru
    _
  // Predicated region
  $region6: #{jepa_forward.7} parent=0 // pred_check
    _
  $region7: #{jepa_forward.7} parent=0 // pred_check_branch
    %11 = sbr.rel (0) target = $region9
  $region8: #{jepa_forward.7} parent=0 // pred_region
    _
  $region9: #{jepa_forward.7} parent=0 // pred_fallthru
    _
  // Predicated region
  $region10: #{jepa_forward.7} parent=0 // pred_check
    _
  $region11: #{jepa_forward.7} parent=0 // pred_check_branch
    %13 = sbr.rel (0) target = $region13
  $region12: #{jepa_forward.7} parent=0 // pred_region
    _
  $region13: #{jepa_forward.7} parent=0 // pred_fallthru
    _
  %v14 = vld [vmem:[%s0] sm:$0xff]
  %v15 = vld [vmem:[%s0 + $0x8] sm:$0xff]
  %v16 = vld [vmem:[%s0 + $0x10] sm:$0x3f]
  %v17 = vld [vmem:[%s0 + $0x18] sm:$0x3f]
  %v18 = vld [vmem:[%s1] sm:$0xff]
  %v19 = vld [vmem:[%s1 + $0x8] sm:$0xff]
  %v20 = vld [vmem:[%s1 + $0x10] sm:$0xff]
  %v21 = vld [vmem:[%s1 + $0x18] sm:$0xff]
  %v22 = vld [vmem:[%s1 + $0x20] sm:$0xff]
  %v23 = vld [vmem:[%s1 + $0x28] sm:$0xff]
  %v24 = vld [vmem:[%s1 + $0x30] sm:$0xff]
  %v25 = vld [vmem:[%s1 + $0x38] sm:$0xff]
  %v26 = vld [vmem:[%s1 + $0x40] sm:$0xff]
  %v27 = vld [vmem:[%s1 + $0x48] sm:$0xff]
  %v28 = vld [vmem:[%s1 + $0x50] sm:$0xff]
  %v29 = vld [vmem:[%s1 + $0x58] sm:$0xff]
  %v30 = vld [vmem:[%s1 + $0x60] sm:$0xff]
  %v31 = vld [vmem:[%s1 + $0x68] sm:$0xff]
  %v32 = vld [vmem:[%s1 + $0x70] sm:$0xff]
  %v33 = vld [vmem:[%s1 + $0x78] sm:$0xff]
  %v34 = vld [vmem:[%s1 + $0x80] sm:$0xff]
  %v35 = vld [vmem:[%s2] sm:$0x1]
  %v37 = vlaneseq
  %v38 = vshrl.u32 %v37, 7
  %v39 = vsub.s32 0, %v38
  %v40 = vrot.slane %v35, %v39
  %vm42 = vcmask 64512
  %v44 = vsel %vm42, %v15, 0
  %v47 = vsel %vm42, %v17, 0
  %49 = vmatprep.subr.mxu0 0.0
  %50 = vmatpush1.msra.mxu0 %v33
  %51 = vmatprep.subr.mxu0 0.0
  %52 = vmatpush1.msra.mxu0 %v32
  %53 = vmatprep.subr.mxu0 0.0
  %54 = vmatpush1.msra.mxu0 %v31
  %55 = vmatprep.subr.mxu0 0.0
  %56 = vmatpush1.msra.mxu0 %v30
  %57 = vmatprep.subr.mxu0 0.0
  %58 = vmatpush1.msra.mxu0 %v29
  %59 = vmatprep.subr.mxu0 0.0
  %60 = vmatpush1.msra.mxu0 %v28
  %61 = vmatprep.subr.mxu0 0.0
  %62 = vmatpush1.msra.mxu0 %v27
  %63 = vmatprep.subr.mxu0 0.0
  %64 = vmatpush1.msra.mxu0 %v26
  %65 = vmatprep.subr.mxu0 0.0
  %66 = vmatpush1.msra.mxu0 %v25
  %67 = vmatprep.subr.mxu0 0.0
  %68 = vmatpush1.msra.mxu0 %v24
  %69 = vmatprep.subr.mxu0 0.0
  %70 = vmatpush1.msra.mxu0 %v23
  %71 = vmatprep.subr.mxu0 0.0
  %72 = vmatpush1.msra.mxu0 %v22
  %73 = vmatprep.subr.mxu0 0.0
  %74 = vmatpush1.msra.mxu0 %v21
  %75 = vmatprep.subr.mxu0 0.0
  %76 = vmatpush1.msra.mxu0 %v20
  %77 = vmatprep.subr.mxu0 0.0
  %78 = vmatpush1.msra.mxu0 %v19
  %79 = vmatprep.subr.mxu0 0.0
  %80 = vmatpush1.msra.mxu0 %v18
  %81 = vmatprep.subr.mxu0 0.0
  %82 = vmatpush2.msra.mxu0 0.0
  %83 = vmatprep.subr.mxu0 0.0
  %84 = vmatpush2.msra.mxu0 0.0
  %85 = vmatprep.subr.mxu0 0.0
  %86 = vmatpush2.msra.mxu0 0.0
  %87 = vmatprep.subr.mxu0 0.0
  %88 = vmatpush2.msra.mxu0 0.0
  %89 = vmatprep.subr.mxu0 0.0
  %90 = vmatpush2.msra.mxu0 0.0
  %91 = vmatprep.subr.mxu0 0.0
  %92 = vmatpush2.msra.mxu0 0.0
  %93 = vmatprep.subr.mxu0 0.0
  %94 = vmatpush2.msra.mxu0 0.0
  %95 = vmatprep.subr.mxu0 0.0
  %96 = vmatpush2.msra.mxu0 0.0
  %97 = vmatprep.subr.mxu0 0.0
  %98 = vmatpush2.msra.mxu0 0.0
  %99 = vmatprep.subr.mxu0 0.0
  %100 = vmatpush2.msra.mxu0 0.0
  %101 = vmatprep.subr.mxu0 0.0
  %102 = vmatpush2.msra.mxu0 0.0
  %103 = vmatprep.subr.mxu0 0.0
  %104 = vmatpush2.msra.mxu0 0.0
  %105 = vmatprep.subr.mxu0 0.0
  %106 = vmatpush2.msra.mxu0 0.0
  %107 = vmatprep.subr.mxu0 0.0
  %108 = vmatpush2.msra.mxu0 0.0
  %109 = vmatprep.subr.mxu0 0.0
  %110 = vmatpush2.msra.mxu0 0.0
  %111 = vmatprep.subr.mxu0 0.0
  %112 = vmatpush2.msra.mxu0 %v34
  %113 = vmatprep.mubr.f32.mxu0 %v44
  %114 = vmatmul.mubr.f32.gmra.mxu0 %v14
  %v115 = vpop.f32.mrf.mxu0
  %v116 = vadd.f32 %v40, %v115
  %v117 = vpop.f32.mrf.mxu0
  %118 = vmatprep.mubr.f32.mxu0 %v47
  %119 = vmatmul.mubr.f32.gmra.mxu0 %v16
  %v120 = vpop.f32.mrf.mxu0
  %v121 = vadd.f32 %v40, %v120
  %v122 = vpop.f32.mrf.mxu0
  %123 = vdwg.mxu0
  %v124 = vmax.f32 %v116, 0.0
  %v125 = vmax.f32 %v121, 0.0
  %126 = vst [vmem:[%s3] sm:$0xff] %v124
  %127 = vst [vmem:[%s3 + $0x8] sm:$0x3f] %v125
  // Predicated region
  $region14: #{jepa_forward.7} parent=0 // pred_check
    _
  $region15: #{jepa_forward.7} parent=0 // pred_check_branch
    %129 = sbr.rel (0) target = $region17
  $region16: #{jepa_forward.7} parent=0 // pred_region
    _
  $region17: #{jepa_forward.7} parent=0 // pred_fallthru
    _
  // Predicated region
  $region18: #{jepa_forward.7} parent=0 // pred_check
    _
  $region19: #{jepa_forward.7} parent=0 // pred_check_branch
    %131 = sbr.rel (0) target = $region21
  $region20: #{jepa_forward.7} parent=0 // pred_region
    _
  $region21: #{jepa_forward.7} parent=0 // pred_fallthru
    _

</llo_original>
